<compile_context>
chip_gen: v7x
topology: tpu7x:2x2x1
jax: 0.10.0
libtpu: 0.0.40
codegen_flags: <defaults>
</compile_context>

<pallas_src>
import functools

import jax
import jax.numpy as jnp
from jax.experimental import pallas as pl
from jax.experimental.pallas import tpu as pltpu

CP = 128                 # channel lanes (real channels occupy the first C_REAL)
C_REAL = 16              # real trunk channel count of the mini-ResNet
CIN_REAL = 3             # real input channels
NUM_CLASSES = 10
NCLS_PAD = 128           # classes padded to a lane-dense width
NEG = -1e9               # bias on padded class lanes (softmax ignores them)
OUT_ROWS = 8             # sublane-dense per-image output block (8 x 128 stores)
VMEM_LIMIT = 32 * 1024 * 1024   # fits v5e/v6e (128 MiB) and v7x (64 MiB) physical


# ----------------------------- fused Pallas kernel -----------------------------

def _fused_resnet_ce_kernel(tgt_ref, x_ref, wc_ref, scale_ref, shift_ref,
                            fcw_ref, fcb_ref, logits_ref, nll_ref,
                            *, h, w, num_blocks):
    """One grid step = one image: stem + residual blocks + GAP + FC + CE."""
    hw = h * w
    # column index of every flattened (row-major) pixel, broadcast over lanes
    col = jax.lax.broadcasted_iota(jnp.int32, (h, w, CP), 1).reshape(hw, CP)

    def conv_bn_relu(x_in, layer, residual=None):
        """3x3/s1/p1 conv + folded BN (+residual) + ReLU as ONE MXU contraction.

        The 9 taps are folded into K: the patch is (HW, 9*CP) with K-block order
        (tap_row, tap_col, cin) matching the packed weight slab wc_ref[layer].
        Column shifts go to the XLU via pltpu.roll (no unaligned sublane slices);
        row shifts are aligned zero-row concats along the major axis.
        """
        xf = x_in.reshape(hw, CP)
        x32 = xf.astype(jnp.float32)
        # left[p]  = x[p-1]  (column x'-1), zeroed where x' == 0
        left = jnp.where(col >= 1, pltpu.roll(x32, shift=1, axis=0), 0.0)
        # right[p] = x[p+1]  (column x'+1), zeroed where x' == w-1
        right = jnp.where(col <= w - 2, pltpu.roll(x32, shift=hw - 1, axis=0), 0.0)
        xcat = jnp.concatenate(
            [left.astype(x_in.dtype), xf, right.astype(x_in.dtype)],
            axis=-1).reshape(h, w, 3 * CP)                       # (h, w, 3*CP)
        zrow = jnp.zeros((1, w, 3 * CP), xcat.dtype)
        up = jnp.concatenate([zrow, xcat[:-1]], axis=0)          # row y-1
        down = jnp.concatenate([xcat[1:], zrow], axis=0)         # row y+1
        patch = jnp.concatenate([up, xcat, down], axis=-1).reshape(hw, 9 * CP)
        acc = jnp.dot(patch, wc_ref[layer],
                      preferred_element_type=jnp.float32)        # single MXU pass
        out = acc * scale_ref[layer] + shift_ref[layer]          # folded BatchNorm
        if residual is not None:
            out = out + residual.reshape(hw, CP).astype(jnp.float32)
        out = jnp.maximum(out, 0.0)
        return out.reshape(h, w, CP).astype(x_in.dtype)

    # stem + residual BasicBlocks, all activations stay on-chip
    act = conv_bn_relu(x_ref[0], 0)
    layer = 1
    for _ in range(num_blocks):
        identity = act
        mid = conv_bn_relu(act, layer)
        act = conv_bn_relu(mid, layer + 1, residual=identity)
        layer += 2

    # ------- fused head: GAP + FC(+bias) + softmax cross-entropy (per image) -------
    xf = act.astype(jnp.float32).reshape(hw, CP)
    pooled = jnp.sum(xf, axis=0, keepdims=True) * (1.0 / hw)            # (1, CP)
    pooled = jnp.broadcast_to(pooled, (OUT_ROWS, CP))                   # sublane-dense
    logits = jnp.dot(pooled, fcw_ref[...],
                     preferred_element_type=jnp.float32) + fcb_ref[...]
    logits_ref[0] = logits                                              # (8, NCLS_PAD)

    mx = jnp.max(logits, axis=-1, keepdims=True)
    z = logits - mx
    lse = jnp.log(jnp.sum(jnp.exp(z), axis=-1, keepdims=True))
    tgt = tgt_ref[pl.program_id(0)]                                     # SMEM scalar
    cls = jax.lax.broadcasted_iota(jnp.int32, (OUT_ROWS, NCLS_PAD), 1)
    z_tgt = jnp.sum(jnp.where(cls == tgt, z, 0.0), axis=-1, keepdims=True)
    nll_ref[0] = jnp.broadcast_to(lse - z_tgt, (OUT_ROWS, 128))         # per-image NLL


def fused_forward(x_pad, conv_w, scale, shift, fc_w, fc_b, target):
    """Single pallas_call over grid=(N,) running the whole network + loss."""
    n, h, w, cp = x_pad.shape
    assert cp == CP
    layers = conv_w.shape[0]
    num_blocks = (layers - 1) // 2
    hw = h * w

    kern = functools.partial(_fused_resnet_ce_kernel, h=h, w=w,
                             num_blocks=num_blocks)

    # Advisory cost: REAL-channel FLOPs (not the 128-lane padded ones).
    conv_flops = 2 * hw * 9 * (CIN_REAL * C_REAL + (layers - 1) * C_REAL * C_REAL)
    flops = n * (conv_flops + 2 * C_REAL * NUM_CLASSES)
    bytes_accessed = int(
        x_pad.size * 2 + conv_w.size * 2 + (scale.size + shift.size) * 4
        + (fc_w.size + fc_b.size) * 4 + target.size * 4
        + n * OUT_ROWS * (NCLS_PAD + 128) * 4)

    grid_spec = pltpu.PrefetchScalarGridSpec(
        num_scalar_prefetch=1,                      # targets -> SMEM
        grid=(n,),
        in_specs=[
            pl.BlockSpec((1, h, w, CP), lambda i, tgt: (i, 0, 0, 0)),      # image i
            pl.BlockSpec((layers, 9 * CP, CP), lambda i, tgt: (0, 0, 0)),  # weights, resident
            pl.BlockSpec((layers, 1, CP), lambda i, tgt: (0, 0, 0)),       # BN scale
            pl.BlockSpec((layers, 1, CP), lambda i, tgt: (0, 0, 0)),       # BN shift
            pl.BlockSpec((CP, NCLS_PAD), lambda i, tgt: (0, 0)),           # fc_w
            pl.BlockSpec((1, NCLS_PAD), lambda i, tgt: (0, 0)),            # fc_b
        ],
        out_specs=(
            pl.BlockSpec((1, OUT_ROWS, NCLS_PAD), lambda i, tgt: (i, 0, 0)),
            pl.BlockSpec((1, OUT_ROWS, 128), lambda i, tgt: (i, 0, 0)),
        ),
    )
    logits, nll = pl.pallas_call(
        kern,
        out_shape=(jax.ShapeDtypeStruct((n, OUT_ROWS, NCLS_PAD), jnp.float32),
                   jax.ShapeDtypeStruct((n, OUT_ROWS, 128), jnp.float32)),
        grid_spec=grid_spec,
        compiler_params=pltpu.CompilerParams(
            dimension_semantics=("parallel",),       # both TCs on v7x
            vmem_limit_bytes=VMEM_LIMIT),
        cost_estimate=pl.CostEstimate(flops=flops,
                                      transcendentals=n * (NCLS_PAD + 1),
                                      bytes_accessed=bytes_accessed),
    )(target, x_pad, conv_w, scale, shift, fc_w, fc_b)
    return logits, nll


# ------------------------- parameter packing (plain JAX) -------------------------

def _fold_bn(gamma, beta, mean, var, eps=1e-5):
    scale = gamma / jnp.sqrt(var + eps)
    shift = beta - mean * scale
    return scale, shift


def _pack_conv(w, gamma, beta, mean, var):
    """PyTorch (Cout, Cin, 3, 3) conv -> K-folded (9*CP, CP) bf16 slab + BN affine."""
    cout, cin = w.shape[0], w.shape[1]
    wt = jnp.transpose(w, (2, 3, 1, 0))                              # (i, j, ci, co)
    w_pad = jnp.zeros((3, 3, CP, CP), jnp.float32).at[:, :, :cin, :cout].set(wt)
    w_k = w_pad.reshape(9 * CP, CP).astype(jnp.bfloat16)             # K = (i*3+j)*CP + ci
    scale, shift = _fold_bn(gamma, beta, mean, var)
    scale_pad = jnp.zeros((1, CP), jnp.float32).at[0, :cout].set(scale)
    shift_pad = jnp.zeros((1, CP), jnp.float32).at[0, :cout].set(shift)
    return w_k, scale_pad, shift_pad


def init_params(key, cin=3, c=16, num_classes=NUM_CLASSES, num_blocks=2):
    def conv_w(k, cout, cin_):
        return 0.1 * jax.random.normal(k, (cout, cin_, 3, 3), jnp.float32)

    def bn(k, cout):
        k1, k2, k3 = jax.random.split(k, 3)
        gamma = 1.0 + 0.05 * jax.random.normal(k1, (cout,), jnp.float32)
        beta = 0.05 * jax.random.normal(k2, (cout,), jnp.float32)
        mean = 0.05 * jax.random.normal(k3, (cout,), jnp.float32)
        var = jnp.ones((cout,), jnp.float32)
        return gamma, beta, mean, var

    keys = jax.random.split(key, 4 + 4 * num_blocks)
    raw_layers = [(conv_w(keys[0], c, cin),) + bn(keys[1], c)]         # stem
    for b in range(num_blocks):
        kw1, kb1, kw2, kb2 = keys[4 + 4 * b: 8 + 4 * b]
        raw_layers.append((conv_w(kw1, c, c),) + bn(kb1, c))
        raw_layers.append((conv_w(kw2, c, c),) + bn(kb2, c))
    fc_w = 0.1 * jax.random.normal(keys[2], (c, num_classes), jnp.float32)
    fc_b = 0.01 * jax.random.normal(keys[3], (num_classes,), jnp.float32)

    packed_w, scales, shifts = [], [], []
    for (w, gamma, beta, mean, var) in raw_layers:
        wk, sc, sh = _pack_conv(w, gamma, beta, mean, var)
        packed_w.append(wk); scales.append(sc); shifts.append(sh)

    params = {
        "conv_w": jnp.stack(packed_w),                                 # (L, 9*CP, CP) bf16
        "scale": jnp.stack(scales),                                    # (L, 1, CP) f32
        "shift": jnp.stack(shifts),                                    # (L, 1, CP) f32
        "fc_w": jnp.zeros((CP, NCLS_PAD), jnp.float32).at[:c, :num_classes].set(fc_w),
        "fc_b": jnp.full((1, NCLS_PAD), NEG, jnp.float32).at[0, :num_classes].set(fc_b),
    }
    raw = {"layers": raw_layers, "fc_w": fc_w, "fc_b": fc_b}
    return params, raw


# -------------------- forward (ModelAndLoss equivalent) + reference --------------------

def model_and_loss_forward(params, data_nchw, target):
    """Equivalent of ModelAndLoss.forward(data, target) -> (loss, output)."""
    x = jnp.transpose(data_nchw, (0, 2, 3, 1)).astype(jnp.float32)     # NCHW -> NHWC
    n, h, w, cin = x.shape
    x = jnp.pad(x, ((0, 0), (0, 0), (0, 0), (0, CP - cin))).astype(jnp.bfloat16)
    logits3, nll3 = fused_forward(x, params["conv_w"], params["scale"],
                                  params["shift"], params["fc_w"], params["fc_b"],
                                  target.astype(jnp.int32))
    loss = jnp.mean(nll3[:, 0, 0])         # batch mean of N scalars (outside kernel)
    return loss, logits3[:, 0, :NUM_CLASSES]


def reference_forward(raw, data_nchw, target):
    """Pure-JAX f32 reference of the same mini-ResNet + CrossEntropy."""
    x = jnp.transpose(data_nchw, (0, 2, 3, 1)).astype(jnp.float32)

    def conv_bn(x, layer, residual=None):
        w, gamma, beta, mean, var = layer
        y = jax.lax.conv_general_dilated(
            x, jnp.transpose(w, (2, 3, 1, 0)), (1, 1), "SAME",
            dimension_numbers=("NHWC", "HWIO", "NHWC"))
        scale = gamma / jnp.sqrt(var + 1e-5)
        y = y * scale + (beta - mean * scale)
        if residual is not None:
            y = y + residual
        return jax.nn.relu(y)

    layers = raw["layers"]
    num_blocks = (len(layers) - 1) // 2
    x = conv_bn(x, layers[0])
    li = 1
    for _ in range(num_blocks):
        identity = x
        y = conv_bn(x, layers[li])
        x = conv_bn(y, layers[li + 1], residual=identity)
        li += 2
    pooled = jnp.mean(x, axis=(1, 2))
    logits = pooled @ raw["fc_w"] + raw["fc_b"]
    logp = jax.nn.log_softmax(logits)
    loss = -jnp.mean(jnp.take_along_axis(logp, target[:, None], axis=1))
    return loss, logits


if __name__ == "__main__":
    key = jax.random.PRNGKey(0)
    kp, kd, kt = jax.random.split(key, 3)

    params, raw = init_params(kp, cin=CIN_REAL, c=C_REAL,
                              num_classes=NUM_CLASSES, num_blocks=2)
    data = jax.random.normal(kd, (2, 3, 16, 16), jnp.float32)          # NCHW like PyTorch
    target = jax.random.randint(kt, (2,), 0, NUM_CLASSES, jnp.int32)

    loss, output = jax.jit(model_and_loss_forward)(params, data, target)
    jax.block_until_ready((loss, output))

    assert output.shape == (2, NUM_CLASSES)
    assert loss.shape == ()
    assert bool(jnp.isfinite(loss))

    # pure-JAX f32 reference check (kernel runs in bf16 -> loose tolerance)
    ref_loss, ref_logits = reference_forward(raw, data, target)
    assert jnp.allclose(output.astype(jnp.float32), ref_logits, atol=0.1, rtol=0.1)
    assert abs(float(loss) - float(ref_loss)) < 0.1

    print("KERNEL_OK")
</pallas_src>

<mosaic_0001>
module attributes {stable_mosaic.version = 11 : i64} {
  func.func @_fused_resnet_ce_kernel(%arg0: i32, %arg1: memref<2xi32, #tpu.memory_space<smem>>, %arg2: memref<1x16x16x128xbf16, #tpu.memory_space<vmem>>, %arg3: memref<5x1152x128xbf16, #tpu.memory_space<vmem>>, %arg4: memref<5x1x128xf32, #tpu.memory_space<vmem>>, %arg5: memref<5x1x128xf32, #tpu.memory_space<vmem>>, %arg6: memref<128x128xf32, #tpu.memory_space<vmem>>, %arg7: memref<1x128xf32, #tpu.memory_space<vmem>>, %arg8: memref<1x8x128xf32, #tpu.memory_space<vmem>>, %arg9: memref<1x8x128xf32, #tpu.memory_space<vmem>>) attributes {dimension_semantics = [#tpu.dimension_semantics<parallel>], iteration_bounds = array<i64: 2>, scalar_prefetch = 1 : i64, scratch_operands = 0 : i64, tpu.core_type = #tpu.core_type<tc>, window_params = [{transform_indices = @transform_0, window_bounds = array<i64: 1, 16, 16, 128>}, {pipeline_mode = #tpu.pipeline_mode<synchronous>, transform_indices = @transform_1, window_bounds = array<i64: 5, 1152, 128>}, {pipeline_mode = #tpu.pipeline_mode<synchronous>, transform_indices = @transform_2, window_bounds = array<i64: 5, 1, 128>}, {pipeline_mode = #tpu.pipeline_mode<synchronous>, transform_indices = @transform_3, window_bounds = array<i64: 5, 1, 128>}, {pipeline_mode = #tpu.pipeline_mode<synchronous>, transform_indices = @transform_4, window_bounds = array<i64: 128, 128>}, {pipeline_mode = #tpu.pipeline_mode<synchronous>, transform_indices = @transform_5, window_bounds = array<i64: 1, 128>}, {transform_indices = @transform_6, window_bounds = array<i64: 1, 8, 128>}, {transform_indices = @transform_7, window_bounds = array<i64: 1, 8, 128>}]} {
    %0 = tpu.iota {dimensions = array<i32: 1>} : vector<16x16x128xi32>
    %1 = vector.shape_cast %0 : vector<16x16x128xi32> to vector<256x128xi32>
    %c0 = arith.constant 0 : index
    %c0_0 = arith.constant 0 : index
    %c0_1 = arith.constant 0 : index
    %c0_2 = arith.constant 0 : index
    %2 = vector.load %arg2[%c0, %c0_0, %c0_1, %c0_2] : memref<1x16x16x128xbf16, #tpu.memory_space<vmem>>, vector<1x16x16x128xbf16>
    %3 = vector.shape_cast %2 : vector<1x16x16x128xbf16> to vector<16x16x128xbf16>
    %4 = vector.shape_cast %3 : vector<16x16x128xbf16> to vector<256x128xbf16>
    %5 = arith.extf %4 : vector<256x128xbf16> to vector<256x128xf32>
    %c1_i32 = arith.constant 1 : i32
    %6 = vector.broadcast %c1_i32 : i32 to vector<256x128xi32>
    %7 = arith.cmpi sge, %1, %6 : vector<256x128xi32>
    %c1_i32_3 = arith.constant 1 : i32
    %8 = tpu.dynamic_rotate %5 by %c1_i32_3 dim 0 : vector<256x128xf32>, i32 -> vector<256x128xf32>
    %cst = arith.constant 0.000000e+00 : f32
    %9 = vector.broadcast %cst : f32 to vector<256x128xf32>
    %10 = arith.select %7, %8, %9 : vector<256x128xi1>, vector<256x128xf32>
    %c14_i32 = arith.constant 14 : i32
    %11 = vector.broadcast %c14_i32 : i32 to vector<256x128xi32>
    %12 = arith.cmpi sle, %1, %11 : vector<256x128xi32>
    %c255_i32 = arith.constant 255 : i32
    %13 = tpu.dynamic_rotate %5 by %c255_i32 dim 0 : vector<256x128xf32>, i32 -> vector<256x128xf32>
    %cst_4 = arith.constant 0.000000e+00 : f32
    %14 = vector.broadcast %cst_4 : f32 to vector<256x128xf32>
    %15 = arith.select %12, %13, %14 : vector<256x128xi1>, vector<256x128xf32>
    %16 = arith.truncf %10 : vector<256x128xf32> to vector<256x128xbf16>
    %17 = arith.truncf %15 : vector<256x128xf32> to vector<256x128xbf16>
    %18 = tpu.concatenate %16, %4, %17 in 1 : vector<256x128xbf16>, vector<256x128xbf16>, vector<256x128xbf16> -> vector<256x384xbf16>
    %19 = vector.shape_cast %18 : vector<256x384xbf16> to vector<16x16x384xbf16>
    %cst_5 = arith.constant 0.000000e+00 : bf16
    %20 = vector.broadcast %cst_5 : bf16 to vector<1x16x384xbf16>
    %21 = vector.extract_strided_slice %19 {offsets = [0, 0, 0], sizes = [15, 16, 384], strides = [1, 1, 1]} : vector<16x16x384xbf16> to vector<15x16x384xbf16>
    %22 = tpu.concatenate %20, %21 in 0 : vector<1x16x384xbf16>, vector<15x16x384xbf16> -> vector<16x16x384xbf16>
    %23 = vector.extract_strided_slice %19 {offsets = [1, 0, 0], sizes = [15, 16, 384], strides = [1, 1, 1]} : vector<16x16x384xbf16> to vector<15x16x384xbf16>
    %24 = tpu.concatenate %23, %20 in 0 : vector<15x16x384xbf16>, vector<1x16x384xbf16> -> vector<16x16x384xbf16>
    %25 = tpu.concatenate %22, %19, %24 in 2 : vector<16x16x384xbf16>, vector<16x16x384xbf16>, vector<16x16x384xbf16> -> vector<16x16x1152xbf16>
    %26 = vector.shape_cast %25 : vector<16x16x1152xbf16> to vector<256x1152xbf16>
    %c0_6 = arith.constant 0 : index
    %c0_7 = arith.constant 0 : index
    %c0_8 = arith.constant 0 : index
    %27 = vector.load %arg3[%c0_6, %c0_7, %c0_8] : memref<5x1152x128xbf16, #tpu.memory_space<vmem>>, vector<1x1152x128xbf16>
    %28 = vector.shape_cast %27 : vector<1x1152x128xbf16> to vector<1152x128xbf16>
    %cst_9 = arith.constant dense<0.000000e+00> : vector<256x128xf32>
    %29 = tpu.matmul %26, %28, %cst_9 {dimension_numbers = #tpu.dot_dimension_numbers<[1], [0], [0], [1], [0, 0, 1, 1], [], []>} : vector<256x1152xbf16>, vector<1152x128xbf16>, vector<256x128xf32> -> vector<256x128xf32>
    %c0_10 = arith.constant 0 : index
    %c0_11 = arith.constant 0 : index
    %c0_12 = arith.constant 0 : index
    %30 = vector.load %arg4[%c0_10, %c0_11, %c0_12] : memref<5x1x128xf32, #tpu.memory_space<vmem>>, vector<1x1x128xf32>
    %31 = vector.shape_cast %30 : vector<1x1x128xf32> to vector<1x128xf32>
    %32 = vector.broadcast %31 : vector<1x128xf32> to vector<256x128xf32>
    %33 = arith.mulf %29, %32 : vector<256x128xf32>
    %c0_13 = arith.constant 0 : index
    %c0_14 = arith.constant 0 : index
    %c0_15 = arith.constant 0 : index
    %34 = vector.load %arg5[%c0_13, %c0_14, %c0_15] : memref<5x1x128xf32, #tpu.memory_space<vmem>>, vector<1x1x128xf32>
    %35 = vector.shape_cast %34 : vector<1x1x128xf32> to vector<1x128xf32>
    %36 = vector.broadcast %35 : vector<1x128xf32> to vector<256x128xf32>
    %37 = arith.addf %33, %36 : vector<256x128xf32>
    %cst_16 = arith.constant 0.000000e+00 : f32
    %38 = vector.broadcast %cst_16 : f32 to vector<256x128xf32>
    %39 = arith.maximumf %37, %38 : vector<256x128xf32>
    %40 = vector.shape_cast %39 : vector<256x128xf32> to vector<16x16x128xf32>
    %41 = arith.truncf %40 : vector<16x16x128xf32> to vector<16x16x128xbf16>
    %42 = vector.shape_cast %41 : vector<16x16x128xbf16> to vector<256x128xbf16>
    %43 = arith.extf %42 : vector<256x128xbf16> to vector<256x128xf32>
    %c1_i32_17 = arith.constant 1 : i32
    %44 = vector.broadcast %c1_i32_17 : i32 to vector<256x128xi32>
    %45 = arith.cmpi sge, %1, %44 : vector<256x128xi32>
    %c1_i32_18 = arith.constant 1 : i32
    %46 = tpu.dynamic_rotate %43 by %c1_i32_18 dim 0 : vector<256x128xf32>, i32 -> vector<256x128xf32>
    %cst_19 = arith.constant 0.000000e+00 : f32
    %47 = vector.broadcast %cst_19 : f32 to vector<256x128xf32>
    %48 = arith.select %45, %46, %47 : vector<256x128xi1>, vector<256x128xf32>
    %c14_i32_20 = arith.constant 14 : i32
    %49 = vector.broadcast %c14_i32_20 : i32 to vector<256x128xi32>
    %50 = arith.cmpi sle, %1, %49 : vector<256x128xi32>
    %c255_i32_21 = arith.constant 255 : i32
    %51 = tpu.dynamic_rotate %43 by %c255_i32_21 dim 0 : vector<256x128xf32>, i32 -> vector<256x128xf32>
    %cst_22 = arith.constant 0.000000e+00 : f32
    %52 = vector.broadcast %cst_22 : f32 to vector<256x128xf32>
    %53 = arith.select %50, %51, %52 : vector<256x128xi1>, vector<256x128xf32>
    %54 = arith.truncf %48 : vector<256x128xf32> to vector<256x128xbf16>
    %55 = arith.truncf %53 : vector<256x128xf32> to vector<256x128xbf16>
    %56 = tpu.concatenate %54, %42, %55 in 1 : vector<256x128xbf16>, vector<256x128xbf16>, vector<256x128xbf16> -> vector<256x384xbf16>
    %57 = vector.shape_cast %56 : vector<256x384xbf16> to vector<16x16x384xbf16>
    %cst_23 = arith.constant 0.000000e+00 : bf16
    %58 = vector.broadcast %cst_23 : bf16 to vector<1x16x384xbf16>
    %59 = vector.extract_strided_slice %57 {offsets = [0, 0, 0], sizes = [15, 16, 384], strides = [1, 1, 1]} : vector<16x16x384xbf16> to vector<15x16x384xbf16>
    %60 = tpu.concatenate %58, %59 in 0 : vector<1x16x384xbf16>, vector<15x16x384xbf16> -> vector<16x16x384xbf16>
    %61 = vector.extract_strided_slice %57 {offsets = [1, 0, 0], sizes = [15, 16, 384], strides = [1, 1, 1]} : vector<16x16x384xbf16> to vector<15x16x384xbf16>
    %62 = tpu.concatenate %61, %58 in 0 : vector<15x16x384xbf16>, vector<1x16x384xbf16> -> vector<16x16x384xbf16>
    %63 = tpu.concatenate %60, %57, %62 in 2 : vector<16x16x384xbf16>, vector<16x16x384xbf16>, vector<16x16x384xbf16> -> vector<16x16x1152xbf16>
    %64 = vector.shape_cast %63 : vector<16x16x1152xbf16> to vector<256x1152xbf16>
    %c1 = arith.constant 1 : index
    %c0_24 = arith.constant 0 : index
    %c0_25 = arith.constant 0 : index
    %65 = vector.load %arg3[%c1, %c0_24, %c0_25] : memref<5x1152x128xbf16, #tpu.memory_space<vmem>>, vector<1x1152x128xbf16>
    %66 = vector.shape_cast %65 : vector<1x1152x128xbf16> to vector<1152x128xbf16>
    %cst_26 = arith.constant dense<0.000000e+00> : vector<256x128xf32>
    %67 = tpu.matmul %64, %66, %cst_26 {dimension_numbers = #tpu.dot_dimension_numbers<[1], [0], [0], [1], [0, 0, 1, 1], [], []>} : vector<256x1152xbf16>, vector<1152x128xbf16>, vector<256x128xf32> -> vector<256x128xf32>
    %c1_27 = arith.constant 1 : index
    %c0_28 = arith.constant 0 : index
    %c0_29 = arith.constant 0 : index
    %68 = vector.load %arg4[%c1_27, %c0_28, %c0_29] : memref<5x1x128xf32, #tpu.memory_space<vmem>>, vector<1x1x128xf32>
    %69 = vector.shape_cast %68 : vector<1x1x128xf32> to vector<1x128xf32>
    %70 = vector.broadcast %69 : vector<1x128xf32> to vector<256x128xf32>
    %71 = arith.mulf %67, %70 : vector<256x128xf32>
    %c1_30 = arith.constant 1 : index
    %c0_31 = arith.constant 0 : index
    %c0_32 = arith.constant 0 : index
    %72 = vector.load %arg5[%c1_30, %c0_31, %c0_32] : memref<5x1x128xf32, #tpu.memory_space<vmem>>, vector<1x1x128xf32>
    %73 = vector.shape_cast %72 : vector<1x1x128xf32> to vector<1x128xf32>
    %74 = vector.broadcast %73 : vector<1x128xf32> to vector<256x128xf32>
    %75 = arith.addf %71, %74 : vector<256x128xf32>
    %cst_33 = arith.constant 0.000000e+00 : f32
    %76 = vector.broadcast %cst_33 : f32 to vector<256x128xf32>
    %77 = arith.maximumf %75, %76 : vector<256x128xf32>
    %78 = vector.shape_cast %77 : vector<256x128xf32> to vector<16x16x128xf32>
    %79 = arith.truncf %78 : vector<16x16x128xf32> to vector<16x16x128xbf16>
    %80 = vector.shape_cast %79 : vector<16x16x128xbf16> to vector<256x128xbf16>
    %81 = arith.extf %80 : vector<256x128xbf16> to vector<256x128xf32>
    %c1_i32_34 = arith.constant 1 : i32
    %82 = vector.broadcast %c1_i32_34 : i32 to vector<256x128xi32>
    %83 = arith.cmpi sge, %1, %82 : vector<256x128xi32>
    %c1_i32_35 = arith.constant 1 : i32
    %84 = tpu.dynamic_rotate %81 by %c1_i32_35 dim 0 : vector<256x128xf32>, i32 -> vector<256x128xf32>
    %cst_36 = arith.constant 0.000000e+00 : f32
    %85 = vector.broadcast %cst_36 : f32 to vector<256x128xf32>
    %86 = arith.select %83, %84, %85 : vector<256x128xi1>, vector<256x128xf32>
    %c14_i32_37 = arith.constant 14 : i32
    %87 = vector.broadcast %c14_i32_37 : i32 to vector<256x128xi32>
    %88 = arith.cmpi sle, %1, %87 : vector<256x128xi32>
    %c255_i32_38 = arith.constant 255 : i32
    %89 = tpu.dynamic_rotate %81 by %c255_i32_38 dim 0 : vector<256x128xf32>, i32 -> vector<256x128xf32>
    %cst_39 = arith.constant 0.000000e+00 : f32
    %90 = vector.broadcast %cst_39 : f32 to vector<256x128xf32>
    %91 = arith.select %88, %89, %90 : vector<256x128xi1>, vector<256x128xf32>
    %92 = arith.truncf %86 : vector<256x128xf32> to vector<256x128xbf16>
    %93 = arith.truncf %91 : vector<256x128xf32> to vector<256x128xbf16>
    %94 = tpu.concatenate %92, %80, %93 in 1 : vector<256x128xbf16>, vector<256x128xbf16>, vector<256x128xbf16> -> vector<256x384xbf16>
    %95 = vector.shape_cast %94 : vector<256x384xbf16> to vector<16x16x384xbf16>
    %cst_40 = arith.constant 0.000000e+00 : bf16
    %96 = vector.broadcast %cst_40 : bf16 to vector<1x16x384xbf16>
    %97 = vector.extract_strided_slice %95 {offsets = [0, 0, 0], sizes = [15, 16, 384], strides = [1, 1, 1]} : vector<16x16x384xbf16> to vector<15x16x384xbf16>
    %98 = tpu.concatenate %96, %97 in 0 : vector<1x16x384xbf16>, vector<15x16x384xbf16> -> vector<16x16x384xbf16>
    %99 = vector.extract_strided_slice %95 {offsets = [1, 0, 0], sizes = [15, 16, 384], strides = [1, 1, 1]} : vector<16x16x384xbf16> to vector<15x16x384xbf16>
    %100 = tpu.concatenate %99, %96 in 0 : vector<15x16x384xbf16>, vector<1x16x384xbf16> -> vector<16x16x384xbf16>
    %101 = tpu.concatenate %98, %95, %100 in 2 : vector<16x16x384xbf16>, vector<16x16x384xbf16>, vector<16x16x384xbf16> -> vector<16x16x1152xbf16>
    %102 = vector.shape_cast %101 : vector<16x16x1152xbf16> to vector<256x1152xbf16>
    %c2 = arith.constant 2 : index
    %c0_41 = arith.constant 0 : index
    %c0_42 = arith.constant 0 : index
    %103 = vector.load %arg3[%c2, %c0_41, %c0_42] : memref<5x1152x128xbf16, #tpu.memory_space<vmem>>, vector<1x1152x128xbf16>
    %104 = vector.shape_cast %103 : vector<1x1152x128xbf16> to vector<1152x128xbf16>
    %cst_43 = arith.constant dense<0.000000e+00> : vector<256x128xf32>
    %105 = tpu.matmul %102, %104, %cst_43 {dimension_numbers = #tpu.dot_dimension_numbers<[1], [0], [0], [1], [0, 0, 1, 1], [], []>} : vector<256x1152xbf16>, vector<1152x128xbf16>, vector<256x128xf32> -> vector<256x128xf32>
    %c2_44 = arith.constant 2 : index
    %c0_45 = arith.constant 0 : index
    %c0_46 = arith.constant 0 : index
    %106 = vector.load %arg4[%c2_44, %c0_45, %c0_46] : memref<5x1x128xf32, #tpu.memory_space<vmem>>, vector<1x1x128xf32>
    %107 = vector.shape_cast %106 : vector<1x1x128xf32> to vector<1x128xf32>
    %108 = vector.broadcast %107 : vector<1x128xf32> to vector<256x128xf32>
    %109 = arith.mulf %105, %108 : vector<256x128xf32>
    %c2_47 = arith.constant 2 : index
    %c0_48 = arith.constant 0 : index
    %c0_49 = arith.constant 0 : index
    %110 = vector.load %arg5[%c2_47, %c0_48, %c0_49] : memref<5x1x128xf32, #tpu.memory_space<vmem>>, vector<1x1x128xf32>
    %111 = vector.shape_cast %110 : vector<1x1x128xf32> to vector<1x128xf32>
    %112 = vector.broadcast %111 : vector<1x128xf32> to vector<256x128xf32>
    %113 = arith.addf %109, %112 : vector<256x128xf32>
    %114 = vector.shape_cast %41 : vector<16x16x128xbf16> to vector<256x128xbf16>
    %115 = arith.extf %114 : vector<256x128xbf16> to vector<256x128xf32>
    %116 = arith.addf %113, %115 : vector<256x128xf32>
    %cst_50 = arith.constant 0.000000e+00 : f32
    %117 = vector.broadcast %cst_50 : f32 to vector<256x128xf32>
    %118 = arith.maximumf %116, %117 : vector<256x128xf32>
    %119 = vector.shape_cast %118 : vector<256x128xf32> to vector<16x16x128xf32>
    %120 = arith.truncf %119 : vector<16x16x128xf32> to vector<16x16x128xbf16>
    %121 = vector.shape_cast %120 : vector<16x16x128xbf16> to vector<256x128xbf16>
    %122 = arith.extf %121 : vector<256x128xbf16> to vector<256x128xf32>
    %c1_i32_51 = arith.constant 1 : i32
    %123 = vector.broadcast %c1_i32_51 : i32 to vector<256x128xi32>
    %124 = arith.cmpi sge, %1, %123 : vector<256x128xi32>
    %c1_i32_52 = arith.constant 1 : i32
    %125 = tpu.dynamic_rotate %122 by %c1_i32_52 dim 0 : vector<256x128xf32>, i32 -> vector<256x128xf32>
    %cst_53 = arith.constant 0.000000e+00 : f32
    %126 = vector.broadcast %cst_53 : f32 to vector<256x128xf32>
    %127 = arith.select %124, %125, %126 : vector<256x128xi1>, vector<256x128xf32>
    %c14_i32_54 = arith.constant 14 : i32
    %128 = vector.broadcast %c14_i32_54 : i32 to vector<256x128xi32>
    %129 = arith.cmpi sle, %1, %128 : vector<256x128xi32>
    %c255_i32_55 = arith.constant 255 : i32
    %130 = tpu.dynamic_rotate %122 by %c255_i32_55 dim 0 : vector<256x128xf32>, i32 -> vector<256x128xf32>
    %cst_56 = arith.constant 0.000000e+00 : f32
    %131 = vector.broadcast %cst_56 : f32 to vector<256x128xf32>
    %132 = arith.select %129, %130, %131 : vector<256x128xi1>, vector<256x128xf32>
    %133 = arith.truncf %127 : vector<256x128xf32> to vector<256x128xbf16>
    %134 = arith.truncf %132 : vector<256x128xf32> to vector<256x128xbf16>
    %135 = tpu.concatenate %133, %121, %134 in 1 : vector<256x128xbf16>, vector<256x128xbf16>, vector<256x128xbf16> -> vector<256x384xbf16>
    %136 = vector.shape_cast %135 : vector<256x384xbf16> to vector<16x16x384xbf16>
    %cst_57 = arith.constant 0.000000e+00 : bf16
    %137 = vector.broadcast %cst_57 : bf16 to vector<1x16x384xbf16>
    %138 = vector.extract_strided_slice %136 {offsets = [0, 0, 0], sizes = [15, 16, 384], strides = [1, 1, 1]} : vector<16x16x384xbf16> to vector<15x16x384xbf16>
    %139 = tpu.concatenate %137, %138 in 0 : vector<1x16x384xbf16>, vector<15x16x384xbf16> -> vector<16x16x384xbf16>
    %140 = vector.extract_strided_slice %136 {offsets = [1, 0, 0], sizes = [15, 16, 384], strides = [1, 1, 1]} : vector<16x16x384xbf16> to vector<15x16x384xbf16>
    %141 = tpu.concatenate %140, %137 in 0 : vector<15x16x384xbf16>, vector<1x16x384xbf16> -> vector<16x16x384xbf16>
    %142 = tpu.concatenate %139, %136, %141 in 2 : vector<16x16x384xbf16>, vector<16x16x384xbf16>, vector<16x16x384xbf16> -> vector<16x16x1152xbf16>
    %143 = vector.shape_cast %142 : vector<16x16x1152xbf16> to vector<256x1152xbf16>
    %c3 = arith.constant 3 : index
    %c0_58 = arith.constant 0 : index
    %c0_59 = arith.constant 0 : index
    %144 = vector.load %arg3[%c3, %c0_58, %c0_59] : memref<5x1152x128xbf16, #tpu.memory_space<vmem>>, vector<1x1152x128xbf16>
    %145 = vector.shape_cast %144 : vector<1x1152x128xbf16> to vector<1152x128xbf16>
    %cst_60 = arith.constant dense<0.000000e+00> : vector<256x128xf32>
    %146 = tpu.matmul %143, %145, %cst_60 {dimension_numbers = #tpu.dot_dimension_numbers<[1], [0], [0], [1], [0, 0, 1, 1], [], []>} : vector<256x1152xbf16>, vector<1152x128xbf16>, vector<256x128xf32> -> vector<256x128xf32>
    %c3_61 = arith.constant 3 : index
    %c0_62 = arith.constant 0 : index
    %c0_63 = arith.constant 0 : index
    %147 = vector.load %arg4[%c3_61, %c0_62, %c0_63] : memref<5x1x128xf32, #tpu.memory_space<vmem>>, vector<1x1x128xf32>
    %148 = vector.shape_cast %147 : vector<1x1x128xf32> to vector<1x128xf32>
    %149 = vector.broadcast %148 : vector<1x128xf32> to vector<256x128xf32>
    %150 = arith.mulf %146, %149 : vector<256x128xf32>
    %c3_64 = arith.constant 3 : index
    %c0_65 = arith.constant 0 : index
    %c0_66 = arith.constant 0 : index
    %151 = vector.load %arg5[%c3_64, %c0_65, %c0_66] : memref<5x1x128xf32, #tpu.memory_space<vmem>>, vector<1x1x128xf32>
    %152 = vector.shape_cast %151 : vector<1x1x128xf32> to vector<1x128xf32>
    %153 = vector.broadcast %152 : vector<1x128xf32> to vector<256x128xf32>
    %154 = arith.addf %150, %153 : vector<256x128xf32>
    %cst_67 = arith.constant 0.000000e+00 : f32
    %155 = vector.broadcast %cst_67 : f32 to vector<256x128xf32>
    %156 = arith.maximumf %154, %155 : vector<256x128xf32>
    %157 = vector.shape_cast %156 : vector<256x128xf32> to vector<16x16x128xf32>
    %158 = arith.truncf %157 : vector<16x16x128xf32> to vector<16x16x128xbf16>
    %159 = vector.shape_cast %158 : vector<16x16x128xbf16> to vector<256x128xbf16>
    %160 = arith.extf %159 : vector<256x128xbf16> to vector<256x128xf32>
    %c1_i32_68 = arith.constant 1 : i32
    %161 = vector.broadcast %c1_i32_68 : i32 to vector<256x128xi32>
    %162 = arith.cmpi sge, %1, %161 : vector<256x128xi32>
    %c1_i32_69 = arith.constant 1 : i32
    %163 = tpu.dynamic_rotate %160 by %c1_i32_69 dim 0 : vector<256x128xf32>, i32 -> vector<256x128xf32>
    %cst_70 = arith.constant 0.000000e+00 : f32
    %164 = vector.broadcast %cst_70 : f32 to vector<256x128xf32>
    %165 = arith.select %162, %163, %164 : vector<256x128xi1>, vector<256x128xf32>
    %c14_i32_71 = arith.constant 14 : i32
    %166 = vector.broadcast %c14_i32_71 : i32 to vector<256x128xi32>
    %167 = arith.cmpi sle, %1, %166 : vector<256x128xi32>
    %c255_i32_72 = arith.constant 255 : i32
    %168 = tpu.dynamic_rotate %160 by %c255_i32_72 dim 0 : vector<256x128xf32>, i32 -> vector<256x128xf32>
    %cst_73 = arith.constant 0.000000e+00 : f32
    %169 = vector.broadcast %cst_73 : f32 to vector<256x128xf32>
    %170 = arith.select %167, %168, %169 : vector<256x128xi1>, vector<256x128xf32>
    %171 = arith.truncf %165 : vector<256x128xf32> to vector<256x128xbf16>
    %172 = arith.truncf %170 : vector<256x128xf32> to vector<256x128xbf16>
    %173 = tpu.concatenate %171, %159, %172 in 1 : vector<256x128xbf16>, vector<256x128xbf16>, vector<256x128xbf16> -> vector<256x384xbf16>
    %174 = vector.shape_cast %173 : vector<256x384xbf16> to vector<16x16x384xbf16>
    %cst_74 = arith.constant 0.000000e+00 : bf16
    %175 = vector.broadcast %cst_74 : bf16 to vector<1x16x384xbf16>
    %176 = vector.extract_strided_slice %174 {offsets = [0, 0, 0], sizes = [15, 16, 384], strides = [1, 1, 1]} : vector<16x16x384xbf16> to vector<15x16x384xbf16>
    %177 = tpu.concatenate %175, %176 in 0 : vector<1x16x384xbf16>, vector<15x16x384xbf16> -> vector<16x16x384xbf16>
    %178 = vector.extract_strided_slice %174 {offsets = [1, 0, 0], sizes = [15, 16, 384], strides = [1, 1, 1]} : vector<16x16x384xbf16> to vector<15x16x384xbf16>
    %179 = tpu.concatenate %178, %175 in 0 : vector<15x16x384xbf16>, vector<1x16x384xbf16> -> vector<16x16x384xbf16>
    %180 = tpu.concatenate %177, %174, %179 in 2 : vector<16x16x384xbf16>, vector<16x16x384xbf16>, vector<16x16x384xbf16> -> vector<16x16x1152xbf16>
    %181 = vector.shape_cast %180 : vector<16x16x1152xbf16> to vector<256x1152xbf16>
    %c4 = arith.constant 4 : index
    %c0_75 = arith.constant 0 : index
    %c0_76 = arith.constant 0 : index
    %182 = vector.load %arg3[%c4, %c0_75, %c0_76] : memref<5x1152x128xbf16, #tpu.memory_space<vmem>>, vector<1x1152x128xbf16>
    %183 = vector.shape_cast %182 : vector<1x1152x128xbf16> to vector<1152x128xbf16>
    %cst_77 = arith.constant dense<0.000000e+00> : vector<256x128xf32>
    %184 = tpu.matmul %181, %183, %cst_77 {dimension_numbers = #tpu.dot_dimension_numbers<[1], [0], [0], [1], [0, 0, 1, 1], [], []>} : vector<256x1152xbf16>, vector<1152x128xbf16>, vector<256x128xf32> -> vector<256x128xf32>
    %c4_78 = arith.constant 4 : index
    %c0_79 = arith.constant 0 : index
    %c0_80 = arith.constant 0 : index
    %185 = vector.load %arg4[%c4_78, %c0_79, %c0_80] : memref<5x1x128xf32, #tpu.memory_space<vmem>>, vector<1x1x128xf32>
    %186 = vector.shape_cast %185 : vector<1x1x128xf32> to vector<1x128xf32>
    %187 = vector.broadcast %186 : vector<1x128xf32> to vector<256x128xf32>
    %188 = arith.mulf %184, %187 : vector<256x128xf32>
    %c4_81 = arith.constant 4 : index
    %c0_82 = arith.constant 0 : index
    %c0_83 = arith.constant 0 : index
    %189 = vector.load %arg5[%c4_81, %c0_82, %c0_83] : memref<5x1x128xf32, #tpu.memory_space<vmem>>, vector<1x1x128xf32>
    %190 = vector.shape_cast %189 : vector<1x1x128xf32> to vector<1x128xf32>
    %191 = vector.broadcast %190 : vector<1x128xf32> to vector<256x128xf32>
    %192 = arith.addf %188, %191 : vector<256x128xf32>
    %193 = vector.shape_cast %120 : vector<16x16x128xbf16> to vector<256x128xbf16>
    %194 = arith.extf %193 : vector<256x128xbf16> to vector<256x128xf32>
    %195 = arith.addf %192, %194 : vector<256x128xf32>
    %cst_84 = arith.constant 0.000000e+00 : f32
    %196 = vector.broadcast %cst_84 : f32 to vector<256x128xf32>
    %197 = arith.maximumf %195, %196 : vector<256x128xf32>
    %198 = vector.shape_cast %197 : vector<256x128xf32> to vector<16x16x128xf32>
    %199 = arith.truncf %198 : vector<16x16x128xf32> to vector<16x16x128xbf16>
    %200 = arith.extf %199 : vector<16x16x128xbf16> to vector<16x16x128xf32>
    %201 = vector.shape_cast %200 : vector<16x16x128xf32> to vector<256x128xf32>
    %cst_85 = arith.constant dense<0.000000e+00> : vector<128xf32>
    %202 = vector.multi_reduction <add>, %201, %cst_85 [0] : vector<256x128xf32> to vector<128xf32>
    %203 = vector.shape_cast %202 : vector<128xf32> to vector<1x128xf32>
    %cst_86 = arith.constant 3.906250e-03 : f32
    %204 = vector.broadcast %cst_86 : f32 to vector<1x128xf32>
    %205 = arith.mulf %203, %204 : vector<1x128xf32>
    %206 = vector.shape_cast %205 : vector<1x128xf32> to vector<1x128xf32>
    %207 = vector.broadcast %206 : vector<1x128xf32> to vector<8x128xf32>
    %c0_87 = arith.constant 0 : index
    %c0_88 = arith.constant 0 : index
    %208 = vector.load %arg6[%c0_87, %c0_88] : memref<128x128xf32, #tpu.memory_space<vmem>>, vector<128x128xf32>
    %cst_89 = arith.constant dense<0.000000e+00> : vector<8x128xf32>
    %209 = tpu.matmul %207, %208, %cst_89 {dimension_numbers = #tpu.dot_dimension_numbers<[1], [0], [0], [1], [0, 0, 1, 1], [], []>} : vector<8x128xf32>, vector<128x128xf32>, vector<8x128xf32> -> vector<8x128xf32>
    %c0_90 = arith.constant 0 : index
    %c0_91 = arith.constant 0 : index
    %210 = vector.load %arg7[%c0_90, %c0_91] : memref<1x128xf32, #tpu.memory_space<vmem>>, vector<1x128xf32>
    %211 = vector.broadcast %210 : vector<1x128xf32> to vector<8x128xf32>
    %212 = arith.addf %209, %211 : vector<8x128xf32>
    %c0_92 = arith.constant 0 : index
    %c0_93 = arith.constant 0 : index
    %c0_94 = arith.constant 0 : index
    %213 = vector.load %arg8[%c0_92, %c0_93, %c0_94] : memref<1x8x128xf32, #tpu.memory_space<vmem>>, vector<1x8x128xf32>
    %214 = vector.shape_cast %213 : vector<1x8x128xf32> to vector<8x128xf32>
    %215 = vector.shape_cast %212 : vector<8x128xf32> to vector<1x8x128xf32>
    tpu.vector_store %arg8[%c0_92, %c0_93, %c0_94], %215 {strides = array<i32>} : memref<1x8x128xf32, #tpu.memory_space<vmem>>, vector<1x8x128xf32>,
    %cst_95 = arith.constant dense<0xFF800000> : vector<8xf32>
    %216 = vector.multi_reduction <maximumf>, %212, %cst_95 [1] : vector<8x128xf32> to vector<8xf32>
    %217 = vector.shape_cast %216 : vector<8xf32> to vector<8x1xf32>
    %218 = vector.broadcast %217 : vector<8x1xf32> to vector<8x128xf32>
    %219 = arith.subf %212, %218 : vector<8x128xf32>
    %220 = math.exp %219 : vector<8x128xf32>
    %cst_96 = arith.constant dense<0.000000e+00> : vector<8xf32>
    %221 = vector.multi_reduction <add>, %220, %cst_96 [1] : vector<8x128xf32> to vector<8xf32>
    %222 = vector.shape_cast %221 : vector<8xf32> to vector<8x1xf32>
    %223 = math.log %222 : vector<8x1xf32>
    %224 = arith.index_cast %arg0 : i32 to index
    %225 = memref.load %arg1[%224] : memref<2xi32, #tpu.memory_space<smem>>
    %226 = tpu.iota {dimensions = array<i32: 1>} : vector<8x128xi32>
    %227 = vector.broadcast %225 : i32 to vector<8x128xi32>
    %228 = arith.cmpi eq, %226, %227 : vector<8x128xi32>
    %cst_97 = arith.constant 0.000000e+00 : f32
    %229 = vector.broadcast %cst_97 : f32 to vector<8x128xf32>
    %230 = arith.select %228, %219, %229 : vector<8x128xi1>, vector<8x128xf32>
    %cst_98 = arith.constant dense<0.000000e+00> : vector<8xf32>
    %231 = vector.multi_reduction <add>, %230, %cst_98 [1] : vector<8x128xf32> to vector<8xf32>
    %232 = vector.shape_cast %231 : vector<8xf32> to vector<8x1xf32>
    %233 = arith.subf %223, %232 : vector<8x1xf32>
    %234 = vector.shape_cast %233 : vector<8x1xf32> to vector<8x1xf32>
    %235 = vector.broadcast %234 : vector<8x1xf32> to vector<8x128xf32>
    %c0_99 = arith.constant 0 : index
    %c0_100 = arith.constant 0 : index
    %c0_101 = arith.constant 0 : index
    %236 = vector.load %arg9[%c0_99, %c0_100, %c0_101] : memref<1x8x128xf32, #tpu.memory_space<vmem>>, vector<1x8x128xf32>
    %237 = vector.shape_cast %236 : vector<1x8x128xf32> to vector<8x128xf32>
    %238 = vector.shape_cast %235 : vector<8x128xf32> to vector<1x8x128xf32>
    tpu.vector_store %arg9[%c0_99, %c0_100, %c0_101], %238 {strides = array<i32>} : memref<1x8x128xf32, #tpu.memory_space<vmem>>, vector<1x8x128xf32>,
    return
  }
  func.func @transform_0(%arg0: i32, %arg1: memref<2xi32, #tpu.memory_space<smem>>) -> (i32, i32, i32, i32) {
    %c0_i32 = arith.constant 0 : i32
    %c0_i32_0 = arith.constant 0 : i32
    %c0_i32_1 = arith.constant 0 : i32
    %c0_i32_2 = arith.constant 0 : i32
    return %arg0, %c0_i32, %c0_i32_0, %c0_i32_1 : i32, i32, i32, i32
  }
  func.func @transform_1(%arg0: i32, %arg1: memref<2xi32, #tpu.memory_space<smem>>) -> (i32, i32, i32) {
    %c0_i32 = arith.constant 0 : i32
    %c0_i32_0 = arith.constant 0 : i32
    %c0_i32_1 = arith.constant 0 : i32
    %c0_i32_2 = arith.constant 0 : i32
    return %c0_i32, %c0_i32_0, %c0_i32_1 : i32, i32, i32
  }
  func.func @transform_2(%arg0: i32, %arg1: memref<2xi32, #tpu.memory_space<smem>>) -> (i32, i32, i32) {
    %c0_i32 = arith.constant 0 : i32
    %c0_i32_0 = arith.constant 0 : i32
    %c0_i32_1 = arith.constant 0 : i32
    %c0_i32_2 = arith.constant 0 : i32
    return %c0_i32, %c0_i32_0, %c0_i32_1 : i32, i32, i32
  }
  func.func @transform_3(%arg0: i32, %arg1: memref<2xi32, #tpu.memory_space<smem>>) -> (i32, i32, i32) {
    %c0_i32 = arith.constant 0 : i32
    %c0_i32_0 = arith.constant 0 : i32
    %c0_i32_1 = arith.constant 0 : i32
    %c0_i32_2 = arith.constant 0 : i32
    return %c0_i32, %c0_i32_0, %c0_i32_1 : i32, i32, i32
  }
  func.func @transform_4(%arg0: i32, %arg1: memref<2xi32, #tpu.memory_space<smem>>) -> (i32, i32) {
    %c0_i32 = arith.constant 0 : i32
    %c0_i32_0 = arith.constant 0 : i32
    %c0_i32_1 = arith.constant 0 : i32
    return %c0_i32, %c0_i32_0 : i32, i32
  }
  func.func @transform_5(%arg0: i32, %arg1: memref<2xi32, #tpu.memory_space<smem>>) -> (i32, i32) {
    %c0_i32 = arith.constant 0 : i32
    %c0_i32_0 = arith.constant 0 : i32
    %c0_i32_1 = arith.constant 0 : i32
    return %c0_i32, %c0_i32_0 : i32, i32
  }
  func.func @transform_6(%arg0: i32, %arg1: memref<2xi32, #tpu.memory_space<smem>>) -> (i32, i32, i32) {
    %c0_i32 = arith.constant 0 : i32
    %c0_i32_0 = arith.constant 0 : i32
    %c0_i32_1 = arith.constant 0 : i32
    return %arg0, %c0_i32, %c0_i32_0 : i32, i32, i32
  }
  func.func @transform_7(%arg0: i32, %arg1: memref<2xi32, #tpu.memory_space<smem>>) -> (i32, i32, i32) {
    %c0_i32 = arith.constant 0 : i32
    %c0_i32_0 = arith.constant 0 : i32
    %c0_i32_1 = arith.constant 0 : i32
    return %arg0, %c0_i32, %c0_i32_0 : i32, i32, i32
  }
}

</mosaic_0001>

<llo_original>
// kernel: model_and_loss_forward.1
$region0: #{model_and_loss_forward.1}
  #allocation0 [shape = 'u32[]', space=smem, size = 0x4, offset = 0x4, fixed_abs, tag = 'smem constant byte address 0x4 - core index']
  #allocation1 [shape = 'u32[144,128]{1,0:T(1,128)}', space=vmem, size = 0x12000, scoped, tag = 'internal scratch']
  #allocation2 [shape = 's32[1]{0}', space=sflag, size = 0x4, scoped, tag = 'scoped memory for model_and_loss_forward.1']
  #allocation3 [shape = 'u8[512]{0}', space=smem, size = 0x200, scoped, tag = 'prefetched SMEM operand 0']
  %s0 = inlined_call_operand.hbm [shape: s32[2], index: 0, kind: input, shape index: {}]
  %s1 = inlined_call_operand.vmem [shape: bf16[2,16,16,128], index: 1, kind: input, shape index: {}]
  %s2 = inlined_call_operand.hbm [shape: bf16[5,1152,128], index: 2, kind: input, shape index: {}]
  %s3 = inlined_call_operand.hbm [shape: f32[5,1,128], index: 3, kind: input, shape index: {}]
  %s4 = inlined_call_operand.hbm [shape: f32[5,1,128], index: 4, kind: input, shape index: {}]
  %s5 = inlined_call_operand.hbm [shape: f32[128,128], index: 5, kind: input, shape index: {}]
  %s6 = inlined_call_operand.hbm [shape: f32[1,128], index: 6, kind: input, shape index: {}]
  %s7 = inlined_call_operand.vmem [shape: f32[2,8,128], index: 7, kind: output, shape index: {0}]
  %s8 = inlined_call_operand.vmem [shape: f32[2,8,128], index: 8, kind: output, shape index: {1}]
  %9 = xla_tuple %s7, %s8
  %s10 = sld [smem:[#allocation0]]
  $region85: #{model_and_loss_forward.1} parent=0
    _
  %s12 = ssub.s32 1, %s10
  %s13 = scalar_select 0, %s12, %s10
  %15 = dma.hbm_to_smem %s0, 16, [#allocation3], [#allocation2]
  %16 = dma.done [#allocation2], 16
  %17 = sfence
  $region1: #{model_and_loss_forward.1} parent=0
    #allocation4 [shape = 'u8[1474560]{0}', space=vmem, size = 0x168000, scoped, tag = 'input window, operand 2, single buffered']
    #allocation5 [shape = 's32[2]{0}', space=sflag, size = 0x8, scoped, tag = 'scoped memory for model_and_loss_forward.1']
    #allocation6 [shape = 'u8[2560]{0}', space=vmem, size = 0xc00, scoped, tag = 'input window, operand 3, single buffered']
    #allocation7 [shape = 's32[1]{0}', space=sflag, size = 0x4, scoped, tag = 'scoped memory for model_and_loss_forward.1']
    #allocation8 [shape = 'u8[2560]{0}', space=vmem, size = 0xc00, scoped, tag = 'input window, operand 4, single buffered']
    #allocation9 [shape = 'u8[65536]{0}', space=vmem, size = 0x10000, scoped, tag = 'input window, operand 5, single buffered']
    #allocation10 [shape = 's32[1]{0}', space=sflag, size = 0x4, scoped, tag = 'scoped memory for model_and_loss_forward.1']
    #allocation11 [shape = 'u8[512]{0}', space=vmem, size = 0x400, scoped, tag = 'input window, operand 6, single buffered']
    %18 = vsyncpa [#allocation5], 0
    %19 = vsyncpa [#allocation7], 0
    %20 = vsyncpa [#allocation10], 0
    loop: start=0, step=1, limit=4
    $region2: #{model_and_loss_forward.1} parent=1 // loop_pre_header
      _
    $region3: #{model_and_loss_forward.1} parent=1 // loop_header
      %s22 = sphi 0, %s26
      %p23 = scmp.ge.s32.totalorder %s22, 4
      %s32 = sphi 0, %s34
      %s35 = sphi 0, %s32
      %s36 = sphi 0, %s35
      %s52 = sphi 0, %s36
      %s56 = sphi 0, %s56
      %s58 = sphi 0, %s56
      %s59 = sphi 0, %s58
      %s73 = sphi 0, %s59
      %s77 = sphi 0, %s77
      %s79 = sphi 0, %s77
      %s80 = sphi 0, %s79
      %s94 = sphi 0, %s80
      %s98 = sphi 0, %s98
      %s100 = sphi 0, %s98
      %s101 = sphi 0, %s100
      %s115 = sphi 0, %s101
      %s119 = sphi 0, %s119
      %s121 = sphi 0, %s119
      %s122 = sphi 0, %s121
      %s136 = sphi 0, %s122
      %s140 = sphi 0, %s140
      %s142 = sphi 0, %s140
      %s143 = sphi 0, %s142
      %s157 = sphi 0, %s143
      %s163 = sphi 0, %s165
      %s166 = sphi 0, %s163
      %s167 = sphi 0, %s166
      %s183 = sphi 0, %s167
      %s189 = sphi 0, %s191
      %s192 = sphi 0, %s189
      %s193 = sphi 0, %s192
      %s209 = sphi 0, %s193
    $region4: #{model_and_loss_forward.1} parent=1 // loop_header_branch
      %25 = sbr.rel (%p23) target = $region8
    $region5: #{model_and_loss_forward.1} parent=1 // loop_body
      %s27 = ssub.s32 %s22, 1
      %s28 = ssub.s32 %s22, 2
      %s29 = sadd.s32 %s22, 1
      %s30 = ssub.s32 %s22, %s29
      %p31 = scmp.eq.s32.totalorder %s30, 0
      %s33 = sadd.s32 %s32, 1
      %s34 = scalar_select %p31, %s32, %s33
      %p37 = pneg %p31
      %p38 = scmp.eq.s32.totalorder %s22, 1
      %p39 = por %p37, %p38
      %p40 = scmp.ne.s32.totalorder %s32, %s35
      %p41 = scmp.eq.s32.totalorder %s22, 0
      %p42 = por %p40, %p41
      %p43 = scmp.ne.s32.totalorder %s32, %s35
      %p44 = scmp.eq.s32.totalorder %s27, 1
      %p45 = por %p43, %p44
      %p46 = scmp.ne.s32.totalorder %s35, %s36
      %p47 = scmp.eq.s32.totalorder %s27, 0
      %p48 = por %p46, %p47
      %p49 = scmp.ne.s32.totalorder %s35, %s36
      %p50 = scmp.eq.s32.totalorder %s28, 1
      %p51 = por %p49, %p50
      %p53 = scmp.ne.s32.totalorder %s36, %s52
      %p54 = scmp.eq.s32.totalorder %s28, 0
      %p55 = por %p53, %p54
      %s57 = sadd.s32 %s56, 1
      %p60 = scmp.eq.s32.totalorder %s22, 1
      %p61 = scmp.ne.s32.totalorder %s56, %s58
      %p62 = scmp.eq.s32.totalorder %s22, 0
      %p63 = por %p61, %p62
      %p64 = scmp.ne.s32.totalorder %s56, %s58
      %p65 = scmp.eq.s32.totalorder %s27, 1
      %p66 = por %p64, %p65
      %p67 = scmp.ne.s32.totalorder %s58, %s59
      %p68 = scmp.eq.s32.totalorder %s27, 0
      %p69 = por %p67, %p68
      %p70 = scmp.ne.s32.totalorder %s58, %s59
      %p71 = scmp.eq.s32.totalorder %s28, 1
      %p72 = por %p70, %p71
      %p74 = scmp.ne.s32.totalorder %s59, %s73
      %p75 = scmp.eq.s32.totalorder %s28, 0
      %p76 = por %p74, %p75
      %s78 = sadd.s32 %s77, 1
      %p81 = scmp.eq.s32.totalorder %s22, 1
      %p82 = scmp.ne.s32.totalorder %s77, %s79
      %p83 = scmp.eq.s32.totalorder %s22, 0
      %p84 = por %p82, %p83
      %p85 = scmp.ne.s32.totalorder %s77, %s79
      %p86 = scmp.eq.s32.totalorder %s27, 1
      %p87 = por %p85, %p86
      %p88 = scmp.ne.s32.totalorder %s79, %s80
      %p89 = scmp.eq.s32.totalorder %s27, 0
      %p90 = por %p88, %p89
      %p91 = scmp.ne.s32.totalorder %s79, %s80
      %p92 = scmp.eq.s32.totalorder %s28, 1
      %p93 = por %p91, %p92
      %p95 = scmp.ne.s32.totalorder %s80, %s94
      %p96 = scmp.eq.s32.totalorder %s28, 0
      %p97 = por %p95, %p96
      %s99 = sadd.s32 %s98, 1
      %p102 = scmp.eq.s32.totalorder %s22, 1
      %p103 = scmp.ne.s32.totalorder %s98, %s100
      %p104 = scmp.eq.s32.totalorder %s22, 0
      %p105 = por %p103, %p104
      %p106 = scmp.ne.s32.totalorder %s98, %s100
      %p107 = scmp.eq.s32.totalorder %s27, 1
      %p108 = por %p106, %p107
      %p109 = scmp.ne.s32.totalorder %s100, %s101
      %p110 = scmp.eq.s32.totalorder %s27, 0
      %p111 = por %p109, %p110
      %p112 = scmp.ne.s32.totalorder %s100, %s101
      %p113 = scmp.eq.s32.totalorder %s28, 1
      %p114 = por %p112, %p113
      %p116 = scmp.ne.s32.totalorder %s101, %s115
      %p117 = scmp.eq.s32.totalorder %s28, 0
      %p118 = por %p116, %p117
      %s120 = sadd.s32 %s119, 1
      %p123 = scmp.eq.s32.totalorder %s22, 1
      %p124 = scmp.ne.s32.totalorder %s119, %s121
      %p125 = scmp.eq.s32.totalorder %s22, 0
      %p126 = por %p124, %p125
      %p127 = scmp.ne.s32.totalorder %s119, %s121
      %p128 = scmp.eq.s32.totalorder %s27, 1
      %p129 = por %p127, %p128
      %p130 = scmp.ne.s32.totalorder %s121, %s122
      %p131 = scmp.eq.s32.totalorder %s27, 0
      %p132 = por %p130, %p131
      %p133 = scmp.ne.s32.totalorder %s121, %s122
      %p134 = scmp.eq.s32.totalorder %s28, 1
      %p135 = por %p133, %p134
      %p137 = scmp.ne.s32.totalorder %s122, %s136
      %p138 = scmp.eq.s32.totalorder %s28, 0
      %p139 = por %p137, %p138
      %s141 = sadd.s32 %s140, 1
      %p144 = scmp.eq.s32.totalorder %s22, 1
      %p145 = scmp.ne.s32.totalorder %s140, %s142
      %p146 = scmp.eq.s32.totalorder %s22, 0
      %p147 = por %p145, %p146
      %p148 = scmp.ne.s32.totalorder %s140, %s142
      %p149 = scmp.eq.s32.totalorder %s27, 1
      %p150 = por %p148, %p149
      %p151 = scmp.ne.s32.totalorder %s142, %s143
      %p152 = scmp.eq.s32.totalorder %s27, 0
      %p153 = por %p151, %p152
      %p154 = scmp.ne.s32.totalorder %s142, %s143
      %p155 = scmp.eq.s32.totalorder %s28, 1
      %p156 = por %p154, %p155
      %p158 = scmp.ne.s32.totalorder %s143, %s157
      %p159 = scmp.eq.s32.totalorder %s28, 0
      %p160 = por %p158, %p159
      %s161 = ssub.s32 %s22, %s29
      %p162 = scmp.eq.s32.totalorder %s161, 0
      %s164 = sadd.s32 %s163, 1
      %s165 = scalar_select %p162, %s163, %s164
      %p168 = pneg %p162
      %p169 = scmp.eq.s32.totalorder %s22, 1
      %p170 = por %p168, %p169
      %p171 = scmp.ne.s32.totalorder %s163, %s166
      %p172 = scmp.eq.s32.totalorder %s22, 0
      %p173 = por %p171, %p172
      %p174 = scmp.ne.s32.totalorder %s163, %s166
      %p175 = scmp.eq.s32.totalorder %s27, 1
      %p176 = por %p174, %p175
      %p177 = scmp.ne.s32.totalorder %s166, %s167
      %p178 = scmp.eq.s32.totalorder %s27, 0
      %p179 = por %p177, %p178
      %p180 = scmp.ne.s32.totalorder %s166, %s167
      %p181 = scmp.eq.s32.totalorder %s28, 1
      %p182 = por %p180, %p181
      %p184 = scmp.ne.s32.totalorder %s167, %s183
      %p185 = scmp.eq.s32.totalorder %s28, 0
      %p186 = por %p184, %p185
      %s187 = ssub.s32 %s22, %s29
      %p188 = scmp.eq.s32.totalorder %s187, 0
      %s190 = sadd.s32 %s189, 1
      %s191 = scalar_select %p188, %s189, %s190
      %p194 = pneg %p188
      %p195 = scmp.eq.s32.totalorder %s22, 1
      %p196 = por %p194, %p195
      %p197 = scmp.ne.s32.totalorder %s189, %s192
      %p198 = scmp.eq.s32.totalorder %s22, 0
      %p199 = por %p197, %p198
      %p200 = scmp.ne.s32.totalorder %s189, %s192
      %p201 = scmp.eq.s32.totalorder %s27, 1
      %p202 = por %p200, %p201
      %p203 = scmp.ne.s32.totalorder %s192, %s193
      %p204 = scmp.eq.s32.totalorder %s27, 0
      %p205 = por %p203, %p204
      %p206 = scmp.ne.s32.totalorder %s192, %s193
      %p207 = scmp.eq.s32.totalorder %s28, 1
      %p208 = por %p206, %p207
      %p210 = scmp.ne.s32.totalorder %s193, %s209
      %p211 = scmp.eq.s32.totalorder %s28, 0
      %p212 = por %p210, %p211
      %p213 = scmp.le.s32.totalorder 1, %s22
      %p214 = scmp.lt.s32.totalorder %s22, 3
      %p215 = pnand %p213, %p214
      %p216 = pneg %p215
      // Predicated region
      $region9: #{model_and_loss_forward.1} parent=5 // pred_check
        _
      $region10: #{model_and_loss_forward.1} parent=5 // pred_check_branch
        %218 = sbr.rel (%p215) target = $region12
      $region11: #{model_and_loss_forward.1} parent=5 // pred_region
        %s219 = ssub.s32 %s22, 1
        // Predicated region
        $region13: #{model_and_loss_forward.1} parent=11 // pred_check
          %p220 = pneg %p69
        $region14: #{model_and_loss_forward.1} parent=11 // pred_check_branch
          %222 = sbr.rel (%p220) target = $region16
        $region15: #{model_and_loss_forward.1} parent=11 // pred_region
          %s224 = ssub.s32 46080, 46080
          %225 = vsyncadd [#allocation5], %s224
          %s226 = sshll.u32 [#allocation4], 4
          %s227 = int_to_ptr.vmem [resolvable:$true] %s226
          %232 = dma.hbm_to_vmem [thread:$0]  %s2, 46080, %s227, [#allocation5], 64, 64, 4
        $region16: #{model_and_loss_forward.1} parent=11 // pred_fallthru
          _
        // Predicated region
        $region17: #{model_and_loss_forward.1} parent=11 // pred_check
          %p233 = pneg %p90
        $region18: #{model_and_loss_forward.1} parent=11 // pred_check_branch
          %235 = sbr.rel (%p233) target = $region20
        $region19: #{model_and_loss_forward.1} parent=11 // pred_region
          %s237 = ssub.s32 80, 80
          %238 = vsyncadd [#allocation7], %s237
          %s239 = sshll.u32 [#allocation6], 4
          %s240 = int_to_ptr.vmem [resolvable:$true] %s239
          %245 = dma.hbm_to_vmem [thread:$0]  %s3, 80, %s240, [#allocation7], 16, 16, 1
        $region20: #{model_and_loss_forward.1} parent=11 // pred_fallthru
          _
        // Predicated region
        $region21: #{model_and_loss_forward.1} parent=11 // pred_check
          %p246 = pneg %p111
        $region22: #{model_and_loss_forward.1} parent=11 // pred_check_branch
          %248 = sbr.rel (%p246) target = $region24
        $region23: #{model_and_loss_forward.1} parent=11 // pred_region
          %s250 = ssub.s32 80, 80
          %251 = vsyncadd [#allocation7], %s250
          %s252 = sshll.u32 [#allocation8], 4
          %s253 = int_to_ptr.vmem [resolvable:$true] %s252
          %258 = dma.hbm_to_vmem [thread:$0]  %s4, 80, %s253, [#allocation7], 16, 16, 1
        $region24: #{model_and_loss_forward.1} parent=11 // pred_fallthru
          _
        // Predicated region
        $region25: #{model_and_loss_forward.1} parent=11 // pred_check
          %p259 = pneg %p132
        $region26: #{model_and_loss_forward.1} parent=11 // pred_check_branch
          %261 = sbr.rel (%p259) target = $region28
        $region27: #{model_and_loss_forward.1} parent=11 // pred_region
          %s263 = ssub.s32 2048, 2048
          %264 = vsyncadd [#allocation10], %s263
          %s265 = sshll.u32 [#allocation9], 4
          %s266 = int_to_ptr.vmem [resolvable:$true] %s265
          %271 = dma.hbm_to_vmem [thread:$0]  %s5, 2048, %s266, [#allocation10], 128, 128, 8
        $region28: #{model_and_loss_forward.1} parent=11 // pred_fallthru
          _
        // Predicated region
        $region29: #{model_and_loss_forward.1} parent=11 // pred_check
          %p272 = pneg %p153
        $region30: #{model_and_loss_forward.1} parent=11 // pred_check_branch
          %274 = sbr.rel (%p272) target = $region32
        $region31: #{model_and_loss_forward.1} parent=11 // pred_region
          %s276 = ssub.s32 16, 16
          %277 = vsyncadd [#allocation10], %s276
          %s279 = sshll.u32 [#allocation11], 4
          %s280 = int_to_ptr.vmem [resolvable:$true] %s279
          %282 = dma.hbm_to_vmem [thread:$0]  %s6, 16, %s280, [#allocation10]
        $region32: #{model_and_loss_forward.1} parent=11 // pred_fallthru
          _
      $region12: #{model_and_loss_forward.1} parent=5 // pred_fallthru
        _
      %p283 = scmp.lt.s32.totalorder %s22, 2
      // Predicated region
      $region33: #{model_and_loss_forward.1} parent=5 // pred_check
        %p284 = pneg %p283
      $region34: #{model_and_loss_forward.1} parent=5 // pred_check_branch
        %286 = sbr.rel (%p284) target = $region36
      $region35: #{model_and_loss_forward.1} parent=5 // pred_region
        // Predicated region
        $region37: #{model_and_loss_forward.1} parent=35 // pred_check
          %p287 = pneg %p42
        $region38: #{model_and_loss_forward.1} parent=35 // pred_check_branch
          %289 = sbr.rel (%p287) target = $region40
        $region39: #{model_and_loss_forward.1} parent=35 // pred_region
          %p290 = scmp.lt.s32.totalorder %s22, 1
          %s291 = scalar_select %p290, %s22, 1
          %s292 = smul.addr %s291, 32
          %s293 = smul.addr %s292, 4
          %s294 = scalar_lea.vmem %s1, %s293
        $region40: #{model_and_loss_forward.1} parent=35 // pred_fallthru
          _
      $region36: #{model_and_loss_forward.1} parent=5 // pred_fallthru
        _
      %p295 = scmp.le.s32.totalorder 1, %s22
      %p296 = scmp.lt.s32.totalorder %s22, 3
      %p297 = pnand %p295, %p296
      %p298 = pneg %p297
      // Predicated region
      $region41: #{model_and_loss_forward.1} parent=5 // pred_check
        _
      $region42: #{model_and_loss_forward.1} parent=5 // pred_check_branch
        %300 = sbr.rel (%p297) target = $region44
      $region43: #{model_and_loss_forward.1} parent=5 // pred_region
        %s301 = ssub.s32 %s22, 1
        // Predicated region
        $region45: #{model_and_loss_forward.1} parent=43 // pred_check
          %p302 = pneg %p69
        $region46: #{model_and_loss_forward.1} parent=43 // pred_check_branch
          %304 = sbr.rel (%p302) target = $region48
        $region47: #{model_and_loss_forward.1} parent=43 // pred_region
          %305 = dma.done [#allocation5], 46080
        $region48: #{model_and_loss_forward.1} parent=43 // pred_fallthru
          _
        // Predicated region
        $region49: #{model_and_loss_forward.1} parent=43 // pred_check
          %p306 = pneg %p90
        $region50: #{model_and_loss_forward.1} parent=43 // pred_check_branch
          %308 = sbr.rel (%p306) target = $region52
        $region51: #{model_and_loss_forward.1} parent=43 // pred_region
          %309 = dma.done [#allocation7], 80
        $region52: #{model_and_loss_forward.1} parent=43 // pred_fallthru
          _
        // Predicated region
        $region53: #{model_and_loss_forward.1} parent=43 // pred_check
          %p310 = pneg %p111
        $region54: #{model_and_loss_forward.1} parent=43 // pred_check_branch
          %312 = sbr.rel (%p310) target = $region56
        $region55: #{model_and_loss_forward.1} parent=43 // pred_region
          %313 = dma.done [#allocation7], 80
        $region56: #{model_and_loss_forward.1} parent=43 // pred_fallthru
          _
        // Predicated region
        $region57: #{model_and_loss_forward.1} parent=43 // pred_check
          %p314 = pneg %p132
        $region58: #{model_and_loss_forward.1} parent=43 // pred_check_branch
          %316 = sbr.rel (%p314) target = $region60
        $region59: #{model_and_loss_forward.1} parent=43 // pred_region
          %317 = dma.done [#allocation10], 2048
        $region60: #{model_and_loss_forward.1} parent=43 // pred_fallthru
          _
        // Predicated region
        $region61: #{model_and_loss_forward.1} parent=43 // pred_check
          %p318 = pneg %p153
        $region62: #{model_and_loss_forward.1} parent=43 // pred_check_branch
          %320 = sbr.rel (%p318) target = $region64
        $region63: #{model_and_loss_forward.1} parent=43 // pred_region
          %321 = dma.done [#allocation10], 16
        $region64: #{model_and_loss_forward.1} parent=43 // pred_fallthru
          _
        %p322 = scmp.lt.s32.totalorder %s27, 1
        %s323 = scalar_select %p322, %s27, 1
        %s324 = smul.addr %s323, 32
        %s325 = smul.addr %s324, 4
        %s326 = scalar_lea.vmem %s1, %s325
        %p327 = pneg %p48
        %p328 = pneg %p45
        %p329 = pneg %p69
        %p330 = pneg %p66
        %p331 = pneg %p90
        %p332 = pneg %p87
        %p333 = pneg %p111
        %p334 = pneg %p108
        %p335 = pneg %p132
        %p336 = pneg %p129
        %p337 = pneg %p153
        %p338 = pneg %p150
        %p339 = pneg %p179
        %p340 = pneg %p176
        %p341 = scmp.lt.s32.totalorder %s27, 1
        %s342 = scalar_select %p341, %s27, 1
        %s343 = smul.addr %s342, 8
        %s344 = scalar_lea.vmem %s7, %s343
        %p345 = pneg %p205
        %p346 = pneg %p202
        %p347 = scmp.lt.s32.totalorder %s27, 1
        %s348 = scalar_select %p347, %s27, 1
        %s349 = smul.addr %s348, 8
        %s350 = scalar_lea.vmem %s8, %s349
        %p351 = scmp.lt.s32.totalorder %s27, 1
        %s352 = scalar_select %p351, %s27, 1
        %s353 = smul.addr %s352, 32
        %s354 = smul.addr %s353, 4
        %s355 = scalar_lea.vmem %s1, %s354
        %p356 = scmp.lt.s32.totalorder %s27, 1
        %s357 = scalar_select %p356, %s27, 1
        %s358 = smul.addr %s357, 8
        %s359 = scalar_lea.vmem %s7, %s358
        %p360 = scmp.lt.s32.totalorder %s27, 1
        %s361 = scalar_select %p360, %s27, 1
        %s362 = smul.addr %s361, 8
        %s363 = scalar_lea.vmem %s8, %s362
        %v365 = vlaneseq
        %v366 = vshrl.u32 %v365, 7
        %v367 = vadd.s32 %v366, 8
        %v368 = vld [vmem:[%s355] sm:$0xf]
        %v369 = vld [vmem:[%s355 + $0x4] sm:$0xf]
        %v370 = vld [vmem:[%s355 + $0x8] sm:$0xf]
        %v371 = vld [vmem:[%s355 + $0xc] sm:$0xf]
        %v372 = vld [vmem:[%s355 + $0x10] sm:$0xf]
        %v373 = vld [vmem:[%s355 + $0x14] sm:$0xf]
        %v374 = vld [vmem:[%s355 + $0x18] sm:$0xf]
        %v375 = vld [vmem:[%s355 + $0x1c] sm:$0xf]
        %v376 = vld [vmem:[%s355 + $0x20] sm:$0xf]
        %v377 = vld [vmem:[%s355 + $0x24] sm:$0xf]
        %v378 = vld [vmem:[%s355 + $0x28] sm:$0xf]
        %v379 = vld [vmem:[%s355 + $0x2c] sm:$0xf]
        %v380 = vld [vmem:[%s355 + $0x30] sm:$0xf]
        %v381 = vld [vmem:[%s355 + $0x34] sm:$0xf]
        %v382 = vld [vmem:[%s355 + $0x38] sm:$0xf]
        %v383 = vld [vmem:[%s355 + $0x3c] sm:$0xf]
        %v384 = vld [vmem:[%s355 + $0x40] sm:$0xf]
        %v385 = vld [vmem:[%s355 + $0x44] sm:$0xf]
        %v386 = vld [vmem:[%s355 + $0x48] sm:$0xf]
        %v387 = vld [vmem:[%s355 + $0x4c] sm:$0xf]
        %v388 = vld [vmem:[%s355 + $0x50] sm:$0xf]
        %v389 = vld [vmem:[%s355 + $0x54] sm:$0xf]
        %v390 = vld [vmem:[%s355 + $0x58] sm:$0xf]
        %v391 = vld [vmem:[%s355 + $0x5c] sm:$0xf]
        %v392 = vld [vmem:[%s355 + $0x60] sm:$0xf]
        %v393 = vld [vmem:[%s355 + $0x64] sm:$0xf]
        %v394 = vld [vmem:[%s355 + $0x68] sm:$0xf]
        %v395 = vld [vmem:[%s355 + $0x6c] sm:$0xf]
        %v396 = vld [vmem:[%s355 + $0x70] sm:$0xf]
        %v397 = vld [vmem:[%s355 + $0x74] sm:$0xf]
        %v398 = vld [vmem:[%s355 + $0x78] sm:$0xf]
        %v399 = vld [vmem:[%s355 + $0x7c] sm:$0xf]
        %v400 = vunpack.c.l.bf16 %v368
        %v401 = vunpack.c.l.bf16 %v369
        %v402 = vunpack.c.l.bf16 %v370
        %v403 = vunpack.c.l.bf16 %v371
        %v404 = vunpack.c.l.bf16 %v372
        %v405 = vunpack.c.l.bf16 %v373
        %v406 = vunpack.c.l.bf16 %v374
        %v407 = vunpack.c.l.bf16 %v375
        %v408 = vunpack.c.l.bf16 %v376
        %v409 = vunpack.c.l.bf16 %v377
        %v410 = vunpack.c.l.bf16 %v378
        %v411 = vunpack.c.l.bf16 %v379
        %v412 = vunpack.c.l.bf16 %v380
        %v413 = vunpack.c.l.bf16 %v381
        %v414 = vunpack.c.l.bf16 %v382
        %v415 = vunpack.c.l.bf16 %v383
        %v416 = vunpack.c.l.bf16 %v384
        %v417 = vunpack.c.l.bf16 %v385
        %v418 = vunpack.c.l.bf16 %v386
        %v419 = vunpack.c.l.bf16 %v387
        %v420 = vunpack.c.l.bf16 %v388
        %v421 = vunpack.c.l.bf16 %v389
        %v422 = vunpack.c.l.bf16 %v390
        %v423 = vunpack.c.l.bf16 %v391
        %v424 = vunpack.c.l.bf16 %v392
        %v425 = vunpack.c.l.bf16 %v393
        %v426 = vunpack.c.l.bf16 %v394
        %v427 = vunpack.c.l.bf16 %v395
        %v428 = vunpack.c.l.bf16 %v396
        %v429 = vunpack.c.l.bf16 %v397
        %v430 = vunpack.c.l.bf16 %v398
        %v431 = vunpack.c.l.bf16 %v399
        %vm432 = vcmp.ge.s32.totalorder %v366, 1
        %vm433 = vcmp.ge.s32.totalorder %v367, 1
        %v434 = vrot.slane %v400, 7
        %v435 = vrot.slane %v401, 7
        %v436 = vrot.slane %v402, 7
        %v437 = vrot.slane %v403, 7
        %v438 = vrot.slane %v404, 7
        %v439 = vrot.slane %v405, 7
        %v440 = vrot.slane %v406, 7
        %v441 = vrot.slane %v407, 7
        %v442 = vrot.slane %v408, 7
        %v443 = vrot.slane %v409, 7
        %v444 = vrot.slane %v410, 7
        %v445 = vrot.slane %v411, 7
        %v446 = vrot.slane %v412, 7
        %v447 = vrot.slane %v413, 7
        %v448 = vrot.slane %v414, 7
        %v449 = vrot.slane %v415, 7
        %v450 = vrot.slane %v416, 7
        %v451 = vrot.slane %v417, 7
        %v452 = vrot.slane %v418, 7
        %v453 = vrot.slane %v419, 7
        %v454 = vrot.slane %v420, 7
        %v455 = vrot.slane %v421, 7
        %v456 = vrot.slane %v422, 7
        %v457 = vrot.slane %v423, 7
        %v458 = vrot.slane %v424, 7
        %v459 = vrot.slane %v425, 7
        %v460 = vrot.slane %v426, 7
        %v461 = vrot.slane %v427, 7
        %v462 = vrot.slane %v428, 7
        %v463 = vrot.slane %v429, 7
        %v464 = vrot.slane %v430, 7
        %v465 = vrot.slane %v431, 7
        %vm466 = vcmp.lt.s32.totalorder %v366, 1
        %v467 = vsel %vm466, %v464, %v465
        %v468 = vsel %vm466, %v463, %v464
        %v469 = vsel %vm466, %v462, %v463
        %v470 = vsel %vm466, %v461, %v462
        %v471 = vsel %vm466, %v460, %v461
        %v472 = vsel %vm466, %v459, %v460
        %v473 = vsel %vm466, %v458, %v459
        %v474 = vsel %vm466, %v457, %v458
        %v475 = vsel %vm466, %v456, %v457
        %v476 = vsel %vm466, %v455, %v456
        %v477 = vsel %vm466, %v454, %v455
        %v478 = vsel %vm466, %v453, %v454
        %v479 = vsel %vm466, %v452, %v453
        %v480 = vsel %vm466, %v451, %v452
        %v481 = vsel %vm466, %v450, %v451
        %v482 = vsel %vm466, %v449, %v450
        %v483 = vsel %vm466, %v448, %v449
        %v484 = vsel %vm466, %v447, %v448
        %v485 = vsel %vm466, %v446, %v447
        %v486 = vsel %vm466, %v445, %v446
        %v487 = vsel %vm466, %v444, %v445
        %v488 = vsel %vm466, %v443, %v444
        %v489 = vsel %vm466, %v442, %v443
        %v490 = vsel %vm466, %v441, %v442
        %v491 = vsel %vm466, %v440, %v441
        %v492 = vsel %vm466, %v439, %v440
        %v493 = vsel %vm466, %v438, %v439
        %v494 = vsel %vm466, %v437, %v438
        %v495 = vsel %vm466, %v436, %v437
        %v496 = vsel %vm466, %v435, %v436
        %v497 = vsel %vm466, %v434, %v435
        %v498 = vsel %vm466, %v465, %v434
        %v499 = vsel %vm432, %v498, 0.0
        %v500 = vsel %vm433, %v497, 0.0
        %v501 = vsel %vm432, %v496, 0.0
        %v502 = vsel %vm433, %v495, 0.0
        %v503 = vsel %vm432, %v494, 0.0
        %v504 = vsel %vm433, %v493, 0.0
        %v505 = vsel %vm432, %v492, 0.0
        %v506 = vsel %vm433, %v491, 0.0
        %v507 = vsel %vm432, %v490, 0.0
        %v508 = vsel %vm433, %v489, 0.0
        %v509 = vsel %vm432, %v488, 0.0
        %v510 = vsel %vm433, %v487, 0.0
        %v511 = vsel %vm432, %v486, 0.0
        %v512 = vsel %vm433, %v485, 0.0
        %v513 = vsel %vm432, %v484, 0.0
        %v514 = vsel %vm433, %v483, 0.0
        %v515 = vsel %vm432, %v482, 0.0
        %v516 = vsel %vm433, %v481, 0.0
        %v517 = vsel %vm432, %v480, 0.0
        %v518 = vsel %vm433, %v479, 0.0
        %v519 = vsel %vm432, %v478, 0.0
        %v520 = vsel %vm433, %v477, 0.0
        %v521 = vsel %vm432, %v476, 0.0
        %v522 = vsel %vm433, %v475, 0.0
        %v523 = vsel %vm432, %v474, 0.0
        %v524 = vsel %vm433, %v473, 0.0
        %v525 = vsel %vm432, %v472, 0.0
        %v526 = vsel %vm433, %v471, 0.0
        %v527 = vsel %vm432, %v470, 0.0
        %v528 = vsel %vm433, %v469, 0.0
        %v529 = vsel %vm432, %v468, 0.0
        %v530 = vsel %vm433, %v467, 0.0
        %vm531 = vcmp.le.s32.totalorder %v366, 14
        %vm532 = vcmp.le.s32.totalorder %v367, 14
        %v533 = vrot.slane %v400, 1
        %v534 = vrot.slane %v401, 1
        %v535 = vrot.slane %v402, 1
        %v536 = vrot.slane %v403, 1
        %v537 = vrot.slane %v404, 1
        %v538 = vrot.slane %v405, 1
        %v539 = vrot.slane %v406, 1
        %v540 = vrot.slane %v407, 1
        %v541 = vrot.slane %v408, 1
        %v542 = vrot.slane %v409, 1
        %v543 = vrot.slane %v410, 1
        %v544 = vrot.slane %v411, 1
        %v545 = vrot.slane %v412, 1
        %v546 = vrot.slane %v413, 1
        %v547 = vrot.slane %v414, 1
        %v548 = vrot.slane %v415, 1
        %v549 = vrot.slane %v416, 1
        %v550 = vrot.slane %v417, 1
        %v551 = vrot.slane %v418, 1
        %v552 = vrot.slane %v419, 1
        %v553 = vrot.slane %v420, 1
        %v554 = vrot.slane %v421, 1
        %v555 = vrot.slane %v422, 1
        %v556 = vrot.slane %v423, 1
        %v557 = vrot.slane %v424, 1
        %v558 = vrot.slane %v425, 1
        %v559 = vrot.slane %v426, 1
        %v560 = vrot.slane %v427, 1
        %v561 = vrot.slane %v428, 1
        %v562 = vrot.slane %v429, 1
        %v563 = vrot.slane %v430, 1
        %v564 = vrot.slane %v431, 1
        %vm565 = vcmp.lt.s32.totalorder %v366, 7
        %v566 = vsel %vm565, %v563, %v564
        %v567 = vsel %vm565, %v562, %v563
        %v568 = vsel %vm565, %v561, %v562
        %v569 = vsel %vm565, %v560, %v561
        %v570 = vsel %vm565, %v559, %v560
        %v571 = vsel %vm565, %v558, %v559
        %v572 = vsel %vm565, %v557, %v558
        %v573 = vsel %vm565, %v556, %v557
        %v574 = vsel %vm565, %v555, %v556
        %v575 = vsel %vm565, %v554, %v555
        %v576 = vsel %vm565, %v553, %v554
        %v577 = vsel %vm565, %v552, %v553
        %v578 = vsel %vm565, %v551, %v552
        %v579 = vsel %vm565, %v550, %v551
        %v580 = vsel %vm565, %v549, %v550
        %v581 = vsel %vm565, %v548, %v549
        %v582 = vsel %vm565, %v547, %v548
        %v583 = vsel %vm565, %v546, %v547
        %v584 = vsel %vm565, %v545, %v546
        %v585 = vsel %vm565, %v544, %v545
        %v586 = vsel %vm565, %v543, %v544
        %v587 = vsel %vm565, %v542, %v543
        %v588 = vsel %vm565, %v541, %v542
        %v589 = vsel %vm565, %v540, %v541
        %v590 = vsel %vm565, %v539, %v540
        %v591 = vsel %vm565, %v538, %v539
        %v592 = vsel %vm565, %v537, %v538
        %v593 = vsel %vm565, %v536, %v537
        %v594 = vsel %vm565, %v535, %v536
        %v595 = vsel %vm565, %v534, %v535
        %v596 = vsel %vm565, %v533, %v534
        %v597 = vsel %vm565, %v564, %v533
        %v598 = vsel %vm531, %v596, 0.0
        %v599 = vsel %vm532, %v595, 0.0
        %v600 = vsel %vm531, %v594, 0.0
        %v601 = vsel %vm532, %v593, 0.0
        %v602 = vsel %vm531, %v592, 0.0
        %v603 = vsel %vm532, %v591, 0.0
        %v604 = vsel %vm531, %v590, 0.0
        %v605 = vsel %vm532, %v589, 0.0
        %v606 = vsel %vm531, %v588, 0.0
        %v607 = vsel %vm532, %v587, 0.0
        %v608 = vsel %vm531, %v586, 0.0
        %v609 = vsel %vm532, %v585, 0.0
        %v610 = vsel %vm531, %v584, 0.0
        %v611 = vsel %vm532, %v583, 0.0
        %v612 = vsel %vm531, %v582, 0.0
        %v613 = vsel %vm532, %v581, 0.0
        %v614 = vsel %vm531, %v580, 0.0
        %v615 = vsel %vm532, %v579, 0.0
        %v616 = vsel %vm531, %v578, 0.0
        %v617 = vsel %vm532, %v577, 0.0
        %v618 = vsel %vm531, %v576, 0.0
        %v619 = vsel %vm532, %v575, 0.0
        %v620 = vsel %vm531, %v574, 0.0
        %v621 = vsel %vm532, %v573, 0.0
        %v622 = vsel %vm531, %v572, 0.0
        %v623 = vsel %vm532, %v571, 0.0
        %v624 = vsel %vm531, %v570, 0.0
        %v625 = vsel %vm532, %v569, 0.0
        %v626 = vsel %vm531, %v568, 0.0
        %v627 = vsel %vm532, %v567, 0.0
        %v628 = vsel %vm531, %v566, 0.0
        %v629 = vsel %vm532, %v597, 0.0
        %v630 = vpack.c.bf16 %v500, %v499
        %v631 = vpack.c.bf16 %v502, %v501
        %v632 = vpack.c.bf16 %v504, %v503
        %v633 = vpack.c.bf16 %v506, %v505
        %v634 = vpack.c.bf16 %v508, %v507
        %v635 = vpack.c.bf16 %v510, %v509
        %v636 = vpack.c.bf16 %v512, %v511
        %v637 = vpack.c.bf16 %v514, %v513
        %v638 = vpack.c.bf16 %v516, %v515
        %v639 = vpack.c.bf16 %v518, %v517
        %v640 = vpack.c.bf16 %v520, %v519
        %v641 = vpack.c.bf16 %v522, %v521
        %v642 = vpack.c.bf16 %v524, %v523
        %v643 = vpack.c.bf16 %v526, %v525
        %v644 = vpack.c.bf16 %v528, %v527
        %v645 = vpack.c.bf16 %v530, %v529
        %v646 = vpack.c.bf16 %v599, %v598
        %v647 = vpack.c.bf16 %v601, %v600
        %v648 = vpack.c.bf16 %v603, %v602
        %v649 = vpack.c.bf16 %v605, %v604
        %v650 = vpack.c.bf16 %v607, %v606
        %v651 = vpack.c.bf16 %v609, %v608
        %v652 = vpack.c.bf16 %v611, %v610
        %v653 = vpack.c.bf16 %v613, %v612
        %v654 = vpack.c.bf16 %v615, %v614
        %v655 = vpack.c.bf16 %v617, %v616
        %v656 = vpack.c.bf16 %v619, %v618
        %v657 = vpack.c.bf16 %v621, %v620
        %v658 = vpack.c.bf16 %v623, %v622
        %v659 = vpack.c.bf16 %v625, %v624
        %v660 = vpack.c.bf16 %v627, %v626
        %v661 = vpack.c.bf16 %v629, %v628
        %v694 = vunpack.c.l.b16 %v368
        %v695 = vunpack.c.l.b16 %v369
        %v696 = vunpack.c.l.b16 %v370
        %v697 = vunpack.c.l.b16 %v371
        %v698 = vunpack.c.l.b16 %v372
        %v699 = vunpack.c.l.b16 %v373
        %v700 = vunpack.c.l.b16 %v374
        %v701 = vunpack.c.l.b16 %v375
        %v702 = vunpack.c.l.b16 %v376
        %v703 = vunpack.c.l.b16 %v377
        %v704 = vunpack.c.l.b16 %v378
        %v705 = vunpack.c.l.b16 %v379
        %v706 = vunpack.c.l.b16 %v380
        %v707 = vunpack.c.l.b16 %v381
        %v708 = vunpack.c.l.b16 %v382
        %v709 = vunpack.c.l.b16 %v383
        %v710 = vunpack.c.l.b16 %v384
        %v711 = vunpack.c.l.b16 %v385
        %v712 = vunpack.c.l.b16 %v386
        %v713 = vunpack.c.l.b16 %v387
        %v714 = vunpack.c.l.b16 %v388
        %v715 = vunpack.c.l.b16 %v389
        %v716 = vunpack.c.l.b16 %v390
        %v717 = vunpack.c.l.b16 %v391
        %v718 = vunpack.c.l.b16 %v392
        %v719 = vunpack.c.l.b16 %v393
        %v720 = vunpack.c.l.b16 %v394
        %v721 = vunpack.c.l.b16 %v395
        %v722 = vunpack.c.l.b16 %v396
        %v723 = vunpack.c.l.b16 %v397
        %v724 = vunpack.c.l.b16 %v398
        %v725 = vunpack.c.l.b16 %v399
        %v726 = vpack.c.b16 %v695, %v694
        %v727 = vpack.c.b16 %v697, %v696
        %v728 = vpack.c.b16 %v699, %v698
        %v729 = vpack.c.b16 %v701, %v700
        %v730 = vpack.c.b16 %v703, %v702
        %v731 = vpack.c.b16 %v705, %v704
        %v732 = vpack.c.b16 %v707, %v706
        %v733 = vpack.c.b16 %v709, %v708
        %v734 = vpack.c.b16 %v711, %v710
        %v735 = vpack.c.b16 %v713, %v712
        %v736 = vpack.c.b16 %v715, %v714
        %v737 = vpack.c.b16 %v717, %v716
        %v738 = vpack.c.b16 %v719, %v718
        %v739 = vpack.c.b16 %v721, %v720
        %v740 = vpack.c.b16 %v723, %v722
        %v741 = vpack.c.b16 %v725, %v724
        %v758 = vld [vmem:[#allocation4] sm:$0xf]
        %v759 = vld [vmem:[#allocation4 + $0x4] sm:$0xf]
        %v760 = vld [vmem:[#allocation4 + $0x8] sm:$0xf]
        %v761 = vld [vmem:[#allocation4 + $0xc] sm:$0xf]
        %v762 = vld [vmem:[#allocation4 + $0x10] sm:$0xf]
        %v763 = vld [vmem:[#allocation4 + $0x14] sm:$0xf]
        %v764 = vld [vmem:[#allocation4 + $0x18] sm:$0xf]
        %v765 = vld [vmem:[#allocation4 + $0x1c] sm:$0xf]
        %v766 = vld [vmem:[#allocation4 + $0x20] sm:$0xf]
        %v767 = vld [vmem:[#allocation4 + $0x24] sm:$0xf]
        %v768 = vld [vmem:[#allocation4 + $0x28] sm:$0xf]
        %v769 = vld [vmem:[#allocation4 + $0x2c] sm:$0xf]
        %v770 = vld [vmem:[#allocation4 + $0x30] sm:$0xf]
        %v771 = vld [vmem:[#allocation4 + $0x34] sm:$0xf]
        %v772 = vld [vmem:[#allocation4 + $0x38] sm:$0xf]
        %v773 = vld [vmem:[#allocation4 + $0x3c] sm:$0xf]
        %v774 = vld [vmem:[#allocation4 + $0x40] sm:$0xf]
        %v775 = vld [vmem:[#allocation4 + $0x44] sm:$0xf]
        %v776 = vld [vmem:[#allocation4 + $0x48] sm:$0xf]
        %v777 = vld [vmem:[#allocation4 + $0x4c] sm:$0xf]
        %v778 = vld [vmem:[#allocation4 + $0x50] sm:$0xf]
        %v779 = vld [vmem:[#allocation4 + $0x54] sm:$0xf]
        %v780 = vld [vmem:[#allocation4 + $0x58] sm:$0xf]
        %v781 = vld [vmem:[#allocation4 + $0x5c] sm:$0xf]
        %v782 = vld [vmem:[#allocation4 + $0x60] sm:$0xf]
        %v783 = vld [vmem:[#allocation4 + $0x64] sm:$0xf]
        %v784 = vld [vmem:[#allocation4 + $0x68] sm:$0xf]
        %v785 = vld [vmem:[#allocation4 + $0x6c] sm:$0xf]
        %v786 = vld [vmem:[#allocation4 + $0x70] sm:$0xf]
        %v787 = vld [vmem:[#allocation4 + $0x74] sm:$0xf]
        %v788 = vld [vmem:[#allocation4 + $0x78] sm:$0xf]
        %v789 = vld [vmem:[#allocation4 + $0x7c] sm:$0xf]
        %v790 = vld [vmem:[#allocation4 + $0x80] sm:$0xf]
        %v791 = vld [vmem:[#allocation4 + $0x84] sm:$0xf]
        %v792 = vld [vmem:[#allocation4 + $0x88] sm:$0xf]
        %v793 = vld [vmem:[#allocation4 + $0x8c] sm:$0xf]
        %v794 = vld [vmem:[#allocation4 + $0x90] sm:$0xf]
        %v795 = vld [vmem:[#allocation4 + $0x94] sm:$0xf]
        %v796 = vld [vmem:[#allocation4 + $0x98] sm:$0xf]
        %v797 = vld [vmem:[#allocation4 + $0x9c] sm:$0xf]
        %v798 = vld [vmem:[#allocation4 + $0xa0] sm:$0xf]
        %v799 = vld [vmem:[#allocation4 + $0xa4] sm:$0xf]
        %v800 = vld [vmem:[#allocation4 + $0xa8] sm:$0xf]
        %v801 = vld [vmem:[#allocation4 + $0xac] sm:$0xf]
        %v802 = vld [vmem:[#allocation4 + $0xb0] sm:$0xf]
        %v803 = vld [vmem:[#allocation4 + $0xb4] sm:$0xf]
        %v804 = vld [vmem:[#allocation4 + $0xb8] sm:$0xf]
        %v805 = vld [vmem:[#allocation4 + $0xbc] sm:$0xf]
        %v806 = vld [vmem:[#allocation4 + $0xc0] sm:$0xf]
        %v807 = vld [vmem:[#allocation4 + $0xc4] sm:$0xf]
        %v808 = vld [vmem:[#allocation4 + $0xc8] sm:$0xf]
        %v809 = vld [vmem:[#allocation4 + $0xcc] sm:$0xf]
        %v810 = vld [vmem:[#allocation4 + $0xd0] sm:$0xf]
        %v811 = vld [vmem:[#allocation4 + $0xd4] sm:$0xf]
        %v812 = vld [vmem:[#allocation4 + $0xd8] sm:$0xf]
        %v813 = vld [vmem:[#allocation4 + $0xdc] sm:$0xf]
        %v814 = vld [vmem:[#allocation4 + $0xe0] sm:$0xf]
        %v815 = vld [vmem:[#allocation4 + $0xe4] sm:$0xf]
        %v816 = vld [vmem:[#allocation4 + $0xe8] sm:$0xf]
        %v817 = vld [vmem:[#allocation4 + $0xec] sm:$0xf]
        %v818 = vld [vmem:[#allocation4 + $0xf0] sm:$0xf]
        %v819 = vld [vmem:[#allocation4 + $0xf4] sm:$0xf]
        %v820 = vld [vmem:[#allocation4 + $0xf8] sm:$0xf]
        %v821 = vld [vmem:[#allocation4 + $0xfc] sm:$0xf]
        %v822 = vld [vmem:[#allocation4 + $0x100] sm:$0xf]
        %v823 = vld [vmem:[#allocation4 + $0x104] sm:$0xf]
        %v824 = vld [vmem:[#allocation4 + $0x108] sm:$0xf]
        %v825 = vld [vmem:[#allocation4 + $0x10c] sm:$0xf]
        %v826 = vld [vmem:[#allocation4 + $0x110] sm:$0xf]
        %v827 = vld [vmem:[#allocation4 + $0x114] sm:$0xf]
        %v828 = vld [vmem:[#allocation4 + $0x118] sm:$0xf]
        %v829 = vld [vmem:[#allocation4 + $0x11c] sm:$0xf]
        %v830 = vld [vmem:[#allocation4 + $0x120] sm:$0xf]
        %v831 = vld [vmem:[#allocation4 + $0x124] sm:$0xf]
        %v832 = vld [vmem:[#allocation4 + $0x128] sm:$0xf]
        %v833 = vld [vmem:[#allocation4 + $0x12c] sm:$0xf]
        %v834 = vld [vmem:[#allocation4 + $0x130] sm:$0xf]
        %v835 = vld [vmem:[#allocation4 + $0x134] sm:$0xf]
        %v836 = vld [vmem:[#allocation4 + $0x138] sm:$0xf]
        %v837 = vld [vmem:[#allocation4 + $0x13c] sm:$0xf]
        %v838 = vld [vmem:[#allocation4 + $0x140] sm:$0xf]
        %v839 = vld [vmem:[#allocation4 + $0x144] sm:$0xf]
        %v840 = vld [vmem:[#allocation4 + $0x148] sm:$0xf]
        %v841 = vld [vmem:[#allocation4 + $0x14c] sm:$0xf]
        %v842 = vld [vmem:[#allocation4 + $0x150] sm:$0xf]
        %v843 = vld [vmem:[#allocation4 + $0x154] sm:$0xf]
        %v844 = vld [vmem:[#allocation4 + $0x158] sm:$0xf]
        %v845 = vld [vmem:[#allocation4 + $0x15c] sm:$0xf]
        %v846 = vld [vmem:[#allocation4 + $0x160] sm:$0xf]
        %v847 = vld [vmem:[#allocation4 + $0x164] sm:$0xf]
        %v848 = vld [vmem:[#allocation4 + $0x168] sm:$0xf]
        %v849 = vld [vmem:[#allocation4 + $0x16c] sm:$0xf]
        %v850 = vld [vmem:[#allocation4 + $0x170] sm:$0xf]
        %v851 = vld [vmem:[#allocation4 + $0x174] sm:$0xf]
        %v852 = vld [vmem:[#allocation4 + $0x178] sm:$0xf]
        %v853 = vld [vmem:[#allocation4 + $0x17c] sm:$0xf]
        %v854 = vld [vmem:[#allocation4 + $0x180] sm:$0xf]
        %v855 = vld [vmem:[#allocation4 + $0x184] sm:$0xf]
        %v856 = vld [vmem:[#allocation4 + $0x188] sm:$0xf]
        %v857 = vld [vmem:[#allocation4 + $0x18c] sm:$0xf]
        %v858 = vld [vmem:[#allocation4 + $0x190] sm:$0xf]
        %v859 = vld [vmem:[#allocation4 + $0x194] sm:$0xf]
        %v860 = vld [vmem:[#allocation4 + $0x198] sm:$0xf]
        %v861 = vld [vmem:[#allocation4 + $0x19c] sm:$0xf]
        %v862 = vld [vmem:[#allocation4 + $0x1a0] sm:$0xf]
        %v863 = vld [vmem:[#allocation4 + $0x1a4] sm:$0xf]
        %v864 = vld [vmem:[#allocation4 + $0x1a8] sm:$0xf]
        %v865 = vld [vmem:[#allocation4 + $0x1ac] sm:$0xf]
        %v866 = vld [vmem:[#allocation4 + $0x1b0] sm:$0xf]
        %v867 = vld [vmem:[#allocation4 + $0x1b4] sm:$0xf]
        %v868 = vld [vmem:[#allocation4 + $0x1b8] sm:$0xf]
        %v869 = vld [vmem:[#allocation4 + $0x1bc] sm:$0xf]
        %v870 = vld [vmem:[#allocation4 + $0x1c0] sm:$0xf]
        %v871 = vld [vmem:[#allocation4 + $0x1c4] sm:$0xf]
        %v872 = vld [vmem:[#allocation4 + $0x1c8] sm:$0xf]
        %v873 = vld [vmem:[#allocation4 + $0x1cc] sm:$0xf]
        %v874 = vld [vmem:[#allocation4 + $0x1d0] sm:$0xf]
        %v875 = vld [vmem:[#allocation4 + $0x1d4] sm:$0xf]
        %v876 = vld [vmem:[#allocation4 + $0x1d8] sm:$0xf]
        %v877 = vld [vmem:[#allocation4 + $0x1dc] sm:$0xf]
        %v878 = vld [vmem:[#allocation4 + $0x1e0] sm:$0xf]
        %v879 = vld [vmem:[#allocation4 + $0x1e4] sm:$0xf]
        %v880 = vld [vmem:[#allocation4 + $0x1e8] sm:$0xf]
        %v881 = vld [vmem:[#allocation4 + $0x1ec] sm:$0xf]
        %v882 = vld [vmem:[#allocation4 + $0x1f0] sm:$0xf]
        %v883 = vld [vmem:[#allocation4 + $0x1f4] sm:$0xf]
        %v884 = vld [vmem:[#allocation4 + $0x1f8] sm:$0xf]
        %v885 = vld [vmem:[#allocation4 + $0x1fc] sm:$0xf]
        %v886 = vld [vmem:[#allocation4 + $0x200] sm:$0xf]
        %v887 = vld [vmem:[#allocation4 + $0x204] sm:$0xf]
        %v888 = vld [vmem:[#allocation4 + $0x208] sm:$0xf]
        %v889 = vld [vmem:[#allocation4 + $0x20c] sm:$0xf]
        %v890 = vld [vmem:[#allocation4 + $0x210] sm:$0xf]
        %v891 = vld [vmem:[#allocation4 + $0x214] sm:$0xf]
        %v892 = vld [vmem:[#allocation4 + $0x218] sm:$0xf]
        %v893 = vld [vmem:[#allocation4 + $0x21c] sm:$0xf]
        %v894 = vld [vmem:[#allocation4 + $0x220] sm:$0xf]
        %v895 = vld [vmem:[#allocation4 + $0x224] sm:$0xf]
        %v896 = vld [vmem:[#allocation4 + $0x228] sm:$0xf]
        %v897 = vld [vmem:[#allocation4 + $0x22c] sm:$0xf]
        %v898 = vld [vmem:[#allocation4 + $0x230] sm:$0xf]
        %v899 = vld [vmem:[#allocation4 + $0x234] sm:$0xf]
        %v900 = vld [vmem:[#allocation4 + $0x238] sm:$0xf]
        %v901 = vld [vmem:[#allocation4 + $0x23c] sm:$0xf]
        %v1046 = vunpack.c.l.b16 %v758
        %v1047 = vunpack.c.l.b16 %v759
        %v1048 = vunpack.c.l.b16 %v760
        %v1049 = vunpack.c.l.b16 %v761
        %v1050 = vunpack.c.l.b16 %v762
        %v1051 = vunpack.c.l.b16 %v763
        %v1052 = vunpack.c.l.b16 %v764
        %v1053 = vunpack.c.l.b16 %v765
        %v1054 = vunpack.c.l.b16 %v766
        %v1055 = vunpack.c.l.b16 %v767
        %v1056 = vunpack.c.l.b16 %v768
        %v1057 = vunpack.c.l.b16 %v769
        %v1058 = vunpack.c.l.b16 %v770
        %v1059 = vunpack.c.l.b16 %v771
        %v1060 = vunpack.c.l.b16 %v772
        %v1061 = vunpack.c.l.b16 %v773
        %v1062 = vunpack.c.l.b16 %v774
        %v1063 = vunpack.c.l.b16 %v775
        %v1064 = vunpack.c.l.b16 %v776
        %v1065 = vunpack.c.l.b16 %v777
        %v1066 = vunpack.c.l.b16 %v778
        %v1067 = vunpack.c.l.b16 %v779
        %v1068 = vunpack.c.l.b16 %v780
        %v1069 = vunpack.c.l.b16 %v781
        %v1070 = vunpack.c.l.b16 %v782
        %v1071 = vunpack.c.l.b16 %v783
        %v1072 = vunpack.c.l.b16 %v784
        %v1073 = vunpack.c.l.b16 %v785
        %v1074 = vunpack.c.l.b16 %v786
        %v1075 = vunpack.c.l.b16 %v787
        %v1076 = vunpack.c.l.b16 %v788
        %v1077 = vunpack.c.l.b16 %v789
        %v1078 = vunpack.c.l.b16 %v790
        %v1079 = vunpack.c.l.b16 %v791
        %v1080 = vunpack.c.l.b16 %v792
        %v1081 = vunpack.c.l.b16 %v793
        %v1082 = vunpack.c.l.b16 %v794
        %v1083 = vunpack.c.l.b16 %v795
        %v1084 = vunpack.c.l.b16 %v796
        %v1085 = vunpack.c.l.b16 %v797
        %v1086 = vunpack.c.l.b16 %v798
        %v1087 = vunpack.c.l.b16 %v799
        %v1088 = vunpack.c.l.b16 %v800
        %v1089 = vunpack.c.l.b16 %v801
        %v1090 = vunpack.c.l.b16 %v802
        %v1091 = vunpack.c.l.b16 %v803
        %v1092 = vunpack.c.l.b16 %v804
        %v1093 = vunpack.c.l.b16 %v805
        %v1094 = vunpack.c.l.b16 %v806
        %v1095 = vunpack.c.l.b16 %v807
        %v1096 = vunpack.c.l.b16 %v808
        %v1097 = vunpack.c.l.b16 %v809
        %v1098 = vunpack.c.l.b16 %v810
        %v1099 = vunpack.c.l.b16 %v811
        %v1100 = vunpack.c.l.b16 %v812
        %v1101 = vunpack.c.l.b16 %v813
        %v1102 = vunpack.c.l.b16 %v814
        %v1103 = vunpack.c.l.b16 %v815
        %v1104 = vunpack.c.l.b16 %v816
        %v1105 = vunpack.c.l.b16 %v817
        %v1106 = vunpack.c.l.b16 %v818
        %v1107 = vunpack.c.l.b16 %v819
        %v1108 = vunpack.c.l.b16 %v820
        %v1109 = vunpack.c.l.b16 %v821
        %v1110 = vunpack.c.l.b16 %v822
        %v1111 = vunpack.c.l.b16 %v823
        %v1112 = vunpack.c.l.b16 %v824
        %v1113 = vunpack.c.l.b16 %v825
        %v1114 = vunpack.c.l.b16 %v826
        %v1115 = vunpack.c.l.b16 %v827
        %v1116 = vunpack.c.l.b16 %v828
        %v1117 = vunpack.c.l.b16 %v829
        %v1118 = vunpack.c.l.b16 %v830
        %v1119 = vunpack.c.l.b16 %v831
        %v1120 = vunpack.c.l.b16 %v832
        %v1121 = vunpack.c.l.b16 %v833
        %v1122 = vunpack.c.l.b16 %v834
        %v1123 = vunpack.c.l.b16 %v835
        %v1124 = vunpack.c.l.b16 %v836
        %v1125 = vunpack.c.l.b16 %v837
        %v1126 = vunpack.c.l.b16 %v838
        %v1127 = vunpack.c.l.b16 %v839
        %v1128 = vunpack.c.l.b16 %v840
        %v1129 = vunpack.c.l.b16 %v841
        %v1130 = vunpack.c.l.b16 %v842
        %v1131 = vunpack.c.l.b16 %v843
        %v1132 = vunpack.c.l.b16 %v844
        %v1133 = vunpack.c.l.b16 %v845
        %v1134 = vunpack.c.l.b16 %v846
        %v1135 = vunpack.c.l.b16 %v847
        %v1136 = vunpack.c.l.b16 %v848
        %v1137 = vunpack.c.l.b16 %v849
        %v1138 = vunpack.c.l.b16 %v850
        %v1139 = vunpack.c.l.b16 %v851
        %v1140 = vunpack.c.l.b16 %v852
        %v1141 = vunpack.c.l.b16 %v853
        %v1142 = vunpack.c.l.b16 %v854
        %v1143 = vunpack.c.l.b16 %v855
        %v1144 = vunpack.c.l.b16 %v856
        %v1145 = vunpack.c.l.b16 %v857
        %v1146 = vunpack.c.l.b16 %v858
        %v1147 = vunpack.c.l.b16 %v859
        %v1148 = vunpack.c.l.b16 %v860
        %v1149 = vunpack.c.l.b16 %v861
        %v1150 = vunpack.c.l.b16 %v862
        %v1151 = vunpack.c.l.b16 %v863
        %v1152 = vunpack.c.l.b16 %v864
        %v1153 = vunpack.c.l.b16 %v865
        %v1154 = vunpack.c.l.b16 %v866
        %v1155 = vunpack.c.l.b16 %v867
        %v1156 = vunpack.c.l.b16 %v868
        %v1157 = vunpack.c.l.b16 %v869
        %v1158 = vunpack.c.l.b16 %v870
        %v1159 = vunpack.c.l.b16 %v871
        %v1160 = vunpack.c.l.b16 %v872
        %v1161 = vunpack.c.l.b16 %v873
        %v1162 = vunpack.c.l.b16 %v874
        %v1163 = vunpack.c.l.b16 %v875
        %v1164 = vunpack.c.l.b16 %v876
        %v1165 = vunpack.c.l.b16 %v877
        %v1166 = vunpack.c.l.b16 %v878
        %v1167 = vunpack.c.l.b16 %v879
        %v1168 = vunpack.c.l.b16 %v880
        %v1169 = vunpack.c.l.b16 %v881
        %v1170 = vunpack.c.l.b16 %v882
        %v1171 = vunpack.c.l.b16 %v883
        %v1172 = vunpack.c.l.b16 %v884
        %v1173 = vunpack.c.l.b16 %v885
        %v1174 = vunpack.c.l.b16 %v886
        %v1175 = vunpack.c.l.b16 %v887
        %v1176 = vunpack.c.l.b16 %v888
        %v1177 = vunpack.c.l.b16 %v889
        %v1178 = vunpack.c.l.b16 %v890
        %v1179 = vunpack.c.l.b16 %v891
        %v1180 = vunpack.c.l.b16 %v892
        %v1181 = vunpack.c.l.b16 %v893
        %v1182 = vunpack.c.l.b16 %v894
        %v1183 = vunpack.c.l.b16 %v895
        %v1184 = vunpack.c.l.b16 %v896
        %v1185 = vunpack.c.l.b16 %v897
        %v1186 = vunpack.c.l.b16 %v898
        %v1187 = vunpack.c.l.b16 %v899
        %v1188 = vunpack.c.l.b16 %v900
        %v1189 = vunpack.c.l.b16 %v901
        %v1190 = vpack.c.b16 %v1047, %v1046
        %v1191 = vpack.c.b16 %v1049, %v1048
        %v1192 = vpack.c.b16 %v1051, %v1050
        %v1193 = vpack.c.b16 %v1053, %v1052
        %v1194 = vpack.c.b16 %v1055, %v1054
        %v1195 = vpack.c.b16 %v1057, %v1056
        %v1196 = vpack.c.b16 %v1059, %v1058
        %v1197 = vpack.c.b16 %v1061, %v1060
        %v1198 = vpack.c.b16 %v1063, %v1062
        %v1199 = vpack.c.b16 %v1065, %v1064
        %v1200 = vpack.c.b16 %v1067, %v1066
        %v1201 = vpack.c.b16 %v1069, %v1068
        %v1202 = vpack.c.b16 %v1071, %v1070
        %v1203 = vpack.c.b16 %v1073, %v1072
        %v1204 = vpack.c.b16 %v1075, %v1074
        %v1205 = vpack.c.b16 %v1077, %v1076
        %v1206 = vpack.c.b16 %v1079, %v1078
        %v1207 = vpack.c.b16 %v1081, %v1080
        %v1208 = vpack.c.b16 %v1083, %v1082
        %v1209 = vpack.c.b16 %v1085, %v1084
        %v1210 = vpack.c.b16 %v1087, %v1086
        %v1211 = vpack.c.b16 %v1089, %v1088
        %v1212 = vpack.c.b16 %v1091, %v1090
        %v1213 = vpack.c.b16 %v1093, %v1092
        %v1214 = vpack.c.b16 %v1095, %v1094
        %v1215 = vpack.c.b16 %v1097, %v1096
        %v1216 = vpack.c.b16 %v1099, %v1098
        %v1217 = vpack.c.b16 %v1101, %v1100
        %v1218 = vpack.c.b16 %v1103, %v1102
        %v1219 = vpack.c.b16 %v1105, %v1104
        %v1220 = vpack.c.b16 %v1107, %v1106
        %v1221 = vpack.c.b16 %v1109, %v1108
        %v1222 = vpack.c.b16 %v1111, %v1110
        %v1223 = vpack.c.b16 %v1113, %v1112
        %v1224 = vpack.c.b16 %v1115, %v1114
        %v1225 = vpack.c.b16 %v1117, %v1116
        %v1226 = vpack.c.b16 %v1119, %v1118
        %v1227 = vpack.c.b16 %v1121, %v1120
        %v1228 = vpack.c.b16 %v1123, %v1122
        %v1229 = vpack.c.b16 %v1125, %v1124
        %v1230 = vpack.c.b16 %v1127, %v1126
        %v1231 = vpack.c.b16 %v1129, %v1128
        %v1232 = vpack.c.b16 %v1131, %v1130
        %v1233 = vpack.c.b16 %v1133, %v1132
        %v1234 = vpack.c.b16 %v1135, %v1134
        %v1235 = vpack.c.b16 %v1137, %v1136
        %v1236 = vpack.c.b16 %v1139, %v1138
        %v1237 = vpack.c.b16 %v1141, %v1140
        %v1238 = vpack.c.b16 %v1143, %v1142
        %v1239 = vpack.c.b16 %v1145, %v1144
        %v1240 = vpack.c.b16 %v1147, %v1146
        %v1241 = vpack.c.b16 %v1149, %v1148
        %v1242 = vpack.c.b16 %v1151, %v1150
        %v1243 = vpack.c.b16 %v1153, %v1152
        %v1244 = vpack.c.b16 %v1155, %v1154
        %v1245 = vpack.c.b16 %v1157, %v1156
        %v1246 = vpack.c.b16 %v1159, %v1158
        %v1247 = vpack.c.b16 %v1161, %v1160
        %v1248 = vpack.c.b16 %v1163, %v1162
        %v1249 = vpack.c.b16 %v1165, %v1164
        %v1250 = vpack.c.b16 %v1167, %v1166
        %v1251 = vpack.c.b16 %v1169, %v1168
        %v1252 = vpack.c.b16 %v1171, %v1170
        %v1253 = vpack.c.b16 %v1173, %v1172
        %v1254 = vpack.c.b16 %v1175, %v1174
        %v1255 = vpack.c.b16 %v1177, %v1176
        %v1256 = vpack.c.b16 %v1179, %v1178
        %v1257 = vpack.c.b16 %v1181, %v1180
        %v1258 = vpack.c.b16 %v1183, %v1182
        %v1259 = vpack.c.b16 %v1185, %v1184
        %v1260 = vpack.c.b16 %v1187, %v1186
        %v1261 = vpack.c.b16 %v1189, %v1188
        %1334 = vmatprep.subr.bf16.mxu0 0
        %1335 = vmatpush1.bf16.msra.mxu0 %v1190
        %1336 = vmatprep.subr.bf16.mxu0 0
        %1337 = vmatpush1.bf16.msra.mxu0 %v1191
        %1338 = vmatprep.subr.bf16.mxu0 0
        %1339 = vmatpush1.bf16.msra.mxu0 %v1192
        %1340 = vmatprep.subr.bf16.mxu0 0
        %1341 = vmatpush1.bf16.msra.mxu0 %v1193
        %1342 = vmatprep.subr.bf16.mxu0 0
        %1343 = vmatpush1.bf16.msra.mxu0 %v1194
        %1344 = vmatprep.subr.bf16.mxu0 0
        %1345 = vmatpush1.bf16.msra.mxu0 %v1195
        %1346 = vmatprep.subr.bf16.mxu0 0
        %1347 = vmatpush1.bf16.msra.mxu0 %v1196
        %1348 = vmatprep.subr.bf16.mxu0 0
        %1349 = vmatpush1.bf16.msra.mxu0 %v1197
        %1350 = vmatprep.subr.bf16.mxu0 0
        %1351 = vmatpush1.bf16.msra.mxu0 %v1198
        %1352 = vmatprep.subr.bf16.mxu0 0
        %1353 = vmatpush1.bf16.msra.mxu0 %v1199
        %1354 = vmatprep.subr.bf16.mxu0 0
        %1355 = vmatpush1.bf16.msra.mxu0 %v1200
        %1356 = vmatprep.subr.bf16.mxu0 0
        %1357 = vmatpush1.bf16.msra.mxu0 %v1201
        %1358 = vmatprep.subr.bf16.mxu0 0
        %1359 = vmatpush1.bf16.msra.mxu0 %v1202
        %1360 = vmatprep.subr.bf16.mxu0 0
        %1361 = vmatpush1.bf16.msra.mxu0 %v1203
        %1362 = vmatprep.subr.bf16.mxu0 0
        %1363 = vmatpush1.bf16.msra.mxu0 %v1204
        %1364 = vmatprep.subr.bf16.mxu0 0
        %1365 = vmatpush1.bf16.msra.mxu0 %v1205
        %1366 = vmatprep.mubr.bf16.mxu0 0
        %1367 = vmatmul.mubr.bf16.gmra.mrb[0].mxu0 0
        %v1368 = vpop.f32.mrb[0].mxu0
        %v1369 = vadd.f32 0.0, %v1368
        %v1370 = vpop.f32.mrb[0].mxu0
        %v1371 = vpop.f32.mrb[0].mxu0
        %v1372 = vadd.f32 0.0, %v1371
        %v1373 = vpop.f32.mrb[0].mxu0
        %1374 = vmatprep.mubr.bf16.mxu0 %v726
        %1375 = vmatmul.mubr.bf16.gmra.mrb[0].mxu0 %v630
        %v1376 = vpop.f32.mrb[0].mxu0
        %v1377 = vadd.f32 0.0, %v1376
        %v1378 = vpop.f32.mrb[0].mxu0
        %v1379 = vpop.f32.mrb[0].mxu0
        %v1380 = vadd.f32 0.0, %v1379
        %v1381 = vpop.f32.mrb[0].mxu0
        %1382 = vmatprep.mubr.bf16.mxu0 %v727
        %1383 = vmatmul.mubr.bf16.gmra.mrb[0].mxu0 %v631
        %v1384 = vpop.f32.mrb[0].mxu0
        %v1385 = vadd.f32 0.0, %v1384
        %v1386 = vpop.f32.mrb[0].mxu0
        %v1387 = vpop.f32.mrb[0].mxu0
        %v1388 = vadd.f32 0.0, %v1387
        %v1389 = vpop.f32.mrb[0].mxu0
        %1390 = vmatprep.mubr.bf16.mxu0 %v728
        %1391 = vmatmul.mubr.bf16.gmra.mrb[0].mxu0 %v632
        %v1392 = vpop.f32.mrb[0].mxu0
        %v1393 = vadd.f32 0.0, %v1392
        %v1394 = vpop.f32.mrb[0].mxu0
        %v1395 = vpop.f32.mrb[0].mxu0
        %v1396 = vadd.f32 0.0, %v1395
        %v1397 = vpop.f32.mrb[0].mxu0
        %1398 = vmatprep.mubr.bf16.mxu0 %v729
        %1399 = vmatmul.mubr.bf16.gmra.mrb[0].mxu0 %v633
        %v1400 = vpop.f32.mrb[0].mxu0
        %v1401 = vadd.f32 0.0, %v1400
        %v1402 = vpop.f32.mrb[0].mxu0
        %v1403 = vpop.f32.mrb[0].mxu0
        %v1404 = vadd.f32 0.0, %v1403
        %v1405 = vpop.f32.mrb[0].mxu0
        %1406 = vmatprep.mubr.bf16.mxu0 %v730
        %1407 = vmatmul.mubr.bf16.gmra.mrb[0].mxu0 %v634
        %v1408 = vpop.f32.mrb[0].mxu0
        %v1409 = vadd.f32 0.0, %v1408
        %v1410 = vpop.f32.mrb[0].mxu0
        %v1411 = vpop.f32.mrb[0].mxu0
        %v1412 = vadd.f32 0.0, %v1411
        %v1413 = vpop.f32.mrb[0].mxu0
        %1414 = vmatprep.mubr.bf16.mxu0 %v731
        %1415 = vmatmul.mubr.bf16.gmra.mrb[0].mxu0 %v635
        %v1416 = vpop.f32.mrb[0].mxu0
        %v1417 = vadd.f32 0.0, %v1416
        %v1418 = vpop.f32.mrb[0].mxu0
        %v1419 = vpop.f32.mrb[0].mxu0
        %v1420 = vadd.f32 0.0, %v1419
        %v1421 = vpop.f32.mrb[0].mxu0
        %1422 = vmatprep.mubr.bf16.mxu0 %v732
        %1423 = vmatmul.mubr.bf16.gmra.mrb[0].mxu0 %v636
        %v1424 = vpop.f32.mrb[0].mxu0
        %v1425 = vadd.f32 0.0, %v1424
        %v1426 = vpop.f32.mrb[0].mxu0
        %v1427 = vpop.f32.mrb[0].mxu0
        %v1428 = vadd.f32 0.0, %v1427
        %v1429 = vpop.f32.mrb[0].mxu0
        %1430 = vmatprep.mubr.bf16.mxu0 %v733
        %1431 = vmatmul.mubr.bf16.gmra.mrb[0].mxu0 %v637
        %v1432 = vpop.f32.mrb[0].mxu0
        %v1433 = vadd.f32 0.0, %v1432
        %v1434 = vpop.f32.mrb[0].mxu0
        %v1435 = vpop.f32.mrb[0].mxu0
        %v1436 = vadd.f32 0.0, %v1435
        %v1437 = vpop.f32.mrb[0].mxu0
        %1438 = vmatprep.mubr.bf16.mxu0 %v734
        %1439 = vmatmul.mubr.bf16.gmra.mrb[0].mxu0 %v638
        %v1440 = vpop.f32.mrb[0].mxu0
        %v1441 = vadd.f32 0.0, %v1440
        %v1442 = vpop.f32.mrb[0].mxu0
        %v1443 = vpop.f32.mrb[0].mxu0
        %v1444 = vadd.f32 0.0, %v1443
        %v1445 = vpop.f32.mrb[0].mxu0
        %1446 = vmatprep.mubr.bf16.mxu0 %v735
        %1447 = vmatmul.mubr.bf16.gmra.mrb[0].mxu0 %v639
        %v1448 = vpop.f32.mrb[0].mxu0
        %v1449 = vadd.f32 0.0, %v1448
        %v1450 = vpop.f32.mrb[0].mxu0
        %v1451 = vpop.f32.mrb[0].mxu0
        %v1452 = vadd.f32 0.0, %v1451
        %v1453 = vpop.f32.mrb[0].mxu0
        %1454 = vmatprep.mubr.bf16.mxu0 %v736
        %1455 = vmatmul.mubr.bf16.gmra.mrb[0].mxu0 %v640
        %v1456 = vpop.f32.mrb[0].mxu0
        %v1457 = vadd.f32 0.0, %v1456
        %v1458 = vpop.f32.mrb[0].mxu0
        %v1459 = vpop.f32.mrb[0].mxu0
        %v1460 = vadd.f32 0.0, %v1459
        %v1461 = vpop.f32.mrb[0].mxu0
        %1462 = vmatprep.mubr.bf16.mxu0 %v737
        %1463 = vmatmul.mubr.bf16.gmra.mrb[0].mxu0 %v641
        %v1464 = vpop.f32.mrb[0].mxu0
        %v1465 = vadd.f32 0.0, %v1464
        %v1466 = vpop.f32.mrb[0].mxu0
        %v1467 = vpop.f32.mrb[0].mxu0
        %v1468 = vadd.f32 0.0, %v1467
        %v1469 = vpop.f32.mrb[0].mxu0
        %1470 = vmatprep.mubr.bf16.mxu0 %v738
        %1471 = vmatmul.mubr.bf16.gmra.mrb[0].mxu0 %v642
        %v1472 = vpop.f32.mrb[0].mxu0
        %v1473 = vadd.f32 0.0, %v1472
        %v1474 = vpop.f32.mrb[0].mxu0
        %v1475 = vpop.f32.mrb[0].mxu0
        %v1476 = vadd.f32 0.0, %v1475
        %v1477 = vpop.f32.mrb[0].mxu0
        %1478 = vmatprep.mubr.bf16.mxu0 %v739
        %1479 = vmatmul.mubr.bf16.gmra.mrb[0].mxu0 %v643
        %v1480 = vpop.f32.mrb[0].mxu0
        %v1481 = vadd.f32 0.0, %v1480
        %v1482 = vpop.f32.mrb[0].mxu0
        %v1483 = vpop.f32.mrb[0].mxu0
        %v1484 = vadd.f32 0.0, %v1483
        %v1485 = vpop.f32.mrb[0].mxu0
        %1486 = vmatprep.mubr.bf16.mxu0 %v740
        %1487 = vmatmul.mubr.bf16.gmra.mrb[0].mxu0 %v644
        %v1488 = vpop.f32.mrb[0].mxu0
        %v1489 = vadd.f32 0.0, %v1488
        %v1490 = vpop.f32.mrb[0].mxu0
        %v1491 = vpop.f32.mrb[0].mxu0
        %v1492 = vadd.f32 0.0, %v1491
        %v1493 = vpop.f32.mrb[0].mxu0
        %1494 = vdwg.mxu0
        %1495 = vmatprep.subr.bf16.mxu0 0
        %1496 = vmatpush1.bf16.msra.mxu0 %v1206
        %1497 = vmatprep.subr.bf16.mxu0 0
        %1498 = vmatpush1.bf16.msra.mxu0 %v1207
        %1499 = vmatprep.subr.bf16.mxu0 0
        %1500 = vmatpush1.bf16.msra.mxu0 %v1208
        %1501 = vmatprep.subr.bf16.mxu0 0
        %1502 = vmatpush1.bf16.msra.mxu0 %v1209
        %1503 = vmatprep.subr.bf16.mxu0 0
        %1504 = vmatpush1.bf16.msra.mxu0 %v1210
        %1505 = vmatprep.subr.bf16.mxu0 0
        %1506 = vmatpush1.bf16.msra.mxu0 %v1211
        %1507 = vmatprep.subr.bf16.mxu0 0
        %1508 = vmatpush1.bf16.msra.mxu0 %v1212
        %1509 = vmatprep.subr.bf16.mxu0 0
        %1510 = vmatpush1.bf16.msra.mxu0 %v1213
        %1511 = vmatprep.subr.bf16.mxu0 0
        %1512 = vmatpush1.bf16.msra.mxu0 %v1214
        %1513 = vmatprep.subr.bf16.mxu0 0
        %1514 = vmatpush1.bf16.msra.mxu0 %v1215
        %1515 = vmatprep.subr.bf16.mxu0 0
        %1516 = vmatpush1.bf16.msra.mxu0 %v1216
        %1517 = vmatprep.subr.bf16.mxu0 0
        %1518 = vmatpush1.bf16.msra.mxu0 %v1217
        %1519 = vmatprep.subr.bf16.mxu0 0
        %1520 = vmatpush1.bf16.msra.mxu0 %v1218
        %1521 = vmatprep.subr.bf16.mxu0 0
        %1522 = vmatpush1.bf16.msra.mxu0 %v1219
        %1523 = vmatprep.subr.bf16.mxu0 0
        %1524 = vmatpush1.bf16.msra.mxu0 %v1220
        %1525 = vmatprep.subr.bf16.mxu0 0
        %1526 = vmatpush1.bf16.msra.mxu0 %v1221
        %1527 = vmatprep.mubr.bf16.mxu0 %v630
        %1528 = vmatmul.mubr.bf16.gmra.mrb[0].mxu0 0
        %v1529 = vpop.f32.mrb[0].mxu0
        %v1530 = vadd.f32 %v1369, %v1529
        %v1531 = vpop.f32.mrb[0].mxu0
        %v1532 = vpop.f32.mrb[0].mxu0
        %v1533 = vadd.f32 %v1372, %v1532
        %v1534 = vpop.f32.mrb[0].mxu0
        %1535 = vmatprep.mubr.bf16.mxu0 %v631
        %1536 = vmatmul.mubr.bf16.gmra.mrb[0].mxu0 %v646
        %v1537 = vpop.f32.mrb[0].mxu0
        %v1538 = vadd.f32 %v1377, %v1537
        %v1539 = vpop.f32.mrb[0].mxu0
        %v1540 = vpop.f32.mrb[0].mxu0
        %v1541 = vadd.f32 %v1380, %v1540
        %v1542 = vpop.f32.mrb[0].mxu0
        %1543 = vmatprep.mubr.bf16.mxu0 %v632
        %1544 = vmatmul.mubr.bf16.gmra.mrb[0].mxu0 %v647
        %v1545 = vpop.f32.mrb[0].mxu0
        %v1546 = vadd.f32 %v1385, %v1545
        %v1547 = vpop.f32.mrb[0].mxu0
        %v1548 = vpop.f32.mrb[0].mxu0
        %v1549 = vadd.f32 %v1388, %v1548
        %v1550 = vpop.f32.mrb[0].mxu0
        %1551 = vmatprep.mubr.bf16.mxu0 %v633
        %1552 = vmatmul.mubr.bf16.gmra.mrb[0].mxu0 %v648
        %v1553 = vpop.f32.mrb[0].mxu0
        %v1554 = vadd.f32 %v1393, %v1553
        %v1555 = vpop.f32.mrb[0].mxu0
        %v1556 = vpop.f32.mrb[0].mxu0
        %v1557 = vadd.f32 %v1396, %v1556
        %v1558 = vpop.f32.mrb[0].mxu0
        %1559 = vmatprep.mubr.bf16.mxu0 %v634
        %1560 = vmatmul.mubr.bf16.gmra.mrb[0].mxu0 %v649
        %v1561 = vpop.f32.mrb[0].mxu0
        %v1562 = vadd.f32 %v1401, %v1561
        %v1563 = vpop.f32.mrb[0].mxu0
        %v1564 = vpop.f32.mrb[0].mxu0
        %v1565 = vadd.f32 %v1404, %v1564
        %v1566 = vpop.f32.mrb[0].mxu0
        %1567 = vmatprep.mubr.bf16.mxu0 %v635
        %1568 = vmatmul.mubr.bf16.gmra.mrb[0].mxu0 %v650
        %v1569 = vpop.f32.mrb[0].mxu0
        %v1570 = vadd.f32 %v1409, %v1569
        %v1571 = vpop.f32.mrb[0].mxu0
        %v1572 = vpop.f32.mrb[0].mxu0
        %v1573 = vadd.f32 %v1412, %v1572
        %v1574 = vpop.f32.mrb[0].mxu0
        %1575 = vmatprep.mubr.bf16.mxu0 %v636
        %1576 = vmatmul.mubr.bf16.gmra.mrb[0].mxu0 %v651
        %v1577 = vpop.f32.mrb[0].mxu0
        %v1578 = vadd.f32 %v1417, %v1577
        %v1579 = vpop.f32.mrb[0].mxu0
        %v1580 = vpop.f32.mrb[0].mxu0
        %v1581 = vadd.f32 %v1420, %v1580
        %v1582 = vpop.f32.mrb[0].mxu0
        %1583 = vmatprep.mubr.bf16.mxu0 %v637
        %1584 = vmatmul.mubr.bf16.gmra.mrb[0].mxu0 %v652
        %v1585 = vpop.f32.mrb[0].mxu0
        %v1586 = vadd.f32 %v1425, %v1585
        %v1587 = vpop.f32.mrb[0].mxu0
        %v1588 = vpop.f32.mrb[0].mxu0
        %v1589 = vadd.f32 %v1428, %v1588
        %v1590 = vpop.f32.mrb[0].mxu0
        %1591 = vmatprep.mubr.bf16.mxu0 %v638
        %1592 = vmatmul.mubr.bf16.gmra.mrb[0].mxu0 %v653
        %v1593 = vpop.f32.mrb[0].mxu0
        %v1594 = vadd.f32 %v1433, %v1593
        %v1595 = vpop.f32.mrb[0].mxu0
        %v1596 = vpop.f32.mrb[0].mxu0
        %v1597 = vadd.f32 %v1436, %v1596
        %v1598 = vpop.f32.mrb[0].mxu0
        %1599 = vmatprep.mubr.bf16.mxu0 %v639
        %1600 = vmatmul.mubr.bf16.gmra.mrb[0].mxu0 %v654
        %v1601 = vpop.f32.mrb[0].mxu0
        %v1602 = vadd.f32 %v1441, %v1601
        %v1603 = vpop.f32.mrb[0].mxu0
        %v1604 = vpop.f32.mrb[0].mxu0
        %v1605 = vadd.f32 %v1444, %v1604
        %v1606 = vpop.f32.mrb[0].mxu0
        %1607 = vmatprep.mubr.bf16.mxu0 %v640
        %1608 = vmatmul.mubr.bf16.gmra.mrb[0].mxu0 %v655
        %v1609 = vpop.f32.mrb[0].mxu0
        %v1610 = vadd.f32 %v1449, %v1609
        %v1611 = vpop.f32.mrb[0].mxu0
        %v1612 = vpop.f32.mrb[0].mxu0
        %v1613 = vadd.f32 %v1452, %v1612
        %v1614 = vpop.f32.mrb[0].mxu0
        %1615 = vmatprep.mubr.bf16.mxu0 %v641
        %1616 = vmatmul.mubr.bf16.gmra.mrb[0].mxu0 %v656
        %v1617 = vpop.f32.mrb[0].mxu0
        %v1618 = vadd.f32 %v1457, %v1617
        %v1619 = vpop.f32.mrb[0].mxu0
        %v1620 = vpop.f32.mrb[0].mxu0
        %v1621 = vadd.f32 %v1460, %v1620
        %v1622 = vpop.f32.mrb[0].mxu0
        %1623 = vmatprep.mubr.bf16.mxu0 %v642
        %1624 = vmatmul.mubr.bf16.gmra.mrb[0].mxu0 %v657
        %v1625 = vpop.f32.mrb[0].mxu0
        %v1626 = vadd.f32 %v1465, %v1625
        %v1627 = vpop.f32.mrb[0].mxu0
        %v1628 = vpop.f32.mrb[0].mxu0
        %v1629 = vadd.f32 %v1468, %v1628
        %v1630 = vpop.f32.mrb[0].mxu0
        %1631 = vmatprep.mubr.bf16.mxu0 %v643
        %1632 = vmatmul.mubr.bf16.gmra.mrb[0].mxu0 %v658
        %v1633 = vpop.f32.mrb[0].mxu0
        %v1634 = vadd.f32 %v1473, %v1633
        %v1635 = vpop.f32.mrb[0].mxu0
        %v1636 = vpop.f32.mrb[0].mxu0
        %v1637 = vadd.f32 %v1476, %v1636
        %v1638 = vpop.f32.mrb[0].mxu0
        %1639 = vmatprep.mubr.bf16.mxu0 %v644
        %1640 = vmatmul.mubr.bf16.gmra.mrb[0].mxu0 %v659
        %v1641 = vpop.f32.mrb[0].mxu0
        %v1642 = vadd.f32 %v1481, %v1641
        %v1643 = vpop.f32.mrb[0].mxu0
        %v1644 = vpop.f32.mrb[0].mxu0
        %v1645 = vadd.f32 %v1484, %v1644
        %v1646 = vpop.f32.mrb[0].mxu0
        %1647 = vmatprep.mubr.bf16.mxu0 %v645
        %1648 = vmatmul.mubr.bf16.gmra.mrb[0].mxu0 %v660
        %v1649 = vpop.f32.mrb[0].mxu0
        %v1650 = vadd.f32 %v1489, %v1649
        %v1651 = vpop.f32.mrb[0].mxu0
        %v1652 = vpop.f32.mrb[0].mxu0
        %v1653 = vadd.f32 %v1492, %v1652
        %v1654 = vpop.f32.mrb[0].mxu0
        %1655 = vdwg.mxu0
        %1656 = vmatprep.subr.bf16.mxu0 0
        %1657 = vmatpush1.bf16.msra.mxu0 %v1222
        %1658 = vmatprep.subr.bf16.mxu0 0
        %1659 = vmatpush1.bf16.msra.mxu0 %v1223
        %1660 = vmatprep.subr.bf16.mxu0 0
        %1661 = vmatpush1.bf16.msra.mxu0 %v1224
        %1662 = vmatprep.subr.bf16.mxu0 0
        %1663 = vmatpush1.bf16.msra.mxu0 %v1225
        %1664 = vmatprep.subr.bf16.mxu0 0
        %1665 = vmatpush1.bf16.msra.mxu0 %v1226
        %1666 = vmatprep.subr.bf16.mxu0 0
        %1667 = vmatpush1.bf16.msra.mxu0 %v1227
        %1668 = vmatprep.subr.bf16.mxu0 0
        %1669 = vmatpush1.bf16.msra.mxu0 %v1228
        %1670 = vmatprep.subr.bf16.mxu0 0
        %1671 = vmatpush1.bf16.msra.mxu0 %v1229
        %1672 = vmatprep.subr.bf16.mxu0 0
        %1673 = vmatpush1.bf16.msra.mxu0 %v1230
        %1674 = vmatprep.subr.bf16.mxu0 0
        %1675 = vmatpush1.bf16.msra.mxu0 %v1231
        %1676 = vmatprep.subr.bf16.mxu0 0
        %1677 = vmatpush1.bf16.msra.mxu0 %v1232
        %1678 = vmatprep.subr.bf16.mxu0 0
        %1679 = vmatpush1.bf16.msra.mxu0 %v1233
        %1680 = vmatprep.subr.bf16.mxu0 0
        %1681 = vmatpush1.bf16.msra.mxu0 %v1234
        %1682 = vmatprep.subr.bf16.mxu0 0
        %1683 = vmatpush1.bf16.msra.mxu0 %v1235
        %1684 = vmatprep.subr.bf16.mxu0 0
        %1685 = vmatpush1.bf16.msra.mxu0 %v1236
        %1686 = vmatprep.subr.bf16.mxu0 0
        %1687 = vmatpush1.bf16.msra.mxu0 %v1237
        %1688 = vmatprep.mubr.bf16.mxu0 %v646
        %1689 = vmatmul.mubr.bf16.gmra.mrb[0].mxu0 %v726
        %v1690 = vpop.f32.mrb[0].mxu0
        %v1691 = vadd.f32 %v1530, %v1690
        %v1692 = vpop.f32.mrb[0].mxu0
        %v1693 = vpop.f32.mrb[0].mxu0
        %v1694 = vadd.f32 %v1533, %v1693
        %v1695 = vpop.f32.mrb[0].mxu0
        %1696 = vmatprep.mubr.bf16.mxu0 %v647
        %1697 = vmatmul.mubr.bf16.gmra.mrb[0].mxu0 %v727
        %v1698 = vpop.f32.mrb[0].mxu0
        %v1699 = vadd.f32 %v1538, %v1698
        %v1700 = vpop.f32.mrb[0].mxu0
        %v1701 = vpop.f32.mrb[0].mxu0
        %v1702 = vadd.f32 %v1541, %v1701
        %v1703 = vpop.f32.mrb[0].mxu0
        %1704 = vmatprep.mubr.bf16.mxu0 %v648
        %1705 = vmatmul.mubr.bf16.gmra.mrb[0].mxu0 %v728
        %v1706 = vpop.f32.mrb[0].mxu0
        %v1707 = vadd.f32 %v1546, %v1706
        %v1708 = vpop.f32.mrb[0].mxu0
        %v1709 = vpop.f32.mrb[0].mxu0
        %v1710 = vadd.f32 %v1549, %v1709
        %v1711 = vpop.f32.mrb[0].mxu0
        %1712 = vmatprep.mubr.bf16.mxu0 %v649
        %1713 = vmatmul.mubr.bf16.gmra.mrb[0].mxu0 %v729
        %v1714 = vpop.f32.mrb[0].mxu0
        %v1715 = vadd.f32 %v1554, %v1714
        %v1716 = vpop.f32.mrb[0].mxu0
        %v1717 = vpop.f32.mrb[0].mxu0
        %v1718 = vadd.f32 %v1557, %v1717
        %v1719 = vpop.f32.mrb[0].mxu0
        %1720 = vmatprep.mubr.bf16.mxu0 %v650
        %1721 = vmatmul.mubr.bf16.gmra.mrb[0].mxu0 %v730
        %v1722 = vpop.f32.mrb[0].mxu0
        %v1723 = vadd.f32 %v1562, %v1722
        %v1724 = vpop.f32.mrb[0].mxu0
        %v1725 = vpop.f32.mrb[0].mxu0
        %v1726 = vadd.f32 %v1565, %v1725
        %v1727 = vpop.f32.mrb[0].mxu0
        %1728 = vmatprep.mubr.bf16.mxu0 %v651
        %1729 = vmatmul.mubr.bf16.gmra.mrb[0].mxu0 %v731
        %v1730 = vpop.f32.mrb[0].mxu0
        %v1731 = vadd.f32 %v1570, %v1730
        %v1732 = vpop.f32.mrb[0].mxu0
        %v1733 = vpop.f32.mrb[0].mxu0
        %v1734 = vadd.f32 %v1573, %v1733
        %v1735 = vpop.f32.mrb[0].mxu0
        %1736 = vmatprep.mubr.bf16.mxu0 %v652
        %1737 = vmatmul.mubr.bf16.gmra.mrb[0].mxu0 %v732
        %v1738 = vpop.f32.mrb[0].mxu0
        %v1739 = vadd.f32 %v1578, %v1738
        %v1740 = vpop.f32.mrb[0].mxu0
        %v1741 = vpop.f32.mrb[0].mxu0
        %v1742 = vadd.f32 %v1581, %v1741
        %v1743 = vpop.f32.mrb[0].mxu0
        %1744 = vmatprep.mubr.bf16.mxu0 %v653
        %1745 = vmatmul.mubr.bf16.gmra.mrb[0].mxu0 %v733
        %v1746 = vpop.f32.mrb[0].mxu0
        %v1747 = vadd.f32 %v1586, %v1746
        %v1748 = vpop.f32.mrb[0].mxu0
        %v1749 = vpop.f32.mrb[0].mxu0
        %v1750 = vadd.f32 %v1589, %v1749
        %v1751 = vpop.f32.mrb[0].mxu0
        %1752 = vmatprep.mubr.bf16.mxu0 %v654
        %1753 = vmatmul.mubr.bf16.gmra.mrb[0].mxu0 %v734
        %v1754 = vpop.f32.mrb[0].mxu0
        %v1755 = vadd.f32 %v1594, %v1754
        %v1756 = vpop.f32.mrb[0].mxu0
        %v1757 = vpop.f32.mrb[0].mxu0
        %v1758 = vadd.f32 %v1597, %v1757
        %v1759 = vpop.f32.mrb[0].mxu0
        %1760 = vmatprep.mubr.bf16.mxu0 %v655
        %1761 = vmatmul.mubr.bf16.gmra.mrb[0].mxu0 %v735
        %v1762 = vpop.f32.mrb[0].mxu0
        %v1763 = vadd.f32 %v1602, %v1762
        %v1764 = vpop.f32.mrb[0].mxu0
        %v1765 = vpop.f32.mrb[0].mxu0
        %v1766 = vadd.f32 %v1605, %v1765
        %v1767 = vpop.f32.mrb[0].mxu0
        %1768 = vmatprep.mubr.bf16.mxu0 %v656
        %1769 = vmatmul.mubr.bf16.gmra.mrb[0].mxu0 %v736
        %v1770 = vpop.f32.mrb[0].mxu0
        %v1771 = vadd.f32 %v1610, %v1770
        %v1772 = vpop.f32.mrb[0].mxu0
        %v1773 = vpop.f32.mrb[0].mxu0
        %v1774 = vadd.f32 %v1613, %v1773
        %v1775 = vpop.f32.mrb[0].mxu0
        %1776 = vmatprep.mubr.bf16.mxu0 %v657
        %1777 = vmatmul.mubr.bf16.gmra.mrb[0].mxu0 %v737
        %v1778 = vpop.f32.mrb[0].mxu0
        %v1779 = vadd.f32 %v1618, %v1778
        %v1780 = vpop.f32.mrb[0].mxu0
        %v1781 = vpop.f32.mrb[0].mxu0
        %v1782 = vadd.f32 %v1621, %v1781
        %v1783 = vpop.f32.mrb[0].mxu0
        %1784 = vmatprep.mubr.bf16.mxu0 %v658
        %1785 = vmatmul.mubr.bf16.gmra.mrb[0].mxu0 %v738
        %v1786 = vpop.f32.mrb[0].mxu0
        %v1787 = vadd.f32 %v1626, %v1786
        %v1788 = vpop.f32.mrb[0].mxu0
        %v1789 = vpop.f32.mrb[0].mxu0
        %v1790 = vadd.f32 %v1629, %v1789
        %v1791 = vpop.f32.mrb[0].mxu0
        %1792 = vmatprep.mubr.bf16.mxu0 %v659
        %1793 = vmatmul.mubr.bf16.gmra.mrb[0].mxu0 %v739
        %v1794 = vpop.f32.mrb[0].mxu0
        %v1795 = vadd.f32 %v1634, %v1794
        %v1796 = vpop.f32.mrb[0].mxu0
        %v1797 = vpop.f32.mrb[0].mxu0
        %v1798 = vadd.f32 %v1637, %v1797
        %v1799 = vpop.f32.mrb[0].mxu0
        %1800 = vmatprep.mubr.bf16.mxu0 %v660
        %1801 = vmatmul.mubr.bf16.gmra.mrb[0].mxu0 %v740
        %v1802 = vpop.f32.mrb[0].mxu0
        %v1803 = vadd.f32 %v1642, %v1802
        %v1804 = vpop.f32.mrb[0].mxu0
        %v1805 = vpop.f32.mrb[0].mxu0
        %v1806 = vadd.f32 %v1645, %v1805
        %v1807 = vpop.f32.mrb[0].mxu0
        %1808 = vmatprep.mubr.bf16.mxu0 %v661
        %1809 = vmatmul.mubr.bf16.gmra.mrb[0].mxu0 %v741
        %v1810 = vpop.f32.mrb[0].mxu0
        %v1811 = vadd.f32 %v1650, %v1810
        %v1812 = vpop.f32.mrb[0].mxu0
        %v1813 = vpop.f32.mrb[0].mxu0
        %v1814 = vadd.f32 %v1653, %v1813
        %v1815 = vpop.f32.mrb[0].mxu0
        %1816 = vdwg.mxu0
        %1817 = vmatprep.subr.bf16.mxu0 0
        %1818 = vmatpush1.bf16.msra.mxu0 %v1238
        %1819 = vmatprep.subr.bf16.mxu0 0
        %1820 = vmatpush1.bf16.msra.mxu0 %v1239
        %1821 = vmatprep.subr.bf16.mxu0 0
        %1822 = vmatpush1.bf16.msra.mxu0 %v1240
        %1823 = vmatprep.subr.bf16.mxu0 0
        %1824 = vmatpush1.bf16.msra.mxu0 %v1241
        %1825 = vmatprep.subr.bf16.mxu0 0
        %1826 = vmatpush1.bf16.msra.mxu0 %v1242
        %1827 = vmatprep.subr.bf16.mxu0 0
        %1828 = vmatpush1.bf16.msra.mxu0 %v1243
        %1829 = vmatprep.subr.bf16.mxu0 0
        %1830 = vmatpush1.bf16.msra.mxu0 %v1244
        %1831 = vmatprep.subr.bf16.mxu0 0
        %1832 = vmatpush1.bf16.msra.mxu0 %v1245
        %1833 = vmatprep.subr.bf16.mxu0 0
        %1834 = vmatpush1.bf16.msra.mxu0 %v1246
        %1835 = vmatprep.subr.bf16.mxu0 0
        %1836 = vmatpush1.bf16.msra.mxu0 %v1247
        %1837 = vmatprep.subr.bf16.mxu0 0
        %1838 = vmatpush1.bf16.msra.mxu0 %v1248
        %1839 = vmatprep.subr.bf16.mxu0 0
        %1840 = vmatpush1.bf16.msra.mxu0 %v1249
        %1841 = vmatprep.subr.bf16.mxu0 0
        %1842 = vmatpush1.bf16.msra.mxu0 %v1250
        %1843 = vmatprep.subr.bf16.mxu0 0
        %1844 = vmatpush1.bf16.msra.mxu0 %v1251
        %1845 = vmatprep.subr.bf16.mxu0 0
        %1846 = vmatpush1.bf16.msra.mxu0 %v1252
        %1847 = vmatprep.subr.bf16.mxu0 0
        %1848 = vmatpush1.bf16.msra.mxu0 %v1253
        %1849 = vmatprep.mubr.bf16.mxu0 %v727
        %1850 = vmatmul.mubr.bf16.gmra.mrb[0].mxu0 %v631
        %v1851 = vpop.f32.mrb[0].mxu0
        %v1852 = vadd.f32 %v1691, %v1851
        %v1853 = vpop.f32.mrb[0].mxu0
        %v1854 = vpop.f32.mrb[0].mxu0
        %v1855 = vadd.f32 %v1694, %v1854
        %v1856 = vpop.f32.mrb[0].mxu0
        %1857 = vmatprep.mubr.bf16.mxu0 %v728
        %1858 = vmatmul.mubr.bf16.gmra.mrb[0].mxu0 %v632
        %v1859 = vpop.f32.mrb[0].mxu0
        %v1860 = vadd.f32 %v1699, %v1859
        %v1861 = vpop.f32.mrb[0].mxu0
        %v1862 = vpop.f32.mrb[0].mxu0
        %v1863 = vadd.f32 %v1702, %v1862
        %v1864 = vpop.f32.mrb[0].mxu0
        %1865 = vmatprep.mubr.bf16.mxu0 %v729
        %1866 = vmatmul.mubr.bf16.gmra.mrb[0].mxu0 %v633
        %v1867 = vpop.f32.mrb[0].mxu0
        %v1868 = vadd.f32 %v1707, %v1867
        %v1869 = vpop.f32.mrb[0].mxu0
        %v1870 = vpop.f32.mrb[0].mxu0
        %v1871 = vadd.f32 %v1710, %v1870
        %v1872 = vpop.f32.mrb[0].mxu0
        %1873 = vmatprep.mubr.bf16.mxu0 %v730
        %1874 = vmatmul.mubr.bf16.gmra.mrb[0].mxu0 %v634
        %v1875 = vpop.f32.mrb[0].mxu0
        %v1876 = vadd.f32 %v1715, %v1875
        %v1877 = vpop.f32.mrb[0].mxu0
        %v1878 = vpop.f32.mrb[0].mxu0
        %v1879 = vadd.f32 %v1718, %v1878
        %v1880 = vpop.f32.mrb[0].mxu0
        %1881 = vmatprep.mubr.bf16.mxu0 %v731
        %1882 = vmatmul.mubr.bf16.gmra.mrb[0].mxu0 %v635
        %v1883 = vpop.f32.mrb[0].mxu0
        %v1884 = vadd.f32 %v1723, %v1883
        %v1885 = vpop.f32.mrb[0].mxu0
        %v1886 = vpop.f32.mrb[0].mxu0
        %v1887 = vadd.f32 %v1726, %v1886
        %v1888 = vpop.f32.mrb[0].mxu0
        %1889 = vmatprep.mubr.bf16.mxu0 %v732
        %1890 = vmatmul.mubr.bf16.gmra.mrb[0].mxu0 %v636
        %v1891 = vpop.f32.mrb[0].mxu0
        %v1892 = vadd.f32 %v1731, %v1891
        %v1893 = vpop.f32.mrb[0].mxu0
        %v1894 = vpop.f32.mrb[0].mxu0
        %v1895 = vadd.f32 %v1734, %v1894
        %v1896 = vpop.f32.mrb[0].mxu0
        %1897 = vmatprep.mubr.bf16.mxu0 %v733
        %1898 = vmatmul.mubr.bf16.gmra.mrb[0].mxu0 %v637
        %v1899 = vpop.f32.mrb[0].mxu0
        %v1900 = vadd.f32 %v1739, %v1899
        %v1901 = vpop.f32.mrb[0].mxu0
        %v1902 = vpop.f32.mrb[0].mxu0
        %v1903 = vadd.f32 %v1742, %v1902
        %v1904 = vpop.f32.mrb[0].mxu0
        %1905 = vmatprep.mubr.bf16.mxu0 %v734
        %1906 = vmatmul.mubr.bf16.gmra.mrb[0].mxu0 %v638
        %v1907 = vpop.f32.mrb[0].mxu0
        %v1908 = vadd.f32 %v1747, %v1907
        %v1909 = vpop.f32.mrb[0].mxu0
        %v1910 = vpop.f32.mrb[0].mxu0
        %v1911 = vadd.f32 %v1750, %v1910
        %v1912 = vpop.f32.mrb[0].mxu0
        %1913 = vmatprep.mubr.bf16.mxu0 %v735
        %1914 = vmatmul.mubr.bf16.gmra.mrb[0].mxu0 %v639
        %v1915 = vpop.f32.mrb[0].mxu0
        %v1916 = vadd.f32 %v1755, %v1915
        %v1917 = vpop.f32.mrb[0].mxu0
        %v1918 = vpop.f32.mrb[0].mxu0
        %v1919 = vadd.f32 %v1758, %v1918
        %v1920 = vpop.f32.mrb[0].mxu0
        %1921 = vmatprep.mubr.bf16.mxu0 %v736
        %1922 = vmatmul.mubr.bf16.gmra.mrb[0].mxu0 %v640
        %v1923 = vpop.f32.mrb[0].mxu0
        %v1924 = vadd.f32 %v1763, %v1923
        %v1925 = vpop.f32.mrb[0].mxu0
        %v1926 = vpop.f32.mrb[0].mxu0
        %v1927 = vadd.f32 %v1766, %v1926
        %v1928 = vpop.f32.mrb[0].mxu0
        %1929 = vmatprep.mubr.bf16.mxu0 %v737
        %1930 = vmatmul.mubr.bf16.gmra.mrb[0].mxu0 %v641
        %v1931 = vpop.f32.mrb[0].mxu0
        %v1932 = vadd.f32 %v1771, %v1931
        %v1933 = vpop.f32.mrb[0].mxu0
        %v1934 = vpop.f32.mrb[0].mxu0
        %v1935 = vadd.f32 %v1774, %v1934
        %v1936 = vpop.f32.mrb[0].mxu0
        %1937 = vmatprep.mubr.bf16.mxu0 %v738
        %1938 = vmatmul.mubr.bf16.gmra.mrb[0].mxu0 %v642
        %v1939 = vpop.f32.mrb[0].mxu0
        %v1940 = vadd.f32 %v1779, %v1939
        %v1941 = vpop.f32.mrb[0].mxu0
        %v1942 = vpop.f32.mrb[0].mxu0
        %v1943 = vadd.f32 %v1782, %v1942
        %v1944 = vpop.f32.mrb[0].mxu0
        %1945 = vmatprep.mubr.bf16.mxu0 %v739
        %1946 = vmatmul.mubr.bf16.gmra.mrb[0].mxu0 %v643
        %v1947 = vpop.f32.mrb[0].mxu0
        %v1948 = vadd.f32 %v1787, %v1947
        %v1949 = vpop.f32.mrb[0].mxu0
        %v1950 = vpop.f32.mrb[0].mxu0
        %v1951 = vadd.f32 %v1790, %v1950
        %v1952 = vpop.f32.mrb[0].mxu0
        %1953 = vmatprep.mubr.bf16.mxu0 %v740
        %1954 = vmatmul.mubr.bf16.gmra.mrb[0].mxu0 %v644
        %v1955 = vpop.f32.mrb[0].mxu0
        %v1956 = vadd.f32 %v1795, %v1955
        %v1957 = vpop.f32.mrb[0].mxu0
        %v1958 = vpop.f32.mrb[0].mxu0
        %v1959 = vadd.f32 %v1798, %v1958
        %v1960 = vpop.f32.mrb[0].mxu0
        %1961 = vmatprep.mubr.bf16.mxu0 %v741
        %1962 = vmatmul.mubr.bf16.gmra.mrb[0].mxu0 %v645
        %v1963 = vpop.f32.mrb[0].mxu0
        %v1964 = vadd.f32 %v1803, %v1963
        %v1965 = vpop.f32.mrb[0].mxu0
        %v1966 = vpop.f32.mrb[0].mxu0
        %v1967 = vadd.f32 %v1806, %v1966
        %v1968 = vpop.f32.mrb[0].mxu0
        %1969 = vmatprep.mubr.bf16.mxu0 0
        %1970 = vmatmul.mubr.bf16.gmra.mrb[0].mxu0 0
        %v1971 = vpop.f32.mrb[0].mxu0
        %v1972 = vadd.f32 %v1811, %v1971
        %v1973 = vpop.f32.mrb[0].mxu0
        %v1974 = vpop.f32.mrb[0].mxu0
        %v1975 = vadd.f32 %v1814, %v1974
        %v1976 = vpop.f32.mrb[0].mxu0
        %1977 = vdwg.mxu0
        %1978 = vmatprep.subr.bf16.mxu0 0
        %1979 = vmatpush1.bf16.msra.mxu0 %v1254
        %1980 = vmatprep.subr.bf16.mxu0 0
        %1981 = vmatpush1.bf16.msra.mxu0 %v1255
        %1982 = vmatprep.subr.bf16.mxu0 0
        %1983 = vmatpush1.bf16.msra.mxu0 %v1256
        %1984 = vmatprep.subr.bf16.mxu0 0
        %1985 = vmatpush1.bf16.msra.mxu0 %v1257
        %1986 = vmatprep.subr.bf16.mxu0 0
        %1987 = vmatpush1.bf16.msra.mxu0 %v1258
        %1988 = vmatprep.subr.bf16.mxu0 0
        %1989 = vmatpush1.bf16.msra.mxu0 %v1259
        %1990 = vmatprep.subr.bf16.mxu0 0
        %1991 = vmatpush1.bf16.msra.mxu0 %v1260
        %1992 = vmatprep.subr.bf16.mxu0 0
        %1993 = vmatpush1.bf16.msra.mxu0 %v1261
        %1994 = vmatprep.subr.bf16.mxu0 0
        %1995 = vmatpush1.bf16.msra.mxu0 0
        %1996 = vmatprep.subr.bf16.mxu0 0
        %1997 = vmatpush1.bf16.msra.mxu0 0
        %1998 = vmatprep.subr.bf16.mxu0 0
        %1999 = vmatpush1.bf16.msra.mxu0 0
        %2000 = vmatprep.subr.bf16.mxu0 0
        %2001 = vmatpush1.bf16.msra.mxu0 0
        %2002 = vmatprep.subr.bf16.mxu0 0
        %2003 = vmatpush1.bf16.msra.mxu0 0
        %2004 = vmatprep.subr.bf16.mxu0 0
        %2005 = vmatpush1.bf16.msra.mxu0 0
        %2006 = vmatprep.subr.bf16.mxu0 0
        %2007 = vmatpush1.bf16.msra.mxu0 0
        %2008 = vmatprep.subr.bf16.mxu0 0
        %2009 = vmatpush1.bf16.msra.mxu0 0
        %2010 = vmatprep.mubr.bf16.mxu0 0
        %2011 = vmatmul.mubr.bf16.gmra.mrb[0].mxu0 %v647
        %v2012 = vpop.f32.mrb[0].mxu0
        %v2013 = vadd.f32 %v1852, %v2012
        %v2014 = vpop.f32.mrb[0].mxu0
        %v2015 = vpop.f32.mrb[0].mxu0
        %v2016 = vadd.f32 %v1855, %v2015
        %v2017 = vpop.f32.mrb[0].mxu0
        %2018 = vmatprep.mubr.bf16.mxu0 0
        %2019 = vmatmul.mubr.bf16.gmra.mrb[0].mxu0 %v648
        %v2020 = vpop.f32.mrb[0].mxu0
        %v2021 = vadd.f32 %v1860, %v2020
        %v2022 = vpop.f32.mrb[0].mxu0
        %v2023 = vpop.f32.mrb[0].mxu0
        %v2024 = vadd.f32 %v1863, %v2023
        %v2025 = vpop.f32.mrb[0].mxu0
        %2026 = vmatprep.mubr.bf16.mxu0 0
        %2027 = vmatmul.mubr.bf16.gmra.mrb[0].mxu0 %v649
        %v2028 = vpop.f32.mrb[0].mxu0
        %v2029 = vadd.f32 %v1868, %v2028
        %v2030 = vpop.f32.mrb[0].mxu0
        %v2031 = vpop.f32.mrb[0].mxu0
        %v2032 = vadd.f32 %v1871, %v2031
        %v2033 = vpop.f32.mrb[0].mxu0
        %2034 = vmatprep.mubr.bf16.mxu0 0
        %2035 = vmatmul.mubr.bf16.gmra.mrb[0].mxu0 %v650
        %v2036 = vpop.f32.mrb[0].mxu0
        %v2037 = vadd.f32 %v1876, %v2036
        %v2038 = vpop.f32.mrb[0].mxu0
        %v2039 = vpop.f32.mrb[0].mxu0
        %v2040 = vadd.f32 %v1879, %v2039
        %v2041 = vpop.f32.mrb[0].mxu0
        %2042 = vmatprep.mubr.bf16.mxu0 0
        %2043 = vmatmul.mubr.bf16.gmra.mrb[0].mxu0 %v651
        %v2044 = vpop.f32.mrb[0].mxu0
        %v2045 = vadd.f32 %v1884, %v2044
        %v2046 = vpop.f32.mrb[0].mxu0
        %v2047 = vpop.f32.mrb[0].mxu0
        %v2048 = vadd.f32 %v1887, %v2047
        %v2049 = vpop.f32.mrb[0].mxu0
        %2050 = vmatprep.mubr.bf16.mxu0 0
        %2051 = vmatmul.mubr.bf16.gmra.mrb[0].mxu0 %v652
        %v2052 = vpop.f32.mrb[0].mxu0
        %v2053 = vadd.f32 %v1892, %v2052
        %v2054 = vpop.f32.mrb[0].mxu0
        %v2055 = vpop.f32.mrb[0].mxu0
        %v2056 = vadd.f32 %v1895, %v2055
        %v2057 = vpop.f32.mrb[0].mxu0
        %2058 = vmatprep.mubr.bf16.mxu0 0
        %2059 = vmatmul.mubr.bf16.gmra.mrb[0].mxu0 %v653
        %v2060 = vpop.f32.mrb[0].mxu0
        %v2061 = vadd.f32 %v1900, %v2060
        %v2062 = vpop.f32.mrb[0].mxu0
        %v2063 = vpop.f32.mrb[0].mxu0
        %v2064 = vadd.f32 %v1903, %v2063
        %v2065 = vpop.f32.mrb[0].mxu0
        %2066 = vmatprep.mubr.bf16.mxu0 0
        %2067 = vmatmul.mubr.bf16.gmra.mrb[0].mxu0 %v654
        %v2068 = vpop.f32.mrb[0].mxu0
        %v2069 = vadd.f32 %v1908, %v2068
        %v2070 = vpop.f32.mrb[0].mxu0
        %v2071 = vpop.f32.mrb[0].mxu0
        %v2072 = vadd.f32 %v1911, %v2071
        %v2073 = vpop.f32.mrb[0].mxu0
        %2074 = vmatprep.mubr.bf16.mxu0 0
        %2075 = vmatmul.mubr.bf16.gmra.mrb[0].mxu0 %v655
        %v2076 = vpop.f32.mrb[0].mxu0
        %v2077 = vadd.f32 %v1916, %v2076
        %v2078 = vpop.f32.mrb[0].mxu0
        %v2079 = vpop.f32.mrb[0].mxu0
        %v2080 = vadd.f32 %v1919, %v2079
        %v2081 = vpop.f32.mrb[0].mxu0
        %2082 = vmatprep.mubr.bf16.mxu0 0
        %2083 = vmatmul.mubr.bf16.gmra.mrb[0].mxu0 %v656
        %v2084 = vpop.f32.mrb[0].mxu0
        %v2085 = vadd.f32 %v1924, %v2084
        %v2086 = vpop.f32.mrb[0].mxu0
        %v2087 = vpop.f32.mrb[0].mxu0
        %v2088 = vadd.f32 %v1927, %v2087
        %v2089 = vpop.f32.mrb[0].mxu0
        %2090 = vmatprep.mubr.bf16.mxu0 0
        %2091 = vmatmul.mubr.bf16.gmra.mrb[0].mxu0 %v657
        %v2092 = vpop.f32.mrb[0].mxu0
        %v2093 = vadd.f32 %v1932, %v2092
        %v2094 = vpop.f32.mrb[0].mxu0
        %v2095 = vpop.f32.mrb[0].mxu0
        %v2096 = vadd.f32 %v1935, %v2095
        %v2097 = vpop.f32.mrb[0].mxu0
        %2098 = vmatprep.mubr.bf16.mxu0 0
        %2099 = vmatmul.mubr.bf16.gmra.mrb[0].mxu0 %v658
        %v2100 = vpop.f32.mrb[0].mxu0
        %v2101 = vadd.f32 %v1940, %v2100
        %v2102 = vpop.f32.mrb[0].mxu0
        %v2103 = vpop.f32.mrb[0].mxu0
        %v2104 = vadd.f32 %v1943, %v2103
        %v2105 = vpop.f32.mrb[0].mxu0
        %2106 = vmatprep.mubr.bf16.mxu0 0
        %2107 = vmatmul.mubr.bf16.gmra.mrb[0].mxu0 %v659
        %v2108 = vpop.f32.mrb[0].mxu0
        %v2109 = vadd.f32 %v1948, %v2108
        %v2110 = vpop.f32.mrb[0].mxu0
        %v2111 = vpop.f32.mrb[0].mxu0
        %v2112 = vadd.f32 %v1951, %v2111
        %v2113 = vpop.f32.mrb[0].mxu0
        %2114 = vmatprep.mubr.bf16.mxu0 0
        %2115 = vmatmul.mubr.bf16.gmra.mrb[0].mxu0 %v660
        %v2116 = vpop.f32.mrb[0].mxu0
        %v2117 = vadd.f32 %v1956, %v2116
        %v2118 = vpop.f32.mrb[0].mxu0
        %v2119 = vpop.f32.mrb[0].mxu0
        %v2120 = vadd.f32 %v1959, %v2119
        %v2121 = vpop.f32.mrb[0].mxu0
        %2122 = vmatprep.mubr.bf16.mxu0 0
        %2123 = vmatmul.mubr.bf16.gmra.mrb[0].mxu0 %v661
        %v2124 = vpop.f32.mrb[0].mxu0
        %v2125 = vadd.f32 %v1964, %v2124
        %v2126 = vpop.f32.mrb[0].mxu0
        %v2127 = vpop.f32.mrb[0].mxu0
        %v2128 = vadd.f32 %v1967, %v2127
        %v2129 = vpop.f32.mrb[0].mxu0
        %2130 = vmatprep.mubr.bf16.mxu0 0
        %2131 = vmatmul.mubr.bf16.gmra.mrb[0].mxu0 0
        %v2132 = vpop.f32.mrb[0].mxu0
        %v2133 = vadd.f32 %v1972, %v2132
        %v2134 = vpop.f32.mrb[0].mxu0
        %v2135 = vpop.f32.mrb[0].mxu0
        %v2136 = vadd.f32 %v1975, %v2135
        %v2137 = vpop.f32.mrb[0].mxu0
        %2138 = vdwg.mxu0
        %v2139 = vld [vmem:[#allocation6] sm:$0x1]
        %v2141 = vlaneseq
        %v2142 = vshrl.u32 %v2141, 7
        %v2143 = vsub.s32 0, %v2142
        %v2144 = vrot.slane %v2139, %v2143
        %v2146 = vmul.f32 %v2013, %v2144
        %v2147 = vmul.f32 %v2016, %v2144
        %v2148 = vmul.f32 %v2021, %v2144
        %v2149 = vmul.f32 %v2024, %v2144
        %v2150 = vmul.f32 %v2029, %v2144
        %v2151 = vmul.f32 %v2032, %v2144
        %v2152 = vmul.f32 %v2037, %v2144
        %v2153 = vmul.f32 %v2040, %v2144
        %v2154 = vmul.f32 %v2045, %v2144
        %v2155 = vmul.f32 %v2048, %v2144
        %v2156 = vmul.f32 %v2053, %v2144
        %v2157 = vmul.f32 %v2056, %v2144
        %v2158 = vmul.f32 %v2061, %v2144
        %v2159 = vmul.f32 %v2064, %v2144
        %v2160 = vmul.f32 %v2069, %v2144
        %v2161 = vmul.f32 %v2072, %v2144
        %v2162 = vmul.f32 %v2077, %v2144
        %v2163 = vmul.f32 %v2080, %v2144
        %v2164 = vmul.f32 %v2085, %v2144
        %v2165 = vmul.f32 %v2088, %v2144
        %v2166 = vmul.f32 %v2093, %v2144
        %v2167 = vmul.f32 %v2096, %v2144
        %v2168 = vmul.f32 %v2101, %v2144
        %v2169 = vmul.f32 %v2104, %v2144
        %v2170 = vmul.f32 %v2109, %v2144
        %v2171 = vmul.f32 %v2112, %v2144
        %v2172 = vmul.f32 %v2117, %v2144
        %v2173 = vmul.f32 %v2120, %v2144
        %v2174 = vmul.f32 %v2125, %v2144
        %v2175 = vmul.f32 %v2128, %v2144
        %v2176 = vmul.f32 %v2133, %v2144
        %v2177 = vmul.f32 %v2136, %v2144
        %v2178 = vld [vmem:[#allocation8] sm:$0x1]
        %v2180 = vlaneseq
        %v2181 = vshrl.u32 %v2180, 7
        %v2182 = vsub.s32 0, %v2181
        %v2183 = vrot.slane %v2178, %v2182
        %v2185 = vadd.f32 %v2146, %v2183
        %v2186 = vadd.f32 %v2147, %v2183
        %v2187 = vadd.f32 %v2148, %v2183
        %v2188 = vadd.f32 %v2149, %v2183
        %v2189 = vadd.f32 %v2150, %v2183
        %v2190 = vadd.f32 %v2151, %v2183
        %v2191 = vadd.f32 %v2152, %v2183
        %v2192 = vadd.f32 %v2153, %v2183
        %v2193 = vadd.f32 %v2154, %v2183
        %v2194 = vadd.f32 %v2155, %v2183
        %v2195 = vadd.f32 %v2156, %v2183
        %v2196 = vadd.f32 %v2157, %v2183
        %v2197 = vadd.f32 %v2158, %v2183
        %v2198 = vadd.f32 %v2159, %v2183
        %v2199 = vadd.f32 %v2160, %v2183
        %v2200 = vadd.f32 %v2161, %v2183
        %v2201 = vadd.f32 %v2162, %v2183
        %v2202 = vadd.f32 %v2163, %v2183
        %v2203 = vadd.f32 %v2164, %v2183
        %v2204 = vadd.f32 %v2165, %v2183
        %v2205 = vadd.f32 %v2166, %v2183
        %v2206 = vadd.f32 %v2167, %v2183
        %v2207 = vadd.f32 %v2168, %v2183
        %v2208 = vadd.f32 %v2169, %v2183
        %v2209 = vadd.f32 %v2170, %v2183
        %v2210 = vadd.f32 %v2171, %v2183
        %v2211 = vadd.f32 %v2172, %v2183
        %v2212 = vadd.f32 %v2173, %v2183
        %v2213 = vadd.f32 %v2174, %v2183
        %v2214 = vadd.f32 %v2175, %v2183
        %v2215 = vadd.f32 %v2176, %v2183
        %v2216 = vadd.f32 %v2177, %v2183
        %v2217 = vmax.f32 %v2185, 0.0
        %v2218 = vmax.f32 %v2186, 0.0
        %v2219 = vmax.f32 %v2187, 0.0
        %v2220 = vmax.f32 %v2188, 0.0
        %v2221 = vmax.f32 %v2189, 0.0
        %v2222 = vmax.f32 %v2190, 0.0
        %v2223 = vmax.f32 %v2191, 0.0
        %v2224 = vmax.f32 %v2192, 0.0
        %v2225 = vmax.f32 %v2193, 0.0
        %v2226 = vmax.f32 %v2194, 0.0
        %v2227 = vmax.f32 %v2195, 0.0
        %v2228 = vmax.f32 %v2196, 0.0
        %v2229 = vmax.f32 %v2197, 0.0
        %v2230 = vmax.f32 %v2198, 0.0
        %v2231 = vmax.f32 %v2199, 0.0
        %v2232 = vmax.f32 %v2200, 0.0
        %v2233 = vmax.f32 %v2201, 0.0
        %v2234 = vmax.f32 %v2202, 0.0
        %v2235 = vmax.f32 %v2203, 0.0
        %v2236 = vmax.f32 %v2204, 0.0
        %v2237 = vmax.f32 %v2205, 0.0
        %v2238 = vmax.f32 %v2206, 0.0
        %v2239 = vmax.f32 %v2207, 0.0
        %v2240 = vmax.f32 %v2208, 0.0
        %v2241 = vmax.f32 %v2209, 0.0
        %v2242 = vmax.f32 %v2210, 0.0
        %v2243 = vmax.f32 %v2211, 0.0
        %v2244 = vmax.f32 %v2212, 0.0
        %v2245 = vmax.f32 %v2213, 0.0
        %v2246 = vmax.f32 %v2214, 0.0
        %v2247 = vmax.f32 %v2215, 0.0
        %v2248 = vmax.f32 %v2216, 0.0
        %v2249 = vpack.c.bf16 %v2218, %v2217
        %v2250 = vpack.c.bf16 %v2220, %v2219
        %v2251 = vpack.c.bf16 %v2222, %v2221
        %v2252 = vpack.c.bf16 %v2224, %v2223
        %v2253 = vpack.c.bf16 %v2226, %v2225
        %v2254 = vpack.c.bf16 %v2228, %v2227
        %v2255 = vpack.c.bf16 %v2230, %v2229
        %v2256 = vpack.c.bf16 %v2232, %v2231
        %v2257 = vpack.c.bf16 %v2234, %v2233
        %v2258 = vpack.c.bf16 %v2236, %v2235
        %v2259 = vpack.c.bf16 %v2238, %v2237
        %v2260 = vpack.c.bf16 %v2240, %v2239
        %v2261 = vpack.c.bf16 %v2242, %v2241
        %v2262 = vpack.c.bf16 %v2244, %v2243
        %v2263 = vpack.c.bf16 %v2246, %v2245
        %v2264 = vpack.c.bf16 %v2248, %v2247
        %v2265 = vunpack.c.l.bf16 %v2249
        %v2266 = vunpack.c.h.bf16 %v2249
        %v2267 = vunpack.c.l.bf16 %v2250
        %v2268 = vunpack.c.h.bf16 %v2250
        %v2269 = vunpack.c.l.bf16 %v2251
        %v2270 = vunpack.c.h.bf16 %v2251
        %v2271 = vunpack.c.l.bf16 %v2252
        %v2272 = vunpack.c.h.bf16 %v2252
        %v2273 = vunpack.c.l.bf16 %v2253
        %v2274 = vunpack.c.h.bf16 %v2253
        %v2275 = vunpack.c.l.bf16 %v2254
        %v2276 = vunpack.c.h.bf16 %v2254
        %v2277 = vunpack.c.l.bf16 %v2255
        %v2278 = vunpack.c.h.bf16 %v2255
        %v2279 = vunpack.c.l.bf16 %v2256
        %v2280 = vunpack.c.h.bf16 %v2256
        %v2281 = vunpack.c.l.bf16 %v2257
        %v2282 = vunpack.c.h.bf16 %v2257
        %v2283 = vunpack.c.l.bf16 %v2258
        %v2284 = vunpack.c.h.bf16 %v2258
        %v2285 = vunpack.c.l.bf16 %v2259
        %v2286 = vunpack.c.h.bf16 %v2259
        %v2287 = vunpack.c.l.bf16 %v2260
        %v2288 = vunpack.c.h.bf16 %v2260
        %v2289 = vunpack.c.l.bf16 %v2261
        %v2290 = vunpack.c.h.bf16 %v2261
        %v2291 = vunpack.c.l.bf16 %v2262
        %v2292 = vunpack.c.h.bf16 %v2262
        %v2293 = vunpack.c.l.bf16 %v2263
        %v2294 = vunpack.c.h.bf16 %v2263
        %v2295 = vunpack.c.l.bf16 %v2264
        %v2296 = vunpack.c.h.bf16 %v2264
        %v2297 = vrot.slane %v2265, 7
        %v2298 = vrot.slane %v2266, 7
        %v2299 = vrot.slane %v2267, 7
        %v2300 = vrot.slane %v2268, 7
        %v2301 = vrot.slane %v2269, 7
        %v2302 = vrot.slane %v2270, 7
        %v2303 = vrot.slane %v2271, 7
        %v2304 = vrot.slane %v2272, 7
        %v2305 = vrot.slane %v2273, 7
        %v2306 = vrot.slane %v2274, 7
        %v2307 = vrot.slane %v2275, 7
        %v2308 = vrot.slane %v2276, 7
        %v2309 = vrot.slane %v2277, 7
        %v2310 = vrot.slane %v2278, 7
        %v2311 = vrot.slane %v2279, 7
        %v2312 = vrot.slane %v2280, 7
        %v2313 = vrot.slane %v2281, 7
        %v2314 = vrot.slane %v2282, 7
        %v2315 = vrot.slane %v2283, 7
        %v2316 = vrot.slane %v2284, 7
        %v2317 = vrot.slane %v2285, 7
        %v2318 = vrot.slane %v2286, 7
        %v2319 = vrot.slane %v2287, 7
        %v2320 = vrot.slane %v2288, 7
        %v2321 = vrot.slane %v2289, 7
        %v2322 = vrot.slane %v2290, 7
        %v2323 = vrot.slane %v2291, 7
        %v2324 = vrot.slane %v2292, 7
        %v2325 = vrot.slane %v2293, 7
        %v2326 = vrot.slane %v2294, 7
        %v2327 = vrot.slane %v2295, 7
        %v2328 = vrot.slane %v2296, 7
        %v2329 = vsel %vm466, %v2327, %v2328
        %v2330 = vsel %vm466, %v2326, %v2327
        %v2331 = vsel %vm466, %v2325, %v2326
        %v2332 = vsel %vm466, %v2324, %v2325
        %v2333 = vsel %vm466, %v2323, %v2324
        %v2334 = vsel %vm466, %v2322, %v2323
        %v2335 = vsel %vm466, %v2321, %v2322
        %v2336 = vsel %vm466, %v2320, %v2321
        %v2337 = vsel %vm466, %v2319, %v2320
        %v2338 = vsel %vm466, %v2318, %v2319
        %v2339 = vsel %vm466, %v2317, %v2318
        %v2340 = vsel %vm466, %v2316, %v2317
        %v2341 = vsel %vm466, %v2315, %v2316
        %v2342 = vsel %vm466, %v2314, %v2315
        %v2343 = vsel %vm466, %v2313, %v2314
        %v2344 = vsel %vm466, %v2312, %v2313
        %v2345 = vsel %vm466, %v2311, %v2312
        %v2346 = vsel %vm466, %v2310, %v2311
        %v2347 = vsel %vm466, %v2309, %v2310
        %v2348 = vsel %vm466, %v2308, %v2309
        %v2349 = vsel %vm466, %v2307, %v2308
        %v2350 = vsel %vm466, %v2306, %v2307
        %v2351 = vsel %vm466, %v2305, %v2306
        %v2352 = vsel %vm466, %v2304, %v2305
        %v2353 = vsel %vm466, %v2303, %v2304
        %v2354 = vsel %vm466, %v2302, %v2303
        %v2355 = vsel %vm466, %v2301, %v2302
        %v2356 = vsel %vm466, %v2300, %v2301
        %v2357 = vsel %vm466, %v2299, %v2300
        %v2358 = vsel %vm466, %v2298, %v2299
        %v2359 = vsel %vm466, %v2297, %v2298
        %v2360 = vsel %vm466, %v2328, %v2297
        %v2361 = vsel %vm432, %v2360, 0.0
        %v2362 = vsel %vm433, %v2359, 0.0
        %v2363 = vsel %vm432, %v2358, 0.0
        %v2364 = vsel %vm433, %v2357, 0.0
        %v2365 = vsel %vm432, %v2356, 0.0
        %v2366 = vsel %vm433, %v2355, 0.0
        %v2367 = vsel %vm432, %v2354, 0.0
        %v2368 = vsel %vm433, %v2353, 0.0
        %v2369 = vsel %vm432, %v2352, 0.0
        %v2370 = vsel %vm433, %v2351, 0.0
        %v2371 = vsel %vm432, %v2350, 0.0
        %v2372 = vsel %vm433, %v2349, 0.0
        %v2373 = vsel %vm432, %v2348, 0.0
        %v2374 = vsel %vm433, %v2347, 0.0
        %v2375 = vsel %vm432, %v2346, 0.0
        %v2376 = vsel %vm433, %v2345, 0.0
        %v2377 = vsel %vm432, %v2344, 0.0
        %v2378 = vsel %vm433, %v2343, 0.0
        %v2379 = vsel %vm432, %v2342, 0.0
        %v2380 = vsel %vm433, %v2341, 0.0
        %v2381 = vsel %vm432, %v2340, 0.0
        %v2382 = vsel %vm433, %v2339, 0.0
        %v2383 = vsel %vm432, %v2338, 0.0
        %v2384 = vsel %vm433, %v2337, 0.0
        %v2385 = vsel %vm432, %v2336, 0.0
        %v2386 = vsel %vm433, %v2335, 0.0
        %v2387 = vsel %vm432, %v2334, 0.0
        %v2388 = vsel %vm433, %v2333, 0.0
        %v2389 = vsel %vm432, %v2332, 0.0
        %v2390 = vsel %vm433, %v2331, 0.0
        %v2391 = vsel %vm432, %v2330, 0.0
        %v2392 = vsel %vm433, %v2329, 0.0
        %v2393 = vrot.slane %v2265, 1
        %v2394 = vrot.slane %v2266, 1
        %v2395 = vrot.slane %v2267, 1
        %v2396 = vrot.slane %v2268, 1
        %v2397 = vrot.slane %v2269, 1
        %v2398 = vrot.slane %v2270, 1
        %v2399 = vrot.slane %v2271, 1
        %v2400 = vrot.slane %v2272, 1
        %v2401 = vrot.slane %v2273, 1
        %v2402 = vrot.slane %v2274, 1
        %v2403 = vrot.slane %v2275, 1
        %v2404 = vrot.slane %v2276, 1
        %v2405 = vrot.slane %v2277, 1
        %v2406 = vrot.slane %v2278, 1
        %v2407 = vrot.slane %v2279, 1
        %v2408 = vrot.slane %v2280, 1
        %v2409 = vrot.slane %v2281, 1
        %v2410 = vrot.slane %v2282, 1
        %v2411 = vrot.slane %v2283, 1
        %v2412 = vrot.slane %v2284, 1
        %v2413 = vrot.slane %v2285, 1
        %v2414 = vrot.slane %v2286, 1
        %v2415 = vrot.slane %v2287, 1
        %v2416 = vrot.slane %v2288, 1
        %v2417 = vrot.slane %v2289, 1
        %v2418 = vrot.slane %v2290, 1
        %v2419 = vrot.slane %v2291, 1
        %v2420 = vrot.slane %v2292, 1
        %v2421 = vrot.slane %v2293, 1
        %v2422 = vrot.slane %v2294, 1
        %v2423 = vrot.slane %v2295, 1
        %v2424 = vrot.slane %v2296, 1
        %v2425 = vsel %vm565, %v2423, %v2424
        %v2426 = vsel %vm565, %v2422, %v2423
        %v2427 = vsel %vm565, %v2421, %v2422
        %v2428 = vsel %vm565, %v2420, %v2421
        %v2429 = vsel %vm565, %v2419, %v2420
        %v2430 = vsel %vm565, %v2418, %v2419
        %v2431 = vsel %vm565, %v2417, %v2418
        %v2432 = vsel %vm565, %v2416, %v2417
        %v2433 = vsel %vm565, %v2415, %v2416
        %v2434 = vsel %vm565, %v2414, %v2415
        %v2435 = vsel %vm565, %v2413, %v2414
        %v2436 = vsel %vm565, %v2412, %v2413
        %v2437 = vsel %vm565, %v2411, %v2412
        %v2438 = vsel %vm565, %v2410, %v2411
        %v2439 = vsel %vm565, %v2409, %v2410
        %v2440 = vsel %vm565, %v2408, %v2409
        %v2441 = vsel %vm565, %v2407, %v2408
        %v2442 = vsel %vm565, %v2406, %v2407
        %v2443 = vsel %vm565, %v2405, %v2406
        %v2444 = vsel %vm565, %v2404, %v2405
        %v2445 = vsel %vm565, %v2403, %v2404
        %v2446 = vsel %vm565, %v2402, %v2403
        %v2447 = vsel %vm565, %v2401, %v2402
        %v2448 = vsel %vm565, %v2400, %v2401
        %v2449 = vsel %vm565, %v2399, %v2400
        %v2450 = vsel %vm565, %v2398, %v2399
        %v2451 = vsel %vm565, %v2397, %v2398
        %v2452 = vsel %vm565, %v2396, %v2397
        %v2453 = vsel %vm565, %v2395, %v2396
        %v2454 = vsel %vm565, %v2394, %v2395
        %v2455 = vsel %vm565, %v2393, %v2394
        %v2456 = vsel %vm565, %v2424, %v2393
        %v2457 = vsel %vm531, %v2455, 0.0
        %v2458 = vsel %vm532, %v2454, 0.0
        %v2459 = vsel %vm531, %v2453, 0.0
        %v2460 = vsel %vm532, %v2452, 0.0
        %v2461 = vsel %vm531, %v2451, 0.0
        %v2462 = vsel %vm532, %v2450, 0.0
        %v2463 = vsel %vm531, %v2449, 0.0
        %v2464 = vsel %vm532, %v2448, 0.0
        %v2465 = vsel %vm531, %v2447, 0.0
        %v2466 = vsel %vm532, %v2446, 0.0
        %v2467 = vsel %vm531, %v2445, 0.0
        %v2468 = vsel %vm532, %v2444, 0.0
        %v2469 = vsel %vm531, %v2443, 0.0
        %v2470 = vsel %vm532, %v2442, 0.0
        %v2471 = vsel %vm531, %v2441, 0.0
        %v2472 = vsel %vm532, %v2440, 0.0
        %v2473 = vsel %vm531, %v2439, 0.0
        %v2474 = vsel %vm532, %v2438, 0.0
        %v2475 = vsel %vm531, %v2437, 0.0
        %v2476 = vsel %vm532, %v2436, 0.0
        %v2477 = vsel %vm531, %v2435, 0.0
        %v2478 = vsel %vm532, %v2434, 0.0
        %v2479 = vsel %vm531, %v2433, 0.0
        %v2480 = vsel %vm532, %v2432, 0.0
        %v2481 = vsel %vm531, %v2431, 0.0
        %v2482 = vsel %vm532, %v2430, 0.0
        %v2483 = vsel %vm531, %v2429, 0.0
        %v2484 = vsel %vm532, %v2428, 0.0
        %v2485 = vsel %vm531, %v2427, 0.0
        %v2486 = vsel %vm532, %v2426, 0.0
        %v2487 = vsel %vm531, %v2425, 0.0
        %v2488 = vsel %vm532, %v2456, 0.0
        %v2489 = vpack.c.bf16 %v2362, %v2361
        %v2490 = vpack.c.bf16 %v2364, %v2363
        %v2491 = vpack.c.bf16 %v2366, %v2365
        %v2492 = vpack.c.bf16 %v2368, %v2367
        %v2493 = vpack.c.bf16 %v2370, %v2369
        %v2494 = vpack.c.bf16 %v2372, %v2371
        %v2495 = vpack.c.bf16 %v2374, %v2373
        %v2496 = vpack.c.bf16 %v2376, %v2375
        %v2497 = vpack.c.bf16 %v2378, %v2377
        %v2498 = vpack.c.bf16 %v2380, %v2379
        %v2499 = vpack.c.bf16 %v2382, %v2381
        %v2500 = vpack.c.bf16 %v2384, %v2383
        %v2501 = vpack.c.bf16 %v2386, %v2385
        %v2502 = vpack.c.bf16 %v2388, %v2387
        %v2503 = vpack.c.bf16 %v2390, %v2389
        %v2504 = vpack.c.bf16 %v2392, %v2391
        %v2505 = vpack.c.bf16 %v2458, %v2457
        %v2506 = vpack.c.bf16 %v2460, %v2459
        %v2507 = vpack.c.bf16 %v2462, %v2461
        %v2508 = vpack.c.bf16 %v2464, %v2463
        %v2509 = vpack.c.bf16 %v2466, %v2465
        %v2510 = vpack.c.bf16 %v2468, %v2467
        %v2511 = vpack.c.bf16 %v2470, %v2469
        %v2512 = vpack.c.bf16 %v2472, %v2471
        %v2513 = vpack.c.bf16 %v2474, %v2473
        %v2514 = vpack.c.bf16 %v2476, %v2475
        %v2515 = vpack.c.bf16 %v2478, %v2477
        %v2516 = vpack.c.bf16 %v2480, %v2479
        %v2517 = vpack.c.bf16 %v2482, %v2481
        %v2518 = vpack.c.bf16 %v2484, %v2483
        %v2519 = vpack.c.bf16 %v2486, %v2485
        %v2520 = vpack.c.bf16 %v2488, %v2487
        %s2521 = scalar_lea.vmem [#allocation4], 576
        %v2522 = vld [vmem:[%s2521] sm:$0xf]
        %v2523 = vld [vmem:[%s2521 + $0x4] sm:$0xf]
        %v2524 = vld [vmem:[%s2521 + $0x8] sm:$0xf]
        %v2525 = vld [vmem:[%s2521 + $0xc] sm:$0xf]
        %v2526 = vld [vmem:[%s2521 + $0x10] sm:$0xf]
        %v2527 = vld [vmem:[%s2521 + $0x14] sm:$0xf]
        %v2528 = vld [vmem:[%s2521 + $0x18] sm:$0xf]
        %v2529 = vld [vmem:[%s2521 + $0x1c] sm:$0xf]
        %v2530 = vld [vmem:[%s2521 + $0x20] sm:$0xf]
        %v2531 = vld [vmem:[%s2521 + $0x24] sm:$0xf]
        %v2532 = vld [vmem:[%s2521 + $0x28] sm:$0xf]
        %v2533 = vld [vmem:[%s2521 + $0x2c] sm:$0xf]
        %v2534 = vld [vmem:[%s2521 + $0x30] sm:$0xf]
        %v2535 = vld [vmem:[%s2521 + $0x34] sm:$0xf]
        %v2536 = vld [vmem:[%s2521 + $0x38] sm:$0xf]
        %v2537 = vld [vmem:[%s2521 + $0x3c] sm:$0xf]
        %v2538 = vld [vmem:[%s2521 + $0x40] sm:$0xf]
        %v2539 = vld [vmem:[%s2521 + $0x44] sm:$0xf]
        %v2540 = vld [vmem:[%s2521 + $0x48] sm:$0xf]
        %v2541 = vld [vmem:[%s2521 + $0x4c] sm:$0xf]
        %v2542 = vld [vmem:[%s2521 + $0x50] sm:$0xf]
        %v2543 = vld [vmem:[%s2521 + $0x54] sm:$0xf]
        %v2544 = vld [vmem:[%s2521 + $0x58] sm:$0xf]
        %v2545 = vld [vmem:[%s2521 + $0x5c] sm:$0xf]
        %v2546 = vld [vmem:[%s2521 + $0x60] sm:$0xf]
        %v2547 = vld [vmem:[%s2521 + $0x64] sm:$0xf]
        %v2548 = vld [vmem:[%s2521 + $0x68] sm:$0xf]
        %v2549 = vld [vmem:[%s2521 + $0x6c] sm:$0xf]
        %v2550 = vld [vmem:[%s2521 + $0x70] sm:$0xf]
        %v2551 = vld [vmem:[%s2521 + $0x74] sm:$0xf]
        %v2552 = vld [vmem:[%s2521 + $0x78] sm:$0xf]
        %v2553 = vld [vmem:[%s2521 + $0x7c] sm:$0xf]
        %v2554 = vld [vmem:[%s2521 + $0x80] sm:$0xf]
        %v2555 = vld [vmem:[%s2521 + $0x84] sm:$0xf]
        %v2556 = vld [vmem:[%s2521 + $0x88] sm:$0xf]
        %v2557 = vld [vmem:[%s2521 + $0x8c] sm:$0xf]
        %v2558 = vld [vmem:[%s2521 + $0x90] sm:$0xf]
        %v2559 = vld [vmem:[%s2521 + $0x94] sm:$0xf]
        %v2560 = vld [vmem:[%s2521 + $0x98] sm:$0xf]
        %v2561 = vld [vmem:[%s2521 + $0x9c] sm:$0xf]
        %v2562 = vld [vmem:[%s2521 + $0xa0] sm:$0xf]
        %v2563 = vld [vmem:[%s2521 + $0xa4] sm:$0xf]
        %v2564 = vld [vmem:[%s2521 + $0xa8] sm:$0xf]
        %v2565 = vld [vmem:[%s2521 + $0xac] sm:$0xf]
        %v2566 = vld [vmem:[%s2521 + $0xb0] sm:$0xf]
        %v2567 = vld [vmem:[%s2521 + $0xb4] sm:$0xf]
        %v2568 = vld [vmem:[%s2521 + $0xb8] sm:$0xf]
        %v2569 = vld [vmem:[%s2521 + $0xbc] sm:$0xf]
        %v2570 = vld [vmem:[%s2521 + $0xc0] sm:$0xf]
        %v2571 = vld [vmem:[%s2521 + $0xc4] sm:$0xf]
        %v2572 = vld [vmem:[%s2521 + $0xc8] sm:$0xf]
        %v2573 = vld [vmem:[%s2521 + $0xcc] sm:$0xf]
        %v2574 = vld [vmem:[%s2521 + $0xd0] sm:$0xf]
        %v2575 = vld [vmem:[%s2521 + $0xd4] sm:$0xf]
        %v2576 = vld [vmem:[%s2521 + $0xd8] sm:$0xf]
        %v2577 = vld [vmem:[%s2521 + $0xdc] sm:$0xf]
        %v2578 = vld [vmem:[%s2521 + $0xe0] sm:$0xf]
        %v2579 = vld [vmem:[%s2521 + $0xe4] sm:$0xf]
        %v2580 = vld [vmem:[%s2521 + $0xe8] sm:$0xf]
        %v2581 = vld [vmem:[%s2521 + $0xec] sm:$0xf]
        %v2582 = vld [vmem:[%s2521 + $0xf0] sm:$0xf]
        %v2583 = vld [vmem:[%s2521 + $0xf4] sm:$0xf]
        %v2584 = vld [vmem:[%s2521 + $0xf8] sm:$0xf]
        %v2585 = vld [vmem:[%s2521 + $0xfc] sm:$0xf]
        %v2586 = vld [vmem:[%s2521 + $0x100] sm:$0xf]
        %v2587 = vld [vmem:[%s2521 + $0x104] sm:$0xf]
        %v2588 = vld [vmem:[%s2521 + $0x108] sm:$0xf]
        %v2589 = vld [vmem:[%s2521 + $0x10c] sm:$0xf]
        %v2590 = vld [vmem:[%s2521 + $0x110] sm:$0xf]
        %v2591 = vld [vmem:[%s2521 + $0x114] sm:$0xf]
        %v2592 = vld [vmem:[%s2521 + $0x118] sm:$0xf]
        %v2593 = vld [vmem:[%s2521 + $0x11c] sm:$0xf]
        %v2594 = vld [vmem:[%s2521 + $0x120] sm:$0xf]
        %v2595 = vld [vmem:[%s2521 + $0x124] sm:$0xf]
        %v2596 = vld [vmem:[%s2521 + $0x128] sm:$0xf]
        %v2597 = vld [vmem:[%s2521 + $0x12c] sm:$0xf]
        %v2598 = vld [vmem:[%s2521 + $0x130] sm:$0xf]
        %v2599 = vld [vmem:[%s2521 + $0x134] sm:$0xf]
        %v2600 = vld [vmem:[%s2521 + $0x138] sm:$0xf]
        %v2601 = vld [vmem:[%s2521 + $0x13c] sm:$0xf]
        %v2602 = vld [vmem:[%s2521 + $0x140] sm:$0xf]
        %v2603 = vld [vmem:[%s2521 + $0x144] sm:$0xf]
        %v2604 = vld [vmem:[%s2521 + $0x148] sm:$0xf]
        %v2605 = vld [vmem:[%s2521 + $0x14c] sm:$0xf]
        %v2606 = vld [vmem:[%s2521 + $0x150] sm:$0xf]
        %v2607 = vld [vmem:[%s2521 + $0x154] sm:$0xf]
        %v2608 = vld [vmem:[%s2521 + $0x158] sm:$0xf]
        %v2609 = vld [vmem:[%s2521 + $0x15c] sm:$0xf]
        %v2610 = vld [vmem:[%s2521 + $0x160] sm:$0xf]
        %v2611 = vld [vmem:[%s2521 + $0x164] sm:$0xf]
        %v2612 = vld [vmem:[%s2521 + $0x168] sm:$0xf]
        %v2613 = vld [vmem:[%s2521 + $0x16c] sm:$0xf]
        %v2614 = vld [vmem:[%s2521 + $0x170] sm:$0xf]
        %v2615 = vld [vmem:[%s2521 + $0x174] sm:$0xf]
        %v2616 = vld [vmem:[%s2521 + $0x178] sm:$0xf]
        %v2617 = vld [vmem:[%s2521 + $0x17c] sm:$0xf]
        %v2618 = vld [vmem:[%s2521 + $0x180] sm:$0xf]
        %v2619 = vld [vmem:[%s2521 + $0x184] sm:$0xf]
        %v2620 = vld [vmem:[%s2521 + $0x188] sm:$0xf]
        %v2621 = vld [vmem:[%s2521 + $0x18c] sm:$0xf]
        %v2622 = vld [vmem:[%s2521 + $0x190] sm:$0xf]
        %v2623 = vld [vmem:[%s2521 + $0x194] sm:$0xf]
        %v2624 = vld [vmem:[%s2521 + $0x198] sm:$0xf]
        %v2625 = vld [vmem:[%s2521 + $0x19c] sm:$0xf]
        %v2626 = vld [vmem:[%s2521 + $0x1a0] sm:$0xf]
        %v2627 = vld [vmem:[%s2521 + $0x1a4] sm:$0xf]
        %v2628 = vld [vmem:[%s2521 + $0x1a8] sm:$0xf]
        %v2629 = vld [vmem:[%s2521 + $0x1ac] sm:$0xf]
        %v2630 = vld [vmem:[%s2521 + $0x1b0] sm:$0xf]
        %v2631 = vld [vmem:[%s2521 + $0x1b4] sm:$0xf]
        %v2632 = vld [vmem:[%s2521 + $0x1b8] sm:$0xf]
        %v2633 = vld [vmem:[%s2521 + $0x1bc] sm:$0xf]
        %v2634 = vld [vmem:[%s2521 + $0x1c0] sm:$0xf]
        %v2635 = vld [vmem:[%s2521 + $0x1c4] sm:$0xf]
        %v2636 = vld [vmem:[%s2521 + $0x1c8] sm:$0xf]
        %v2637 = vld [vmem:[%s2521 + $0x1cc] sm:$0xf]
        %v2638 = vld [vmem:[%s2521 + $0x1d0] sm:$0xf]
        %v2639 = vld [vmem:[%s2521 + $0x1d4] sm:$0xf]
        %v2640 = vld [vmem:[%s2521 + $0x1d8] sm:$0xf]
        %v2641 = vld [vmem:[%s2521 + $0x1dc] sm:$0xf]
        %v2642 = vld [vmem:[%s2521 + $0x1e0] sm:$0xf]
        %v2643 = vld [vmem:[%s2521 + $0x1e4] sm:$0xf]
        %v2644 = vld [vmem:[%s2521 + $0x1e8] sm:$0xf]
        %v2645 = vld [vmem:[%s2521 + $0x1ec] sm:$0xf]
        %v2646 = vld [vmem:[%s2521 + $0x1f0] sm:$0xf]
        %v2647 = vld [vmem:[%s2521 + $0x1f4] sm:$0xf]
        %v2648 = vld [vmem:[%s2521 + $0x1f8] sm:$0xf]
        %v2649 = vld [vmem:[%s2521 + $0x1fc] sm:$0xf]
        %v2650 = vld [vmem:[%s2521 + $0x200] sm:$0xf]
        %v2651 = vld [vmem:[%s2521 + $0x204] sm:$0xf]
        %v2652 = vld [vmem:[%s2521 + $0x208] sm:$0xf]
        %v2653 = vld [vmem:[%s2521 + $0x20c] sm:$0xf]
        %v2654 = vld [vmem:[%s2521 + $0x210] sm:$0xf]
        %v2655 = vld [vmem:[%s2521 + $0x214] sm:$0xf]
        %v2656 = vld [vmem:[%s2521 + $0x218] sm:$0xf]
        %v2657 = vld [vmem:[%s2521 + $0x21c] sm:$0xf]
        %v2658 = vld [vmem:[%s2521 + $0x220] sm:$0xf]
        %v2659 = vld [vmem:[%s2521 + $0x224] sm:$0xf]
        %v2660 = vld [vmem:[%s2521 + $0x228] sm:$0xf]
        %v2661 = vld [vmem:[%s2521 + $0x22c] sm:$0xf]
        %v2662 = vld [vmem:[%s2521 + $0x230] sm:$0xf]
        %v2663 = vld [vmem:[%s2521 + $0x234] sm:$0xf]
        %v2664 = vld [vmem:[%s2521 + $0x238] sm:$0xf]
        %v2665 = vld [vmem:[%s2521 + $0x23c] sm:$0xf]
        %v2810 = vunpack.c.l.b16 %v2522
        %v2811 = vunpack.c.l.b16 %v2523
        %v2812 = vunpack.c.l.b16 %v2524
        %v2813 = vunpack.c.l.b16 %v2525
        %v2814 = vunpack.c.l.b16 %v2526
        %v2815 = vunpack.c.l.b16 %v2527
        %v2816 = vunpack.c.l.b16 %v2528
        %v2817 = vunpack.c.l.b16 %v2529
        %v2818 = vunpack.c.l.b16 %v2530
        %v2819 = vunpack.c.l.b16 %v2531
        %v2820 = vunpack.c.l.b16 %v2532
        %v2821 = vunpack.c.l.b16 %v2533
        %v2822 = vunpack.c.l.b16 %v2534
        %v2823 = vunpack.c.l.b16 %v2535
        %v2824 = vunpack.c.l.b16 %v2536
        %v2825 = vunpack.c.l.b16 %v2537
        %v2826 = vunpack.c.l.b16 %v2538
        %v2827 = vunpack.c.l.b16 %v2539
        %v2828 = vunpack.c.l.b16 %v2540
        %v2829 = vunpack.c.l.b16 %v2541
        %v2830 = vunpack.c.l.b16 %v2542
        %v2831 = vunpack.c.l.b16 %v2543
        %v2832 = vunpack.c.l.b16 %v2544
        %v2833 = vunpack.c.l.b16 %v2545
        %v2834 = vunpack.c.l.b16 %v2546
        %v2835 = vunpack.c.l.b16 %v2547
        %v2836 = vunpack.c.l.b16 %v2548
        %v2837 = vunpack.c.l.b16 %v2549
        %v2838 = vunpack.c.l.b16 %v2550
        %v2839 = vunpack.c.l.b16 %v2551
        %v2840 = vunpack.c.l.b16 %v2552
        %v2841 = vunpack.c.l.b16 %v2553
        %v2842 = vunpack.c.l.b16 %v2554
        %v2843 = vunpack.c.l.b16 %v2555
        %v2844 = vunpack.c.l.b16 %v2556
        %v2845 = vunpack.c.l.b16 %v2557
        %v2846 = vunpack.c.l.b16 %v2558
        %v2847 = vunpack.c.l.b16 %v2559
        %v2848 = vunpack.c.l.b16 %v2560
        %v2849 = vunpack.c.l.b16 %v2561
        %v2850 = vunpack.c.l.b16 %v2562
        %v2851 = vunpack.c.l.b16 %v2563
        %v2852 = vunpack.c.l.b16 %v2564
        %v2853 = vunpack.c.l.b16 %v2565
        %v2854 = vunpack.c.l.b16 %v2566
        %v2855 = vunpack.c.l.b16 %v2567
        %v2856 = vunpack.c.l.b16 %v2568
        %v2857 = vunpack.c.l.b16 %v2569
        %v2858 = vunpack.c.l.b16 %v2570
        %v2859 = vunpack.c.l.b16 %v2571
        %v2860 = vunpack.c.l.b16 %v2572
        %v2861 = vunpack.c.l.b16 %v2573
        %v2862 = vunpack.c.l.b16 %v2574
        %v2863 = vunpack.c.l.b16 %v2575
        %v2864 = vunpack.c.l.b16 %v2576
        %v2865 = vunpack.c.l.b16 %v2577
        %v2866 = vunpack.c.l.b16 %v2578
        %v2867 = vunpack.c.l.b16 %v2579
        %v2868 = vunpack.c.l.b16 %v2580
        %v2869 = vunpack.c.l.b16 %v2581
        %v2870 = vunpack.c.l.b16 %v2582
        %v2871 = vunpack.c.l.b16 %v2583
        %v2872 = vunpack.c.l.b16 %v2584
        %v2873 = vunpack.c.l.b16 %v2585
        %v2874 = vunpack.c.l.b16 %v2586
        %v2875 = vunpack.c.l.b16 %v2587
        %v2876 = vunpack.c.l.b16 %v2588
        %v2877 = vunpack.c.l.b16 %v2589
        %v2878 = vunpack.c.l.b16 %v2590
        %v2879 = vunpack.c.l.b16 %v2591
        %v2880 = vunpack.c.l.b16 %v2592
        %v2881 = vunpack.c.l.b16 %v2593
        %v2882 = vunpack.c.l.b16 %v2594
        %v2883 = vunpack.c.l.b16 %v2595
        %v2884 = vunpack.c.l.b16 %v2596
        %v2885 = vunpack.c.l.b16 %v2597
        %v2886 = vunpack.c.l.b16 %v2598
        %v2887 = vunpack.c.l.b16 %v2599
        %v2888 = vunpack.c.l.b16 %v2600
        %v2889 = vunpack.c.l.b16 %v2601
        %v2890 = vunpack.c.l.b16 %v2602
        %v2891 = vunpack.c.l.b16 %v2603
        %v2892 = vunpack.c.l.b16 %v2604
        %v2893 = vunpack.c.l.b16 %v2605
        %v2894 = vunpack.c.l.b16 %v2606
        %v2895 = vunpack.c.l.b16 %v2607
        %v2896 = vunpack.c.l.b16 %v2608
        %v2897 = vunpack.c.l.b16 %v2609
        %v2898 = vunpack.c.l.b16 %v2610
        %v2899 = vunpack.c.l.b16 %v2611
        %v2900 = vunpack.c.l.b16 %v2612
        %v2901 = vunpack.c.l.b16 %v2613
        %v2902 = vunpack.c.l.b16 %v2614
        %v2903 = vunpack.c.l.b16 %v2615
        %v2904 = vunpack.c.l.b16 %v2616
        %v2905 = vunpack.c.l.b16 %v2617
        %v2906 = vunpack.c.l.b16 %v2618
        %v2907 = vunpack.c.l.b16 %v2619
        %v2908 = vunpack.c.l.b16 %v2620
        %v2909 = vunpack.c.l.b16 %v2621
        %v2910 = vunpack.c.l.b16 %v2622
        %v2911 = vunpack.c.l.b16 %v2623
        %v2912 = vunpack.c.l.b16 %v2624
        %v2913 = vunpack.c.l.b16 %v2625
        %v2914 = vunpack.c.l.b16 %v2626
        %v2915 = vunpack.c.l.b16 %v2627
        %v2916 = vunpack.c.l.b16 %v2628
        %v2917 = vunpack.c.l.b16 %v2629
        %v2918 = vunpack.c.l.b16 %v2630
        %v2919 = vunpack.c.l.b16 %v2631
        %v2920 = vunpack.c.l.b16 %v2632
        %v2921 = vunpack.c.l.b16 %v2633
        %v2922 = vunpack.c.l.b16 %v2634
        %v2923 = vunpack.c.l.b16 %v2635
        %v2924 = vunpack.c.l.b16 %v2636
        %v2925 = vunpack.c.l.b16 %v2637
        %v2926 = vunpack.c.l.b16 %v2638
        %v2927 = vunpack.c.l.b16 %v2639
        %v2928 = vunpack.c.l.b16 %v2640
        %v2929 = vunpack.c.l.b16 %v2641
        %v2930 = vunpack.c.l.b16 %v2642
        %v2931 = vunpack.c.l.b16 %v2643
        %v2932 = vunpack.c.l.b16 %v2644
        %v2933 = vunpack.c.l.b16 %v2645
        %v2934 = vunpack.c.l.b16 %v2646
        %v2935 = vunpack.c.l.b16 %v2647
        %v2936 = vunpack.c.l.b16 %v2648
        %v2937 = vunpack.c.l.b16 %v2649
        %v2938 = vunpack.c.l.b16 %v2650
        %v2939 = vunpack.c.l.b16 %v2651
        %v2940 = vunpack.c.l.b16 %v2652
        %v2941 = vunpack.c.l.b16 %v2653
        %v2942 = vunpack.c.l.b16 %v2654
        %v2943 = vunpack.c.l.b16 %v2655
        %v2944 = vunpack.c.l.b16 %v2656
        %v2945 = vunpack.c.l.b16 %v2657
        %v2946 = vunpack.c.l.b16 %v2658
        %v2947 = vunpack.c.l.b16 %v2659
        %v2948 = vunpack.c.l.b16 %v2660
        %v2949 = vunpack.c.l.b16 %v2661
        %v2950 = vunpack.c.l.b16 %v2662
        %v2951 = vunpack.c.l.b16 %v2663
        %v2952 = vunpack.c.l.b16 %v2664
        %v2953 = vunpack.c.l.b16 %v2665
        %v2954 = vpack.c.b16 %v2811, %v2810
        %v2955 = vpack.c.b16 %v2813, %v2812
        %v2956 = vpack.c.b16 %v2815, %v2814
        %v2957 = vpack.c.b16 %v2817, %v2816
        %v2958 = vpack.c.b16 %v2819, %v2818
        %v2959 = vpack.c.b16 %v2821, %v2820
        %v2960 = vpack.c.b16 %v2823, %v2822
        %v2961 = vpack.c.b16 %v2825, %v2824
        %v2962 = vpack.c.b16 %v2827, %v2826
        %v2963 = vpack.c.b16 %v2829, %v2828
        %v2964 = vpack.c.b16 %v2831, %v2830
        %v2965 = vpack.c.b16 %v2833, %v2832
        %v2966 = vpack.c.b16 %v2835, %v2834
        %v2967 = vpack.c.b16 %v2837, %v2836
        %v2968 = vpack.c.b16 %v2839, %v2838
        %v2969 = vpack.c.b16 %v2841, %v2840
        %v2970 = vpack.c.b16 %v2843, %v2842
        %v2971 = vpack.c.b16 %v2845, %v2844
        %v2972 = vpack.c.b16 %v2847, %v2846
        %v2973 = vpack.c.b16 %v2849, %v2848
        %v2974 = vpack.c.b16 %v2851, %v2850
        %v2975 = vpack.c.b16 %v2853, %v2852
        %v2976 = vpack.c.b16 %v2855, %v2854
        %v2977 = vpack.c.b16 %v2857, %v2856
        %v2978 = vpack.c.b16 %v2859, %v2858
        %v2979 = vpack.c.b16 %v2861, %v2860
        %v2980 = vpack.c.b16 %v2863, %v2862
        %v2981 = vpack.c.b16 %v2865, %v2864
        %v2982 = vpack.c.b16 %v2867, %v2866
        %v2983 = vpack.c.b16 %v2869, %v2868
        %v2984 = vpack.c.b16 %v2871, %v2870
        %v2985 = vpack.c.b16 %v2873, %v2872
        %v2986 = vpack.c.b16 %v2875, %v2874
        %v2987 = vpack.c.b16 %v2877, %v2876
        %v2988 = vpack.c.b16 %v2879, %v2878
        %v2989 = vpack.c.b16 %v2881, %v2880
        %v2990 = vpack.c.b16 %v2883, %v2882
        %v2991 = vpack.c.b16 %v2885, %v2884
        %v2992 = vpack.c.b16 %v2887, %v2886
        %v2993 = vpack.c.b16 %v2889, %v2888
        %v2994 = vpack.c.b16 %v2891, %v2890
        %v2995 = vpack.c.b16 %v2893, %v2892
        %v2996 = vpack.c.b16 %v2895, %v2894
        %v2997 = vpack.c.b16 %v2897, %v2896
        %v2998 = vpack.c.b16 %v2899, %v2898
        %v2999 = vpack.c.b16 %v2901, %v2900
        %v3000 = vpack.c.b16 %v2903, %v2902
        %v3001 = vpack.c.b16 %v2905, %v2904
        %v3002 = vpack.c.b16 %v2907, %v2906
        %v3003 = vpack.c.b16 %v2909, %v2908
        %v3004 = vpack.c.b16 %v2911, %v2910
        %v3005 = vpack.c.b16 %v2913, %v2912
        %v3006 = vpack.c.b16 %v2915, %v2914
        %v3007 = vpack.c.b16 %v2917, %v2916
        %v3008 = vpack.c.b16 %v2919, %v2918
        %v3009 = vpack.c.b16 %v2921, %v2920
        %v3010 = vpack.c.b16 %v2923, %v2922
        %v3011 = vpack.c.b16 %v2925, %v2924
        %v3012 = vpack.c.b16 %v2927, %v2926
        %v3013 = vpack.c.b16 %v2929, %v2928
        %v3014 = vpack.c.b16 %v2931, %v2930
        %v3015 = vpack.c.b16 %v2933, %v2932
        %v3016 = vpack.c.b16 %v2935, %v2934
        %v3017 = vpack.c.b16 %v2937, %v2936
        %v3018 = vpack.c.b16 %v2939, %v2938
        %v3019 = vpack.c.b16 %v2941, %v2940
        %v3020 = vpack.c.b16 %v2943, %v2942
        %v3021 = vpack.c.b16 %v2945, %v2944
        %v3022 = vpack.c.b16 %v2947, %v2946
        %v3023 = vpack.c.b16 %v2949, %v2948
        %v3024 = vpack.c.b16 %v2951, %v2950
        %v3025 = vpack.c.b16 %v2953, %v2952
        %3098 = vmatprep.subr.bf16.mxu0 0
        %3099 = vmatpush1.bf16.msra.mxu0 %v2954
        %3100 = vmatprep.subr.bf16.mxu0 0
        %3101 = vmatpush1.bf16.msra.mxu0 %v2955
        %3102 = vmatprep.subr.bf16.mxu0 0
        %3103 = vmatpush1.bf16.msra.mxu0 %v2956
        %3104 = vmatprep.subr.bf16.mxu0 0
        %3105 = vmatpush1.bf16.msra.mxu0 %v2957
        %3106 = vmatprep.subr.bf16.mxu0 0
        %3107 = vmatpush1.bf16.msra.mxu0 %v2958
        %3108 = vmatprep.subr.bf16.mxu0 0
        %3109 = vmatpush1.bf16.msra.mxu0 %v2959
        %3110 = vmatprep.subr.bf16.mxu0 0
        %3111 = vmatpush1.bf16.msra.mxu0 %v2960
        %3112 = vmatprep.subr.bf16.mxu0 0
        %3113 = vmatpush1.bf16.msra.mxu0 %v2961
        %3114 = vmatprep.subr.bf16.mxu0 0
        %3115 = vmatpush1.bf16.msra.mxu0 %v2962
        %3116 = vmatprep.subr.bf16.mxu0 0
        %3117 = vmatpush1.bf16.msra.mxu0 %v2963
        %3118 = vmatprep.subr.bf16.mxu0 0
        %3119 = vmatpush1.bf16.msra.mxu0 %v2964
        %3120 = vmatprep.subr.bf16.mxu0 0
        %3121 = vmatpush1.bf16.msra.mxu0 %v2965
        %3122 = vmatprep.subr.bf16.mxu0 0
        %3123 = vmatpush1.bf16.msra.mxu0 %v2966
        %3124 = vmatprep.subr.bf16.mxu0 0
        %3125 = vmatpush1.bf16.msra.mxu0 %v2967
        %3126 = vmatprep.subr.bf16.mxu0 0
        %3127 = vmatpush1.bf16.msra.mxu0 %v2968
        %3128 = vmatprep.subr.bf16.mxu0 0
        %3129 = vmatpush1.bf16.msra.mxu0 %v2969
        %3130 = vmatprep.mubr.bf16.mxu0 0
        %3131 = vmatmul.mubr.bf16.gmra.mrb[0].mxu0 0
        %v3132 = vpop.f32.mrb[0].mxu0
        %v3133 = vadd.f32 0.0, %v3132
        %v3134 = vpop.f32.mrb[0].mxu0
        %v3135 = vpop.f32.mrb[0].mxu0
        %v3136 = vadd.f32 0.0, %v3135
        %v3137 = vpop.f32.mrb[0].mxu0
        %3138 = vmatprep.mubr.bf16.mxu0 %v2249
        %3139 = vmatmul.mubr.bf16.gmra.mrb[0].mxu0 %v2489
        %v3140 = vpop.f32.mrb[0].mxu0
        %v3141 = vadd.f32 0.0, %v3140
        %v3142 = vpop.f32.mrb[0].mxu0
        %v3143 = vpop.f32.mrb[0].mxu0
        %v3144 = vadd.f32 0.0, %v3143
        %v3145 = vpop.f32.mrb[0].mxu0
        %3146 = vmatprep.mubr.bf16.mxu0 %v2250
        %3147 = vmatmul.mubr.bf16.gmra.mrb[0].mxu0 %v2490
        %v3148 = vpop.f32.mrb[0].mxu0
        %v3149 = vadd.f32 0.0, %v3148
        %v3150 = vpop.f32.mrb[0].mxu0
        %v3151 = vpop.f32.mrb[0].mxu0
        %v3152 = vadd.f32 0.0, %v3151
        %v3153 = vpop.f32.mrb[0].mxu0
        %3154 = vmatprep.mubr.bf16.mxu0 %v2251
        %3155 = vmatmul.mubr.bf16.gmra.mrb[0].mxu0 %v2491
        %v3156 = vpop.f32.mrb[0].mxu0
        %v3157 = vadd.f32 0.0, %v3156
        %v3158 = vpop.f32.mrb[0].mxu0
        %v3159 = vpop.f32.mrb[0].mxu0
        %v3160 = vadd.f32 0.0, %v3159
        %v3161 = vpop.f32.mrb[0].mxu0
        %3162 = vmatprep.mubr.bf16.mxu0 %v2252
        %3163 = vmatmul.mubr.bf16.gmra.mrb[0].mxu0 %v2492
        %v3164 = vpop.f32.mrb[0].mxu0
        %v3165 = vadd.f32 0.0, %v3164
        %v3166 = vpop.f32.mrb[0].mxu0
        %v3167 = vpop.f32.mrb[0].mxu0
        %v3168 = vadd.f32 0.0, %v3167
        %v3169 = vpop.f32.mrb[0].mxu0
        %3170 = vmatprep.mubr.bf16.mxu0 %v2253
        %3171 = vmatmul.mubr.bf16.gmra.mrb[0].mxu0 %v2493
        %v3172 = vpop.f32.mrb[0].mxu0
        %v3173 = vadd.f32 0.0, %v3172
        %v3174 = vpop.f32.mrb[0].mxu0
        %v3175 = vpop.f32.mrb[0].mxu0
        %v3176 = vadd.f32 0.0, %v3175
        %v3177 = vpop.f32.mrb[0].mxu0
        %3178 = vmatprep.mubr.bf16.mxu0 %v2254
        %3179 = vmatmul.mubr.bf16.gmra.mrb[0].mxu0 %v2494
        %v3180 = vpop.f32.mrb[0].mxu0
        %v3181 = vadd.f32 0.0, %v3180
        %v3182 = vpop.f32.mrb[0].mxu0
        %v3183 = vpop.f32.mrb[0].mxu0
        %v3184 = vadd.f32 0.0, %v3183
        %v3185 = vpop.f32.mrb[0].mxu0
        %3186 = vmatprep.mubr.bf16.mxu0 %v2255
        %3187 = vmatmul.mubr.bf16.gmra.mrb[0].mxu0 %v2495
        %v3188 = vpop.f32.mrb[0].mxu0
        %v3189 = vadd.f32 0.0, %v3188
        %v3190 = vpop.f32.mrb[0].mxu0
        %v3191 = vpop.f32.mrb[0].mxu0
        %v3192 = vadd.f32 0.0, %v3191
        %v3193 = vpop.f32.mrb[0].mxu0
        %3194 = vmatprep.mubr.bf16.mxu0 %v2256
        %3195 = vmatmul.mubr.bf16.gmra.mrb[0].mxu0 %v2496
        %v3196 = vpop.f32.mrb[0].mxu0
        %v3197 = vadd.f32 0.0, %v3196
        %v3198 = vpop.f32.mrb[0].mxu0
        %v3199 = vpop.f32.mrb[0].mxu0
        %v3200 = vadd.f32 0.0, %v3199
        %v3201 = vpop.f32.mrb[0].mxu0
        %3202 = vmatprep.mubr.bf16.mxu0 %v2257
        %3203 = vmatmul.mubr.bf16.gmra.mrb[0].mxu0 %v2497
        %v3204 = vpop.f32.mrb[0].mxu0
        %v3205 = vadd.f32 0.0, %v3204
        %v3206 = vpop.f32.mrb[0].mxu0
        %v3207 = vpop.f32.mrb[0].mxu0
        %v3208 = vadd.f32 0.0, %v3207
        %v3209 = vpop.f32.mrb[0].mxu0
        %3210 = vmatprep.mubr.bf16.mxu0 %v2258
        %3211 = vmatmul.mubr.bf16.gmra.mrb[0].mxu0 %v2498
        %v3212 = vpop.f32.mrb[0].mxu0
        %v3213 = vadd.f32 0.0, %v3212
        %v3214 = vpop.f32.mrb[0].mxu0
        %v3215 = vpop.f32.mrb[0].mxu0
        %v3216 = vadd.f32 0.0, %v3215
        %v3217 = vpop.f32.mrb[0].mxu0
        %3218 = vmatprep.mubr.bf16.mxu0 %v2259
        %3219 = vmatmul.mubr.bf16.gmra.mrb[0].mxu0 %v2499
        %v3220 = vpop.f32.mrb[0].mxu0
        %v3221 = vadd.f32 0.0, %v3220
        %v3222 = vpop.f32.mrb[0].mxu0
        %v3223 = vpop.f32.mrb[0].mxu0
        %v3224 = vadd.f32 0.0, %v3223
        %v3225 = vpop.f32.mrb[0].mxu0
        %3226 = vmatprep.mubr.bf16.mxu0 %v2260
        %3227 = vmatmul.mubr.bf16.gmra.mrb[0].mxu0 %v2500
        %v3228 = vpop.f32.mrb[0].mxu0
        %v3229 = vadd.f32 0.0, %v3228
        %v3230 = vpop.f32.mrb[0].mxu0
        %v3231 = vpop.f32.mrb[0].mxu0
        %v3232 = vadd.f32 0.0, %v3231
        %v3233 = vpop.f32.mrb[0].mxu0
        %3234 = vmatprep.mubr.bf16.mxu0 %v2261
        %3235 = vmatmul.mubr.bf16.gmra.mrb[0].mxu0 %v2501
        %v3236 = vpop.f32.mrb[0].mxu0
        %v3237 = vadd.f32 0.0, %v3236
        %v3238 = vpop.f32.mrb[0].mxu0
        %v3239 = vpop.f32.mrb[0].mxu0
        %v3240 = vadd.f32 0.0, %v3239
        %v3241 = vpop.f32.mrb[0].mxu0
        %3242 = vmatprep.mubr.bf16.mxu0 %v2262
        %3243 = vmatmul.mubr.bf16.gmra.mrb[0].mxu0 %v2502
        %v3244 = vpop.f32.mrb[0].mxu0
        %v3245 = vadd.f32 0.0, %v3244
        %v3246 = vpop.f32.mrb[0].mxu0
        %v3247 = vpop.f32.mrb[0].mxu0
        %v3248 = vadd.f32 0.0, %v3247
        %v3249 = vpop.f32.mrb[0].mxu0
        %3250 = vmatprep.mubr.bf16.mxu0 %v2263
        %3251 = vmatmul.mubr.bf16.gmra.mrb[0].mxu0 %v2503
        %v3252 = vpop.f32.mrb[0].mxu0
        %v3253 = vadd.f32 0.0, %v3252
        %v3254 = vpop.f32.mrb[0].mxu0
        %v3255 = vpop.f32.mrb[0].mxu0
        %v3256 = vadd.f32 0.0, %v3255
        %v3257 = vpop.f32.mrb[0].mxu0
        %3258 = vdwg.mxu0
        %3259 = vmatprep.subr.bf16.mxu0 0
        %3260 = vmatpush1.bf16.msra.mxu0 %v2970
        %3261 = vmatprep.subr.bf16.mxu0 0
        %3262 = vmatpush1.bf16.msra.mxu0 %v2971
        %3263 = vmatprep.subr.bf16.mxu0 0
        %3264 = vmatpush1.bf16.msra.mxu0 %v2972
        %3265 = vmatprep.subr.bf16.mxu0 0
        %3266 = vmatpush1.bf16.msra.mxu0 %v2973
        %3267 = vmatprep.subr.bf16.mxu0 0
        %3268 = vmatpush1.bf16.msra.mxu0 %v2974
        %3269 = vmatprep.subr.bf16.mxu0 0
        %3270 = vmatpush1.bf16.msra.mxu0 %v2975
        %3271 = vmatprep.subr.bf16.mxu0 0
        %3272 = vmatpush1.bf16.msra.mxu0 %v2976
        %3273 = vmatprep.subr.bf16.mxu0 0
        %3274 = vmatpush1.bf16.msra.mxu0 %v2977
        %3275 = vmatprep.subr.bf16.mxu0 0
        %3276 = vmatpush1.bf16.msra.mxu0 %v2978
        %3277 = vmatprep.subr.bf16.mxu0 0
        %3278 = vmatpush1.bf16.msra.mxu0 %v2979
        %3279 = vmatprep.subr.bf16.mxu0 0
        %3280 = vmatpush1.bf16.msra.mxu0 %v2980
        %3281 = vmatprep.subr.bf16.mxu0 0
        %3282 = vmatpush1.bf16.msra.mxu0 %v2981
        %3283 = vmatprep.subr.bf16.mxu0 0
        %3284 = vmatpush1.bf16.msra.mxu0 %v2982
        %3285 = vmatprep.subr.bf16.mxu0 0
        %3286 = vmatpush1.bf16.msra.mxu0 %v2983
        %3287 = vmatprep.subr.bf16.mxu0 0
        %3288 = vmatpush1.bf16.msra.mxu0 %v2984
        %3289 = vmatprep.subr.bf16.mxu0 0
        %3290 = vmatpush1.bf16.msra.mxu0 %v2985
        %3291 = vmatprep.mubr.bf16.mxu0 %v2489
        %3292 = vmatmul.mubr.bf16.gmra.mrb[0].mxu0 0
        %v3293 = vpop.f32.mrb[0].mxu0
        %v3294 = vadd.f32 %v3133, %v3293
        %v3295 = vpop.f32.mrb[0].mxu0
        %v3296 = vpop.f32.mrb[0].mxu0
        %v3297 = vadd.f32 %v3136, %v3296
        %v3298 = vpop.f32.mrb[0].mxu0
        %3299 = vmatprep.mubr.bf16.mxu0 %v2490
        %3300 = vmatmul.mubr.bf16.gmra.mrb[0].mxu0 %v2505
        %v3301 = vpop.f32.mrb[0].mxu0
        %v3302 = vadd.f32 %v3141, %v3301
        %v3303 = vpop.f32.mrb[0].mxu0
        %v3304 = vpop.f32.mrb[0].mxu0
        %v3305 = vadd.f32 %v3144, %v3304
        %v3306 = vpop.f32.mrb[0].mxu0
        %3307 = vmatprep.mubr.bf16.mxu0 %v2491
        %3308 = vmatmul.mubr.bf16.gmra.mrb[0].mxu0 %v2506
        %v3309 = vpop.f32.mrb[0].mxu0
        %v3310 = vadd.f32 %v3149, %v3309
        %v3311 = vpop.f32.mrb[0].mxu0
        %v3312 = vpop.f32.mrb[0].mxu0
        %v3313 = vadd.f32 %v3152, %v3312
        %v3314 = vpop.f32.mrb[0].mxu0
        %3315 = vmatprep.mubr.bf16.mxu0 %v2492
        %3316 = vmatmul.mubr.bf16.gmra.mrb[0].mxu0 %v2507
        %v3317 = vpop.f32.mrb[0].mxu0
        %v3318 = vadd.f32 %v3157, %v3317
        %v3319 = vpop.f32.mrb[0].mxu0
        %v3320 = vpop.f32.mrb[0].mxu0
        %v3321 = vadd.f32 %v3160, %v3320
        %v3322 = vpop.f32.mrb[0].mxu0
        %3323 = vmatprep.mubr.bf16.mxu0 %v2493
        %3324 = vmatmul.mubr.bf16.gmra.mrb[0].mxu0 %v2508
        %v3325 = vpop.f32.mrb[0].mxu0
        %v3326 = vadd.f32 %v3165, %v3325
        %v3327 = vpop.f32.mrb[0].mxu0
        %v3328 = vpop.f32.mrb[0].mxu0
        %v3329 = vadd.f32 %v3168, %v3328
        %v3330 = vpop.f32.mrb[0].mxu0
        %3331 = vmatprep.mubr.bf16.mxu0 %v2494
        %3332 = vmatmul.mubr.bf16.gmra.mrb[0].mxu0 %v2509
        %v3333 = vpop.f32.mrb[0].mxu0
        %v3334 = vadd.f32 %v3173, %v3333
        %v3335 = vpop.f32.mrb[0].mxu0
        %v3336 = vpop.f32.mrb[0].mxu0
        %v3337 = vadd.f32 %v3176, %v3336
        %v3338 = vpop.f32.mrb[0].mxu0
        %3339 = vmatprep.mubr.bf16.mxu0 %v2495
        %3340 = vmatmul.mubr.bf16.gmra.mrb[0].mxu0 %v2510
        %v3341 = vpop.f32.mrb[0].mxu0
        %v3342 = vadd.f32 %v3181, %v3341
        %v3343 = vpop.f32.mrb[0].mxu0
        %v3344 = vpop.f32.mrb[0].mxu0
        %v3345 = vadd.f32 %v3184, %v3344
        %v3346 = vpop.f32.mrb[0].mxu0
        %3347 = vmatprep.mubr.bf16.mxu0 %v2496
        %3348 = vmatmul.mubr.bf16.gmra.mrb[0].mxu0 %v2511
        %v3349 = vpop.f32.mrb[0].mxu0
        %v3350 = vadd.f32 %v3189, %v3349
        %v3351 = vpop.f32.mrb[0].mxu0
        %v3352 = vpop.f32.mrb[0].mxu0
        %v3353 = vadd.f32 %v3192, %v3352
        %v3354 = vpop.f32.mrb[0].mxu0
        %3355 = vmatprep.mubr.bf16.mxu0 %v2497
        %3356 = vmatmul.mubr.bf16.gmra.mrb[0].mxu0 %v2512
        %v3357 = vpop.f32.mrb[0].mxu0
        %v3358 = vadd.f32 %v3197, %v3357
        %v3359 = vpop.f32.mrb[0].mxu0
        %v3360 = vpop.f32.mrb[0].mxu0
        %v3361 = vadd.f32 %v3200, %v3360
        %v3362 = vpop.f32.mrb[0].mxu0
        %3363 = vmatprep.mubr.bf16.mxu0 %v2498
        %3364 = vmatmul.mubr.bf16.gmra.mrb[0].mxu0 %v2513
        %v3365 = vpop.f32.mrb[0].mxu0
        %v3366 = vadd.f32 %v3205, %v3365
        %v3367 = vpop.f32.mrb[0].mxu0
        %v3368 = vpop.f32.mrb[0].mxu0
        %v3369 = vadd.f32 %v3208, %v3368
        %v3370 = vpop.f32.mrb[0].mxu0
        %3371 = vmatprep.mubr.bf16.mxu0 %v2499
        %3372 = vmatmul.mubr.bf16.gmra.mrb[0].mxu0 %v2514
        %v3373 = vpop.f32.mrb[0].mxu0
        %v3374 = vadd.f32 %v3213, %v3373
        %v3375 = vpop.f32.mrb[0].mxu0
        %v3376 = vpop.f32.mrb[0].mxu0
        %v3377 = vadd.f32 %v3216, %v3376
        %v3378 = vpop.f32.mrb[0].mxu0
        %3379 = vmatprep.mubr.bf16.mxu0 %v2500
        %3380 = vmatmul.mubr.bf16.gmra.mrb[0].mxu0 %v2515
        %v3381 = vpop.f32.mrb[0].mxu0
        %v3382 = vadd.f32 %v3221, %v3381
        %v3383 = vpop.f32.mrb[0].mxu0
        %v3384 = vpop.f32.mrb[0].mxu0
        %v3385 = vadd.f32 %v3224, %v3384
        %v3386 = vpop.f32.mrb[0].mxu0
        %3387 = vmatprep.mubr.bf16.mxu0 %v2501
        %3388 = vmatmul.mubr.bf16.gmra.mrb[0].mxu0 %v2516
        %v3389 = vpop.f32.mrb[0].mxu0
        %v3390 = vadd.f32 %v3229, %v3389
        %v3391 = vpop.f32.mrb[0].mxu0
        %v3392 = vpop.f32.mrb[0].mxu0
        %v3393 = vadd.f32 %v3232, %v3392
        %v3394 = vpop.f32.mrb[0].mxu0
        %3395 = vmatprep.mubr.bf16.mxu0 %v2502
        %3396 = vmatmul.mubr.bf16.gmra.mrb[0].mxu0 %v2517
        %v3397 = vpop.f32.mrb[0].mxu0
        %v3398 = vadd.f32 %v3237, %v3397
        %v3399 = vpop.f32.mrb[0].mxu0
        %v3400 = vpop.f32.mrb[0].mxu0
        %v3401 = vadd.f32 %v3240, %v3400
        %v3402 = vpop.f32.mrb[0].mxu0
        %3403 = vmatprep.mubr.bf16.mxu0 %v2503
        %3404 = vmatmul.mubr.bf16.gmra.mrb[0].mxu0 %v2518
        %v3405 = vpop.f32.mrb[0].mxu0
        %v3406 = vadd.f32 %v3245, %v3405
        %v3407 = vpop.f32.mrb[0].mxu0
        %v3408 = vpop.f32.mrb[0].mxu0
        %v3409 = vadd.f32 %v3248, %v3408
        %v3410 = vpop.f32.mrb[0].mxu0
        %3411 = vmatprep.mubr.bf16.mxu0 %v2504
        %3412 = vmatmul.mubr.bf16.gmra.mrb[0].mxu0 %v2519
        %v3413 = vpop.f32.mrb[0].mxu0
        %v3414 = vadd.f32 %v3253, %v3413
        %v3415 = vpop.f32.mrb[0].mxu0
        %v3416 = vpop.f32.mrb[0].mxu0
        %v3417 = vadd.f32 %v3256, %v3416
        %v3418 = vpop.f32.mrb[0].mxu0
        %3419 = vdwg.mxu0
        %3420 = vmatprep.subr.bf16.mxu0 0
        %3421 = vmatpush1.bf16.msra.mxu0 %v2986
        %3422 = vmatprep.subr.bf16.mxu0 0
        %3423 = vmatpush1.bf16.msra.mxu0 %v2987
        %3424 = vmatprep.subr.bf16.mxu0 0
        %3425 = vmatpush1.bf16.msra.mxu0 %v2988
        %3426 = vmatprep.subr.bf16.mxu0 0
        %3427 = vmatpush1.bf16.msra.mxu0 %v2989
        %3428 = vmatprep.subr.bf16.mxu0 0
        %3429 = vmatpush1.bf16.msra.mxu0 %v2990
        %3430 = vmatprep.subr.bf16.mxu0 0
        %3431 = vmatpush1.bf16.msra.mxu0 %v2991
        %3432 = vmatprep.subr.bf16.mxu0 0
        %3433 = vmatpush1.bf16.msra.mxu0 %v2992
        %3434 = vmatprep.subr.bf16.mxu0 0
        %3435 = vmatpush1.bf16.msra.mxu0 %v2993
        %3436 = vmatprep.subr.bf16.mxu0 0
        %3437 = vmatpush1.bf16.msra.mxu0 %v2994
        %3438 = vmatprep.subr.bf16.mxu0 0
        %3439 = vmatpush1.bf16.msra.mxu0 %v2995
        %3440 = vmatprep.subr.bf16.mxu0 0
        %3441 = vmatpush1.bf16.msra.mxu0 %v2996
        %3442 = vmatprep.subr.bf16.mxu0 0
        %3443 = vmatpush1.bf16.msra.mxu0 %v2997
        %3444 = vmatprep.subr.bf16.mxu0 0
        %3445 = vmatpush1.bf16.msra.mxu0 %v2998
        %3446 = vmatprep.subr.bf16.mxu0 0
        %3447 = vmatpush1.bf16.msra.mxu0 %v2999
        %3448 = vmatprep.subr.bf16.mxu0 0
        %3449 = vmatpush1.bf16.msra.mxu0 %v3000
        %3450 = vmatprep.subr.bf16.mxu0 0
        %3451 = vmatpush1.bf16.msra.mxu0 %v3001
        %3452 = vmatprep.mubr.bf16.mxu0 %v2505
        %3453 = vmatmul.mubr.bf16.gmra.mrb[0].mxu0 %v2249
        %v3454 = vpop.f32.mrb[0].mxu0
        %v3455 = vadd.f32 %v3294, %v3454
        %v3456 = vpop.f32.mrb[0].mxu0
        %v3457 = vpop.f32.mrb[0].mxu0
        %v3458 = vadd.f32 %v3297, %v3457
        %v3459 = vpop.f32.mrb[0].mxu0
        %3460 = vmatprep.mubr.bf16.mxu0 %v2506
        %3461 = vmatmul.mubr.bf16.gmra.mrb[0].mxu0 %v2250
        %v3462 = vpop.f32.mrb[0].mxu0
        %v3463 = vadd.f32 %v3302, %v3462
        %v3464 = vpop.f32.mrb[0].mxu0
        %v3465 = vpop.f32.mrb[0].mxu0
        %v3466 = vadd.f32 %v3305, %v3465
        %v3467 = vpop.f32.mrb[0].mxu0
        %3468 = vmatprep.mubr.bf16.mxu0 %v2507
        %3469 = vmatmul.mubr.bf16.gmra.mrb[0].mxu0 %v2251
        %v3470 = vpop.f32.mrb[0].mxu0
        %v3471 = vadd.f32 %v3310, %v3470
        %v3472 = vpop.f32.mrb[0].mxu0
        %v3473 = vpop.f32.mrb[0].mxu0
        %v3474 = vadd.f32 %v3313, %v3473
        %v3475 = vpop.f32.mrb[0].mxu0
        %3476 = vmatprep.mubr.bf16.mxu0 %v2508
        %3477 = vmatmul.mubr.bf16.gmra.mrb[0].mxu0 %v2252
        %v3478 = vpop.f32.mrb[0].mxu0
        %v3479 = vadd.f32 %v3318, %v3478
        %v3480 = vpop.f32.mrb[0].mxu0
        %v3481 = vpop.f32.mrb[0].mxu0
        %v3482 = vadd.f32 %v3321, %v3481
        %v3483 = vpop.f32.mrb[0].mxu0
        %3484 = vmatprep.mubr.bf16.mxu0 %v2509
        %3485 = vmatmul.mubr.bf16.gmra.mrb[0].mxu0 %v2253
        %v3486 = vpop.f32.mrb[0].mxu0
        %v3487 = vadd.f32 %v3326, %v3486
        %v3488 = vpop.f32.mrb[0].mxu0
        %v3489 = vpop.f32.mrb[0].mxu0
        %v3490 = vadd.f32 %v3329, %v3489
        %v3491 = vpop.f32.mrb[0].mxu0
        %3492 = vmatprep.mubr.bf16.mxu0 %v2510
        %3493 = vmatmul.mubr.bf16.gmra.mrb[0].mxu0 %v2254
        %v3494 = vpop.f32.mrb[0].mxu0
        %v3495 = vadd.f32 %v3334, %v3494
        %v3496 = vpop.f32.mrb[0].mxu0
        %v3497 = vpop.f32.mrb[0].mxu0
        %v3498 = vadd.f32 %v3337, %v3497
        %v3499 = vpop.f32.mrb[0].mxu0
        %3500 = vmatprep.mubr.bf16.mxu0 %v2511
        %3501 = vmatmul.mubr.bf16.gmra.mrb[0].mxu0 %v2255
        %v3502 = vpop.f32.mrb[0].mxu0
        %v3503 = vadd.f32 %v3342, %v3502
        %v3504 = vpop.f32.mrb[0].mxu0
        %v3505 = vpop.f32.mrb[0].mxu0
        %v3506 = vadd.f32 %v3345, %v3505
        %v3507 = vpop.f32.mrb[0].mxu0
        %3508 = vmatprep.mubr.bf16.mxu0 %v2512
        %3509 = vmatmul.mubr.bf16.gmra.mrb[0].mxu0 %v2256
        %v3510 = vpop.f32.mrb[0].mxu0
        %v3511 = vadd.f32 %v3350, %v3510
        %v3512 = vpop.f32.mrb[0].mxu0
        %v3513 = vpop.f32.mrb[0].mxu0
        %v3514 = vadd.f32 %v3353, %v3513
        %v3515 = vpop.f32.mrb[0].mxu0
        %3516 = vmatprep.mubr.bf16.mxu0 %v2513
        %3517 = vmatmul.mubr.bf16.gmra.mrb[0].mxu0 %v2257
        %v3518 = vpop.f32.mrb[0].mxu0
        %v3519 = vadd.f32 %v3358, %v3518
        %v3520 = vpop.f32.mrb[0].mxu0
        %v3521 = vpop.f32.mrb[0].mxu0
        %v3522 = vadd.f32 %v3361, %v3521
        %v3523 = vpop.f32.mrb[0].mxu0
        %3524 = vmatprep.mubr.bf16.mxu0 %v2514
        %3525 = vmatmul.mubr.bf16.gmra.mrb[0].mxu0 %v2258
        %v3526 = vpop.f32.mrb[0].mxu0
        %v3527 = vadd.f32 %v3366, %v3526
        %v3528 = vpop.f32.mrb[0].mxu0
        %v3529 = vpop.f32.mrb[0].mxu0
        %v3530 = vadd.f32 %v3369, %v3529
        %v3531 = vpop.f32.mrb[0].mxu0
        %3532 = vmatprep.mubr.bf16.mxu0 %v2515
        %3533 = vmatmul.mubr.bf16.gmra.mrb[0].mxu0 %v2259
        %v3534 = vpop.f32.mrb[0].mxu0
        %v3535 = vadd.f32 %v3374, %v3534
        %v3536 = vpop.f32.mrb[0].mxu0
        %v3537 = vpop.f32.mrb[0].mxu0
        %v3538 = vadd.f32 %v3377, %v3537
        %v3539 = vpop.f32.mrb[0].mxu0
        %3540 = vmatprep.mubr.bf16.mxu0 %v2516
        %3541 = vmatmul.mubr.bf16.gmra.mrb[0].mxu0 %v2260
        %v3542 = vpop.f32.mrb[0].mxu0
        %v3543 = vadd.f32 %v3382, %v3542
        %v3544 = vpop.f32.mrb[0].mxu0
        %v3545 = vpop.f32.mrb[0].mxu0
        %v3546 = vadd.f32 %v3385, %v3545
        %v3547 = vpop.f32.mrb[0].mxu0
        %3548 = vmatprep.mubr.bf16.mxu0 %v2517
        %3549 = vmatmul.mubr.bf16.gmra.mrb[0].mxu0 %v2261
        %v3550 = vpop.f32.mrb[0].mxu0
        %v3551 = vadd.f32 %v3390, %v3550
        %v3552 = vpop.f32.mrb[0].mxu0
        %v3553 = vpop.f32.mrb[0].mxu0
        %v3554 = vadd.f32 %v3393, %v3553
        %v3555 = vpop.f32.mrb[0].mxu0
        %3556 = vmatprep.mubr.bf16.mxu0 %v2518
        %3557 = vmatmul.mubr.bf16.gmra.mrb[0].mxu0 %v2262
        %v3558 = vpop.f32.mrb[0].mxu0
        %v3559 = vadd.f32 %v3398, %v3558
        %v3560 = vpop.f32.mrb[0].mxu0
        %v3561 = vpop.f32.mrb[0].mxu0
        %v3562 = vadd.f32 %v3401, %v3561
        %v3563 = vpop.f32.mrb[0].mxu0
        %3564 = vmatprep.mubr.bf16.mxu0 %v2519
        %3565 = vmatmul.mubr.bf16.gmra.mrb[0].mxu0 %v2263
        %v3566 = vpop.f32.mrb[0].mxu0
        %v3567 = vadd.f32 %v3406, %v3566
        %v3568 = vpop.f32.mrb[0].mxu0
        %v3569 = vpop.f32.mrb[0].mxu0
        %v3570 = vadd.f32 %v3409, %v3569
        %v3571 = vpop.f32.mrb[0].mxu0
        %3572 = vmatprep.mubr.bf16.mxu0 %v2520
        %3573 = vmatmul.mubr.bf16.gmra.mrb[0].mxu0 %v2264
        %v3574 = vpop.f32.mrb[0].mxu0
        %v3575 = vadd.f32 %v3414, %v3574
        %v3576 = vpop.f32.mrb[0].mxu0
        %v3577 = vpop.f32.mrb[0].mxu0
        %v3578 = vadd.f32 %v3417, %v3577
        %v3579 = vpop.f32.mrb[0].mxu0
        %3580 = vdwg.mxu0
        %3581 = vmatprep.subr.bf16.mxu0 0
        %3582 = vmatpush1.bf16.msra.mxu0 %v3002
        %3583 = vmatprep.subr.bf16.mxu0 0
        %3584 = vmatpush1.bf16.msra.mxu0 %v3003
        %3585 = vmatprep.subr.bf16.mxu0 0
        %3586 = vmatpush1.bf16.msra.mxu0 %v3004
        %3587 = vmatprep.subr.bf16.mxu0 0
        %3588 = vmatpush1.bf16.msra.mxu0 %v3005
        %3589 = vmatprep.subr.bf16.mxu0 0
        %3590 = vmatpush1.bf16.msra.mxu0 %v3006
        %3591 = vmatprep.subr.bf16.mxu0 0
        %3592 = vmatpush1.bf16.msra.mxu0 %v3007
        %3593 = vmatprep.subr.bf16.mxu0 0
        %3594 = vmatpush1.bf16.msra.mxu0 %v3008
        %3595 = vmatprep.subr.bf16.mxu0 0
        %3596 = vmatpush1.bf16.msra.mxu0 %v3009
        %3597 = vmatprep.subr.bf16.mxu0 0
        %3598 = vmatpush1.bf16.msra.mxu0 %v3010
        %3599 = vmatprep.subr.bf16.mxu0 0
        %3600 = vmatpush1.bf16.msra.mxu0 %v3011
        %3601 = vmatprep.subr.bf16.mxu0 0
        %3602 = vmatpush1.bf16.msra.mxu0 %v3012
        %3603 = vmatprep.subr.bf16.mxu0 0
        %3604 = vmatpush1.bf16.msra.mxu0 %v3013
        %3605 = vmatprep.subr.bf16.mxu0 0
        %3606 = vmatpush1.bf16.msra.mxu0 %v3014
        %3607 = vmatprep.subr.bf16.mxu0 0
        %3608 = vmatpush1.bf16.msra.mxu0 %v3015
        %3609 = vmatprep.subr.bf16.mxu0 0
        %3610 = vmatpush1.bf16.msra.mxu0 %v3016
        %3611 = vmatprep.subr.bf16.mxu0 0
        %3612 = vmatpush1.bf16.msra.mxu0 %v3017
        %3613 = vmatprep.mubr.bf16.mxu0 %v2250
        %3614 = vmatmul.mubr.bf16.gmra.mrb[0].mxu0 %v2490
        %v3615 = vpop.f32.mrb[0].mxu0
        %v3616 = vadd.f32 %v3455, %v3615
        %v3617 = vpop.f32.mrb[0].mxu0
        %v3618 = vpop.f32.mrb[0].mxu0
        %v3619 = vadd.f32 %v3458, %v3618
        %v3620 = vpop.f32.mrb[0].mxu0
        %3621 = vmatprep.mubr.bf16.mxu0 %v2251
        %3622 = vmatmul.mubr.bf16.gmra.mrb[0].mxu0 %v2491
        %v3623 = vpop.f32.mrb[0].mxu0
        %v3624 = vadd.f32 %v3463, %v3623
        %v3625 = vpop.f32.mrb[0].mxu0
        %v3626 = vpop.f32.mrb[0].mxu0
        %v3627 = vadd.f32 %v3466, %v3626
        %v3628 = vpop.f32.mrb[0].mxu0
        %3629 = vmatprep.mubr.bf16.mxu0 %v2252
        %3630 = vmatmul.mubr.bf16.gmra.mrb[0].mxu0 %v2492
        %v3631 = vpop.f32.mrb[0].mxu0
        %v3632 = vadd.f32 %v3471, %v3631
        %v3633 = vpop.f32.mrb[0].mxu0
        %v3634 = vpop.f32.mrb[0].mxu0
        %v3635 = vadd.f32 %v3474, %v3634
        %v3636 = vpop.f32.mrb[0].mxu0
        %3637 = vmatprep.mubr.bf16.mxu0 %v2253
        %3638 = vmatmul.mubr.bf16.gmra.mrb[0].mxu0 %v2493
        %v3639 = vpop.f32.mrb[0].mxu0
        %v3640 = vadd.f32 %v3479, %v3639
        %v3641 = vpop.f32.mrb[0].mxu0
        %v3642 = vpop.f32.mrb[0].mxu0
        %v3643 = vadd.f32 %v3482, %v3642
        %v3644 = vpop.f32.mrb[0].mxu0
        %3645 = vmatprep.mubr.bf16.mxu0 %v2254
        %3646 = vmatmul.mubr.bf16.gmra.mrb[0].mxu0 %v2494
        %v3647 = vpop.f32.mrb[0].mxu0
        %v3648 = vadd.f32 %v3487, %v3647
        %v3649 = vpop.f32.mrb[0].mxu0
        %v3650 = vpop.f32.mrb[0].mxu0
        %v3651 = vadd.f32 %v3490, %v3650
        %v3652 = vpop.f32.mrb[0].mxu0
        %3653 = vmatprep.mubr.bf16.mxu0 %v2255
        %3654 = vmatmul.mubr.bf16.gmra.mrb[0].mxu0 %v2495
        %v3655 = vpop.f32.mrb[0].mxu0
        %v3656 = vadd.f32 %v3495, %v3655
        %v3657 = vpop.f32.mrb[0].mxu0
        %v3658 = vpop.f32.mrb[0].mxu0
        %v3659 = vadd.f32 %v3498, %v3658
        %v3660 = vpop.f32.mrb[0].mxu0
        %3661 = vmatprep.mubr.bf16.mxu0 %v2256
        %3662 = vmatmul.mubr.bf16.gmra.mrb[0].mxu0 %v2496
        %v3663 = vpop.f32.mrb[0].mxu0
        %v3664 = vadd.f32 %v3503, %v3663
        %v3665 = vpop.f32.mrb[0].mxu0
        %v3666 = vpop.f32.mrb[0].mxu0
        %v3667 = vadd.f32 %v3506, %v3666
        %v3668 = vpop.f32.mrb[0].mxu0
        %3669 = vmatprep.mubr.bf16.mxu0 %v2257
        %3670 = vmatmul.mubr.bf16.gmra.mrb[0].mxu0 %v2497
        %v3671 = vpop.f32.mrb[0].mxu0
        %v3672 = vadd.f32 %v3511, %v3671
        %v3673 = vpop.f32.mrb[0].mxu0
        %v3674 = vpop.f32.mrb[0].mxu0
        %v3675 = vadd.f32 %v3514, %v3674
        %v3676 = vpop.f32.mrb[0].mxu0
        %3677 = vmatprep.mubr.bf16.mxu0 %v2258
        %3678 = vmatmul.mubr.bf16.gmra.mrb[0].mxu0 %v2498
        %v3679 = vpop.f32.mrb[0].mxu0
        %v3680 = vadd.f32 %v3519, %v3679
        %v3681 = vpop.f32.mrb[0].mxu0
        %v3682 = vpop.f32.mrb[0].mxu0
        %v3683 = vadd.f32 %v3522, %v3682
        %v3684 = vpop.f32.mrb[0].mxu0
        %3685 = vmatprep.mubr.bf16.mxu0 %v2259
        %3686 = vmatmul.mubr.bf16.gmra.mrb[0].mxu0 %v2499
        %v3687 = vpop.f32.mrb[0].mxu0
        %v3688 = vadd.f32 %v3527, %v3687
        %v3689 = vpop.f32.mrb[0].mxu0
        %v3690 = vpop.f32.mrb[0].mxu0
        %v3691 = vadd.f32 %v3530, %v3690
        %v3692 = vpop.f32.mrb[0].mxu0
        %3693 = vmatprep.mubr.bf16.mxu0 %v2260
        %3694 = vmatmul.mubr.bf16.gmra.mrb[0].mxu0 %v2500
        %v3695 = vpop.f32.mrb[0].mxu0
        %v3696 = vadd.f32 %v3535, %v3695
        %v3697 = vpop.f32.mrb[0].mxu0
        %v3698 = vpop.f32.mrb[0].mxu0
        %v3699 = vadd.f32 %v3538, %v3698
        %v3700 = vpop.f32.mrb[0].mxu0
        %3701 = vmatprep.mubr.bf16.mxu0 %v2261
        %3702 = vmatmul.mubr.bf16.gmra.mrb[0].mxu0 %v2501
        %v3703 = vpop.f32.mrb[0].mxu0
        %v3704 = vadd.f32 %v3543, %v3703
        %v3705 = vpop.f32.mrb[0].mxu0
        %v3706 = vpop.f32.mrb[0].mxu0
        %v3707 = vadd.f32 %v3546, %v3706
        %v3708 = vpop.f32.mrb[0].mxu0
        %3709 = vmatprep.mubr.bf16.mxu0 %v2262
        %3710 = vmatmul.mubr.bf16.gmra.mrb[0].mxu0 %v2502
        %v3711 = vpop.f32.mrb[0].mxu0
        %v3712 = vadd.f32 %v3551, %v3711
        %v3713 = vpop.f32.mrb[0].mxu0
        %v3714 = vpop.f32.mrb[0].mxu0
        %v3715 = vadd.f32 %v3554, %v3714
        %v3716 = vpop.f32.mrb[0].mxu0
        %3717 = vmatprep.mubr.bf16.mxu0 %v2263
        %3718 = vmatmul.mubr.bf16.gmra.mrb[0].mxu0 %v2503
        %v3719 = vpop.f32.mrb[0].mxu0
        %v3720 = vadd.f32 %v3559, %v3719
        %v3721 = vpop.f32.mrb[0].mxu0
        %v3722 = vpop.f32.mrb[0].mxu0
        %v3723 = vadd.f32 %v3562, %v3722
        %v3724 = vpop.f32.mrb[0].mxu0
        %3725 = vmatprep.mubr.bf16.mxu0 %v2264
        %3726 = vmatmul.mubr.bf16.gmra.mrb[0].mxu0 %v2504
        %v3727 = vpop.f32.mrb[0].mxu0
        %v3728 = vadd.f32 %v3567, %v3727
        %v3729 = vpop.f32.mrb[0].mxu0
        %v3730 = vpop.f32.mrb[0].mxu0
        %v3731 = vadd.f32 %v3570, %v3730
        %v3732 = vpop.f32.mrb[0].mxu0
        %3733 = vmatprep.mubr.bf16.mxu0 0
        %3734 = vmatmul.mubr.bf16.gmra.mrb[0].mxu0 0
        %v3735 = vpop.f32.mrb[0].mxu0
        %v3736 = vadd.f32 %v3575, %v3735
        %v3737 = vpop.f32.mrb[0].mxu0
        %v3738 = vpop.f32.mrb[0].mxu0
        %v3739 = vadd.f32 %v3578, %v3738
        %v3740 = vpop.f32.mrb[0].mxu0
        %3741 = vdwg.mxu0
        %3742 = vmatprep.subr.bf16.mxu0 0
        %3743 = vmatpush1.bf16.msra.mxu0 %v3018
        %3744 = vmatprep.subr.bf16.mxu0 0
        %3745 = vmatpush1.bf16.msra.mxu0 %v3019
        %3746 = vmatprep.subr.bf16.mxu0 0
        %3747 = vmatpush1.bf16.msra.mxu0 %v3020
        %3748 = vmatprep.subr.bf16.mxu0 0
        %3749 = vmatpush1.bf16.msra.mxu0 %v3021
        %3750 = vmatprep.subr.bf16.mxu0 0
        %3751 = vmatpush1.bf16.msra.mxu0 %v3022
        %3752 = vmatprep.subr.bf16.mxu0 0
        %3753 = vmatpush1.bf16.msra.mxu0 %v3023
        %3754 = vmatprep.subr.bf16.mxu0 0
        %3755 = vmatpush1.bf16.msra.mxu0 %v3024
        %3756 = vmatprep.subr.bf16.mxu0 0
        %3757 = vmatpush1.bf16.msra.mxu0 %v3025
        %3758 = vmatprep.subr.bf16.mxu0 0
        %3759 = vmatpush1.bf16.msra.mxu0 0
        %3760 = vmatprep.subr.bf16.mxu0 0
        %3761 = vmatpush1.bf16.msra.mxu0 0
        %3762 = vmatprep.subr.bf16.mxu0 0
        %3763 = vmatpush1.bf16.msra.mxu0 0
        %3764 = vmatprep.subr.bf16.mxu0 0
        %3765 = vmatpush1.bf16.msra.mxu0 0
        %3766 = vmatprep.subr.bf16.mxu0 0
        %3767 = vmatpush1.bf16.msra.mxu0 0
        %3768 = vmatprep.subr.bf16.mxu0 0
        %3769 = vmatpush1.bf16.msra.mxu0 0
        %3770 = vmatprep.subr.bf16.mxu0 0
        %3771 = vmatpush1.bf16.msra.mxu0 0
        %3772 = vmatprep.subr.bf16.mxu0 0
        %3773 = vmatpush1.bf16.msra.mxu0 0
        %3774 = vmatprep.mubr.bf16.mxu0 0
        %3775 = vmatmul.mubr.bf16.gmra.mrb[0].mxu0 %v2506
        %v3776 = vpop.f32.mrb[0].mxu0
        %v3777 = vadd.f32 %v3616, %v3776
        %v3778 = vpop.f32.mrb[0].mxu0
        %v3779 = vpop.f32.mrb[0].mxu0
        %v3780 = vadd.f32 %v3619, %v3779
        %v3781 = vpop.f32.mrb[0].mxu0
        %3782 = vmatprep.mubr.bf16.mxu0 0
        %3783 = vmatmul.mubr.bf16.gmra.mrb[0].mxu0 %v2507
        %v3784 = vpop.f32.mrb[0].mxu0
        %v3785 = vadd.f32 %v3624, %v3784
        %v3786 = vpop.f32.mrb[0].mxu0
        %v3787 = vpop.f32.mrb[0].mxu0
        %v3788 = vadd.f32 %v3627, %v3787
        %v3789 = vpop.f32.mrb[0].mxu0
        %3790 = vmatprep.mubr.bf16.mxu0 0
        %3791 = vmatmul.mubr.bf16.gmra.mrb[0].mxu0 %v2508
        %v3792 = vpop.f32.mrb[0].mxu0
        %v3793 = vadd.f32 %v3632, %v3792
        %v3794 = vpop.f32.mrb[0].mxu0
        %v3795 = vpop.f32.mrb[0].mxu0
        %v3796 = vadd.f32 %v3635, %v3795
        %v3797 = vpop.f32.mrb[0].mxu0
        %3798 = vmatprep.mubr.bf16.mxu0 0
        %3799 = vmatmul.mubr.bf16.gmra.mrb[0].mxu0 %v2509
        %v3800 = vpop.f32.mrb[0].mxu0
        %v3801 = vadd.f32 %v3640, %v3800
        %v3802 = vpop.f32.mrb[0].mxu0
        %v3803 = vpop.f32.mrb[0].mxu0
        %v3804 = vadd.f32 %v3643, %v3803
        %v3805 = vpop.f32.mrb[0].mxu0
        %3806 = vmatprep.mubr.bf16.mxu0 0
        %3807 = vmatmul.mubr.bf16.gmra.mrb[0].mxu0 %v2510
        %v3808 = vpop.f32.mrb[0].mxu0
        %v3809 = vadd.f32 %v3648, %v3808
        %v3810 = vpop.f32.mrb[0].mxu0
        %v3811 = vpop.f32.mrb[0].mxu0
        %v3812 = vadd.f32 %v3651, %v3811
        %v3813 = vpop.f32.mrb[0].mxu0
        %3814 = vmatprep.mubr.bf16.mxu0 0
        %3815 = vmatmul.mubr.bf16.gmra.mrb[0].mxu0 %v2511
        %v3816 = vpop.f32.mrb[0].mxu0
        %v3817 = vadd.f32 %v3656, %v3816
        %v3818 = vpop.f32.mrb[0].mxu0
        %v3819 = vpop.f32.mrb[0].mxu0
        %v3820 = vadd.f32 %v3659, %v3819
        %v3821 = vpop.f32.mrb[0].mxu0
        %3822 = vmatprep.mubr.bf16.mxu0 0
        %3823 = vmatmul.mubr.bf16.gmra.mrb[0].mxu0 %v2512
        %v3824 = vpop.f32.mrb[0].mxu0
        %v3825 = vadd.f32 %v3664, %v3824
        %v3826 = vpop.f32.mrb[0].mxu0
        %v3827 = vpop.f32.mrb[0].mxu0
        %v3828 = vadd.f32 %v3667, %v3827
        %v3829 = vpop.f32.mrb[0].mxu0
        %3830 = vmatprep.mubr.bf16.mxu0 0
        %3831 = vmatmul.mubr.bf16.gmra.mrb[0].mxu0 %v2513
        %v3832 = vpop.f32.mrb[0].mxu0
        %v3833 = vadd.f32 %v3672, %v3832
        %v3834 = vpop.f32.mrb[0].mxu0
        %v3835 = vpop.f32.mrb[0].mxu0
        %v3836 = vadd.f32 %v3675, %v3835
        %v3837 = vpop.f32.mrb[0].mxu0
        %3838 = vmatprep.mubr.bf16.mxu0 0
        %3839 = vmatmul.mubr.bf16.gmra.mrb[0].mxu0 %v2514
        %v3840 = vpop.f32.mrb[0].mxu0
        %v3841 = vadd.f32 %v3680, %v3840
        %v3842 = vpop.f32.mrb[0].mxu0
        %v3843 = vpop.f32.mrb[0].mxu0
        %v3844 = vadd.f32 %v3683, %v3843
        %v3845 = vpop.f32.mrb[0].mxu0
        %3846 = vmatprep.mubr.bf16.mxu0 0
        %3847 = vmatmul.mubr.bf16.gmra.mrb[0].mxu0 %v2515
        %v3848 = vpop.f32.mrb[0].mxu0
        %v3849 = vadd.f32 %v3688, %v3848
        %v3850 = vpop.f32.mrb[0].mxu0
        %v3851 = vpop.f32.mrb[0].mxu0
        %v3852 = vadd.f32 %v3691, %v3851
        %v3853 = vpop.f32.mrb[0].mxu0
        %3854 = vmatprep.mubr.bf16.mxu0 0
        %3855 = vmatmul.mubr.bf16.gmra.mrb[0].mxu0 %v2516
        %v3856 = vpop.f32.mrb[0].mxu0
        %v3857 = vadd.f32 %v3696, %v3856
        %v3858 = vpop.f32.mrb[0].mxu0
        %v3859 = vpop.f32.mrb[0].mxu0
        %v3860 = vadd.f32 %v3699, %v3859
        %v3861 = vpop.f32.mrb[0].mxu0
        %3862 = vmatprep.mubr.bf16.mxu0 0
        %3863 = vmatmul.mubr.bf16.gmra.mrb[0].mxu0 %v2517
        %v3864 = vpop.f32.mrb[0].mxu0
        %v3865 = vadd.f32 %v3704, %v3864
        %v3866 = vpop.f32.mrb[0].mxu0
        %v3867 = vpop.f32.mrb[0].mxu0
        %v3868 = vadd.f32 %v3707, %v3867
        %v3869 = vpop.f32.mrb[0].mxu0
        %3870 = vmatprep.mubr.bf16.mxu0 0
        %3871 = vmatmul.mubr.bf16.gmra.mrb[0].mxu0 %v2518
        %v3872 = vpop.f32.mrb[0].mxu0
        %v3873 = vadd.f32 %v3712, %v3872
        %v3874 = vpop.f32.mrb[0].mxu0
        %v3875 = vpop.f32.mrb[0].mxu0
        %v3876 = vadd.f32 %v3715, %v3875
        %v3877 = vpop.f32.mrb[0].mxu0
        %3878 = vmatprep.mubr.bf16.mxu0 0
        %3879 = vmatmul.mubr.bf16.gmra.mrb[0].mxu0 %v2519
        %v3880 = vpop.f32.mrb[0].mxu0
        %v3881 = vadd.f32 %v3720, %v3880
        %v3882 = vpop.f32.mrb[0].mxu0
        %v3883 = vpop.f32.mrb[0].mxu0
        %v3884 = vadd.f32 %v3723, %v3883
        %v3885 = vpop.f32.mrb[0].mxu0
        %3886 = vmatprep.mubr.bf16.mxu0 0
        %3887 = vmatmul.mubr.bf16.gmra.mrb[0].mxu0 %v2520
        %v3888 = vpop.f32.mrb[0].mxu0
        %v3889 = vadd.f32 %v3728, %v3888
        %v3890 = vpop.f32.mrb[0].mxu0
        %v3891 = vpop.f32.mrb[0].mxu0
        %v3892 = vadd.f32 %v3731, %v3891
        %v3893 = vpop.f32.mrb[0].mxu0
        %3894 = vmatprep.mubr.bf16.mxu0 0
        %3895 = vmatmul.mubr.bf16.gmra.mrb[0].mxu0 0
        %v3896 = vpop.f32.mrb[0].mxu0
        %v3897 = vadd.f32 %v3736, %v3896
        %v3898 = vpop.f32.mrb[0].mxu0
        %v3899 = vpop.f32.mrb[0].mxu0
        %v3900 = vadd.f32 %v3739, %v3899
        %v3901 = vpop.f32.mrb[0].mxu0
        %3902 = vdwg.mxu0
        %s3903 = scalar_lea.vmem [#allocation6], 1
        %v3904 = vld [vmem:[%s3903] sm:$0x1]
        %v3906 = vlaneseq
        %v3907 = vshrl.u32 %v3906, 7
        %v3908 = vsub.s32 0, %v3907
        %v3909 = vrot.slane %v3904, %v3908
        %v3911 = vmul.f32 %v3777, %v3909
        %v3912 = vmul.f32 %v3780, %v3909
        %v3913 = vmul.f32 %v3785, %v3909
        %v3914 = vmul.f32 %v3788, %v3909
        %v3915 = vmul.f32 %v3793, %v3909
        %v3916 = vmul.f32 %v3796, %v3909
        %v3917 = vmul.f32 %v3801, %v3909
        %v3918 = vmul.f32 %v3804, %v3909
        %v3919 = vmul.f32 %v3809, %v3909
        %v3920 = vmul.f32 %v3812, %v3909
        %v3921 = vmul.f32 %v3817, %v3909
        %v3922 = vmul.f32 %v3820, %v3909
        %v3923 = vmul.f32 %v3825, %v3909
        %v3924 = vmul.f32 %v3828, %v3909
        %v3925 = vmul.f32 %v3833, %v3909
        %v3926 = vmul.f32 %v3836, %v3909
        %v3927 = vmul.f32 %v3841, %v3909
        %v3928 = vmul.f32 %v3844, %v3909
        %v3929 = vmul.f32 %v3849, %v3909
        %v3930 = vmul.f32 %v3852, %v3909
        %v3931 = vmul.f32 %v3857, %v3909
        %v3932 = vmul.f32 %v3860, %v3909
        %v3933 = vmul.f32 %v3865, %v3909
        %v3934 = vmul.f32 %v3868, %v3909
        %v3935 = vmul.f32 %v3873, %v3909
        %v3936 = vmul.f32 %v3876, %v3909
        %v3937 = vmul.f32 %v3881, %v3909
        %v3938 = vmul.f32 %v3884, %v3909
        %v3939 = vmul.f32 %v3889, %v3909
        %v3940 = vmul.f32 %v3892, %v3909
        %v3941 = vmul.f32 %v3897, %v3909
        %v3942 = vmul.f32 %v3900, %v3909
        %s3943 = scalar_lea.vmem [#allocation8], 1
        %v3944 = vld [vmem:[%s3943] sm:$0x1]
        %v3946 = vlaneseq
        %v3947 = vshrl.u32 %v3946, 7
        %v3948 = vsub.s32 0, %v3947
        %v3949 = vrot.slane %v3944, %v3948
        %v3951 = vadd.f32 %v3911, %v3949
        %v3952 = vadd.f32 %v3912, %v3949
        %v3953 = vadd.f32 %v3913, %v3949
        %v3954 = vadd.f32 %v3914, %v3949
        %v3955 = vadd.f32 %v3915, %v3949
        %v3956 = vadd.f32 %v3916, %v3949
        %v3957 = vadd.f32 %v3917, %v3949
        %v3958 = vadd.f32 %v3918, %v3949
        %v3959 = vadd.f32 %v3919, %v3949
        %v3960 = vadd.f32 %v3920, %v3949
        %v3961 = vadd.f32 %v3921, %v3949
        %v3962 = vadd.f32 %v3922, %v3949
        %v3963 = vadd.f32 %v3923, %v3949
        %v3964 = vadd.f32 %v3924, %v3949
        %v3965 = vadd.f32 %v3925, %v3949
        %v3966 = vadd.f32 %v3926, %v3949
        %v3967 = vadd.f32 %v3927, %v3949
        %v3968 = vadd.f32 %v3928, %v3949
        %v3969 = vadd.f32 %v3929, %v3949
        %v3970 = vadd.f32 %v3930, %v3949
        %v3971 = vadd.f32 %v3931, %v3949
        %v3972 = vadd.f32 %v3932, %v3949
        %v3973 = vadd.f32 %v3933, %v3949
        %v3974 = vadd.f32 %v3934, %v3949
        %v3975 = vadd.f32 %v3935, %v3949
        %v3976 = vadd.f32 %v3936, %v3949
        %v3977 = vadd.f32 %v3937, %v3949
        %v3978 = vadd.f32 %v3938, %v3949
        %v3979 = vadd.f32 %v3939, %v3949
        %v3980 = vadd.f32 %v3940, %v3949
        %v3981 = vadd.f32 %v3941, %v3949
        %v3982 = vadd.f32 %v3942, %v3949
        %v3983 = vmax.f32 %v3951, 0.0
        %v3984 = vmax.f32 %v3952, 0.0
        %v3985 = vmax.f32 %v3953, 0.0
        %v3986 = vmax.f32 %v3954, 0.0
        %v3987 = vmax.f32 %v3955, 0.0
        %v3988 = vmax.f32 %v3956, 0.0
        %v3989 = vmax.f32 %v3957, 0.0
        %v3990 = vmax.f32 %v3958, 0.0
        %v3991 = vmax.f32 %v3959, 0.0
        %v3992 = vmax.f32 %v3960, 0.0
        %v3993 = vmax.f32 %v3961, 0.0
        %v3994 = vmax.f32 %v3962, 0.0
        %v3995 = vmax.f32 %v3963, 0.0
        %v3996 = vmax.f32 %v3964, 0.0
        %v3997 = vmax.f32 %v3965, 0.0
        %v3998 = vmax.f32 %v3966, 0.0
        %v3999 = vmax.f32 %v3967, 0.0
        %v4000 = vmax.f32 %v3968, 0.0
        %v4001 = vmax.f32 %v3969, 0.0
        %v4002 = vmax.f32 %v3970, 0.0
        %v4003 = vmax.f32 %v3971, 0.0
        %v4004 = vmax.f32 %v3972, 0.0
        %v4005 = vmax.f32 %v3973, 0.0
        %v4006 = vmax.f32 %v3974, 0.0
        %v4007 = vmax.f32 %v3975, 0.0
        %v4008 = vmax.f32 %v3976, 0.0
        %v4009 = vmax.f32 %v3977, 0.0
        %v4010 = vmax.f32 %v3978, 0.0
        %v4011 = vmax.f32 %v3979, 0.0
        %v4012 = vmax.f32 %v3980, 0.0
        %v4013 = vmax.f32 %v3981, 0.0
        %v4014 = vmax.f32 %v3982, 0.0
        %v4015 = vpack.c.bf16 %v3984, %v3983
        %v4016 = vpack.c.bf16 %v3986, %v3985
        %v4017 = vpack.c.bf16 %v3988, %v3987
        %v4018 = vpack.c.bf16 %v3990, %v3989
        %v4019 = vpack.c.bf16 %v3992, %v3991
        %v4020 = vpack.c.bf16 %v3994, %v3993
        %v4021 = vpack.c.bf16 %v3996, %v3995
        %v4022 = vpack.c.bf16 %v3998, %v3997
        %v4023 = vpack.c.bf16 %v4000, %v3999
        %v4024 = vpack.c.bf16 %v4002, %v4001
        %v4025 = vpack.c.bf16 %v4004, %v4003
        %v4026 = vpack.c.bf16 %v4006, %v4005
        %v4027 = vpack.c.bf16 %v4008, %v4007
        %v4028 = vpack.c.bf16 %v4010, %v4009
        %v4029 = vpack.c.bf16 %v4012, %v4011
        %v4030 = vpack.c.bf16 %v4014, %v4013
        %v4031 = vunpack.c.l.bf16 %v4015
        %v4032 = vunpack.c.h.bf16 %v4015
        %v4033 = vunpack.c.l.bf16 %v4016
        %v4034 = vunpack.c.h.bf16 %v4016
        %v4035 = vunpack.c.l.bf16 %v4017
        %v4036 = vunpack.c.h.bf16 %v4017
        %v4037 = vunpack.c.l.bf16 %v4018
        %v4038 = vunpack.c.h.bf16 %v4018
        %v4039 = vunpack.c.l.bf16 %v4019
        %v4040 = vunpack.c.h.bf16 %v4019
        %v4041 = vunpack.c.l.bf16 %v4020
        %v4042 = vunpack.c.h.bf16 %v4020
        %v4043 = vunpack.c.l.bf16 %v4021
        %v4044 = vunpack.c.h.bf16 %v4021
        %v4045 = vunpack.c.l.bf16 %v4022
        %v4046 = vunpack.c.h.bf16 %v4022
        %v4047 = vunpack.c.l.bf16 %v4023
        %v4048 = vunpack.c.h.bf16 %v4023
        %v4049 = vunpack.c.l.bf16 %v4024
        %v4050 = vunpack.c.h.bf16 %v4024
        %v4051 = vunpack.c.l.bf16 %v4025
        %v4052 = vunpack.c.h.bf16 %v4025
        %v4053 = vunpack.c.l.bf16 %v4026
        %v4054 = vunpack.c.h.bf16 %v4026
        %v4055 = vunpack.c.l.bf16 %v4027
        %v4056 = vunpack.c.h.bf16 %v4027
        %v4057 = vunpack.c.l.bf16 %v4028
        %v4058 = vunpack.c.h.bf16 %v4028
        %v4059 = vunpack.c.l.bf16 %v4029
        %v4060 = vunpack.c.h.bf16 %v4029
        %v4061 = vunpack.c.l.bf16 %v4030
        %v4062 = vunpack.c.h.bf16 %v4030
        %v4063 = vrot.slane %v4031, 7
        %v4064 = vrot.slane %v4032, 7
        %v4065 = vrot.slane %v4033, 7
        %v4066 = vrot.slane %v4034, 7
        %v4067 = vrot.slane %v4035, 7
        %v4068 = vrot.slane %v4036, 7
        %v4069 = vrot.slane %v4037, 7
        %v4070 = vrot.slane %v4038, 7
        %v4071 = vrot.slane %v4039, 7
        %v4072 = vrot.slane %v4040, 7
        %v4073 = vrot.slane %v4041, 7
        %v4074 = vrot.slane %v4042, 7
        %v4075 = vrot.slane %v4043, 7
        %v4076 = vrot.slane %v4044, 7
        %v4077 = vrot.slane %v4045, 7
        %v4078 = vrot.slane %v4046, 7
        %v4079 = vrot.slane %v4047, 7
        %v4080 = vrot.slane %v4048, 7
        %v4081 = vrot.slane %v4049, 7
        %v4082 = vrot.slane %v4050, 7
        %v4083 = vrot.slane %v4051, 7
        %v4084 = vrot.slane %v4052, 7
        %v4085 = vrot.slane %v4053, 7
        %v4086 = vrot.slane %v4054, 7
        %v4087 = vrot.slane %v4055, 7
        %v4088 = vrot.slane %v4056, 7
        %v4089 = vrot.slane %v4057, 7
        %v4090 = vrot.slane %v4058, 7
        %v4091 = vrot.slane %v4059, 7
        %v4092 = vrot.slane %v4060, 7
        %v4093 = vrot.slane %v4061, 7
        %v4094 = vrot.slane %v4062, 7
        %v4095 = vsel %vm466, %v4093, %v4094
        %v4096 = vsel %vm466, %v4092, %v4093
        %v4097 = vsel %vm466, %v4091, %v4092
        %v4098 = vsel %vm466, %v4090, %v4091
        %v4099 = vsel %vm466, %v4089, %v4090
        %v4100 = vsel %vm466, %v4088, %v4089
        %v4101 = vsel %vm466, %v4087, %v4088
        %v4102 = vsel %vm466, %v4086, %v4087
        %v4103 = vsel %vm466, %v4085, %v4086
        %v4104 = vsel %vm466, %v4084, %v4085
        %v4105 = vsel %vm466, %v4083, %v4084
        %v4106 = vsel %vm466, %v4082, %v4083
        %v4107 = vsel %vm466, %v4081, %v4082
        %v4108 = vsel %vm466, %v4080, %v4081
        %v4109 = vsel %vm466, %v4079, %v4080
        %v4110 = vsel %vm466, %v4078, %v4079
        %v4111 = vsel %vm466, %v4077, %v4078
        %v4112 = vsel %vm466, %v4076, %v4077
        %v4113 = vsel %vm466, %v4075, %v4076
        %v4114 = vsel %vm466, %v4074, %v4075
        %v4115 = vsel %vm466, %v4073, %v4074
        %v4116 = vsel %vm466, %v4072, %v4073
        %v4117 = vsel %vm466, %v4071, %v4072
        %v4118 = vsel %vm466, %v4070, %v4071
        %v4119 = vsel %vm466, %v4069, %v4070
        %v4120 = vsel %vm466, %v4068, %v4069
        %v4121 = vsel %vm466, %v4067, %v4068
        %v4122 = vsel %vm466, %v4066, %v4067
        %v4123 = vsel %vm466, %v4065, %v4066
        %v4124 = vsel %vm466, %v4064, %v4065
        %v4125 = vsel %vm466, %v4063, %v4064
        %v4126 = vsel %vm466, %v4094, %v4063
        %v4127 = vsel %vm432, %v4126, 0.0
        %v4128 = vsel %vm433, %v4125, 0.0
        %v4129 = vsel %vm432, %v4124, 0.0
        %v4130 = vsel %vm433, %v4123, 0.0
        %v4131 = vsel %vm432, %v4122, 0.0
        %v4132 = vsel %vm433, %v4121, 0.0
        %v4133 = vsel %vm432, %v4120, 0.0
        %v4134 = vsel %vm433, %v4119, 0.0
        %v4135 = vsel %vm432, %v4118, 0.0
        %v4136 = vsel %vm433, %v4117, 0.0
        %v4137 = vsel %vm432, %v4116, 0.0
        %v4138 = vsel %vm433, %v4115, 0.0
        %v4139 = vsel %vm432, %v4114, 0.0
        %v4140 = vsel %vm433, %v4113, 0.0
        %v4141 = vsel %vm432, %v4112, 0.0
        %v4142 = vsel %vm433, %v4111, 0.0
        %v4143 = vsel %vm432, %v4110, 0.0
        %v4144 = vsel %vm433, %v4109, 0.0
        %v4145 = vsel %vm432, %v4108, 0.0
        %v4146 = vsel %vm433, %v4107, 0.0
        %v4147 = vsel %vm432, %v4106, 0.0
        %v4148 = vsel %vm433, %v4105, 0.0
        %v4149 = vsel %vm432, %v4104, 0.0
        %v4150 = vsel %vm433, %v4103, 0.0
        %v4151 = vsel %vm432, %v4102, 0.0
        %v4152 = vsel %vm433, %v4101, 0.0
        %v4153 = vsel %vm432, %v4100, 0.0
        %v4154 = vsel %vm433, %v4099, 0.0
        %v4155 = vsel %vm432, %v4098, 0.0
        %v4156 = vsel %vm433, %v4097, 0.0
        %v4157 = vsel %vm432, %v4096, 0.0
        %v4158 = vsel %vm433, %v4095, 0.0
        %v4159 = vrot.slane %v4031, 1
        %v4160 = vrot.slane %v4032, 1
        %v4161 = vrot.slane %v4033, 1
        %v4162 = vrot.slane %v4034, 1
        %v4163 = vrot.slane %v4035, 1
        %v4164 = vrot.slane %v4036, 1
        %v4165 = vrot.slane %v4037, 1
        %v4166 = vrot.slane %v4038, 1
        %v4167 = vrot.slane %v4039, 1
        %v4168 = vrot.slane %v4040, 1
        %v4169 = vrot.slane %v4041, 1
        %v4170 = vrot.slane %v4042, 1
        %v4171 = vrot.slane %v4043, 1
        %v4172 = vrot.slane %v4044, 1
        %v4173 = vrot.slane %v4045, 1
        %v4174 = vrot.slane %v4046, 1
        %v4175 = vrot.slane %v4047, 1
        %v4176 = vrot.slane %v4048, 1
        %v4177 = vrot.slane %v4049, 1
        %v4178 = vrot.slane %v4050, 1
        %v4179 = vrot.slane %v4051, 1
        %v4180 = vrot.slane %v4052, 1
        %v4181 = vrot.slane %v4053, 1
        %v4182 = vrot.slane %v4054, 1
        %v4183 = vrot.slane %v4055, 1
        %v4184 = vrot.slane %v4056, 1
        %v4185 = vrot.slane %v4057, 1
        %v4186 = vrot.slane %v4058, 1
        %v4187 = vrot.slane %v4059, 1
        %v4188 = vrot.slane %v4060, 1
        %v4189 = vrot.slane %v4061, 1
        %v4190 = vrot.slane %v4062, 1
        %v4191 = vsel %vm565, %v4189, %v4190
        %v4192 = vsel %vm565, %v4188, %v4189
        %v4193 = vsel %vm565, %v4187, %v4188
        %v4194 = vsel %vm565, %v4186, %v4187
        %v4195 = vsel %vm565, %v4185, %v4186
        %v4196 = vsel %vm565, %v4184, %v4185
        %v4197 = vsel %vm565, %v4183, %v4184
        %v4198 = vsel %vm565, %v4182, %v4183
        %v4199 = vsel %vm565, %v4181, %v4182
        %v4200 = vsel %vm565, %v4180, %v4181
        %v4201 = vsel %vm565, %v4179, %v4180
        %v4202 = vsel %vm565, %v4178, %v4179
        %v4203 = vsel %vm565, %v4177, %v4178
        %v4204 = vsel %vm565, %v4176, %v4177
        %v4205 = vsel %vm565, %v4175, %v4176
        %v4206 = vsel %vm565, %v4174, %v4175
        %v4207 = vsel %vm565, %v4173, %v4174
        %v4208 = vsel %vm565, %v4172, %v4173
        %v4209 = vsel %vm565, %v4171, %v4172
        %v4210 = vsel %vm565, %v4170, %v4171
        %v4211 = vsel %vm565, %v4169, %v4170
        %v4212 = vsel %vm565, %v4168, %v4169
        %v4213 = vsel %vm565, %v4167, %v4168
        %v4214 = vsel %vm565, %v4166, %v4167
        %v4215 = vsel %vm565, %v4165, %v4166
        %v4216 = vsel %vm565, %v4164, %v4165
        %v4217 = vsel %vm565, %v4163, %v4164
        %v4218 = vsel %vm565, %v4162, %v4163
        %v4219 = vsel %vm565, %v4161, %v4162
        %v4220 = vsel %vm565, %v4160, %v4161
        %v4221 = vsel %vm565, %v4159, %v4160
        %v4222 = vsel %vm565, %v4190, %v4159
        %v4223 = vsel %vm531, %v4221, 0.0
        %v4224 = vsel %vm532, %v4220, 0.0
        %v4225 = vsel %vm531, %v4219, 0.0
        %v4226 = vsel %vm532, %v4218, 0.0
        %v4227 = vsel %vm531, %v4217, 0.0
        %v4228 = vsel %vm532, %v4216, 0.0
        %v4229 = vsel %vm531, %v4215, 0.0
        %v4230 = vsel %vm532, %v4214, 0.0
        %v4231 = vsel %vm531, %v4213, 0.0
        %v4232 = vsel %vm532, %v4212, 0.0
        %v4233 = vsel %vm531, %v4211, 0.0
        %v4234 = vsel %vm532, %v4210, 0.0
        %v4235 = vsel %vm531, %v4209, 0.0
        %v4236 = vsel %vm532, %v4208, 0.0
        %v4237 = vsel %vm531, %v4207, 0.0
        %v4238 = vsel %vm532, %v4206, 0.0
        %v4239 = vsel %vm531, %v4205, 0.0
        %v4240 = vsel %vm532, %v4204, 0.0
        %v4241 = vsel %vm531, %v4203, 0.0
        %v4242 = vsel %vm532, %v4202, 0.0
        %v4243 = vsel %vm531, %v4201, 0.0
        %v4244 = vsel %vm532, %v4200, 0.0
        %v4245 = vsel %vm531, %v4199, 0.0
        %v4246 = vsel %vm532, %v4198, 0.0
        %v4247 = vsel %vm531, %v4197, 0.0
        %v4248 = vsel %vm532, %v4196, 0.0
        %v4249 = vsel %vm531, %v4195, 0.0
        %v4250 = vsel %vm532, %v4194, 0.0
        %v4251 = vsel %vm531, %v4193, 0.0
        %v4252 = vsel %vm532, %v4192, 0.0
        %v4253 = vsel %vm531, %v4191, 0.0
        %v4254 = vsel %vm532, %v4222, 0.0
        %v4255 = vpack.c.bf16 %v4128, %v4127
        %v4256 = vpack.c.bf16 %v4130, %v4129
        %v4257 = vpack.c.bf16 %v4132, %v4131
        %v4258 = vpack.c.bf16 %v4134, %v4133
        %v4259 = vpack.c.bf16 %v4136, %v4135
        %v4260 = vpack.c.bf16 %v4138, %v4137
        %v4261 = vpack.c.bf16 %v4140, %v4139
        %v4262 = vpack.c.bf16 %v4142, %v4141
        %v4263 = vpack.c.bf16 %v4144, %v4143
        %v4264 = vpack.c.bf16 %v4146, %v4145
        %v4265 = vpack.c.bf16 %v4148, %v4147
        %v4266 = vpack.c.bf16 %v4150, %v4149
        %v4267 = vpack.c.bf16 %v4152, %v4151
        %v4268 = vpack.c.bf16 %v4154, %v4153
        %v4269 = vpack.c.bf16 %v4156, %v4155
        %v4270 = vpack.c.bf16 %v4158, %v4157
        %v4271 = vpack.c.bf16 %v4224, %v4223
        %v4272 = vpack.c.bf16 %v4226, %v4225
        %v4273 = vpack.c.bf16 %v4228, %v4227
        %v4274 = vpack.c.bf16 %v4230, %v4229
        %v4275 = vpack.c.bf16 %v4232, %v4231
        %v4276 = vpack.c.bf16 %v4234, %v4233
        %v4277 = vpack.c.bf16 %v4236, %v4235
        %v4278 = vpack.c.bf16 %v4238, %v4237
        %v4279 = vpack.c.bf16 %v4240, %v4239
        %v4280 = vpack.c.bf16 %v4242, %v4241
        %v4281 = vpack.c.bf16 %v4244, %v4243
        %v4282 = vpack.c.bf16 %v4246, %v4245
        %v4283 = vpack.c.bf16 %v4248, %v4247
        %v4284 = vpack.c.bf16 %v4250, %v4249
        %v4285 = vpack.c.bf16 %v4252, %v4251
        %v4286 = vpack.c.bf16 %v4254, %v4253
        %s4287 = scalar_lea.vmem [#allocation4], 1152
        %v4288 = vld [vmem:[%s4287] sm:$0xf]
        %v4289 = vld [vmem:[%s4287 + $0x4] sm:$0xf]
        %v4290 = vld [vmem:[%s4287 + $0x8] sm:$0xf]
        %v4291 = vld [vmem:[%s4287 + $0xc] sm:$0xf]
        %v4292 = vld [vmem:[%s4287 + $0x10] sm:$0xf]
        %v4293 = vld [vmem:[%s4287 + $0x14] sm:$0xf]
        %v4294 = vld [vmem:[%s4287 + $0x18] sm:$0xf]
        %v4295 = vld [vmem:[%s4287 + $0x1c] sm:$0xf]
        %v4296 = vld [vmem:[%s4287 + $0x20] sm:$0xf]
        %v4297 = vld [vmem:[%s4287 + $0x24] sm:$0xf]
        %v4298 = vld [vmem:[%s4287 + $0x28] sm:$0xf]
        %v4299 = vld [vmem:[%s4287 + $0x2c] sm:$0xf]
        %v4300 = vld [vmem:[%s4287 + $0x30] sm:$0xf]
        %v4301 = vld [vmem:[%s4287 + $0x34] sm:$0xf]
        %v4302 = vld [vmem:[%s4287 + $0x38] sm:$0xf]
        %v4303 = vld [vmem:[%s4287 + $0x3c] sm:$0xf]
        %v4304 = vld [vmem:[%s4287 + $0x40] sm:$0xf]
        %v4305 = vld [vmem:[%s4287 + $0x44] sm:$0xf]
        %v4306 = vld [vmem:[%s4287 + $0x48] sm:$0xf]
        %v4307 = vld [vmem:[%s4287 + $0x4c] sm:$0xf]
        %v4308 = vld [vmem:[%s4287 + $0x50] sm:$0xf]
        %v4309 = vld [vmem:[%s4287 + $0x54] sm:$0xf]
        %v4310 = vld [vmem:[%s4287 + $0x58] sm:$0xf]
        %v4311 = vld [vmem:[%s4287 + $0x5c] sm:$0xf]
        %v4312 = vld [vmem:[%s4287 + $0x60] sm:$0xf]
        %v4313 = vld [vmem:[%s4287 + $0x64] sm:$0xf]
        %v4314 = vld [vmem:[%s4287 + $0x68] sm:$0xf]
        %v4315 = vld [vmem:[%s4287 + $0x6c] sm:$0xf]
        %v4316 = vld [vmem:[%s4287 + $0x70] sm:$0xf]
        %v4317 = vld [vmem:[%s4287 + $0x74] sm:$0xf]
        %v4318 = vld [vmem:[%s4287 + $0x78] sm:$0xf]
        %v4319 = vld [vmem:[%s4287 + $0x7c] sm:$0xf]
        %v4320 = vld [vmem:[%s4287 + $0x80] sm:$0xf]
        %v4321 = vld [vmem:[%s4287 + $0x84] sm:$0xf]
        %v4322 = vld [vmem:[%s4287 + $0x88] sm:$0xf]
        %v4323 = vld [vmem:[%s4287 + $0x8c] sm:$0xf]
        %v4324 = vld [vmem:[%s4287 + $0x90] sm:$0xf]
        %v4325 = vld [vmem:[%s4287 + $0x94] sm:$0xf]
        %v4326 = vld [vmem:[%s4287 + $0x98] sm:$0xf]
        %v4327 = vld [vmem:[%s4287 + $0x9c] sm:$0xf]
        %v4328 = vld [vmem:[%s4287 + $0xa0] sm:$0xf]
        %v4329 = vld [vmem:[%s4287 + $0xa4] sm:$0xf]
        %v4330 = vld [vmem:[%s4287 + $0xa8] sm:$0xf]
        %v4331 = vld [vmem:[%s4287 + $0xac] sm:$0xf]
        %v4332 = vld [vmem:[%s4287 + $0xb0] sm:$0xf]
        %v4333 = vld [vmem:[%s4287 + $0xb4] sm:$0xf]
        %v4334 = vld [vmem:[%s4287 + $0xb8] sm:$0xf]
        %v4335 = vld [vmem:[%s4287 + $0xbc] sm:$0xf]
        %v4336 = vld [vmem:[%s4287 + $0xc0] sm:$0xf]
        %v4337 = vld [vmem:[%s4287 + $0xc4] sm:$0xf]
        %v4338 = vld [vmem:[%s4287 + $0xc8] sm:$0xf]
        %v4339 = vld [vmem:[%s4287 + $0xcc] sm:$0xf]
        %v4340 = vld [vmem:[%s4287 + $0xd0] sm:$0xf]
        %v4341 = vld [vmem:[%s4287 + $0xd4] sm:$0xf]
        %v4342 = vld [vmem:[%s4287 + $0xd8] sm:$0xf]
        %v4343 = vld [vmem:[%s4287 + $0xdc] sm:$0xf]
        %v4344 = vld [vmem:[%s4287 + $0xe0] sm:$0xf]
        %v4345 = vld [vmem:[%s4287 + $0xe4] sm:$0xf]
        %v4346 = vld [vmem:[%s4287 + $0xe8] sm:$0xf]
        %v4347 = vld [vmem:[%s4287 + $0xec] sm:$0xf]
        %v4348 = vld [vmem:[%s4287 + $0xf0] sm:$0xf]
        %v4349 = vld [vmem:[%s4287 + $0xf4] sm:$0xf]
        %v4350 = vld [vmem:[%s4287 + $0xf8] sm:$0xf]
        %v4351 = vld [vmem:[%s4287 + $0xfc] sm:$0xf]
        %v4352 = vld [vmem:[%s4287 + $0x100] sm:$0xf]
        %v4353 = vld [vmem:[%s4287 + $0x104] sm:$0xf]
        %v4354 = vld [vmem:[%s4287 + $0x108] sm:$0xf]
        %v4355 = vld [vmem:[%s4287 + $0x10c] sm:$0xf]
        %v4356 = vld [vmem:[%s4287 + $0x110] sm:$0xf]
        %v4357 = vld [vmem:[%s4287 + $0x114] sm:$0xf]
        %v4358 = vld [vmem:[%s4287 + $0x118] sm:$0xf]
        %v4359 = vld [vmem:[%s4287 + $0x11c] sm:$0xf]
        %v4360 = vld [vmem:[%s4287 + $0x120] sm:$0xf]
        %v4361 = vld [vmem:[%s4287 + $0x124] sm:$0xf]
        %v4362 = vld [vmem:[%s4287 + $0x128] sm:$0xf]
        %v4363 = vld [vmem:[%s4287 + $0x12c] sm:$0xf]
        %v4364 = vld [vmem:[%s4287 + $0x130] sm:$0xf]
        %v4365 = vld [vmem:[%s4287 + $0x134] sm:$0xf]
        %v4366 = vld [vmem:[%s4287 + $0x138] sm:$0xf]
        %v4367 = vld [vmem:[%s4287 + $0x13c] sm:$0xf]
        %v4368 = vld [vmem:[%s4287 + $0x140] sm:$0xf]
        %v4369 = vld [vmem:[%s4287 + $0x144] sm:$0xf]
        %v4370 = vld [vmem:[%s4287 + $0x148] sm:$0xf]
        %v4371 = vld [vmem:[%s4287 + $0x14c] sm:$0xf]
        %v4372 = vld [vmem:[%s4287 + $0x150] sm:$0xf]
        %v4373 = vld [vmem:[%s4287 + $0x154] sm:$0xf]
        %v4374 = vld [vmem:[%s4287 + $0x158] sm:$0xf]
        %v4375 = vld [vmem:[%s4287 + $0x15c] sm:$0xf]
        %v4376 = vld [vmem:[%s4287 + $0x160] sm:$0xf]
        %v4377 = vld [vmem:[%s4287 + $0x164] sm:$0xf]
        %v4378 = vld [vmem:[%s4287 + $0x168] sm:$0xf]
        %v4379 = vld [vmem:[%s4287 + $0x16c] sm:$0xf]
        %v4380 = vld [vmem:[%s4287 + $0x170] sm:$0xf]
        %v4381 = vld [vmem:[%s4287 + $0x174] sm:$0xf]
        %v4382 = vld [vmem:[%s4287 + $0x178] sm:$0xf]
        %v4383 = vld [vmem:[%s4287 + $0x17c] sm:$0xf]
        %v4384 = vld [vmem:[%s4287 + $0x180] sm:$0xf]
        %v4385 = vld [vmem:[%s4287 + $0x184] sm:$0xf]
        %v4386 = vld [vmem:[%s4287 + $0x188] sm:$0xf]
        %v4387 = vld [vmem:[%s4287 + $0x18c] sm:$0xf]
        %v4388 = vld [vmem:[%s4287 + $0x190] sm:$0xf]
        %v4389 = vld [vmem:[%s4287 + $0x194] sm:$0xf]
        %v4390 = vld [vmem:[%s4287 + $0x198] sm:$0xf]
        %v4391 = vld [vmem:[%s4287 + $0x19c] sm:$0xf]
        %v4392 = vld [vmem:[%s4287 + $0x1a0] sm:$0xf]
        %v4393 = vld [vmem:[%s4287 + $0x1a4] sm:$0xf]
        %v4394 = vld [vmem:[%s4287 + $0x1a8] sm:$0xf]
        %v4395 = vld [vmem:[%s4287 + $0x1ac] sm:$0xf]
        %v4396 = vld [vmem:[%s4287 + $0x1b0] sm:$0xf]
        %v4397 = vld [vmem:[%s4287 + $0x1b4] sm:$0xf]
        %v4398 = vld [vmem:[%s4287 + $0x1b8] sm:$0xf]
        %v4399 = vld [vmem:[%s4287 + $0x1bc] sm:$0xf]
        %v4400 = vld [vmem:[%s4287 + $0x1c0] sm:$0xf]
        %v4401 = vld [vmem:[%s4287 + $0x1c4] sm:$0xf]
        %v4402 = vld [vmem:[%s4287 + $0x1c8] sm:$0xf]
        %v4403 = vld [vmem:[%s4287 + $0x1cc] sm:$0xf]
        %v4404 = vld [vmem:[%s4287 + $0x1d0] sm:$0xf]
        %v4405 = vld [vmem:[%s4287 + $0x1d4] sm:$0xf]
        %v4406 = vld [vmem:[%s4287 + $0x1d8] sm:$0xf]
        %v4407 = vld [vmem:[%s4287 + $0x1dc] sm:$0xf]
        %v4408 = vld [vmem:[%s4287 + $0x1e0] sm:$0xf]
        %v4409 = vld [vmem:[%s4287 + $0x1e4] sm:$0xf]
        %v4410 = vld [vmem:[%s4287 + $0x1e8] sm:$0xf]
        %v4411 = vld [vmem:[%s4287 + $0x1ec] sm:$0xf]
        %v4412 = vld [vmem:[%s4287 + $0x1f0] sm:$0xf]
        %v4413 = vld [vmem:[%s4287 + $0x1f4] sm:$0xf]
        %v4414 = vld [vmem:[%s4287 + $0x1f8] sm:$0xf]
        %v4415 = vld [vmem:[%s4287 + $0x1fc] sm:$0xf]
        %v4416 = vld [vmem:[%s4287 + $0x200] sm:$0xf]
        %v4417 = vld [vmem:[%s4287 + $0x204] sm:$0xf]
        %v4418 = vld [vmem:[%s4287 + $0x208] sm:$0xf]
        %v4419 = vld [vmem:[%s4287 + $0x20c] sm:$0xf]
        %v4420 = vld [vmem:[%s4287 + $0x210] sm:$0xf]
        %v4421 = vld [vmem:[%s4287 + $0x214] sm:$0xf]
        %v4422 = vld [vmem:[%s4287 + $0x218] sm:$0xf]
        %v4423 = vld [vmem:[%s4287 + $0x21c] sm:$0xf]
        %v4424 = vld [vmem:[%s4287 + $0x220] sm:$0xf]
        %v4425 = vld [vmem:[%s4287 + $0x224] sm:$0xf]
        %v4426 = vld [vmem:[%s4287 + $0x228] sm:$0xf]
        %v4427 = vld [vmem:[%s4287 + $0x22c] sm:$0xf]
        %v4428 = vld [vmem:[%s4287 + $0x230] sm:$0xf]
        %v4429 = vld [vmem:[%s4287 + $0x234] sm:$0xf]
        %v4430 = vld [vmem:[%s4287 + $0x238] sm:$0xf]
        %v4431 = vld [vmem:[%s4287 + $0x23c] sm:$0xf]
        %v4576 = vunpack.c.l.b16 %v4288
        %v4577 = vunpack.c.l.b16 %v4289
        %v4578 = vunpack.c.l.b16 %v4290
        %v4579 = vunpack.c.l.b16 %v4291
        %v4580 = vunpack.c.l.b16 %v4292
        %v4581 = vunpack.c.l.b16 %v4293
        %v4582 = vunpack.c.l.b16 %v4294
        %v4583 = vunpack.c.l.b16 %v4295
        %v4584 = vunpack.c.l.b16 %v4296
        %v4585 = vunpack.c.l.b16 %v4297
        %v4586 = vunpack.c.l.b16 %v4298
        %v4587 = vunpack.c.l.b16 %v4299
        %v4588 = vunpack.c.l.b16 %v4300
        %v4589 = vunpack.c.l.b16 %v4301
        %v4590 = vunpack.c.l.b16 %v4302
        %v4591 = vunpack.c.l.b16 %v4303
        %v4592 = vunpack.c.l.b16 %v4304
        %v4593 = vunpack.c.l.b16 %v4305
        %v4594 = vunpack.c.l.b16 %v4306
        %v4595 = vunpack.c.l.b16 %v4307
        %v4596 = vunpack.c.l.b16 %v4308
        %v4597 = vunpack.c.l.b16 %v4309
        %v4598 = vunpack.c.l.b16 %v4310
        %v4599 = vunpack.c.l.b16 %v4311
        %v4600 = vunpack.c.l.b16 %v4312
        %v4601 = vunpack.c.l.b16 %v4313
        %v4602 = vunpack.c.l.b16 %v4314
        %v4603 = vunpack.c.l.b16 %v4315
        %v4604 = vunpack.c.l.b16 %v4316
        %v4605 = vunpack.c.l.b16 %v4317
        %v4606 = vunpack.c.l.b16 %v4318
        %v4607 = vunpack.c.l.b16 %v4319
        %v4608 = vunpack.c.l.b16 %v4320
        %v4609 = vunpack.c.l.b16 %v4321
        %v4610 = vunpack.c.l.b16 %v4322
        %v4611 = vunpack.c.l.b16 %v4323
        %v4612 = vunpack.c.l.b16 %v4324
        %v4613 = vunpack.c.l.b16 %v4325
        %v4614 = vunpack.c.l.b16 %v4326
        %v4615 = vunpack.c.l.b16 %v4327
        %v4616 = vunpack.c.l.b16 %v4328
        %v4617 = vunpack.c.l.b16 %v4329
        %v4618 = vunpack.c.l.b16 %v4330
        %v4619 = vunpack.c.l.b16 %v4331
        %v4620 = vunpack.c.l.b16 %v4332
        %v4621 = vunpack.c.l.b16 %v4333
        %v4622 = vunpack.c.l.b16 %v4334
        %v4623 = vunpack.c.l.b16 %v4335
        %v4624 = vunpack.c.l.b16 %v4336
        %v4625 = vunpack.c.l.b16 %v4337
        %v4626 = vunpack.c.l.b16 %v4338
        %v4627 = vunpack.c.l.b16 %v4339
        %v4628 = vunpack.c.l.b16 %v4340
        %v4629 = vunpack.c.l.b16 %v4341
        %v4630 = vunpack.c.l.b16 %v4342
        %v4631 = vunpack.c.l.b16 %v4343
        %v4632 = vunpack.c.l.b16 %v4344
        %v4633 = vunpack.c.l.b16 %v4345
        %v4634 = vunpack.c.l.b16 %v4346
        %v4635 = vunpack.c.l.b16 %v4347
        %v4636 = vunpack.c.l.b16 %v4348
        %v4637 = vunpack.c.l.b16 %v4349
        %v4638 = vunpack.c.l.b16 %v4350
        %v4639 = vunpack.c.l.b16 %v4351
        %v4640 = vunpack.c.l.b16 %v4352
        %v4641 = vunpack.c.l.b16 %v4353
        %v4642 = vunpack.c.l.b16 %v4354
        %v4643 = vunpack.c.l.b16 %v4355
        %v4644 = vunpack.c.l.b16 %v4356
        %v4645 = vunpack.c.l.b16 %v4357
        %v4646 = vunpack.c.l.b16 %v4358
        %v4647 = vunpack.c.l.b16 %v4359
        %v4648 = vunpack.c.l.b16 %v4360
        %v4649 = vunpack.c.l.b16 %v4361
        %v4650 = vunpack.c.l.b16 %v4362
        %v4651 = vunpack.c.l.b16 %v4363
        %v4652 = vunpack.c.l.b16 %v4364
        %v4653 = vunpack.c.l.b16 %v4365
        %v4654 = vunpack.c.l.b16 %v4366
        %v4655 = vunpack.c.l.b16 %v4367
        %v4656 = vunpack.c.l.b16 %v4368
        %v4657 = vunpack.c.l.b16 %v4369
        %v4658 = vunpack.c.l.b16 %v4370
        %v4659 = vunpack.c.l.b16 %v4371
        %v4660 = vunpack.c.l.b16 %v4372
        %v4661 = vunpack.c.l.b16 %v4373
        %v4662 = vunpack.c.l.b16 %v4374
        %v4663 = vunpack.c.l.b16 %v4375
        %v4664 = vunpack.c.l.b16 %v4376
        %v4665 = vunpack.c.l.b16 %v4377
        %v4666 = vunpack.c.l.b16 %v4378
        %v4667 = vunpack.c.l.b16 %v4379
        %v4668 = vunpack.c.l.b16 %v4380
        %v4669 = vunpack.c.l.b16 %v4381
        %v4670 = vunpack.c.l.b16 %v4382
        %v4671 = vunpack.c.l.b16 %v4383
        %v4672 = vunpack.c.l.b16 %v4384
        %v4673 = vunpack.c.l.b16 %v4385
        %v4674 = vunpack.c.l.b16 %v4386
        %v4675 = vunpack.c.l.b16 %v4387
        %v4676 = vunpack.c.l.b16 %v4388
        %v4677 = vunpack.c.l.b16 %v4389
        %v4678 = vunpack.c.l.b16 %v4390
        %v4679 = vunpack.c.l.b16 %v4391
        %v4680 = vunpack.c.l.b16 %v4392
        %v4681 = vunpack.c.l.b16 %v4393
        %v4682 = vunpack.c.l.b16 %v4394
        %v4683 = vunpack.c.l.b16 %v4395
        %v4684 = vunpack.c.l.b16 %v4396
        %v4685 = vunpack.c.l.b16 %v4397
        %v4686 = vunpack.c.l.b16 %v4398
        %v4687 = vunpack.c.l.b16 %v4399
        %v4688 = vunpack.c.l.b16 %v4400
        %v4689 = vunpack.c.l.b16 %v4401
        %v4690 = vunpack.c.l.b16 %v4402
        %v4691 = vunpack.c.l.b16 %v4403
        %v4692 = vunpack.c.l.b16 %v4404
        %v4693 = vunpack.c.l.b16 %v4405
        %v4694 = vunpack.c.l.b16 %v4406
        %v4695 = vunpack.c.l.b16 %v4407
        %v4696 = vunpack.c.l.b16 %v4408
        %v4697 = vunpack.c.l.b16 %v4409
        %v4698 = vunpack.c.l.b16 %v4410
        %v4699 = vunpack.c.l.b16 %v4411
        %v4700 = vunpack.c.l.b16 %v4412
        %v4701 = vunpack.c.l.b16 %v4413
        %v4702 = vunpack.c.l.b16 %v4414
        %v4703 = vunpack.c.l.b16 %v4415
        %v4704 = vunpack.c.l.b16 %v4416
        %v4705 = vunpack.c.l.b16 %v4417
        %v4706 = vunpack.c.l.b16 %v4418
        %v4707 = vunpack.c.l.b16 %v4419
        %v4708 = vunpack.c.l.b16 %v4420
        %v4709 = vunpack.c.l.b16 %v4421
        %v4710 = vunpack.c.l.b16 %v4422
        %v4711 = vunpack.c.l.b16 %v4423
        %v4712 = vunpack.c.l.b16 %v4424
        %v4713 = vunpack.c.l.b16 %v4425
        %v4714 = vunpack.c.l.b16 %v4426
        %v4715 = vunpack.c.l.b16 %v4427
        %v4716 = vunpack.c.l.b16 %v4428
        %v4717 = vunpack.c.l.b16 %v4429
        %v4718 = vunpack.c.l.b16 %v4430
        %v4719 = vunpack.c.l.b16 %v4431
        %v4720 = vpack.c.b16 %v4577, %v4576
        %v4721 = vpack.c.b16 %v4579, %v4578
        %v4722 = vpack.c.b16 %v4581, %v4580
        %v4723 = vpack.c.b16 %v4583, %v4582
        %v4724 = vpack.c.b16 %v4585, %v4584
        %v4725 = vpack.c.b16 %v4587, %v4586
        %v4726 = vpack.c.b16 %v4589, %v4588
        %v4727 = vpack.c.b16 %v4591, %v4590
        %v4728 = vpack.c.b16 %v4593, %v4592
        %v4729 = vpack.c.b16 %v4595, %v4594
        %v4730 = vpack.c.b16 %v4597, %v4596
        %v4731 = vpack.c.b16 %v4599, %v4598
        %v4732 = vpack.c.b16 %v4601, %v4600
        %v4733 = vpack.c.b16 %v4603, %v4602
        %v4734 = vpack.c.b16 %v4605, %v4604
        %v4735 = vpack.c.b16 %v4607, %v4606
        %v4736 = vpack.c.b16 %v4609, %v4608
        %v4737 = vpack.c.b16 %v4611, %v4610
        %v4738 = vpack.c.b16 %v4613, %v4612
        %v4739 = vpack.c.b16 %v4615, %v4614
        %v4740 = vpack.c.b16 %v4617, %v4616
        %v4741 = vpack.c.b16 %v4619, %v4618
        %v4742 = vpack.c.b16 %v4621, %v4620
        %v4743 = vpack.c.b16 %v4623, %v4622
        %v4744 = vpack.c.b16 %v4625, %v4624
        %v4745 = vpack.c.b16 %v4627, %v4626
        %v4746 = vpack.c.b16 %v4629, %v4628
        %v4747 = vpack.c.b16 %v4631, %v4630
        %v4748 = vpack.c.b16 %v4633, %v4632
        %v4749 = vpack.c.b16 %v4635, %v4634
        %v4750 = vpack.c.b16 %v4637, %v4636
        %v4751 = vpack.c.b16 %v4639, %v4638
        %v4752 = vpack.c.b16 %v4641, %v4640
        %v4753 = vpack.c.b16 %v4643, %v4642
        %v4754 = vpack.c.b16 %v4645, %v4644
        %v4755 = vpack.c.b16 %v4647, %v4646
        %v4756 = vpack.c.b16 %v4649, %v4648
        %v4757 = vpack.c.b16 %v4651, %v4650
        %v4758 = vpack.c.b16 %v4653, %v4652
        %v4759 = vpack.c.b16 %v4655, %v4654
        %v4760 = vpack.c.b16 %v4657, %v4656
        %v4761 = vpack.c.b16 %v4659, %v4658
        %v4762 = vpack.c.b16 %v4661, %v4660
        %v4763 = vpack.c.b16 %v4663, %v4662
        %v4764 = vpack.c.b16 %v4665, %v4664
        %v4765 = vpack.c.b16 %v4667, %v4666
        %v4766 = vpack.c.b16 %v4669, %v4668
        %v4767 = vpack.c.b16 %v4671, %v4670
        %v4768 = vpack.c.b16 %v4673, %v4672
        %v4769 = vpack.c.b16 %v4675, %v4674
        %v4770 = vpack.c.b16 %v4677, %v4676
        %v4771 = vpack.c.b16 %v4679, %v4678
        %v4772 = vpack.c.b16 %v4681, %v4680
        %v4773 = vpack.c.b16 %v4683, %v4682
        %v4774 = vpack.c.b16 %v4685, %v4684
        %v4775 = vpack.c.b16 %v4687, %v4686
        %v4776 = vpack.c.b16 %v4689, %v4688
        %v4777 = vpack.c.b16 %v4691, %v4690
        %v4778 = vpack.c.b16 %v4693, %v4692
        %v4779 = vpack.c.b16 %v4695, %v4694
        %v4780 = vpack.c.b16 %v4697, %v4696
        %v4781 = vpack.c.b16 %v4699, %v4698
        %v4782 = vpack.c.b16 %v4701, %v4700
        %v4783 = vpack.c.b16 %v4703, %v4702
        %v4784 = vpack.c.b16 %v4705, %v4704
        %v4785 = vpack.c.b16 %v4707, %v4706
        %v4786 = vpack.c.b16 %v4709, %v4708
        %v4787 = vpack.c.b16 %v4711, %v4710
        %v4788 = vpack.c.b16 %v4713, %v4712
        %v4789 = vpack.c.b16 %v4715, %v4714
        %v4790 = vpack.c.b16 %v4717, %v4716
        %v4791 = vpack.c.b16 %v4719, %v4718
        %4864 = vmatprep.subr.bf16.mxu0 0
        %4865 = vmatpush1.bf16.msra.mxu0 %v4720
        %4866 = vmatprep.subr.bf16.mxu0 0
        %4867 = vmatpush1.bf16.msra.mxu0 %v4721
        %4868 = vmatprep.subr.bf16.mxu0 0
        %4869 = vmatpush1.bf16.msra.mxu0 %v4722
        %4870 = vmatprep.subr.bf16.mxu0 0
        %4871 = vmatpush1.bf16.msra.mxu0 %v4723
        %4872 = vmatprep.subr.bf16.mxu0 0
        %4873 = vmatpush1.bf16.msra.mxu0 %v4724
        %4874 = vmatprep.subr.bf16.mxu0 0
        %4875 = vmatpush1.bf16.msra.mxu0 %v4725
        %4876 = vmatprep.subr.bf16.mxu0 0
        %4877 = vmatpush1.bf16.msra.mxu0 %v4726
        %4878 = vmatprep.subr.bf16.mxu0 0
        %4879 = vmatpush1.bf16.msra.mxu0 %v4727
        %4880 = vmatprep.subr.bf16.mxu0 0
        %4881 = vmatpush1.bf16.msra.mxu0 %v4728
        %4882 = vmatprep.subr.bf16.mxu0 0
        %4883 = vmatpush1.bf16.msra.mxu0 %v4729
        %4884 = vmatprep.subr.bf16.mxu0 0
        %4885 = vmatpush1.bf16.msra.mxu0 %v4730
        %4886 = vmatprep.subr.bf16.mxu0 0
        %4887 = vmatpush1.bf16.msra.mxu0 %v4731
        %4888 = vmatprep.subr.bf16.mxu0 0
        %4889 = vmatpush1.bf16.msra.mxu0 %v4732
        %4890 = vmatprep.subr.bf16.mxu0 0
        %4891 = vmatpush1.bf16.msra.mxu0 %v4733
        %4892 = vmatprep.subr.bf16.mxu0 0
        %4893 = vmatpush1.bf16.msra.mxu0 %v4734
        %4894 = vmatprep.subr.bf16.mxu0 0
        %4895 = vmatpush1.bf16.msra.mxu0 %v4735
        %4896 = vmatprep.mubr.bf16.mxu0 0
        %4897 = vmatmul.mubr.bf16.gmra.mrb[0].mxu0 0
        %v4898 = vpop.f32.mrb[0].mxu0
        %v4899 = vadd.f32 0.0, %v4898
        %v4900 = vpop.f32.mrb[0].mxu0
        %v4901 = vpop.f32.mrb[0].mxu0
        %v4902 = vadd.f32 0.0, %v4901
        %v4903 = vpop.f32.mrb[0].mxu0
        %4904 = vmatprep.mubr.bf16.mxu0 %v4015
        %4905 = vmatmul.mubr.bf16.gmra.mrb[0].mxu0 %v4255
        %v4906 = vpop.f32.mrb[0].mxu0
        %v4907 = vadd.f32 0.0, %v4906
        %v4908 = vpop.f32.mrb[0].mxu0
        %v4909 = vpop.f32.mrb[0].mxu0
        %v4910 = vadd.f32 0.0, %v4909
        %v4911 = vpop.f32.mrb[0].mxu0
        %4912 = vmatprep.mubr.bf16.mxu0 %v4016
        %4913 = vmatmul.mubr.bf16.gmra.mrb[0].mxu0 %v4256
        %v4914 = vpop.f32.mrb[0].mxu0
        %v4915 = vadd.f32 0.0, %v4914
        %v4916 = vpop.f32.mrb[0].mxu0
        %v4917 = vpop.f32.mrb[0].mxu0
        %v4918 = vadd.f32 0.0, %v4917
        %v4919 = vpop.f32.mrb[0].mxu0
        %4920 = vmatprep.mubr.bf16.mxu0 %v4017
        %4921 = vmatmul.mubr.bf16.gmra.mrb[0].mxu0 %v4257
        %v4922 = vpop.f32.mrb[0].mxu0
        %v4923 = vadd.f32 0.0, %v4922
        %v4924 = vpop.f32.mrb[0].mxu0
        %v4925 = vpop.f32.mrb[0].mxu0
        %v4926 = vadd.f32 0.0, %v4925
        %v4927 = vpop.f32.mrb[0].mxu0
        %4928 = vmatprep.mubr.bf16.mxu0 %v4018
        %4929 = vmatmul.mubr.bf16.gmra.mrb[0].mxu0 %v4258
        %v4930 = vpop.f32.mrb[0].mxu0
        %v4931 = vadd.f32 0.0, %v4930
        %v4932 = vpop.f32.mrb[0].mxu0
        %v4933 = vpop.f32.mrb[0].mxu0
        %v4934 = vadd.f32 0.0, %v4933
        %v4935 = vpop.f32.mrb[0].mxu0
        %4936 = vmatprep.mubr.bf16.mxu0 %v4019
        %4937 = vmatmul.mubr.bf16.gmra.mrb[0].mxu0 %v4259
        %v4938 = vpop.f32.mrb[0].mxu0
        %v4939 = vadd.f32 0.0, %v4938
        %v4940 = vpop.f32.mrb[0].mxu0
        %v4941 = vpop.f32.mrb[0].mxu0
        %v4942 = vadd.f32 0.0, %v4941
        %v4943 = vpop.f32.mrb[0].mxu0
        %4944 = vmatprep.mubr.bf16.mxu0 %v4020
        %4945 = vmatmul.mubr.bf16.gmra.mrb[0].mxu0 %v4260
        %v4946 = vpop.f32.mrb[0].mxu0
        %v4947 = vadd.f32 0.0, %v4946
        %v4948 = vpop.f32.mrb[0].mxu0
        %v4949 = vpop.f32.mrb[0].mxu0
        %v4950 = vadd.f32 0.0, %v4949
        %v4951 = vpop.f32.mrb[0].mxu0
        %4952 = vmatprep.mubr.bf16.mxu0 %v4021
        %4953 = vmatmul.mubr.bf16.gmra.mrb[0].mxu0 %v4261
        %v4954 = vpop.f32.mrb[0].mxu0
        %v4955 = vadd.f32 0.0, %v4954
        %v4956 = vpop.f32.mrb[0].mxu0
        %v4957 = vpop.f32.mrb[0].mxu0
        %v4958 = vadd.f32 0.0, %v4957
        %v4959 = vpop.f32.mrb[0].mxu0
        %4960 = vmatprep.mubr.bf16.mxu0 %v4022
        %4961 = vmatmul.mubr.bf16.gmra.mrb[0].mxu0 %v4262
        %v4962 = vpop.f32.mrb[0].mxu0
        %v4963 = vadd.f32 0.0, %v4962
        %v4964 = vpop.f32.mrb[0].mxu0
        %v4965 = vpop.f32.mrb[0].mxu0
        %v4966 = vadd.f32 0.0, %v4965
        %v4967 = vpop.f32.mrb[0].mxu0
        %4968 = vmatprep.mubr.bf16.mxu0 %v4023
        %4969 = vmatmul.mubr.bf16.gmra.mrb[0].mxu0 %v4263
        %v4970 = vpop.f32.mrb[0].mxu0
        %v4971 = vadd.f32 0.0, %v4970
        %v4972 = vpop.f32.mrb[0].mxu0
        %v4973 = vpop.f32.mrb[0].mxu0
        %v4974 = vadd.f32 0.0, %v4973
        %v4975 = vpop.f32.mrb[0].mxu0
        %4976 = vmatprep.mubr.bf16.mxu0 %v4024
        %4977 = vmatmul.mubr.bf16.gmra.mrb[0].mxu0 %v4264
        %v4978 = vpop.f32.mrb[0].mxu0
        %v4979 = vadd.f32 0.0, %v4978
        %v4980 = vpop.f32.mrb[0].mxu0
        %v4981 = vpop.f32.mrb[0].mxu0
        %v4982 = vadd.f32 0.0, %v4981
        %v4983 = vpop.f32.mrb[0].mxu0
        %4984 = vmatprep.mubr.bf16.mxu0 %v4025
        %4985 = vmatmul.mubr.bf16.gmra.mrb[0].mxu0 %v4265
        %v4986 = vpop.f32.mrb[0].mxu0
        %v4987 = vadd.f32 0.0, %v4986
        %v4988 = vpop.f32.mrb[0].mxu0
        %v4989 = vpop.f32.mrb[0].mxu0
        %v4990 = vadd.f32 0.0, %v4989
        %v4991 = vpop.f32.mrb[0].mxu0
        %4992 = vmatprep.mubr.bf16.mxu0 %v4026
        %4993 = vmatmul.mubr.bf16.gmra.mrb[0].mxu0 %v4266
        %v4994 = vpop.f32.mrb[0].mxu0
        %v4995 = vadd.f32 0.0, %v4994
        %v4996 = vpop.f32.mrb[0].mxu0
        %v4997 = vpop.f32.mrb[0].mxu0
        %v4998 = vadd.f32 0.0, %v4997
        %v4999 = vpop.f32.mrb[0].mxu0
        %5000 = vmatprep.mubr.bf16.mxu0 %v4027
        %5001 = vmatmul.mubr.bf16.gmra.mrb[0].mxu0 %v4267
        %v5002 = vpop.f32.mrb[0].mxu0
        %v5003 = vadd.f32 0.0, %v5002
        %v5004 = vpop.f32.mrb[0].mxu0
        %v5005 = vpop.f32.mrb[0].mxu0
        %v5006 = vadd.f32 0.0, %v5005
        %v5007 = vpop.f32.mrb[0].mxu0
        %5008 = vmatprep.mubr.bf16.mxu0 %v4028
        %5009 = vmatmul.mubr.bf16.gmra.mrb[0].mxu0 %v4268
        %v5010 = vpop.f32.mrb[0].mxu0
        %v5011 = vadd.f32 0.0, %v5010
        %v5012 = vpop.f32.mrb[0].mxu0
        %v5013 = vpop.f32.mrb[0].mxu0
        %v5014 = vadd.f32 0.0, %v5013
        %v5015 = vpop.f32.mrb[0].mxu0
        %5016 = vmatprep.mubr.bf16.mxu0 %v4029
        %5017 = vmatmul.mubr.bf16.gmra.mrb[0].mxu0 %v4269
        %v5018 = vpop.f32.mrb[0].mxu0
        %v5019 = vadd.f32 0.0, %v5018
        %v5020 = vpop.f32.mrb[0].mxu0
        %v5021 = vpop.f32.mrb[0].mxu0
        %v5022 = vadd.f32 0.0, %v5021
        %v5023 = vpop.f32.mrb[0].mxu0
        %5024 = vdwg.mxu0
        %5025 = vmatprep.subr.bf16.mxu0 0
        %5026 = vmatpush1.bf16.msra.mxu0 %v4736
        %5027 = vmatprep.subr.bf16.mxu0 0
        %5028 = vmatpush1.bf16.msra.mxu0 %v4737
        %5029 = vmatprep.subr.bf16.mxu0 0
        %5030 = vmatpush1.bf16.msra.mxu0 %v4738
        %5031 = vmatprep.subr.bf16.mxu0 0
        %5032 = vmatpush1.bf16.msra.mxu0 %v4739
        %5033 = vmatprep.subr.bf16.mxu0 0
        %5034 = vmatpush1.bf16.msra.mxu0 %v4740
        %5035 = vmatprep.subr.bf16.mxu0 0
        %5036 = vmatpush1.bf16.msra.mxu0 %v4741
        %5037 = vmatprep.subr.bf16.mxu0 0
        %5038 = vmatpush1.bf16.msra.mxu0 %v4742
        %5039 = vmatprep.subr.bf16.mxu0 0
        %5040 = vmatpush1.bf16.msra.mxu0 %v4743
        %5041 = vmatprep.subr.bf16.mxu0 0
        %5042 = vmatpush1.bf16.msra.mxu0 %v4744
        %5043 = vmatprep.subr.bf16.mxu0 0
        %5044 = vmatpush1.bf16.msra.mxu0 %v4745
        %5045 = vmatprep.subr.bf16.mxu0 0
        %5046 = vmatpush1.bf16.msra.mxu0 %v4746
        %5047 = vmatprep.subr.bf16.mxu0 0
        %5048 = vmatpush1.bf16.msra.mxu0 %v4747
        %5049 = vmatprep.subr.bf16.mxu0 0
        %5050 = vmatpush1.bf16.msra.mxu0 %v4748
        %5051 = vmatprep.subr.bf16.mxu0 0
        %5052 = vmatpush1.bf16.msra.mxu0 %v4749
        %5053 = vmatprep.subr.bf16.mxu0 0
        %5054 = vmatpush1.bf16.msra.mxu0 %v4750
        %5055 = vmatprep.subr.bf16.mxu0 0
        %5056 = vmatpush1.bf16.msra.mxu0 %v4751
        %5057 = vmatprep.mubr.bf16.mxu0 %v4255
        %5058 = vmatmul.mubr.bf16.gmra.mrb[0].mxu0 0
        %v5059 = vpop.f32.mrb[0].mxu0
        %v5060 = vadd.f32 %v4899, %v5059
        %v5061 = vpop.f32.mrb[0].mxu0
        %v5062 = vpop.f32.mrb[0].mxu0
        %v5063 = vadd.f32 %v4902, %v5062
        %v5064 = vpop.f32.mrb[0].mxu0
        %5065 = vmatprep.mubr.bf16.mxu0 %v4256
        %5066 = vmatmul.mubr.bf16.gmra.mrb[0].mxu0 %v4271
        %v5067 = vpop.f32.mrb[0].mxu0
        %v5068 = vadd.f32 %v4907, %v5067
        %v5069 = vpop.f32.mrb[0].mxu0
        %v5070 = vpop.f32.mrb[0].mxu0
        %v5071 = vadd.f32 %v4910, %v5070
        %v5072 = vpop.f32.mrb[0].mxu0
        %5073 = vmatprep.mubr.bf16.mxu0 %v4257
        %5074 = vmatmul.mubr.bf16.gmra.mrb[0].mxu0 %v4272
        %v5075 = vpop.f32.mrb[0].mxu0
        %v5076 = vadd.f32 %v4915, %v5075
        %v5077 = vpop.f32.mrb[0].mxu0
        %v5078 = vpop.f32.mrb[0].mxu0
        %v5079 = vadd.f32 %v4918, %v5078
        %v5080 = vpop.f32.mrb[0].mxu0
        %5081 = vmatprep.mubr.bf16.mxu0 %v4258
        %5082 = vmatmul.mubr.bf16.gmra.mrb[0].mxu0 %v4273
        %v5083 = vpop.f32.mrb[0].mxu0
        %v5084 = vadd.f32 %v4923, %v5083
        %v5085 = vpop.f32.mrb[0].mxu0
        %v5086 = vpop.f32.mrb[0].mxu0
        %v5087 = vadd.f32 %v4926, %v5086
        %v5088 = vpop.f32.mrb[0].mxu0
        %5089 = vmatprep.mubr.bf16.mxu0 %v4259
        %5090 = vmatmul.mubr.bf16.gmra.mrb[0].mxu0 %v4274
        %v5091 = vpop.f32.mrb[0].mxu0
        %v5092 = vadd.f32 %v4931, %v5091
        %v5093 = vpop.f32.mrb[0].mxu0
        %v5094 = vpop.f32.mrb[0].mxu0
        %v5095 = vadd.f32 %v4934, %v5094
        %v5096 = vpop.f32.mrb[0].mxu0
        %5097 = vmatprep.mubr.bf16.mxu0 %v4260
        %5098 = vmatmul.mubr.bf16.gmra.mrb[0].mxu0 %v4275
        %v5099 = vpop.f32.mrb[0].mxu0
        %v5100 = vadd.f32 %v4939, %v5099
        %v5101 = vpop.f32.mrb[0].mxu0
        %v5102 = vpop.f32.mrb[0].mxu0
        %v5103 = vadd.f32 %v4942, %v5102
        %v5104 = vpop.f32.mrb[0].mxu0
        %5105 = vmatprep.mubr.bf16.mxu0 %v4261
        %5106 = vmatmul.mubr.bf16.gmra.mrb[0].mxu0 %v4276
        %v5107 = vpop.f32.mrb[0].mxu0
        %v5108 = vadd.f32 %v4947, %v5107
        %v5109 = vpop.f32.mrb[0].mxu0
        %v5110 = vpop.f32.mrb[0].mxu0
        %v5111 = vadd.f32 %v4950, %v5110
        %v5112 = vpop.f32.mrb[0].mxu0
        %5113 = vmatprep.mubr.bf16.mxu0 %v4262
        %5114 = vmatmul.mubr.bf16.gmra.mrb[0].mxu0 %v4277
        %v5115 = vpop.f32.mrb[0].mxu0
        %v5116 = vadd.f32 %v4955, %v5115
        %v5117 = vpop.f32.mrb[0].mxu0
        %v5118 = vpop.f32.mrb[0].mxu0
        %v5119 = vadd.f32 %v4958, %v5118
        %v5120 = vpop.f32.mrb[0].mxu0
        %5121 = vmatprep.mubr.bf16.mxu0 %v4263
        %5122 = vmatmul.mubr.bf16.gmra.mrb[0].mxu0 %v4278
        %v5123 = vpop.f32.mrb[0].mxu0
        %v5124 = vadd.f32 %v4963, %v5123
        %v5125 = vpop.f32.mrb[0].mxu0
        %v5126 = vpop.f32.mrb[0].mxu0
        %v5127 = vadd.f32 %v4966, %v5126
        %v5128 = vpop.f32.mrb[0].mxu0
        %5129 = vmatprep.mubr.bf16.mxu0 %v4264
        %5130 = vmatmul.mubr.bf16.gmra.mrb[0].mxu0 %v4279
        %v5131 = vpop.f32.mrb[0].mxu0
        %v5132 = vadd.f32 %v4971, %v5131
        %v5133 = vpop.f32.mrb[0].mxu0
        %v5134 = vpop.f32.mrb[0].mxu0
        %v5135 = vadd.f32 %v4974, %v5134
        %v5136 = vpop.f32.mrb[0].mxu0
        %5137 = vmatprep.mubr.bf16.mxu0 %v4265
        %5138 = vmatmul.mubr.bf16.gmra.mrb[0].mxu0 %v4280
        %v5139 = vpop.f32.mrb[0].mxu0
        %v5140 = vadd.f32 %v4979, %v5139
        %v5141 = vpop.f32.mrb[0].mxu0
        %v5142 = vpop.f32.mrb[0].mxu0
        %v5143 = vadd.f32 %v4982, %v5142
        %v5144 = vpop.f32.mrb[0].mxu0
        %5145 = vmatprep.mubr.bf16.mxu0 %v4266
        %5146 = vmatmul.mubr.bf16.gmra.mrb[0].mxu0 %v4281
        %v5147 = vpop.f32.mrb[0].mxu0
        %v5148 = vadd.f32 %v4987, %v5147
        %v5149 = vpop.f32.mrb[0].mxu0
        %v5150 = vpop.f32.mrb[0].mxu0
        %v5151 = vadd.f32 %v4990, %v5150
        %v5152 = vpop.f32.mrb[0].mxu0
        %5153 = vmatprep.mubr.bf16.mxu0 %v4267
        %5154 = vmatmul.mubr.bf16.gmra.mrb[0].mxu0 %v4282
        %v5155 = vpop.f32.mrb[0].mxu0
        %v5156 = vadd.f32 %v4995, %v5155
        %v5157 = vpop.f32.mrb[0].mxu0
        %v5158 = vpop.f32.mrb[0].mxu0
        %v5159 = vadd.f32 %v4998, %v5158
        %v5160 = vpop.f32.mrb[0].mxu0
        %5161 = vmatprep.mubr.bf16.mxu0 %v4268
        %5162 = vmatmul.mubr.bf16.gmra.mrb[0].mxu0 %v4283
        %v5163 = vpop.f32.mrb[0].mxu0
        %v5164 = vadd.f32 %v5003, %v5163
        %v5165 = vpop.f32.mrb[0].mxu0
        %v5166 = vpop.f32.mrb[0].mxu0
        %v5167 = vadd.f32 %v5006, %v5166
        %v5168 = vpop.f32.mrb[0].mxu0
        %5169 = vmatprep.mubr.bf16.mxu0 %v4269
        %5170 = vmatmul.mubr.bf16.gmra.mrb[0].mxu0 %v4284
        %v5171 = vpop.f32.mrb[0].mxu0
        %v5172 = vadd.f32 %v5011, %v5171
        %v5173 = vpop.f32.mrb[0].mxu0
        %v5174 = vpop.f32.mrb[0].mxu0
        %v5175 = vadd.f32 %v5014, %v5174
        %v5176 = vpop.f32.mrb[0].mxu0
        %5177 = vmatprep.mubr.bf16.mxu0 %v4270
        %5178 = vmatmul.mubr.bf16.gmra.mrb[0].mxu0 %v4285
        %v5179 = vpop.f32.mrb[0].mxu0
        %v5180 = vadd.f32 %v5019, %v5179
        %v5181 = vpop.f32.mrb[0].mxu0
        %v5182 = vpop.f32.mrb[0].mxu0
        %v5183 = vadd.f32 %v5022, %v5182
        %v5184 = vpop.f32.mrb[0].mxu0
        %5185 = vdwg.mxu0
        %5186 = vmatprep.subr.bf16.mxu0 0
        %5187 = vmatpush1.bf16.msra.mxu0 %v4752
        %5188 = vmatprep.subr.bf16.mxu0 0
        %5189 = vmatpush1.bf16.msra.mxu0 %v4753
        %5190 = vmatprep.subr.bf16.mxu0 0
        %5191 = vmatpush1.bf16.msra.mxu0 %v4754
        %5192 = vmatprep.subr.bf16.mxu0 0
        %5193 = vmatpush1.bf16.msra.mxu0 %v4755
        %5194 = vmatprep.subr.bf16.mxu0 0
        %5195 = vmatpush1.bf16.msra.mxu0 %v4756
        %5196 = vmatprep.subr.bf16.mxu0 0
        %5197 = vmatpush1.bf16.msra.mxu0 %v4757
        %5198 = vmatprep.subr.bf16.mxu0 0
        %5199 = vmatpush1.bf16.msra.mxu0 %v4758
        %5200 = vmatprep.subr.bf16.mxu0 0
        %5201 = vmatpush1.bf16.msra.mxu0 %v4759
        %5202 = vmatprep.subr.bf16.mxu0 0
        %5203 = vmatpush1.bf16.msra.mxu0 %v4760
        %5204 = vmatprep.subr.bf16.mxu0 0
        %5205 = vmatpush1.bf16.msra.mxu0 %v4761
        %5206 = vmatprep.subr.bf16.mxu0 0
        %5207 = vmatpush1.bf16.msra.mxu0 %v4762
        %5208 = vmatprep.subr.bf16.mxu0 0
        %5209 = vmatpush1.bf16.msra.mxu0 %v4763
        %5210 = vmatprep.subr.bf16.mxu0 0
        %5211 = vmatpush1.bf16.msra.mxu0 %v4764
        %5212 = vmatprep.subr.bf16.mxu0 0
        %5213 = vmatpush1.bf16.msra.mxu0 %v4765
        %5214 = vmatprep.subr.bf16.mxu0 0
        %5215 = vmatpush1.bf16.msra.mxu0 %v4766
        %5216 = vmatprep.subr.bf16.mxu0 0
        %5217 = vmatpush1.bf16.msra.mxu0 %v4767
        %5218 = vmatprep.mubr.bf16.mxu0 %v4271
        %5219 = vmatmul.mubr.bf16.gmra.mrb[0].mxu0 %v4015
        %v5220 = vpop.f32.mrb[0].mxu0
        %v5221 = vadd.f32 %v5060, %v5220
        %v5222 = vpop.f32.mrb[0].mxu0
        %v5223 = vpop.f32.mrb[0].mxu0
        %v5224 = vadd.f32 %v5063, %v5223
        %v5225 = vpop.f32.mrb[0].mxu0
        %5226 = vmatprep.mubr.bf16.mxu0 %v4272
        %5227 = vmatmul.mubr.bf16.gmra.mrb[0].mxu0 %v4016
        %v5228 = vpop.f32.mrb[0].mxu0
        %v5229 = vadd.f32 %v5068, %v5228
        %v5230 = vpop.f32.mrb[0].mxu0
        %v5231 = vpop.f32.mrb[0].mxu0
        %v5232 = vadd.f32 %v5071, %v5231
        %v5233 = vpop.f32.mrb[0].mxu0
        %5234 = vmatprep.mubr.bf16.mxu0 %v4273
        %5235 = vmatmul.mubr.bf16.gmra.mrb[0].mxu0 %v4017
        %v5236 = vpop.f32.mrb[0].mxu0
        %v5237 = vadd.f32 %v5076, %v5236
        %v5238 = vpop.f32.mrb[0].mxu0
        %v5239 = vpop.f32.mrb[0].mxu0
        %v5240 = vadd.f32 %v5079, %v5239
        %v5241 = vpop.f32.mrb[0].mxu0
        %5242 = vmatprep.mubr.bf16.mxu0 %v4274
        %5243 = vmatmul.mubr.bf16.gmra.mrb[0].mxu0 %v4018
        %v5244 = vpop.f32.mrb[0].mxu0
        %v5245 = vadd.f32 %v5084, %v5244
        %v5246 = vpop.f32.mrb[0].mxu0
        %v5247 = vpop.f32.mrb[0].mxu0
        %v5248 = vadd.f32 %v5087, %v5247
        %v5249 = vpop.f32.mrb[0].mxu0
        %5250 = vmatprep.mubr.bf16.mxu0 %v4275
        %5251 = vmatmul.mubr.bf16.gmra.mrb[0].mxu0 %v4019
        %v5252 = vpop.f32.mrb[0].mxu0
        %v5253 = vadd.f32 %v5092, %v5252
        %v5254 = vpop.f32.mrb[0].mxu0
        %v5255 = vpop.f32.mrb[0].mxu0
        %v5256 = vadd.f32 %v5095, %v5255
        %v5257 = vpop.f32.mrb[0].mxu0
        %5258 = vmatprep.mubr.bf16.mxu0 %v4276
        %5259 = vmatmul.mubr.bf16.gmra.mrb[0].mxu0 %v4020
        %v5260 = vpop.f32.mrb[0].mxu0
        %v5261 = vadd.f32 %v5100, %v5260
        %v5262 = vpop.f32.mrb[0].mxu0
        %v5263 = vpop.f32.mrb[0].mxu0
        %v5264 = vadd.f32 %v5103, %v5263
        %v5265 = vpop.f32.mrb[0].mxu0
        %5266 = vmatprep.mubr.bf16.mxu0 %v4277
        %5267 = vmatmul.mubr.bf16.gmra.mrb[0].mxu0 %v4021
        %v5268 = vpop.f32.mrb[0].mxu0
        %v5269 = vadd.f32 %v5108, %v5268
        %v5270 = vpop.f32.mrb[0].mxu0
        %v5271 = vpop.f32.mrb[0].mxu0
        %v5272 = vadd.f32 %v5111, %v5271
        %v5273 = vpop.f32.mrb[0].mxu0
        %5274 = vmatprep.mubr.bf16.mxu0 %v4278
        %5275 = vmatmul.mubr.bf16.gmra.mrb[0].mxu0 %v4022
        %v5276 = vpop.f32.mrb[0].mxu0
        %v5277 = vadd.f32 %v5116, %v5276
        %v5278 = vpop.f32.mrb[0].mxu0
        %v5279 = vpop.f32.mrb[0].mxu0
        %v5280 = vadd.f32 %v5119, %v5279
        %v5281 = vpop.f32.mrb[0].mxu0
        %5282 = vmatprep.mubr.bf16.mxu0 %v4279
        %5283 = vmatmul.mubr.bf16.gmra.mrb[0].mxu0 %v4023
        %v5284 = vpop.f32.mrb[0].mxu0
        %v5285 = vadd.f32 %v5124, %v5284
        %v5286 = vpop.f32.mrb[0].mxu0
        %v5287 = vpop.f32.mrb[0].mxu0
        %v5288 = vadd.f32 %v5127, %v5287
        %v5289 = vpop.f32.mrb[0].mxu0
        %5290 = vmatprep.mubr.bf16.mxu0 %v4280
        %5291 = vmatmul.mubr.bf16.gmra.mrb[0].mxu0 %v4024
        %v5292 = vpop.f32.mrb[0].mxu0
        %v5293 = vadd.f32 %v5132, %v5292
        %v5294 = vpop.f32.mrb[0].mxu0
        %v5295 = vpop.f32.mrb[0].mxu0
        %v5296 = vadd.f32 %v5135, %v5295
        %v5297 = vpop.f32.mrb[0].mxu0
        %5298 = vmatprep.mubr.bf16.mxu0 %v4281
        %5299 = vmatmul.mubr.bf16.gmra.mrb[0].mxu0 %v4025
        %v5300 = vpop.f32.mrb[0].mxu0
        %v5301 = vadd.f32 %v5140, %v5300
        %v5302 = vpop.f32.mrb[0].mxu0
        %v5303 = vpop.f32.mrb[0].mxu0
        %v5304 = vadd.f32 %v5143, %v5303
        %v5305 = vpop.f32.mrb[0].mxu0
        %5306 = vmatprep.mubr.bf16.mxu0 %v4282
        %5307 = vmatmul.mubr.bf16.gmra.mrb[0].mxu0 %v4026
        %v5308 = vpop.f32.mrb[0].mxu0
        %v5309 = vadd.f32 %v5148, %v5308
        %v5310 = vpop.f32.mrb[0].mxu0
        %v5311 = vpop.f32.mrb[0].mxu0
        %v5312 = vadd.f32 %v5151, %v5311
        %v5313 = vpop.f32.mrb[0].mxu0
        %5314 = vmatprep.mubr.bf16.mxu0 %v4283
        %5315 = vmatmul.mubr.bf16.gmra.mrb[0].mxu0 %v4027
        %v5316 = vpop.f32.mrb[0].mxu0
        %v5317 = vadd.f32 %v5156, %v5316
        %v5318 = vpop.f32.mrb[0].mxu0
        %v5319 = vpop.f32.mrb[0].mxu0
        %v5320 = vadd.f32 %v5159, %v5319
        %v5321 = vpop.f32.mrb[0].mxu0
        %5322 = vmatprep.mubr.bf16.mxu0 %v4284
        %5323 = vmatmul.mubr.bf16.gmra.mrb[0].mxu0 %v4028
        %v5324 = vpop.f32.mrb[0].mxu0
        %v5325 = vadd.f32 %v5164, %v5324
        %v5326 = vpop.f32.mrb[0].mxu0
        %v5327 = vpop.f32.mrb[0].mxu0
        %v5328 = vadd.f32 %v5167, %v5327
        %v5329 = vpop.f32.mrb[0].mxu0
        %5330 = vmatprep.mubr.bf16.mxu0 %v4285
        %5331 = vmatmul.mubr.bf16.gmra.mrb[0].mxu0 %v4029
        %v5332 = vpop.f32.mrb[0].mxu0
        %v5333 = vadd.f32 %v5172, %v5332
        %v5334 = vpop.f32.mrb[0].mxu0
        %v5335 = vpop.f32.mrb[0].mxu0
        %v5336 = vadd.f32 %v5175, %v5335
        %v5337 = vpop.f32.mrb[0].mxu0
        %5338 = vmatprep.mubr.bf16.mxu0 %v4286
        %5339 = vmatmul.mubr.bf16.gmra.mrb[0].mxu0 %v4030
        %v5340 = vpop.f32.mrb[0].mxu0
        %v5341 = vadd.f32 %v5180, %v5340
        %v5342 = vpop.f32.mrb[0].mxu0
        %v5343 = vpop.f32.mrb[0].mxu0
        %v5344 = vadd.f32 %v5183, %v5343
        %v5345 = vpop.f32.mrb[0].mxu0
        %5346 = vdwg.mxu0
        %5347 = vmatprep.subr.bf16.mxu0 0
        %5348 = vmatpush1.bf16.msra.mxu0 %v4768
        %5349 = vmatprep.subr.bf16.mxu0 0
        %5350 = vmatpush1.bf16.msra.mxu0 %v4769
        %5351 = vmatprep.subr.bf16.mxu0 0
        %5352 = vmatpush1.bf16.msra.mxu0 %v4770
        %5353 = vmatprep.subr.bf16.mxu0 0
        %5354 = vmatpush1.bf16.msra.mxu0 %v4771
        %5355 = vmatprep.subr.bf16.mxu0 0
        %5356 = vmatpush1.bf16.msra.mxu0 %v4772
        %5357 = vmatprep.subr.bf16.mxu0 0
        %5358 = vmatpush1.bf16.msra.mxu0 %v4773
        %5359 = vmatprep.subr.bf16.mxu0 0
        %5360 = vmatpush1.bf16.msra.mxu0 %v4774
        %5361 = vmatprep.subr.bf16.mxu0 0
        %5362 = vmatpush1.bf16.msra.mxu0 %v4775
        %5363 = vmatprep.subr.bf16.mxu0 0
        %5364 = vmatpush1.bf16.msra.mxu0 %v4776
        %5365 = vmatprep.subr.bf16.mxu0 0
        %5366 = vmatpush1.bf16.msra.mxu0 %v4777
        %5367 = vmatprep.subr.bf16.mxu0 0
        %5368 = vmatpush1.bf16.msra.mxu0 %v4778
        %5369 = vmatprep.subr.bf16.mxu0 0
        %5370 = vmatpush1.bf16.msra.mxu0 %v4779
        %5371 = vmatprep.subr.bf16.mxu0 0
        %5372 = vmatpush1.bf16.msra.mxu0 %v4780
        %5373 = vmatprep.subr.bf16.mxu0 0
        %5374 = vmatpush1.bf16.msra.mxu0 %v4781
        %5375 = vmatprep.subr.bf16.mxu0 0
        %5376 = vmatpush1.bf16.msra.mxu0 %v4782
        %5377 = vmatprep.subr.bf16.mxu0 0
        %5378 = vmatpush1.bf16.msra.mxu0 %v4783
        %5379 = vmatprep.mubr.bf16.mxu0 %v4016
        %5380 = vmatmul.mubr.bf16.gmra.mrb[0].mxu0 %v4256
        %v5381 = vpop.f32.mrb[0].mxu0
        %v5382 = vadd.f32 %v5221, %v5381
        %v5383 = vpop.f32.mrb[0].mxu0
        %v5384 = vpop.f32.mrb[0].mxu0
        %v5385 = vadd.f32 %v5224, %v5384
        %v5386 = vpop.f32.mrb[0].mxu0
        %5387 = vmatprep.mubr.bf16.mxu0 %v4017
        %5388 = vmatmul.mubr.bf16.gmra.mrb[0].mxu0 %v4257
        %v5389 = vpop.f32.mrb[0].mxu0
        %v5390 = vadd.f32 %v5229, %v5389
        %v5391 = vpop.f32.mrb[0].mxu0
        %v5392 = vpop.f32.mrb[0].mxu0
        %v5393 = vadd.f32 %v5232, %v5392
        %v5394 = vpop.f32.mrb[0].mxu0
        %5395 = vmatprep.mubr.bf16.mxu0 %v4018
        %5396 = vmatmul.mubr.bf16.gmra.mrb[0].mxu0 %v4258
        %v5397 = vpop.f32.mrb[0].mxu0
        %v5398 = vadd.f32 %v5237, %v5397
        %v5399 = vpop.f32.mrb[0].mxu0
        %v5400 = vpop.f32.mrb[0].mxu0
        %v5401 = vadd.f32 %v5240, %v5400
        %v5402 = vpop.f32.mrb[0].mxu0
        %5403 = vmatprep.mubr.bf16.mxu0 %v4019
        %5404 = vmatmul.mubr.bf16.gmra.mrb[0].mxu0 %v4259
        %v5405 = vpop.f32.mrb[0].mxu0
        %v5406 = vadd.f32 %v5245, %v5405
        %v5407 = vpop.f32.mrb[0].mxu0
        %v5408 = vpop.f32.mrb[0].mxu0
        %v5409 = vadd.f32 %v5248, %v5408
        %v5410 = vpop.f32.mrb[0].mxu0
        %5411 = vmatprep.mubr.bf16.mxu0 %v4020
        %5412 = vmatmul.mubr.bf16.gmra.mrb[0].mxu0 %v4260
        %v5413 = vpop.f32.mrb[0].mxu0
        %v5414 = vadd.f32 %v5253, %v5413
        %v5415 = vpop.f32.mrb[0].mxu0
        %v5416 = vpop.f32.mrb[0].mxu0
        %v5417 = vadd.f32 %v5256, %v5416
        %v5418 = vpop.f32.mrb[0].mxu0
        %5419 = vmatprep.mubr.bf16.mxu0 %v4021
        %5420 = vmatmul.mubr.bf16.gmra.mrb[0].mxu0 %v4261
        %v5421 = vpop.f32.mrb[0].mxu0
        %v5422 = vadd.f32 %v5261, %v5421
        %v5423 = vpop.f32.mrb[0].mxu0
        %v5424 = vpop.f32.mrb[0].mxu0
        %v5425 = vadd.f32 %v5264, %v5424
        %v5426 = vpop.f32.mrb[0].mxu0
        %5427 = vmatprep.mubr.bf16.mxu0 %v4022
        %5428 = vmatmul.mubr.bf16.gmra.mrb[0].mxu0 %v4262
        %v5429 = vpop.f32.mrb[0].mxu0
        %v5430 = vadd.f32 %v5269, %v5429
        %v5431 = vpop.f32.mrb[0].mxu0
        %v5432 = vpop.f32.mrb[0].mxu0
        %v5433 = vadd.f32 %v5272, %v5432
        %v5434 = vpop.f32.mrb[0].mxu0
        %5435 = vmatprep.mubr.bf16.mxu0 %v4023
        %5436 = vmatmul.mubr.bf16.gmra.mrb[0].mxu0 %v4263
        %v5437 = vpop.f32.mrb[0].mxu0
        %v5438 = vadd.f32 %v5277, %v5437
        %v5439 = vpop.f32.mrb[0].mxu0
        %v5440 = vpop.f32.mrb[0].mxu0
        %v5441 = vadd.f32 %v5280, %v5440
        %v5442 = vpop.f32.mrb[0].mxu0
        %5443 = vmatprep.mubr.bf16.mxu0 %v4024
        %5444 = vmatmul.mubr.bf16.gmra.mrb[0].mxu0 %v4264
        %v5445 = vpop.f32.mrb[0].mxu0
        %v5446 = vadd.f32 %v5285, %v5445
        %v5447 = vpop.f32.mrb[0].mxu0
        %v5448 = vpop.f32.mrb[0].mxu0
        %v5449 = vadd.f32 %v5288, %v5448
        %v5450 = vpop.f32.mrb[0].mxu0
        %5451 = vmatprep.mubr.bf16.mxu0 %v4025
        %5452 = vmatmul.mubr.bf16.gmra.mrb[0].mxu0 %v4265
        %v5453 = vpop.f32.mrb[0].mxu0
        %v5454 = vadd.f32 %v5293, %v5453
        %v5455 = vpop.f32.mrb[0].mxu0
        %v5456 = vpop.f32.mrb[0].mxu0
        %v5457 = vadd.f32 %v5296, %v5456
        %v5458 = vpop.f32.mrb[0].mxu0
        %5459 = vmatprep.mubr.bf16.mxu0 %v4026
        %5460 = vmatmul.mubr.bf16.gmra.mrb[0].mxu0 %v4266
        %v5461 = vpop.f32.mrb[0].mxu0
        %v5462 = vadd.f32 %v5301, %v5461
        %v5463 = vpop.f32.mrb[0].mxu0
        %v5464 = vpop.f32.mrb[0].mxu0
        %v5465 = vadd.f32 %v5304, %v5464
        %v5466 = vpop.f32.mrb[0].mxu0
        %5467 = vmatprep.mubr.bf16.mxu0 %v4027
        %5468 = vmatmul.mubr.bf16.gmra.mrb[0].mxu0 %v4267
        %v5469 = vpop.f32.mrb[0].mxu0
        %v5470 = vadd.f32 %v5309, %v5469
        %v5471 = vpop.f32.mrb[0].mxu0
        %v5472 = vpop.f32.mrb[0].mxu0
        %v5473 = vadd.f32 %v5312, %v5472
        %v5474 = vpop.f32.mrb[0].mxu0
        %5475 = vmatprep.mubr.bf16.mxu0 %v4028
        %5476 = vmatmul.mubr.bf16.gmra.mrb[0].mxu0 %v4268
        %v5477 = vpop.f32.mrb[0].mxu0
        %v5478 = vadd.f32 %v5317, %v5477
        %v5479 = vpop.f32.mrb[0].mxu0
        %v5480 = vpop.f32.mrb[0].mxu0
        %v5481 = vadd.f32 %v5320, %v5480
        %v5482 = vpop.f32.mrb[0].mxu0
        %5483 = vmatprep.mubr.bf16.mxu0 %v4029
        %5484 = vmatmul.mubr.bf16.gmra.mrb[0].mxu0 %v4269
        %v5485 = vpop.f32.mrb[0].mxu0
        %v5486 = vadd.f32 %v5325, %v5485
        %v5487 = vpop.f32.mrb[0].mxu0
        %v5488 = vpop.f32.mrb[0].mxu0
        %v5489 = vadd.f32 %v5328, %v5488
        %v5490 = vpop.f32.mrb[0].mxu0
        %5491 = vmatprep.mubr.bf16.mxu0 %v4030
        %5492 = vmatmul.mubr.bf16.gmra.mrb[0].mxu0 %v4270
        %v5493 = vpop.f32.mrb[0].mxu0
        %v5494 = vadd.f32 %v5333, %v5493
        %v5495 = vpop.f32.mrb[0].mxu0
        %v5496 = vpop.f32.mrb[0].mxu0
        %v5497 = vadd.f32 %v5336, %v5496
        %v5498 = vpop.f32.mrb[0].mxu0
        %5499 = vmatprep.mubr.bf16.mxu0 0
        %5500 = vmatmul.mubr.bf16.gmra.mrb[0].mxu0 0
        %v5501 = vpop.f32.mrb[0].mxu0
        %v5502 = vadd.f32 %v5341, %v5501
        %v5503 = vpop.f32.mrb[0].mxu0
        %v5504 = vpop.f32.mrb[0].mxu0
        %v5505 = vadd.f32 %v5344, %v5504
        %v5506 = vpop.f32.mrb[0].mxu0
        %5507 = vdwg.mxu0
        %5508 = vmatprep.subr.bf16.mxu0 0
        %5509 = vmatpush1.bf16.msra.mxu0 %v4784
        %5510 = vmatprep.subr.bf16.mxu0 0
        %5511 = vmatpush1.bf16.msra.mxu0 %v4785
        %5512 = vmatprep.subr.bf16.mxu0 0
        %5513 = vmatpush1.bf16.msra.mxu0 %v4786
        %5514 = vmatprep.subr.bf16.mxu0 0
        %5515 = vmatpush1.bf16.msra.mxu0 %v4787
        %5516 = vmatprep.subr.bf16.mxu0 0
        %5517 = vmatpush1.bf16.msra.mxu0 %v4788
        %5518 = vmatprep.subr.bf16.mxu0 0
        %5519 = vmatpush1.bf16.msra.mxu0 %v4789
        %5520 = vmatprep.subr.bf16.mxu0 0
        %5521 = vmatpush1.bf16.msra.mxu0 %v4790
        %5522 = vmatprep.subr.bf16.mxu0 0
        %5523 = vmatpush1.bf16.msra.mxu0 %v4791
        %5524 = vmatprep.subr.bf16.mxu0 0
        %5525 = vmatpush1.bf16.msra.mxu0 0
        %5526 = vmatprep.subr.bf16.mxu0 0
        %5527 = vmatpush1.bf16.msra.mxu0 0
        %5528 = vmatprep.subr.bf16.mxu0 0
        %5529 = vmatpush1.bf16.msra.mxu0 0
        %5530 = vmatprep.subr.bf16.mxu0 0
        %5531 = vmatpush1.bf16.msra.mxu0 0
        %5532 = vmatprep.subr.bf16.mxu0 0
        %5533 = vmatpush1.bf16.msra.mxu0 0
        %5534 = vmatprep.subr.bf16.mxu0 0
        %5535 = vmatpush1.bf16.msra.mxu0 0
        %5536 = vmatprep.subr.bf16.mxu0 0
        %5537 = vmatpush1.bf16.msra.mxu0 0
        %5538 = vmatprep.subr.bf16.mxu0 0
        %5539 = vmatpush1.bf16.msra.mxu0 0
        %5540 = vmatprep.mubr.bf16.mxu0 0
        %5541 = vmatmul.mubr.bf16.gmra.mrb[0].mxu0 %v4272
        %v5542 = vpop.f32.mrb[0].mxu0
        %v5543 = vadd.f32 %v5382, %v5542
        %v5544 = vpop.f32.mrb[0].mxu0
        %v5545 = vpop.f32.mrb[0].mxu0
        %v5546 = vadd.f32 %v5385, %v5545
        %v5547 = vpop.f32.mrb[0].mxu0
        %5548 = vmatprep.mubr.bf16.mxu0 0
        %5549 = vmatmul.mubr.bf16.gmra.mrb[0].mxu0 %v4273
        %v5550 = vpop.f32.mrb[0].mxu0
        %v5551 = vadd.f32 %v5390, %v5550
        %v5552 = vpop.f32.mrb[0].mxu0
        %v5553 = vpop.f32.mrb[0].mxu0
        %v5554 = vadd.f32 %v5393, %v5553
        %v5555 = vpop.f32.mrb[0].mxu0
        %5556 = vmatprep.mubr.bf16.mxu0 0
        %5557 = vmatmul.mubr.bf16.gmra.mrb[0].mxu0 %v4274
        %v5558 = vpop.f32.mrb[0].mxu0
        %v5559 = vadd.f32 %v5398, %v5558
        %v5560 = vpop.f32.mrb[0].mxu0
        %v5561 = vpop.f32.mrb[0].mxu0
        %v5562 = vadd.f32 %v5401, %v5561
        %v5563 = vpop.f32.mrb[0].mxu0
        %5564 = vmatprep.mubr.bf16.mxu0 0
        %5565 = vmatmul.mubr.bf16.gmra.mrb[0].mxu0 %v4275
        %v5566 = vpop.f32.mrb[0].mxu0
        %v5567 = vadd.f32 %v5406, %v5566
        %v5568 = vpop.f32.mrb[0].mxu0
        %v5569 = vpop.f32.mrb[0].mxu0
        %v5570 = vadd.f32 %v5409, %v5569
        %v5571 = vpop.f32.mrb[0].mxu0
        %5572 = vmatprep.mubr.bf16.mxu0 0
        %5573 = vmatmul.mubr.bf16.gmra.mrb[0].mxu0 %v4276
        %v5574 = vpop.f32.mrb[0].mxu0
        %v5575 = vadd.f32 %v5414, %v5574
        %v5576 = vpop.f32.mrb[0].mxu0
        %v5577 = vpop.f32.mrb[0].mxu0
        %v5578 = vadd.f32 %v5417, %v5577
        %v5579 = vpop.f32.mrb[0].mxu0
        %5580 = vmatprep.mubr.bf16.mxu0 0
        %5581 = vmatmul.mubr.bf16.gmra.mrb[0].mxu0 %v4277
        %v5582 = vpop.f32.mrb[0].mxu0
        %v5583 = vadd.f32 %v5422, %v5582
        %v5584 = vpop.f32.mrb[0].mxu0
        %v5585 = vpop.f32.mrb[0].mxu0
        %v5586 = vadd.f32 %v5425, %v5585
        %v5587 = vpop.f32.mrb[0].mxu0
        %5588 = vmatprep.mubr.bf16.mxu0 0
        %5589 = vmatmul.mubr.bf16.gmra.mrb[0].mxu0 %v4278
        %v5590 = vpop.f32.mrb[0].mxu0
        %v5591 = vadd.f32 %v5430, %v5590
        %v5592 = vpop.f32.mrb[0].mxu0
        %v5593 = vpop.f32.mrb[0].mxu0
        %v5594 = vadd.f32 %v5433, %v5593
        %v5595 = vpop.f32.mrb[0].mxu0
        %5596 = vmatprep.mubr.bf16.mxu0 0
        %5597 = vmatmul.mubr.bf16.gmra.mrb[0].mxu0 %v4279
        %v5598 = vpop.f32.mrb[0].mxu0
        %v5599 = vadd.f32 %v5438, %v5598
        %v5600 = vpop.f32.mrb[0].mxu0
        %v5601 = vpop.f32.mrb[0].mxu0
        %v5602 = vadd.f32 %v5441, %v5601
        %v5603 = vpop.f32.mrb[0].mxu0
        %5604 = vmatprep.mubr.bf16.mxu0 0
        %5605 = vmatmul.mubr.bf16.gmra.mrb[0].mxu0 %v4280
        %v5606 = vpop.f32.mrb[0].mxu0
        %v5607 = vadd.f32 %v5446, %v5606
        %v5608 = vpop.f32.mrb[0].mxu0
        %v5609 = vpop.f32.mrb[0].mxu0
        %v5610 = vadd.f32 %v5449, %v5609
        %v5611 = vpop.f32.mrb[0].mxu0
        %5612 = vmatprep.mubr.bf16.mxu0 0
        %5613 = vmatmul.mubr.bf16.gmra.mrb[0].mxu0 %v4281
        %v5614 = vpop.f32.mrb[0].mxu0
        %v5615 = vadd.f32 %v5454, %v5614
        %v5616 = vpop.f32.mrb[0].mxu0
        %v5617 = vpop.f32.mrb[0].mxu0
        %v5618 = vadd.f32 %v5457, %v5617
        %v5619 = vpop.f32.mrb[0].mxu0
        %5620 = vmatprep.mubr.bf16.mxu0 0
        %5621 = vmatmul.mubr.bf16.gmra.mrb[0].mxu0 %v4282
        %v5622 = vpop.f32.mrb[0].mxu0
        %v5623 = vadd.f32 %v5462, %v5622
        %v5624 = vpop.f32.mrb[0].mxu0
        %v5625 = vpop.f32.mrb[0].mxu0
        %v5626 = vadd.f32 %v5465, %v5625
        %v5627 = vpop.f32.mrb[0].mxu0
        %5628 = vmatprep.mubr.bf16.mxu0 0
        %5629 = vmatmul.mubr.bf16.gmra.mrb[0].mxu0 %v4283
        %v5630 = vpop.f32.mrb[0].mxu0
        %v5631 = vadd.f32 %v5470, %v5630
        %v5632 = vpop.f32.mrb[0].mxu0
        %v5633 = vpop.f32.mrb[0].mxu0
        %v5634 = vadd.f32 %v5473, %v5633
        %v5635 = vpop.f32.mrb[0].mxu0
        %5636 = vmatprep.mubr.bf16.mxu0 0
        %5637 = vmatmul.mubr.bf16.gmra.mrb[0].mxu0 %v4284
        %v5638 = vpop.f32.mrb[0].mxu0
        %v5639 = vadd.f32 %v5478, %v5638
        %v5640 = vpop.f32.mrb[0].mxu0
        %v5641 = vpop.f32.mrb[0].mxu0
        %v5642 = vadd.f32 %v5481, %v5641
        %v5643 = vpop.f32.mrb[0].mxu0
        %5644 = vmatprep.mubr.bf16.mxu0 0
        %5645 = vmatmul.mubr.bf16.gmra.mrb[0].mxu0 %v4285
        %v5646 = vpop.f32.mrb[0].mxu0
        %v5647 = vadd.f32 %v5486, %v5646
        %v5648 = vpop.f32.mrb[0].mxu0
        %v5649 = vpop.f32.mrb[0].mxu0
        %v5650 = vadd.f32 %v5489, %v5649
        %v5651 = vpop.f32.mrb[0].mxu0
        %5652 = vmatprep.mubr.bf16.mxu0 0
        %5653 = vmatmul.mubr.bf16.gmra.mrb[0].mxu0 %v4286
        %v5654 = vpop.f32.mrb[0].mxu0
        %v5655 = vadd.f32 %v5494, %v5654
        %v5656 = vpop.f32.mrb[0].mxu0
        %v5657 = vpop.f32.mrb[0].mxu0
        %v5658 = vadd.f32 %v5497, %v5657
        %v5659 = vpop.f32.mrb[0].mxu0
        %5660 = vmatprep.mubr.bf16.mxu0 0
        %5661 = vmatmul.mubr.bf16.gmra.mrb[0].mxu0 0
        %v5662 = vpop.f32.mrb[0].mxu0
        %v5663 = vadd.f32 %v5502, %v5662
        %v5664 = vpop.f32.mrb[0].mxu0
        %v5665 = vpop.f32.mrb[0].mxu0
        %v5666 = vadd.f32 %v5505, %v5665
        %v5667 = vpop.f32.mrb[0].mxu0
        %5668 = vdwg.mxu0
        %s5669 = scalar_lea.vmem [#allocation6], 2
        %v5670 = vld [vmem:[%s5669] sm:$0x1]
        %v5672 = vlaneseq
        %v5673 = vshrl.u32 %v5672, 7
        %v5674 = vsub.s32 0, %v5673
        %v5675 = vrot.slane %v5670, %v5674
        %v5677 = vmul.f32 %v5543, %v5675
        %v5678 = vmul.f32 %v5546, %v5675
        %v5679 = vmul.f32 %v5551, %v5675
        %v5680 = vmul.f32 %v5554, %v5675
        %v5681 = vmul.f32 %v5559, %v5675
        %v5682 = vmul.f32 %v5562, %v5675
        %v5683 = vmul.f32 %v5567, %v5675
        %v5684 = vmul.f32 %v5570, %v5675
        %v5685 = vmul.f32 %v5575, %v5675
        %v5686 = vmul.f32 %v5578, %v5675
        %v5687 = vmul.f32 %v5583, %v5675
        %v5688 = vmul.f32 %v5586, %v5675
        %v5689 = vmul.f32 %v5591, %v5675
        %v5690 = vmul.f32 %v5594, %v5675
        %v5691 = vmul.f32 %v5599, %v5675
        %v5692 = vmul.f32 %v5602, %v5675
        %v5693 = vmul.f32 %v5607, %v5675
        %v5694 = vmul.f32 %v5610, %v5675
        %v5695 = vmul.f32 %v5615, %v5675
        %v5696 = vmul.f32 %v5618, %v5675
        %v5697 = vmul.f32 %v5623, %v5675
        %v5698 = vmul.f32 %v5626, %v5675
        %v5699 = vmul.f32 %v5631, %v5675
        %v5700 = vmul.f32 %v5634, %v5675
        %v5701 = vmul.f32 %v5639, %v5675
        %v5702 = vmul.f32 %v5642, %v5675
        %v5703 = vmul.f32 %v5647, %v5675
        %v5704 = vmul.f32 %v5650, %v5675
        %v5705 = vmul.f32 %v5655, %v5675
        %v5706 = vmul.f32 %v5658, %v5675
        %v5707 = vmul.f32 %v5663, %v5675
        %v5708 = vmul.f32 %v5666, %v5675
        %s5709 = scalar_lea.vmem [#allocation8], 2
        %v5710 = vld [vmem:[%s5709] sm:$0x1]
        %v5712 = vlaneseq
        %v5713 = vshrl.u32 %v5712, 7
        %v5714 = vsub.s32 0, %v5713
        %v5715 = vrot.slane %v5710, %v5714
        %v5717 = vadd.f32 %v5677, %v5715
        %v5718 = vadd.f32 %v5678, %v5715
        %v5719 = vadd.f32 %v5679, %v5715
        %v5720 = vadd.f32 %v5680, %v5715
        %v5721 = vadd.f32 %v5681, %v5715
        %v5722 = vadd.f32 %v5682, %v5715
        %v5723 = vadd.f32 %v5683, %v5715
        %v5724 = vadd.f32 %v5684, %v5715
        %v5725 = vadd.f32 %v5685, %v5715
        %v5726 = vadd.f32 %v5686, %v5715
        %v5727 = vadd.f32 %v5687, %v5715
        %v5728 = vadd.f32 %v5688, %v5715
        %v5729 = vadd.f32 %v5689, %v5715
        %v5730 = vadd.f32 %v5690, %v5715
        %v5731 = vadd.f32 %v5691, %v5715
        %v5732 = vadd.f32 %v5692, %v5715
        %v5733 = vadd.f32 %v5693, %v5715
        %v5734 = vadd.f32 %v5694, %v5715
        %v5735 = vadd.f32 %v5695, %v5715
        %v5736 = vadd.f32 %v5696, %v5715
        %v5737 = vadd.f32 %v5697, %v5715
        %v5738 = vadd.f32 %v5698, %v5715
        %v5739 = vadd.f32 %v5699, %v5715
        %v5740 = vadd.f32 %v5700, %v5715
        %v5741 = vadd.f32 %v5701, %v5715
        %v5742 = vadd.f32 %v5702, %v5715
        %v5743 = vadd.f32 %v5703, %v5715
        %v5744 = vadd.f32 %v5704, %v5715
        %v5745 = vadd.f32 %v5705, %v5715
        %v5746 = vadd.f32 %v5706, %v5715
        %v5747 = vadd.f32 %v5707, %v5715
        %v5748 = vadd.f32 %v5708, %v5715
        %v5749 = vadd.f32 %v5717, %v2265
        %v5750 = vadd.f32 %v5718, %v2266
        %v5751 = vadd.f32 %v5719, %v2267
        %v5752 = vadd.f32 %v5720, %v2268
        %v5753 = vadd.f32 %v5721, %v2269
        %v5754 = vadd.f32 %v5722, %v2270
        %v5755 = vadd.f32 %v5723, %v2271
        %v5756 = vadd.f32 %v5724, %v2272
        %v5757 = vadd.f32 %v5725, %v2273
        %v5758 = vadd.f32 %v5726, %v2274
        %v5759 = vadd.f32 %v5727, %v2275
        %v5760 = vadd.f32 %v5728, %v2276
        %v5761 = vadd.f32 %v5729, %v2277
        %v5762 = vadd.f32 %v5730, %v2278
        %v5763 = vadd.f32 %v5731, %v2279
        %v5764 = vadd.f32 %v5732, %v2280
        %v5765 = vadd.f32 %v5733, %v2281
        %v5766 = vadd.f32 %v5734, %v2282
        %v5767 = vadd.f32 %v5735, %v2283
        %v5768 = vadd.f32 %v5736, %v2284
        %v5769 = vadd.f32 %v5737, %v2285
        %v5770 = vadd.f32 %v5738, %v2286
        %v5771 = vadd.f32 %v5739, %v2287
        %v5772 = vadd.f32 %v5740, %v2288
        %v5773 = vadd.f32 %v5741, %v2289
        %v5774 = vadd.f32 %v5742, %v2290
        %v5775 = vadd.f32 %v5743, %v2291
        %v5776 = vadd.f32 %v5744, %v2292
        %v5777 = vadd.f32 %v5745, %v2293
        %v5778 = vadd.f32 %v5746, %v2294
        %v5779 = vadd.f32 %v5747, %v2295
        %v5780 = vadd.f32 %v5748, %v2296
        %v5781 = vmax.f32 %v5749, 0.0
        %v5782 = vmax.f32 %v5750, 0.0
        %v5783 = vmax.f32 %v5751, 0.0
        %v5784 = vmax.f32 %v5752, 0.0
        %v5785 = vmax.f32 %v5753, 0.0
        %v5786 = vmax.f32 %v5754, 0.0
        %v5787 = vmax.f32 %v5755, 0.0
        %v5788 = vmax.f32 %v5756, 0.0
        %v5789 = vmax.f32 %v5757, 0.0
        %v5790 = vmax.f32 %v5758, 0.0
        %v5791 = vmax.f32 %v5759, 0.0
        %v5792 = vmax.f32 %v5760, 0.0
        %v5793 = vmax.f32 %v5761, 0.0
        %v5794 = vmax.f32 %v5762, 0.0
        %v5795 = vmax.f32 %v5763, 0.0
        %v5796 = vmax.f32 %v5764, 0.0
        %v5797 = vmax.f32 %v5765, 0.0
        %v5798 = vmax.f32 %v5766, 0.0
        %v5799 = vmax.f32 %v5767, 0.0
        %v5800 = vmax.f32 %v5768, 0.0
        %v5801 = vmax.f32 %v5769, 0.0
        %v5802 = vmax.f32 %v5770, 0.0
        %v5803 = vmax.f32 %v5771, 0.0
        %v5804 = vmax.f32 %v5772, 0.0
        %v5805 = vmax.f32 %v5773, 0.0
        %v5806 = vmax.f32 %v5774, 0.0
        %v5807 = vmax.f32 %v5775, 0.0
        %v5808 = vmax.f32 %v5776, 0.0
        %v5809 = vmax.f32 %v5777, 0.0
        %v5810 = vmax.f32 %v5778, 0.0
        %v5811 = vmax.f32 %v5779, 0.0
        %v5812 = vmax.f32 %v5780, 0.0
        %v5813 = vpack.c.bf16 %v5782, %v5781
        %v5814 = vpack.c.bf16 %v5784, %v5783
        %v5815 = vpack.c.bf16 %v5786, %v5785
        %v5816 = vpack.c.bf16 %v5788, %v5787
        %v5817 = vpack.c.bf16 %v5790, %v5789
        %v5818 = vpack.c.bf16 %v5792, %v5791
        %v5819 = vpack.c.bf16 %v5794, %v5793
        %v5820 = vpack.c.bf16 %v5796, %v5795
        %v5821 = vpack.c.bf16 %v5798, %v5797
        %v5822 = vpack.c.bf16 %v5800, %v5799
        %v5823 = vpack.c.bf16 %v5802, %v5801
        %v5824 = vpack.c.bf16 %v5804, %v5803
        %v5825 = vpack.c.bf16 %v5806, %v5805
        %v5826 = vpack.c.bf16 %v5808, %v5807
        %v5827 = vpack.c.bf16 %v5810, %v5809
        %v5828 = vpack.c.bf16 %v5812, %v5811
        %v5829 = vunpack.c.l.bf16 %v5813
        %v5830 = vunpack.c.h.bf16 %v5813
        %v5831 = vunpack.c.l.bf16 %v5814
        %v5832 = vunpack.c.h.bf16 %v5814
        %v5833 = vunpack.c.l.bf16 %v5815
        %v5834 = vunpack.c.h.bf16 %v5815
        %v5835 = vunpack.c.l.bf16 %v5816
        %v5836 = vunpack.c.h.bf16 %v5816
        %v5837 = vunpack.c.l.bf16 %v5817
        %v5838 = vunpack.c.h.bf16 %v5817
        %v5839 = vunpack.c.l.bf16 %v5818
        %v5840 = vunpack.c.h.bf16 %v5818
        %v5841 = vunpack.c.l.bf16 %v5819
        %v5842 = vunpack.c.h.bf16 %v5819
        %v5843 = vunpack.c.l.bf16 %v5820
        %v5844 = vunpack.c.h.bf16 %v5820
        %v5845 = vunpack.c.l.bf16 %v5821
        %v5846 = vunpack.c.h.bf16 %v5821
        %v5847 = vunpack.c.l.bf16 %v5822
        %v5848 = vunpack.c.h.bf16 %v5822
        %v5849 = vunpack.c.l.bf16 %v5823
        %v5850 = vunpack.c.h.bf16 %v5823
        %v5851 = vunpack.c.l.bf16 %v5824
        %v5852 = vunpack.c.h.bf16 %v5824
        %v5853 = vunpack.c.l.bf16 %v5825
        %v5854 = vunpack.c.h.bf16 %v5825
        %v5855 = vunpack.c.l.bf16 %v5826
        %v5856 = vunpack.c.h.bf16 %v5826
        %v5857 = vunpack.c.l.bf16 %v5827
        %v5858 = vunpack.c.h.bf16 %v5827
        %v5859 = vunpack.c.l.bf16 %v5828
        %v5860 = vunpack.c.h.bf16 %v5828
        %v5861 = vrot.slane %v5829, 7
        %v5862 = vrot.slane %v5830, 7
        %v5863 = vrot.slane %v5831, 7
        %v5864 = vrot.slane %v5832, 7
        %v5865 = vrot.slane %v5833, 7
        %v5866 = vrot.slane %v5834, 7
        %v5867 = vrot.slane %v5835, 7
        %v5868 = vrot.slane %v5836, 7
        %v5869 = vrot.slane %v5837, 7
        %v5870 = vrot.slane %v5838, 7
        %v5871 = vrot.slane %v5839, 7
        %v5872 = vrot.slane %v5840, 7
        %v5873 = vrot.slane %v5841, 7
        %v5874 = vrot.slane %v5842, 7
        %v5875 = vrot.slane %v5843, 7
        %v5876 = vrot.slane %v5844, 7
        %v5877 = vrot.slane %v5845, 7
        %v5878 = vrot.slane %v5846, 7
        %v5879 = vrot.slane %v5847, 7
        %v5880 = vrot.slane %v5848, 7
        %v5881 = vrot.slane %v5849, 7
        %v5882 = vrot.slane %v5850, 7
        %v5883 = vrot.slane %v5851, 7
        %v5884 = vrot.slane %v5852, 7
        %v5885 = vrot.slane %v5853, 7
        %v5886 = vrot.slane %v5854, 7
        %v5887 = vrot.slane %v5855, 7
        %v5888 = vrot.slane %v5856, 7
        %v5889 = vrot.slane %v5857, 7
        %v5890 = vrot.slane %v5858, 7
        %v5891 = vrot.slane %v5859, 7
        %v5892 = vrot.slane %v5860, 7
        %v5893 = vsel %vm466, %v5891, %v5892
        %v5894 = vsel %vm466, %v5890, %v5891
        %v5895 = vsel %vm466, %v5889, %v5890
        %v5896 = vsel %vm466, %v5888, %v5889
        %v5897 = vsel %vm466, %v5887, %v5888
        %v5898 = vsel %vm466, %v5886, %v5887
        %v5899 = vsel %vm466, %v5885, %v5886
        %v5900 = vsel %vm466, %v5884, %v5885
        %v5901 = vsel %vm466, %v5883, %v5884
        %v5902 = vsel %vm466, %v5882, %v5883
        %v5903 = vsel %vm466, %v5881, %v5882
        %v5904 = vsel %vm466, %v5880, %v5881
        %v5905 = vsel %vm466, %v5879, %v5880
        %v5906 = vsel %vm466, %v5878, %v5879
        %v5907 = vsel %vm466, %v5877, %v5878
        %v5908 = vsel %vm466, %v5876, %v5877
        %v5909 = vsel %vm466, %v5875, %v5876
        %v5910 = vsel %vm466, %v5874, %v5875
        %v5911 = vsel %vm466, %v5873, %v5874
        %v5912 = vsel %vm466, %v5872, %v5873
        %v5913 = vsel %vm466, %v5871, %v5872
        %v5914 = vsel %vm466, %v5870, %v5871
        %v5915 = vsel %vm466, %v5869, %v5870
        %v5916 = vsel %vm466, %v5868, %v5869
        %v5917 = vsel %vm466, %v5867, %v5868
        %v5918 = vsel %vm466, %v5866, %v5867
        %v5919 = vsel %vm466, %v5865, %v5866
        %v5920 = vsel %vm466, %v5864, %v5865
        %v5921 = vsel %vm466, %v5863, %v5864
        %v5922 = vsel %vm466, %v5862, %v5863
        %v5923 = vsel %vm466, %v5861, %v5862
        %v5924 = vsel %vm466, %v5892, %v5861
        %v5925 = vsel %vm432, %v5924, 0.0
        %v5926 = vsel %vm433, %v5923, 0.0
        %v5927 = vsel %vm432, %v5922, 0.0
        %v5928 = vsel %vm433, %v5921, 0.0
        %v5929 = vsel %vm432, %v5920, 0.0
        %v5930 = vsel %vm433, %v5919, 0.0
        %v5931 = vsel %vm432, %v5918, 0.0
        %v5932 = vsel %vm433, %v5917, 0.0
        %v5933 = vsel %vm432, %v5916, 0.0
        %v5934 = vsel %vm433, %v5915, 0.0
        %v5935 = vsel %vm432, %v5914, 0.0
        %v5936 = vsel %vm433, %v5913, 0.0
        %v5937 = vsel %vm432, %v5912, 0.0
        %v5938 = vsel %vm433, %v5911, 0.0
        %v5939 = vsel %vm432, %v5910, 0.0
        %v5940 = vsel %vm433, %v5909, 0.0
        %v5941 = vsel %vm432, %v5908, 0.0
        %v5942 = vsel %vm433, %v5907, 0.0
        %v5943 = vsel %vm432, %v5906, 0.0
        %v5944 = vsel %vm433, %v5905, 0.0
        %v5945 = vsel %vm432, %v5904, 0.0
        %v5946 = vsel %vm433, %v5903, 0.0
        %v5947 = vsel %vm432, %v5902, 0.0
        %v5948 = vsel %vm433, %v5901, 0.0
        %v5949 = vsel %vm432, %v5900, 0.0
        %v5950 = vsel %vm433, %v5899, 0.0
        %v5951 = vsel %vm432, %v5898, 0.0
        %v5952 = vsel %vm433, %v5897, 0.0
        %v5953 = vsel %vm432, %v5896, 0.0
        %v5954 = vsel %vm433, %v5895, 0.0
        %v5955 = vsel %vm432, %v5894, 0.0
        %v5956 = vsel %vm433, %v5893, 0.0
        %v5957 = vrot.slane %v5829, 1
        %v5958 = vrot.slane %v5830, 1
        %v5959 = vrot.slane %v5831, 1
        %v5960 = vrot.slane %v5832, 1
        %v5961 = vrot.slane %v5833, 1
        %v5962 = vrot.slane %v5834, 1
        %v5963 = vrot.slane %v5835, 1
        %v5964 = vrot.slane %v5836, 1
        %v5965 = vrot.slane %v5837, 1
        %v5966 = vrot.slane %v5838, 1
        %v5967 = vrot.slane %v5839, 1
        %v5968 = vrot.slane %v5840, 1
        %v5969 = vrot.slane %v5841, 1
        %v5970 = vrot.slane %v5842, 1
        %v5971 = vrot.slane %v5843, 1
        %v5972 = vrot.slane %v5844, 1
        %v5973 = vrot.slane %v5845, 1
        %v5974 = vrot.slane %v5846, 1
        %v5975 = vrot.slane %v5847, 1
        %v5976 = vrot.slane %v5848, 1
        %v5977 = vrot.slane %v5849, 1
        %v5978 = vrot.slane %v5850, 1
        %v5979 = vrot.slane %v5851, 1
        %v5980 = vrot.slane %v5852, 1
        %v5981 = vrot.slane %v5853, 1
        %v5982 = vrot.slane %v5854, 1
        %v5983 = vrot.slane %v5855, 1
        %v5984 = vrot.slane %v5856, 1
        %v5985 = vrot.slane %v5857, 1
        %v5986 = vrot.slane %v5858, 1
        %v5987 = vrot.slane %v5859, 1
        %v5988 = vrot.slane %v5860, 1
        %v5989 = vsel %vm565, %v5987, %v5988
        %v5990 = vsel %vm565, %v5986, %v5987
        %v5991 = vsel %vm565, %v5985, %v5986
        %v5992 = vsel %vm565, %v5984, %v5985
        %v5993 = vsel %vm565, %v5983, %v5984
        %v5994 = vsel %vm565, %v5982, %v5983
        %v5995 = vsel %vm565, %v5981, %v5982
        %v5996 = vsel %vm565, %v5980, %v5981
        %v5997 = vsel %vm565, %v5979, %v5980
        %v5998 = vsel %vm565, %v5978, %v5979
        %v5999 = vsel %vm565, %v5977, %v5978
        %v6000 = vsel %vm565, %v5976, %v5977
        %v6001 = vsel %vm565, %v5975, %v5976
        %v6002 = vsel %vm565, %v5974, %v5975
        %v6003 = vsel %vm565, %v5973, %v5974
        %v6004 = vsel %vm565, %v5972, %v5973
        %v6005 = vsel %vm565, %v5971, %v5972
        %v6006 = vsel %vm565, %v5970, %v5971
        %v6007 = vsel %vm565, %v5969, %v5970
        %v6008 = vsel %vm565, %v5968, %v5969
        %v6009 = vsel %vm565, %v5967, %v5968
        %v6010 = vsel %vm565, %v5966, %v5967
        %v6011 = vsel %vm565, %v5965, %v5966
        %v6012 = vsel %vm565, %v5964, %v5965
        %v6013 = vsel %vm565, %v5963, %v5964
        %v6014 = vsel %vm565, %v5962, %v5963
        %v6015 = vsel %vm565, %v5961, %v5962
        %v6016 = vsel %vm565, %v5960, %v5961
        %v6017 = vsel %vm565, %v5959, %v5960
        %v6018 = vsel %vm565, %v5958, %v5959
        %v6019 = vsel %vm565, %v5957, %v5958
        %v6020 = vsel %vm565, %v5988, %v5957
        %v6021 = vsel %vm531, %v6019, 0.0
        %v6022 = vsel %vm532, %v6018, 0.0
        %v6023 = vsel %vm531, %v6017, 0.0
        %v6024 = vsel %vm532, %v6016, 0.0
        %v6025 = vsel %vm531, %v6015, 0.0
        %v6026 = vsel %vm532, %v6014, 0.0
        %v6027 = vsel %vm531, %v6013, 0.0
        %v6028 = vsel %vm532, %v6012, 0.0
        %v6029 = vsel %vm531, %v6011, 0.0
        %v6030 = vsel %vm532, %v6010, 0.0
        %v6031 = vsel %vm531, %v6009, 0.0
        %v6032 = vsel %vm532, %v6008, 0.0
        %v6033 = vsel %vm531, %v6007, 0.0
        %v6034 = vsel %vm532, %v6006, 0.0
        %v6035 = vsel %vm531, %v6005, 0.0
        %v6036 = vsel %vm532, %v6004, 0.0
        %v6037 = vsel %vm531, %v6003, 0.0
        %v6038 = vsel %vm532, %v6002, 0.0
        %v6039 = vsel %vm531, %v6001, 0.0
        %v6040 = vsel %vm532, %v6000, 0.0
        %v6041 = vsel %vm531, %v5999, 0.0
        %v6042 = vsel %vm532, %v5998, 0.0
        %v6043 = vsel %vm531, %v5997, 0.0
        %v6044 = vsel %vm532, %v5996, 0.0
        %v6045 = vsel %vm531, %v5995, 0.0
        %v6046 = vsel %vm532, %v5994, 0.0
        %v6047 = vsel %vm531, %v5993, 0.0
        %v6048 = vsel %vm532, %v5992, 0.0
        %v6049 = vsel %vm531, %v5991, 0.0
        %v6050 = vsel %vm532, %v5990, 0.0
        %v6051 = vsel %vm531, %v5989, 0.0
        %v6052 = vsel %vm532, %v6020, 0.0
        %v6053 = vpack.c.bf16 %v5926, %v5925
        %v6054 = vpack.c.bf16 %v5928, %v5927
        %v6055 = vpack.c.bf16 %v5930, %v5929
        %v6056 = vpack.c.bf16 %v5932, %v5931
        %v6057 = vpack.c.bf16 %v5934, %v5933
        %v6058 = vpack.c.bf16 %v5936, %v5935
        %v6059 = vpack.c.bf16 %v5938, %v5937
        %v6060 = vpack.c.bf16 %v5940, %v5939
        %v6061 = vpack.c.bf16 %v5942, %v5941
        %v6062 = vpack.c.bf16 %v5944, %v5943
        %v6063 = vpack.c.bf16 %v5946, %v5945
        %v6064 = vpack.c.bf16 %v5948, %v5947
        %v6065 = vpack.c.bf16 %v5950, %v5949
        %v6066 = vpack.c.bf16 %v5952, %v5951
        %v6067 = vpack.c.bf16 %v5954, %v5953
        %v6068 = vpack.c.bf16 %v5956, %v5955
        %v6069 = vpack.c.bf16 %v6022, %v6021
        %v6070 = vpack.c.bf16 %v6024, %v6023
        %v6071 = vpack.c.bf16 %v6026, %v6025
        %v6072 = vpack.c.bf16 %v6028, %v6027
        %v6073 = vpack.c.bf16 %v6030, %v6029
        %v6074 = vpack.c.bf16 %v6032, %v6031
        %v6075 = vpack.c.bf16 %v6034, %v6033
        %v6076 = vpack.c.bf16 %v6036, %v6035
        %v6077 = vpack.c.bf16 %v6038, %v6037
        %v6078 = vpack.c.bf16 %v6040, %v6039
        %v6079 = vpack.c.bf16 %v6042, %v6041
        %v6080 = vpack.c.bf16 %v6044, %v6043
        %v6081 = vpack.c.bf16 %v6046, %v6045
        %v6082 = vpack.c.bf16 %v6048, %v6047
        %v6083 = vpack.c.bf16 %v6050, %v6049
        %v6084 = vpack.c.bf16 %v6052, %v6051
        %s6085 = scalar_lea.vmem [#allocation4], 1728
        %v6086 = vld [vmem:[%s6085] sm:$0xf]
        %v6087 = vld [vmem:[%s6085 + $0x4] sm:$0xf]
        %v6088 = vld [vmem:[%s6085 + $0x8] sm:$0xf]
        %v6089 = vld [vmem:[%s6085 + $0xc] sm:$0xf]
        %v6090 = vld [vmem:[%s6085 + $0x10] sm:$0xf]
        %v6091 = vld [vmem:[%s6085 + $0x14] sm:$0xf]
        %v6092 = vld [vmem:[%s6085 + $0x18] sm:$0xf]
        %v6093 = vld [vmem:[%s6085 + $0x1c] sm:$0xf]
        %v6094 = vld [vmem:[%s6085 + $0x20] sm:$0xf]
        %v6095 = vld [vmem:[%s6085 + $0x24] sm:$0xf]
        %v6096 = vld [vmem:[%s6085 + $0x28] sm:$0xf]
        %v6097 = vld [vmem:[%s6085 + $0x2c] sm:$0xf]
        %v6098 = vld [vmem:[%s6085 + $0x30] sm:$0xf]
        %v6099 = vld [vmem:[%s6085 + $0x34] sm:$0xf]
        %v6100 = vld [vmem:[%s6085 + $0x38] sm:$0xf]
        %v6101 = vld [vmem:[%s6085 + $0x3c] sm:$0xf]
        %v6102 = vld [vmem:[%s6085 + $0x40] sm:$0xf]
        %v6103 = vld [vmem:[%s6085 + $0x44] sm:$0xf]
        %v6104 = vld [vmem:[%s6085 + $0x48] sm:$0xf]
        %v6105 = vld [vmem:[%s6085 + $0x4c] sm:$0xf]
        %v6106 = vld [vmem:[%s6085 + $0x50] sm:$0xf]
        %v6107 = vld [vmem:[%s6085 + $0x54] sm:$0xf]
        %v6108 = vld [vmem:[%s6085 + $0x58] sm:$0xf]
        %v6109 = vld [vmem:[%s6085 + $0x5c] sm:$0xf]
        %v6110 = vld [vmem:[%s6085 + $0x60] sm:$0xf]
        %v6111 = vld [vmem:[%s6085 + $0x64] sm:$0xf]
        %v6112 = vld [vmem:[%s6085 + $0x68] sm:$0xf]
        %v6113 = vld [vmem:[%s6085 + $0x6c] sm:$0xf]
        %v6114 = vld [vmem:[%s6085 + $0x70] sm:$0xf]
        %v6115 = vld [vmem:[%s6085 + $0x74] sm:$0xf]
        %v6116 = vld [vmem:[%s6085 + $0x78] sm:$0xf]
        %v6117 = vld [vmem:[%s6085 + $0x7c] sm:$0xf]
        %v6118 = vld [vmem:[%s6085 + $0x80] sm:$0xf]
        %v6119 = vld [vmem:[%s6085 + $0x84] sm:$0xf]
        %v6120 = vld [vmem:[%s6085 + $0x88] sm:$0xf]
        %v6121 = vld [vmem:[%s6085 + $0x8c] sm:$0xf]
        %v6122 = vld [vmem:[%s6085 + $0x90] sm:$0xf]
        %v6123 = vld [vmem:[%s6085 + $0x94] sm:$0xf]
        %v6124 = vld [vmem:[%s6085 + $0x98] sm:$0xf]
        %v6125 = vld [vmem:[%s6085 + $0x9c] sm:$0xf]
        %v6126 = vld [vmem:[%s6085 + $0xa0] sm:$0xf]
        %v6127 = vld [vmem:[%s6085 + $0xa4] sm:$0xf]
        %v6128 = vld [vmem:[%s6085 + $0xa8] sm:$0xf]
        %v6129 = vld [vmem:[%s6085 + $0xac] sm:$0xf]
        %v6130 = vld [vmem:[%s6085 + $0xb0] sm:$0xf]
        %v6131 = vld [vmem:[%s6085 + $0xb4] sm:$0xf]
        %v6132 = vld [vmem:[%s6085 + $0xb8] sm:$0xf]
        %v6133 = vld [vmem:[%s6085 + $0xbc] sm:$0xf]
        %v6134 = vld [vmem:[%s6085 + $0xc0] sm:$0xf]
        %v6135 = vld [vmem:[%s6085 + $0xc4] sm:$0xf]
        %v6136 = vld [vmem:[%s6085 + $0xc8] sm:$0xf]
        %v6137 = vld [vmem:[%s6085 + $0xcc] sm:$0xf]
        %v6138 = vld [vmem:[%s6085 + $0xd0] sm:$0xf]
        %v6139 = vld [vmem:[%s6085 + $0xd4] sm:$0xf]
        %v6140 = vld [vmem:[%s6085 + $0xd8] sm:$0xf]
        %v6141 = vld [vmem:[%s6085 + $0xdc] sm:$0xf]
        %v6142 = vld [vmem:[%s6085 + $0xe0] sm:$0xf]
        %v6143 = vld [vmem:[%s6085 + $0xe4] sm:$0xf]
        %v6144 = vld [vmem:[%s6085 + $0xe8] sm:$0xf]
        %v6145 = vld [vmem:[%s6085 + $0xec] sm:$0xf]
        %v6146 = vld [vmem:[%s6085 + $0xf0] sm:$0xf]
        %v6147 = vld [vmem:[%s6085 + $0xf4] sm:$0xf]
        %v6148 = vld [vmem:[%s6085 + $0xf8] sm:$0xf]
        %v6149 = vld [vmem:[%s6085 + $0xfc] sm:$0xf]
        %v6150 = vld [vmem:[%s6085 + $0x100] sm:$0xf]
        %v6151 = vld [vmem:[%s6085 + $0x104] sm:$0xf]
        %v6152 = vld [vmem:[%s6085 + $0x108] sm:$0xf]
        %v6153 = vld [vmem:[%s6085 + $0x10c] sm:$0xf]
        %v6154 = vld [vmem:[%s6085 + $0x110] sm:$0xf]
        %v6155 = vld [vmem:[%s6085 + $0x114] sm:$0xf]
        %v6156 = vld [vmem:[%s6085 + $0x118] sm:$0xf]
        %v6157 = vld [vmem:[%s6085 + $0x11c] sm:$0xf]
        %v6158 = vld [vmem:[%s6085 + $0x120] sm:$0xf]
        %v6159 = vld [vmem:[%s6085 + $0x124] sm:$0xf]
        %v6160 = vld [vmem:[%s6085 + $0x128] sm:$0xf]
        %v6161 = vld [vmem:[%s6085 + $0x12c] sm:$0xf]
        %v6162 = vld [vmem:[%s6085 + $0x130] sm:$0xf]
        %v6163 = vld [vmem:[%s6085 + $0x134] sm:$0xf]
        %v6164 = vld [vmem:[%s6085 + $0x138] sm:$0xf]
        %v6165 = vld [vmem:[%s6085 + $0x13c] sm:$0xf]
        %v6166 = vld [vmem:[%s6085 + $0x140] sm:$0xf]
        %v6167 = vld [vmem:[%s6085 + $0x144] sm:$0xf]
        %v6168 = vld [vmem:[%s6085 + $0x148] sm:$0xf]
        %v6169 = vld [vmem:[%s6085 + $0x14c] sm:$0xf]
        %v6170 = vld [vmem:[%s6085 + $0x150] sm:$0xf]
        %v6171 = vld [vmem:[%s6085 + $0x154] sm:$0xf]
        %v6172 = vld [vmem:[%s6085 + $0x158] sm:$0xf]
        %v6173 = vld [vmem:[%s6085 + $0x15c] sm:$0xf]
        %v6174 = vld [vmem:[%s6085 + $0x160] sm:$0xf]
        %v6175 = vld [vmem:[%s6085 + $0x164] sm:$0xf]
        %v6176 = vld [vmem:[%s6085 + $0x168] sm:$0xf]
        %v6177 = vld [vmem:[%s6085 + $0x16c] sm:$0xf]
        %v6178 = vld [vmem:[%s6085 + $0x170] sm:$0xf]
        %v6179 = vld [vmem:[%s6085 + $0x174] sm:$0xf]
        %v6180 = vld [vmem:[%s6085 + $0x178] sm:$0xf]
        %v6181 = vld [vmem:[%s6085 + $0x17c] sm:$0xf]
        %v6182 = vld [vmem:[%s6085 + $0x180] sm:$0xf]
        %v6183 = vld [vmem:[%s6085 + $0x184] sm:$0xf]
        %v6184 = vld [vmem:[%s6085 + $0x188] sm:$0xf]
        %v6185 = vld [vmem:[%s6085 + $0x18c] sm:$0xf]
        %v6186 = vld [vmem:[%s6085 + $0x190] sm:$0xf]
        %v6187 = vld [vmem:[%s6085 + $0x194] sm:$0xf]
        %v6188 = vld [vmem:[%s6085 + $0x198] sm:$0xf]
        %v6189 = vld [vmem:[%s6085 + $0x19c] sm:$0xf]
        %v6190 = vld [vmem:[%s6085 + $0x1a0] sm:$0xf]
        %v6191 = vld [vmem:[%s6085 + $0x1a4] sm:$0xf]
        %v6192 = vld [vmem:[%s6085 + $0x1a8] sm:$0xf]
        %v6193 = vld [vmem:[%s6085 + $0x1ac] sm:$0xf]
        %v6194 = vld [vmem:[%s6085 + $0x1b0] sm:$0xf]
        %v6195 = vld [vmem:[%s6085 + $0x1b4] sm:$0xf]
        %v6196 = vld [vmem:[%s6085 + $0x1b8] sm:$0xf]
        %v6197 = vld [vmem:[%s6085 + $0x1bc] sm:$0xf]
        %v6198 = vld [vmem:[%s6085 + $0x1c0] sm:$0xf]
        %v6199 = vld [vmem:[%s6085 + $0x1c4] sm:$0xf]
        %v6200 = vld [vmem:[%s6085 + $0x1c8] sm:$0xf]
        %v6201 = vld [vmem:[%s6085 + $0x1cc] sm:$0xf]
        %v6202 = vld [vmem:[%s6085 + $0x1d0] sm:$0xf]
        %v6203 = vld [vmem:[%s6085 + $0x1d4] sm:$0xf]
        %v6204 = vld [vmem:[%s6085 + $0x1d8] sm:$0xf]
        %v6205 = vld [vmem:[%s6085 + $0x1dc] sm:$0xf]
        %v6206 = vld [vmem:[%s6085 + $0x1e0] sm:$0xf]
        %v6207 = vld [vmem:[%s6085 + $0x1e4] sm:$0xf]
        %v6208 = vld [vmem:[%s6085 + $0x1e8] sm:$0xf]
        %v6209 = vld [vmem:[%s6085 + $0x1ec] sm:$0xf]
        %v6210 = vld [vmem:[%s6085 + $0x1f0] sm:$0xf]
        %v6211 = vld [vmem:[%s6085 + $0x1f4] sm:$0xf]
        %v6212 = vld [vmem:[%s6085 + $0x1f8] sm:$0xf]
        %v6213 = vld [vmem:[%s6085 + $0x1fc] sm:$0xf]
        %v6214 = vld [vmem:[%s6085 + $0x200] sm:$0xf]
        %v6215 = vld [vmem:[%s6085 + $0x204] sm:$0xf]
        %v6216 = vld [vmem:[%s6085 + $0x208] sm:$0xf]
        %v6217 = vld [vmem:[%s6085 + $0x20c] sm:$0xf]
        %v6218 = vld [vmem:[%s6085 + $0x210] sm:$0xf]
        %v6219 = vld [vmem:[%s6085 + $0x214] sm:$0xf]
        %v6220 = vld [vmem:[%s6085 + $0x218] sm:$0xf]
        %v6221 = vld [vmem:[%s6085 + $0x21c] sm:$0xf]
        %v6222 = vld [vmem:[%s6085 + $0x220] sm:$0xf]
        %v6223 = vld [vmem:[%s6085 + $0x224] sm:$0xf]
        %v6224 = vld [vmem:[%s6085 + $0x228] sm:$0xf]
        %v6225 = vld [vmem:[%s6085 + $0x22c] sm:$0xf]
        %v6226 = vld [vmem:[%s6085 + $0x230] sm:$0xf]
        %v6227 = vld [vmem:[%s6085 + $0x234] sm:$0xf]
        %v6228 = vld [vmem:[%s6085 + $0x238] sm:$0xf]
        %v6229 = vld [vmem:[%s6085 + $0x23c] sm:$0xf]
        %v6374 = vunpack.c.l.b16 %v6086
        %v6375 = vunpack.c.l.b16 %v6087
        %v6376 = vunpack.c.l.b16 %v6088
        %v6377 = vunpack.c.l.b16 %v6089
        %v6378 = vunpack.c.l.b16 %v6090
        %v6379 = vunpack.c.l.b16 %v6091
        %v6380 = vunpack.c.l.b16 %v6092
        %v6381 = vunpack.c.l.b16 %v6093
        %v6382 = vunpack.c.l.b16 %v6094
        %v6383 = vunpack.c.l.b16 %v6095
        %v6384 = vunpack.c.l.b16 %v6096
        %v6385 = vunpack.c.l.b16 %v6097
        %v6386 = vunpack.c.l.b16 %v6098
        %v6387 = vunpack.c.l.b16 %v6099
        %v6388 = vunpack.c.l.b16 %v6100
        %v6389 = vunpack.c.l.b16 %v6101
        %v6390 = vunpack.c.l.b16 %v6102
        %v6391 = vunpack.c.l.b16 %v6103
        %v6392 = vunpack.c.l.b16 %v6104
        %v6393 = vunpack.c.l.b16 %v6105
        %v6394 = vunpack.c.l.b16 %v6106
        %v6395 = vunpack.c.l.b16 %v6107
        %v6396 = vunpack.c.l.b16 %v6108
        %v6397 = vunpack.c.l.b16 %v6109
        %v6398 = vunpack.c.l.b16 %v6110
        %v6399 = vunpack.c.l.b16 %v6111
        %v6400 = vunpack.c.l.b16 %v6112
        %v6401 = vunpack.c.l.b16 %v6113
        %v6402 = vunpack.c.l.b16 %v6114
        %v6403 = vunpack.c.l.b16 %v6115
        %v6404 = vunpack.c.l.b16 %v6116
        %v6405 = vunpack.c.l.b16 %v6117
        %v6406 = vunpack.c.l.b16 %v6118
        %v6407 = vunpack.c.l.b16 %v6119
        %v6408 = vunpack.c.l.b16 %v6120
        %v6409 = vunpack.c.l.b16 %v6121
        %v6410 = vunpack.c.l.b16 %v6122
        %v6411 = vunpack.c.l.b16 %v6123
        %v6412 = vunpack.c.l.b16 %v6124
        %v6413 = vunpack.c.l.b16 %v6125
        %v6414 = vunpack.c.l.b16 %v6126
        %v6415 = vunpack.c.l.b16 %v6127
        %v6416 = vunpack.c.l.b16 %v6128
        %v6417 = vunpack.c.l.b16 %v6129
        %v6418 = vunpack.c.l.b16 %v6130
        %v6419 = vunpack.c.l.b16 %v6131
        %v6420 = vunpack.c.l.b16 %v6132
        %v6421 = vunpack.c.l.b16 %v6133
        %v6422 = vunpack.c.l.b16 %v6134
        %v6423 = vunpack.c.l.b16 %v6135
        %v6424 = vunpack.c.l.b16 %v6136
        %v6425 = vunpack.c.l.b16 %v6137
        %v6426 = vunpack.c.l.b16 %v6138
        %v6427 = vunpack.c.l.b16 %v6139
        %v6428 = vunpack.c.l.b16 %v6140
        %v6429 = vunpack.c.l.b16 %v6141
        %v6430 = vunpack.c.l.b16 %v6142
        %v6431 = vunpack.c.l.b16 %v6143
        %v6432 = vunpack.c.l.b16 %v6144
        %v6433 = vunpack.c.l.b16 %v6145
        %v6434 = vunpack.c.l.b16 %v6146
        %v6435 = vunpack.c.l.b16 %v6147
        %v6436 = vunpack.c.l.b16 %v6148
        %v6437 = vunpack.c.l.b16 %v6149
        %v6438 = vunpack.c.l.b16 %v6150
        %v6439 = vunpack.c.l.b16 %v6151
        %v6440 = vunpack.c.l.b16 %v6152
        %v6441 = vunpack.c.l.b16 %v6153
        %v6442 = vunpack.c.l.b16 %v6154
        %v6443 = vunpack.c.l.b16 %v6155
        %v6444 = vunpack.c.l.b16 %v6156
        %v6445 = vunpack.c.l.b16 %v6157
        %v6446 = vunpack.c.l.b16 %v6158
        %v6447 = vunpack.c.l.b16 %v6159
        %v6448 = vunpack.c.l.b16 %v6160
        %v6449 = vunpack.c.l.b16 %v6161
        %v6450 = vunpack.c.l.b16 %v6162
        %v6451 = vunpack.c.l.b16 %v6163
        %v6452 = vunpack.c.l.b16 %v6164
        %v6453 = vunpack.c.l.b16 %v6165
        %v6454 = vunpack.c.l.b16 %v6166
        %v6455 = vunpack.c.l.b16 %v6167
        %v6456 = vunpack.c.l.b16 %v6168
        %v6457 = vunpack.c.l.b16 %v6169
        %v6458 = vunpack.c.l.b16 %v6170
        %v6459 = vunpack.c.l.b16 %v6171
        %v6460 = vunpack.c.l.b16 %v6172
        %v6461 = vunpack.c.l.b16 %v6173
        %v6462 = vunpack.c.l.b16 %v6174
        %v6463 = vunpack.c.l.b16 %v6175
        %v6464 = vunpack.c.l.b16 %v6176
        %v6465 = vunpack.c.l.b16 %v6177
        %v6466 = vunpack.c.l.b16 %v6178
        %v6467 = vunpack.c.l.b16 %v6179
        %v6468 = vunpack.c.l.b16 %v6180
        %v6469 = vunpack.c.l.b16 %v6181
        %v6470 = vunpack.c.l.b16 %v6182
        %v6471 = vunpack.c.l.b16 %v6183
        %v6472 = vunpack.c.l.b16 %v6184
        %v6473 = vunpack.c.l.b16 %v6185
        %v6474 = vunpack.c.l.b16 %v6186
        %v6475 = vunpack.c.l.b16 %v6187
        %v6476 = vunpack.c.l.b16 %v6188
        %v6477 = vunpack.c.l.b16 %v6189
        %v6478 = vunpack.c.l.b16 %v6190
        %v6479 = vunpack.c.l.b16 %v6191
        %v6480 = vunpack.c.l.b16 %v6192
        %v6481 = vunpack.c.l.b16 %v6193
        %v6482 = vunpack.c.l.b16 %v6194
        %v6483 = vunpack.c.l.b16 %v6195
        %v6484 = vunpack.c.l.b16 %v6196
        %v6485 = vunpack.c.l.b16 %v6197
        %v6486 = vunpack.c.l.b16 %v6198
        %v6487 = vunpack.c.l.b16 %v6199
        %v6488 = vunpack.c.l.b16 %v6200
        %v6489 = vunpack.c.l.b16 %v6201
        %v6490 = vunpack.c.l.b16 %v6202
        %v6491 = vunpack.c.l.b16 %v6203
        %v6492 = vunpack.c.l.b16 %v6204
        %v6493 = vunpack.c.l.b16 %v6205
        %v6494 = vunpack.c.l.b16 %v6206
        %v6495 = vunpack.c.l.b16 %v6207
        %v6496 = vunpack.c.l.b16 %v6208
        %v6497 = vunpack.c.l.b16 %v6209
        %v6498 = vunpack.c.l.b16 %v6210
        %v6499 = vunpack.c.l.b16 %v6211
        %v6500 = vunpack.c.l.b16 %v6212
        %v6501 = vunpack.c.l.b16 %v6213
        %v6502 = vunpack.c.l.b16 %v6214
        %v6503 = vunpack.c.l.b16 %v6215
        %v6504 = vunpack.c.l.b16 %v6216
        %v6505 = vunpack.c.l.b16 %v6217
        %v6506 = vunpack.c.l.b16 %v6218
        %v6507 = vunpack.c.l.b16 %v6219
        %v6508 = vunpack.c.l.b16 %v6220
        %v6509 = vunpack.c.l.b16 %v6221
        %v6510 = vunpack.c.l.b16 %v6222
        %v6511 = vunpack.c.l.b16 %v6223
        %v6512 = vunpack.c.l.b16 %v6224
        %v6513 = vunpack.c.l.b16 %v6225
        %v6514 = vunpack.c.l.b16 %v6226
        %v6515 = vunpack.c.l.b16 %v6227
        %v6516 = vunpack.c.l.b16 %v6228
        %v6517 = vunpack.c.l.b16 %v6229
        %v6518 = vpack.c.b16 %v6375, %v6374
        %v6519 = vpack.c.b16 %v6377, %v6376
        %v6520 = vpack.c.b16 %v6379, %v6378
        %v6521 = vpack.c.b16 %v6381, %v6380
        %v6522 = vpack.c.b16 %v6383, %v6382
        %v6523 = vpack.c.b16 %v6385, %v6384
        %v6524 = vpack.c.b16 %v6387, %v6386
        %v6525 = vpack.c.b16 %v6389, %v6388
        %v6526 = vpack.c.b16 %v6391, %v6390
        %v6527 = vpack.c.b16 %v6393, %v6392
        %v6528 = vpack.c.b16 %v6395, %v6394
        %v6529 = vpack.c.b16 %v6397, %v6396
        %v6530 = vpack.c.b16 %v6399, %v6398
        %v6531 = vpack.c.b16 %v6401, %v6400
        %v6532 = vpack.c.b16 %v6403, %v6402
        %v6533 = vpack.c.b16 %v6405, %v6404
        %v6534 = vpack.c.b16 %v6407, %v6406
        %v6535 = vpack.c.b16 %v6409, %v6408
        %v6536 = vpack.c.b16 %v6411, %v6410
        %v6537 = vpack.c.b16 %v6413, %v6412
        %v6538 = vpack.c.b16 %v6415, %v6414
        %v6539 = vpack.c.b16 %v6417, %v6416
        %v6540 = vpack.c.b16 %v6419, %v6418
        %v6541 = vpack.c.b16 %v6421, %v6420
        %v6542 = vpack.c.b16 %v6423, %v6422
        %v6543 = vpack.c.b16 %v6425, %v6424
        %v6544 = vpack.c.b16 %v6427, %v6426
        %v6545 = vpack.c.b16 %v6429, %v6428
        %v6546 = vpack.c.b16 %v6431, %v6430
        %v6547 = vpack.c.b16 %v6433, %v6432
        %v6548 = vpack.c.b16 %v6435, %v6434
        %v6549 = vpack.c.b16 %v6437, %v6436
        %v6550 = vpack.c.b16 %v6439, %v6438
        %v6551 = vpack.c.b16 %v6441, %v6440
        %v6552 = vpack.c.b16 %v6443, %v6442
        %v6553 = vpack.c.b16 %v6445, %v6444
        %v6554 = vpack.c.b16 %v6447, %v6446
        %v6555 = vpack.c.b16 %v6449, %v6448
        %v6556 = vpack.c.b16 %v6451, %v6450
        %v6557 = vpack.c.b16 %v6453, %v6452
        %v6558 = vpack.c.b16 %v6455, %v6454
        %v6559 = vpack.c.b16 %v6457, %v6456
        %v6560 = vpack.c.b16 %v6459, %v6458
        %v6561 = vpack.c.b16 %v6461, %v6460
        %v6562 = vpack.c.b16 %v6463, %v6462
        %v6563 = vpack.c.b16 %v6465, %v6464
        %v6564 = vpack.c.b16 %v6467, %v6466
        %v6565 = vpack.c.b16 %v6469, %v6468
        %v6566 = vpack.c.b16 %v6471, %v6470
        %v6567 = vpack.c.b16 %v6473, %v6472
        %v6568 = vpack.c.b16 %v6475, %v6474
        %v6569 = vpack.c.b16 %v6477, %v6476
        %v6570 = vpack.c.b16 %v6479, %v6478
        %v6571 = vpack.c.b16 %v6481, %v6480
        %v6572 = vpack.c.b16 %v6483, %v6482
        %v6573 = vpack.c.b16 %v6485, %v6484
        %v6574 = vpack.c.b16 %v6487, %v6486
        %v6575 = vpack.c.b16 %v6489, %v6488
        %v6576 = vpack.c.b16 %v6491, %v6490
        %v6577 = vpack.c.b16 %v6493, %v6492
        %v6578 = vpack.c.b16 %v6495, %v6494
        %v6579 = vpack.c.b16 %v6497, %v6496
        %v6580 = vpack.c.b16 %v6499, %v6498
        %v6581 = vpack.c.b16 %v6501, %v6500
        %v6582 = vpack.c.b16 %v6503, %v6502
        %v6583 = vpack.c.b16 %v6505, %v6504
        %v6584 = vpack.c.b16 %v6507, %v6506
        %v6585 = vpack.c.b16 %v6509, %v6508
        %v6586 = vpack.c.b16 %v6511, %v6510
        %v6587 = vpack.c.b16 %v6513, %v6512
        %v6588 = vpack.c.b16 %v6515, %v6514
        %v6589 = vpack.c.b16 %v6517, %v6516
        %6662 = vmatprep.subr.bf16.mxu0 0
        %6663 = vmatpush1.bf16.msra.mxu0 %v6518
        %6664 = vmatprep.subr.bf16.mxu0 0
        %6665 = vmatpush1.bf16.msra.mxu0 %v6519
        %6666 = vmatprep.subr.bf16.mxu0 0
        %6667 = vmatpush1.bf16.msra.mxu0 %v6520
        %6668 = vmatprep.subr.bf16.mxu0 0
        %6669 = vmatpush1.bf16.msra.mxu0 %v6521
        %6670 = vmatprep.subr.bf16.mxu0 0
        %6671 = vmatpush1.bf16.msra.mxu0 %v6522
        %6672 = vmatprep.subr.bf16.mxu0 0
        %6673 = vmatpush1.bf16.msra.mxu0 %v6523
        %6674 = vmatprep.subr.bf16.mxu0 0
        %6675 = vmatpush1.bf16.msra.mxu0 %v6524
        %6676 = vmatprep.subr.bf16.mxu0 0
        %6677 = vmatpush1.bf16.msra.mxu0 %v6525
        %6678 = vmatprep.subr.bf16.mxu0 0
        %6679 = vmatpush1.bf16.msra.mxu0 %v6526
        %6680 = vmatprep.subr.bf16.mxu0 0
        %6681 = vmatpush1.bf16.msra.mxu0 %v6527
        %6682 = vmatprep.subr.bf16.mxu0 0
        %6683 = vmatpush1.bf16.msra.mxu0 %v6528
        %6684 = vmatprep.subr.bf16.mxu0 0
        %6685 = vmatpush1.bf16.msra.mxu0 %v6529
        %6686 = vmatprep.subr.bf16.mxu0 0
        %6687 = vmatpush1.bf16.msra.mxu0 %v6530
        %6688 = vmatprep.subr.bf16.mxu0 0
        %6689 = vmatpush1.bf16.msra.mxu0 %v6531
        %6690 = vmatprep.subr.bf16.mxu0 0
        %6691 = vmatpush1.bf16.msra.mxu0 %v6532
        %6692 = vmatprep.subr.bf16.mxu0 0
        %6693 = vmatpush1.bf16.msra.mxu0 %v6533
        %6694 = vmatprep.mubr.bf16.mxu0 0
        %6695 = vmatmul.mubr.bf16.gmra.mrb[0].mxu0 0
        %v6696 = vpop.f32.mrb[0].mxu0
        %v6697 = vadd.f32 0.0, %v6696
        %v6698 = vpop.f32.mrb[0].mxu0
        %v6699 = vpop.f32.mrb[0].mxu0
        %v6700 = vadd.f32 0.0, %v6699
        %v6701 = vpop.f32.mrb[0].mxu0
        %6702 = vmatprep.mubr.bf16.mxu0 %v5813
        %6703 = vmatmul.mubr.bf16.gmra.mrb[0].mxu0 %v6053
        %v6704 = vpop.f32.mrb[0].mxu0
        %v6705 = vadd.f32 0.0, %v6704
        %v6706 = vpop.f32.mrb[0].mxu0
        %v6707 = vpop.f32.mrb[0].mxu0
        %v6708 = vadd.f32 0.0, %v6707
        %v6709 = vpop.f32.mrb[0].mxu0
        %6710 = vmatprep.mubr.bf16.mxu0 %v5814
        %6711 = vmatmul.mubr.bf16.gmra.mrb[0].mxu0 %v6054
        %v6712 = vpop.f32.mrb[0].mxu0
        %v6713 = vadd.f32 0.0, %v6712
        %v6714 = vpop.f32.mrb[0].mxu0
        %v6715 = vpop.f32.mrb[0].mxu0
        %v6716 = vadd.f32 0.0, %v6715
        %v6717 = vpop.f32.mrb[0].mxu0
        %6718 = vmatprep.mubr.bf16.mxu0 %v5815
        %6719 = vmatmul.mubr.bf16.gmra.mrb[0].mxu0 %v6055
        %v6720 = vpop.f32.mrb[0].mxu0
        %v6721 = vadd.f32 0.0, %v6720
        %v6722 = vpop.f32.mrb[0].mxu0
        %v6723 = vpop.f32.mrb[0].mxu0
        %v6724 = vadd.f32 0.0, %v6723
        %v6725 = vpop.f32.mrb[0].mxu0
        %6726 = vmatprep.mubr.bf16.mxu0 %v5816
        %6727 = vmatmul.mubr.bf16.gmra.mrb[0].mxu0 %v6056
        %v6728 = vpop.f32.mrb[0].mxu0
        %v6729 = vadd.f32 0.0, %v6728
        %v6730 = vpop.f32.mrb[0].mxu0
        %v6731 = vpop.f32.mrb[0].mxu0
        %v6732 = vadd.f32 0.0, %v6731
        %v6733 = vpop.f32.mrb[0].mxu0
        %6734 = vmatprep.mubr.bf16.mxu0 %v5817
        %6735 = vmatmul.mubr.bf16.gmra.mrb[0].mxu0 %v6057
        %v6736 = vpop.f32.mrb[0].mxu0
        %v6737 = vadd.f32 0.0, %v6736
        %v6738 = vpop.f32.mrb[0].mxu0
        %v6739 = vpop.f32.mrb[0].mxu0
        %v6740 = vadd.f32 0.0, %v6739
        %v6741 = vpop.f32.mrb[0].mxu0
        %6742 = vmatprep.mubr.bf16.mxu0 %v5818
        %6743 = vmatmul.mubr.bf16.gmra.mrb[0].mxu0 %v6058
        %v6744 = vpop.f32.mrb[0].mxu0
        %v6745 = vadd.f32 0.0, %v6744
        %v6746 = vpop.f32.mrb[0].mxu0
        %v6747 = vpop.f32.mrb[0].mxu0
        %v6748 = vadd.f32 0.0, %v6747
        %v6749 = vpop.f32.mrb[0].mxu0
        %6750 = vmatprep.mubr.bf16.mxu0 %v5819
        %6751 = vmatmul.mubr.bf16.gmra.mrb[0].mxu0 %v6059
        %v6752 = vpop.f32.mrb[0].mxu0
        %v6753 = vadd.f32 0.0, %v6752
        %v6754 = vpop.f32.mrb[0].mxu0
        %v6755 = vpop.f32.mrb[0].mxu0
        %v6756 = vadd.f32 0.0, %v6755
        %v6757 = vpop.f32.mrb[0].mxu0
        %6758 = vmatprep.mubr.bf16.mxu0 %v5820
        %6759 = vmatmul.mubr.bf16.gmra.mrb[0].mxu0 %v6060
        %v6760 = vpop.f32.mrb[0].mxu0
        %v6761 = vadd.f32 0.0, %v6760
        %v6762 = vpop.f32.mrb[0].mxu0
        %v6763 = vpop.f32.mrb[0].mxu0
        %v6764 = vadd.f32 0.0, %v6763
        %v6765 = vpop.f32.mrb[0].mxu0
        %6766 = vmatprep.mubr.bf16.mxu0 %v5821
        %6767 = vmatmul.mubr.bf16.gmra.mrb[0].mxu0 %v6061
        %v6768 = vpop.f32.mrb[0].mxu0
        %v6769 = vadd.f32 0.0, %v6768
        %v6770 = vpop.f32.mrb[0].mxu0
        %v6771 = vpop.f32.mrb[0].mxu0
        %v6772 = vadd.f32 0.0, %v6771
        %v6773 = vpop.f32.mrb[0].mxu0
        %6774 = vmatprep.mubr.bf16.mxu0 %v5822
        %6775 = vmatmul.mubr.bf16.gmra.mrb[0].mxu0 %v6062
        %v6776 = vpop.f32.mrb[0].mxu0
        %v6777 = vadd.f32 0.0, %v6776
        %v6778 = vpop.f32.mrb[0].mxu0
        %v6779 = vpop.f32.mrb[0].mxu0
        %v6780 = vadd.f32 0.0, %v6779
        %v6781 = vpop.f32.mrb[0].mxu0
        %6782 = vmatprep.mubr.bf16.mxu0 %v5823
        %6783 = vmatmul.mubr.bf16.gmra.mrb[0].mxu0 %v6063
        %v6784 = vpop.f32.mrb[0].mxu0
        %v6785 = vadd.f32 0.0, %v6784
        %v6786 = vpop.f32.mrb[0].mxu0
        %v6787 = vpop.f32.mrb[0].mxu0
        %v6788 = vadd.f32 0.0, %v6787
        %v6789 = vpop.f32.mrb[0].mxu0
        %6790 = vmatprep.mubr.bf16.mxu0 %v5824
        %6791 = vmatmul.mubr.bf16.gmra.mrb[0].mxu0 %v6064
        %v6792 = vpop.f32.mrb[0].mxu0
        %v6793 = vadd.f32 0.0, %v6792
        %v6794 = vpop.f32.mrb[0].mxu0
        %v6795 = vpop.f32.mrb[0].mxu0
        %v6796 = vadd.f32 0.0, %v6795
        %v6797 = vpop.f32.mrb[0].mxu0
        %6798 = vmatprep.mubr.bf16.mxu0 %v5825
        %6799 = vmatmul.mubr.bf16.gmra.mrb[0].mxu0 %v6065
        %v6800 = vpop.f32.mrb[0].mxu0
        %v6801 = vadd.f32 0.0, %v6800
        %v6802 = vpop.f32.mrb[0].mxu0
        %v6803 = vpop.f32.mrb[0].mxu0
        %v6804 = vadd.f32 0.0, %v6803
        %v6805 = vpop.f32.mrb[0].mxu0
        %6806 = vmatprep.mubr.bf16.mxu0 %v5826
        %6807 = vmatmul.mubr.bf16.gmra.mrb[0].mxu0 %v6066
        %v6808 = vpop.f32.mrb[0].mxu0
        %v6809 = vadd.f32 0.0, %v6808
        %v6810 = vpop.f32.mrb[0].mxu0
        %v6811 = vpop.f32.mrb[0].mxu0
        %v6812 = vadd.f32 0.0, %v6811
        %v6813 = vpop.f32.mrb[0].mxu0
        %6814 = vmatprep.mubr.bf16.mxu0 %v5827
        %6815 = vmatmul.mubr.bf16.gmra.mrb[0].mxu0 %v6067
        %v6816 = vpop.f32.mrb[0].mxu0
        %v6817 = vadd.f32 0.0, %v6816
        %v6818 = vpop.f32.mrb[0].mxu0
        %v6819 = vpop.f32.mrb[0].mxu0
        %v6820 = vadd.f32 0.0, %v6819
        %v6821 = vpop.f32.mrb[0].mxu0
        %6822 = vdwg.mxu0
        %6823 = vmatprep.subr.bf16.mxu0 0
        %6824 = vmatpush1.bf16.msra.mxu0 %v6534
        %6825 = vmatprep.subr.bf16.mxu0 0
        %6826 = vmatpush1.bf16.msra.mxu0 %v6535
        %6827 = vmatprep.subr.bf16.mxu0 0
        %6828 = vmatpush1.bf16.msra.mxu0 %v6536
        %6829 = vmatprep.subr.bf16.mxu0 0
        %6830 = vmatpush1.bf16.msra.mxu0 %v6537
        %6831 = vmatprep.subr.bf16.mxu0 0
        %6832 = vmatpush1.bf16.msra.mxu0 %v6538
        %6833 = vmatprep.subr.bf16.mxu0 0
        %6834 = vmatpush1.bf16.msra.mxu0 %v6539
        %6835 = vmatprep.subr.bf16.mxu0 0
        %6836 = vmatpush1.bf16.msra.mxu0 %v6540
        %6837 = vmatprep.subr.bf16.mxu0 0
        %6838 = vmatpush1.bf16.msra.mxu0 %v6541
        %6839 = vmatprep.subr.bf16.mxu0 0
        %6840 = vmatpush1.bf16.msra.mxu0 %v6542
        %6841 = vmatprep.subr.bf16.mxu0 0
        %6842 = vmatpush1.bf16.msra.mxu0 %v6543
        %6843 = vmatprep.subr.bf16.mxu0 0
        %6844 = vmatpush1.bf16.msra.mxu0 %v6544
        %6845 = vmatprep.subr.bf16.mxu0 0
        %6846 = vmatpush1.bf16.msra.mxu0 %v6545
        %6847 = vmatprep.subr.bf16.mxu0 0
        %6848 = vmatpush1.bf16.msra.mxu0 %v6546
        %6849 = vmatprep.subr.bf16.mxu0 0
        %6850 = vmatpush1.bf16.msra.mxu0 %v6547
        %6851 = vmatprep.subr.bf16.mxu0 0
        %6852 = vmatpush1.bf16.msra.mxu0 %v6548
        %6853 = vmatprep.subr.bf16.mxu0 0
        %6854 = vmatpush1.bf16.msra.mxu0 %v6549
        %6855 = vmatprep.mubr.bf16.mxu0 %v6053
        %6856 = vmatmul.mubr.bf16.gmra.mrb[0].mxu0 0
        %v6857 = vpop.f32.mrb[0].mxu0
        %v6858 = vadd.f32 %v6697, %v6857
        %v6859 = vpop.f32.mrb[0].mxu0
        %v6860 = vpop.f32.mrb[0].mxu0
        %v6861 = vadd.f32 %v6700, %v6860
        %v6862 = vpop.f32.mrb[0].mxu0
        %6863 = vmatprep.mubr.bf16.mxu0 %v6054
        %6864 = vmatmul.mubr.bf16.gmra.mrb[0].mxu0 %v6069
        %v6865 = vpop.f32.mrb[0].mxu0
        %v6866 = vadd.f32 %v6705, %v6865
        %v6867 = vpop.f32.mrb[0].mxu0
        %v6868 = vpop.f32.mrb[0].mxu0
        %v6869 = vadd.f32 %v6708, %v6868
        %v6870 = vpop.f32.mrb[0].mxu0
        %6871 = vmatprep.mubr.bf16.mxu0 %v6055
        %6872 = vmatmul.mubr.bf16.gmra.mrb[0].mxu0 %v6070
        %v6873 = vpop.f32.mrb[0].mxu0
        %v6874 = vadd.f32 %v6713, %v6873
        %v6875 = vpop.f32.mrb[0].mxu0
        %v6876 = vpop.f32.mrb[0].mxu0
        %v6877 = vadd.f32 %v6716, %v6876
        %v6878 = vpop.f32.mrb[0].mxu0
        %6879 = vmatprep.mubr.bf16.mxu0 %v6056
        %6880 = vmatmul.mubr.bf16.gmra.mrb[0].mxu0 %v6071
        %v6881 = vpop.f32.mrb[0].mxu0
        %v6882 = vadd.f32 %v6721, %v6881
        %v6883 = vpop.f32.mrb[0].mxu0
        %v6884 = vpop.f32.mrb[0].mxu0
        %v6885 = vadd.f32 %v6724, %v6884
        %v6886 = vpop.f32.mrb[0].mxu0
        %6887 = vmatprep.mubr.bf16.mxu0 %v6057
        %6888 = vmatmul.mubr.bf16.gmra.mrb[0].mxu0 %v6072
        %v6889 = vpop.f32.mrb[0].mxu0
        %v6890 = vadd.f32 %v6729, %v6889
        %v6891 = vpop.f32.mrb[0].mxu0
        %v6892 = vpop.f32.mrb[0].mxu0
        %v6893 = vadd.f32 %v6732, %v6892
        %v6894 = vpop.f32.mrb[0].mxu0
        %6895 = vmatprep.mubr.bf16.mxu0 %v6058
        %6896 = vmatmul.mubr.bf16.gmra.mrb[0].mxu0 %v6073
        %v6897 = vpop.f32.mrb[0].mxu0
        %v6898 = vadd.f32 %v6737, %v6897
        %v6899 = vpop.f32.mrb[0].mxu0
        %v6900 = vpop.f32.mrb[0].mxu0
        %v6901 = vadd.f32 %v6740, %v6900
        %v6902 = vpop.f32.mrb[0].mxu0
        %6903 = vmatprep.mubr.bf16.mxu0 %v6059
        %6904 = vmatmul.mubr.bf16.gmra.mrb[0].mxu0 %v6074
        %v6905 = vpop.f32.mrb[0].mxu0
        %v6906 = vadd.f32 %v6745, %v6905
        %v6907 = vpop.f32.mrb[0].mxu0
        %v6908 = vpop.f32.mrb[0].mxu0
        %v6909 = vadd.f32 %v6748, %v6908
        %v6910 = vpop.f32.mrb[0].mxu0
        %6911 = vmatprep.mubr.bf16.mxu0 %v6060
        %6912 = vmatmul.mubr.bf16.gmra.mrb[0].mxu0 %v6075
        %v6913 = vpop.f32.mrb[0].mxu0
        %v6914 = vadd.f32 %v6753, %v6913
        %v6915 = vpop.f32.mrb[0].mxu0
        %v6916 = vpop.f32.mrb[0].mxu0
        %v6917 = vadd.f32 %v6756, %v6916
        %v6918 = vpop.f32.mrb[0].mxu0
        %6919 = vmatprep.mubr.bf16.mxu0 %v6061
        %6920 = vmatmul.mubr.bf16.gmra.mrb[0].mxu0 %v6076
        %v6921 = vpop.f32.mrb[0].mxu0
        %v6922 = vadd.f32 %v6761, %v6921
        %v6923 = vpop.f32.mrb[0].mxu0
        %v6924 = vpop.f32.mrb[0].mxu0
        %v6925 = vadd.f32 %v6764, %v6924
        %v6926 = vpop.f32.mrb[0].mxu0
        %6927 = vmatprep.mubr.bf16.mxu0 %v6062
        %6928 = vmatmul.mubr.bf16.gmra.mrb[0].mxu0 %v6077
        %v6929 = vpop.f32.mrb[0].mxu0
        %v6930 = vadd.f32 %v6769, %v6929
        %v6931 = vpop.f32.mrb[0].mxu0
        %v6932 = vpop.f32.mrb[0].mxu0
        %v6933 = vadd.f32 %v6772, %v6932
        %v6934 = vpop.f32.mrb[0].mxu0
        %6935 = vmatprep.mubr.bf16.mxu0 %v6063
        %6936 = vmatmul.mubr.bf16.gmra.mrb[0].mxu0 %v6078
        %v6937 = vpop.f32.mrb[0].mxu0
        %v6938 = vadd.f32 %v6777, %v6937
        %v6939 = vpop.f32.mrb[0].mxu0
        %v6940 = vpop.f32.mrb[0].mxu0
        %v6941 = vadd.f32 %v6780, %v6940
        %v6942 = vpop.f32.mrb[0].mxu0
        %6943 = vmatprep.mubr.bf16.mxu0 %v6064
        %6944 = vmatmul.mubr.bf16.gmra.mrb[0].mxu0 %v6079
        %v6945 = vpop.f32.mrb[0].mxu0
        %v6946 = vadd.f32 %v6785, %v6945
        %v6947 = vpop.f32.mrb[0].mxu0
        %v6948 = vpop.f32.mrb[0].mxu0
        %v6949 = vadd.f32 %v6788, %v6948
        %v6950 = vpop.f32.mrb[0].mxu0
        %6951 = vmatprep.mubr.bf16.mxu0 %v6065
        %6952 = vmatmul.mubr.bf16.gmra.mrb[0].mxu0 %v6080
        %v6953 = vpop.f32.mrb[0].mxu0
        %v6954 = vadd.f32 %v6793, %v6953
        %v6955 = vpop.f32.mrb[0].mxu0
        %v6956 = vpop.f32.mrb[0].mxu0
        %v6957 = vadd.f32 %v6796, %v6956
        %v6958 = vpop.f32.mrb[0].mxu0
        %6959 = vmatprep.mubr.bf16.mxu0 %v6066
        %6960 = vmatmul.mubr.bf16.gmra.mrb[0].mxu0 %v6081
        %v6961 = vpop.f32.mrb[0].mxu0
        %v6962 = vadd.f32 %v6801, %v6961
        %v6963 = vpop.f32.mrb[0].mxu0
        %v6964 = vpop.f32.mrb[0].mxu0
        %v6965 = vadd.f32 %v6804, %v6964
        %v6966 = vpop.f32.mrb[0].mxu0
        %6967 = vmatprep.mubr.bf16.mxu0 %v6067
        %6968 = vmatmul.mubr.bf16.gmra.mrb[0].mxu0 %v6082
        %v6969 = vpop.f32.mrb[0].mxu0
        %v6970 = vadd.f32 %v6809, %v6969
        %v6971 = vpop.f32.mrb[0].mxu0
        %v6972 = vpop.f32.mrb[0].mxu0
        %v6973 = vadd.f32 %v6812, %v6972
        %v6974 = vpop.f32.mrb[0].mxu0
        %6975 = vmatprep.mubr.bf16.mxu0 %v6068
        %6976 = vmatmul.mubr.bf16.gmra.mrb[0].mxu0 %v6083
        %v6977 = vpop.f32.mrb[0].mxu0
        %v6978 = vadd.f32 %v6817, %v6977
        %v6979 = vpop.f32.mrb[0].mxu0
        %v6980 = vpop.f32.mrb[0].mxu0
        %v6981 = vadd.f32 %v6820, %v6980
        %v6982 = vpop.f32.mrb[0].mxu0
        %6983 = vdwg.mxu0
        %6984 = vmatprep.subr.bf16.mxu0 0
        %6985 = vmatpush1.bf16.msra.mxu0 %v6550
        %6986 = vmatprep.subr.bf16.mxu0 0
        %6987 = vmatpush1.bf16.msra.mxu0 %v6551
        %6988 = vmatprep.subr.bf16.mxu0 0
        %6989 = vmatpush1.bf16.msra.mxu0 %v6552
        %6990 = vmatprep.subr.bf16.mxu0 0
        %6991 = vmatpush1.bf16.msra.mxu0 %v6553
        %6992 = vmatprep.subr.bf16.mxu0 0
        %6993 = vmatpush1.bf16.msra.mxu0 %v6554
        %6994 = vmatprep.subr.bf16.mxu0 0
        %6995 = vmatpush1.bf16.msra.mxu0 %v6555
        %6996 = vmatprep.subr.bf16.mxu0 0
        %6997 = vmatpush1.bf16.msra.mxu0 %v6556
        %6998 = vmatprep.subr.bf16.mxu0 0
        %6999 = vmatpush1.bf16.msra.mxu0 %v6557
        %7000 = vmatprep.subr.bf16.mxu0 0
        %7001 = vmatpush1.bf16.msra.mxu0 %v6558
        %7002 = vmatprep.subr.bf16.mxu0 0
        %7003 = vmatpush1.bf16.msra.mxu0 %v6559
        %7004 = vmatprep.subr.bf16.mxu0 0
        %7005 = vmatpush1.bf16.msra.mxu0 %v6560
        %7006 = vmatprep.subr.bf16.mxu0 0
        %7007 = vmatpush1.bf16.msra.mxu0 %v6561
        %7008 = vmatprep.subr.bf16.mxu0 0
        %7009 = vmatpush1.bf16.msra.mxu0 %v6562
        %7010 = vmatprep.subr.bf16.mxu0 0
        %7011 = vmatpush1.bf16.msra.mxu0 %v6563
        %7012 = vmatprep.subr.bf16.mxu0 0
        %7013 = vmatpush1.bf16.msra.mxu0 %v6564
        %7014 = vmatprep.subr.bf16.mxu0 0
        %7015 = vmatpush1.bf16.msra.mxu0 %v6565
        %7016 = vmatprep.mubr.bf16.mxu0 %v6069
        %7017 = vmatmul.mubr.bf16.gmra.mrb[0].mxu0 %v5813
        %v7018 = vpop.f32.mrb[0].mxu0
        %v7019 = vadd.f32 %v6858, %v7018
        %v7020 = vpop.f32.mrb[0].mxu0
        %v7021 = vpop.f32.mrb[0].mxu0
        %v7022 = vadd.f32 %v6861, %v7021
        %v7023 = vpop.f32.mrb[0].mxu0
        %7024 = vmatprep.mubr.bf16.mxu0 %v6070
        %7025 = vmatmul.mubr.bf16.gmra.mrb[0].mxu0 %v5814
        %v7026 = vpop.f32.mrb[0].mxu0
        %v7027 = vadd.f32 %v6866, %v7026
        %v7028 = vpop.f32.mrb[0].mxu0
        %v7029 = vpop.f32.mrb[0].mxu0
        %v7030 = vadd.f32 %v6869, %v7029
        %v7031 = vpop.f32.mrb[0].mxu0
        %7032 = vmatprep.mubr.bf16.mxu0 %v6071
        %7033 = vmatmul.mubr.bf16.gmra.mrb[0].mxu0 %v5815
        %v7034 = vpop.f32.mrb[0].mxu0
        %v7035 = vadd.f32 %v6874, %v7034
        %v7036 = vpop.f32.mrb[0].mxu0
        %v7037 = vpop.f32.mrb[0].mxu0
        %v7038 = vadd.f32 %v6877, %v7037
        %v7039 = vpop.f32.mrb[0].mxu0
        %7040 = vmatprep.mubr.bf16.mxu0 %v6072
        %7041 = vmatmul.mubr.bf16.gmra.mrb[0].mxu0 %v5816
        %v7042 = vpop.f32.mrb[0].mxu0
        %v7043 = vadd.f32 %v6882, %v7042
        %v7044 = vpop.f32.mrb[0].mxu0
        %v7045 = vpop.f32.mrb[0].mxu0
        %v7046 = vadd.f32 %v6885, %v7045
        %v7047 = vpop.f32.mrb[0].mxu0
        %7048 = vmatprep.mubr.bf16.mxu0 %v6073
        %7049 = vmatmul.mubr.bf16.gmra.mrb[0].mxu0 %v5817
        %v7050 = vpop.f32.mrb[0].mxu0
        %v7051 = vadd.f32 %v6890, %v7050
        %v7052 = vpop.f32.mrb[0].mxu0
        %v7053 = vpop.f32.mrb[0].mxu0
        %v7054 = vadd.f32 %v6893, %v7053
        %v7055 = vpop.f32.mrb[0].mxu0
        %7056 = vmatprep.mubr.bf16.mxu0 %v6074
        %7057 = vmatmul.mubr.bf16.gmra.mrb[0].mxu0 %v5818
        %v7058 = vpop.f32.mrb[0].mxu0
        %v7059 = vadd.f32 %v6898, %v7058
        %v7060 = vpop.f32.mrb[0].mxu0
        %v7061 = vpop.f32.mrb[0].mxu0
        %v7062 = vadd.f32 %v6901, %v7061
        %v7063 = vpop.f32.mrb[0].mxu0
        %7064 = vmatprep.mubr.bf16.mxu0 %v6075
        %7065 = vmatmul.mubr.bf16.gmra.mrb[0].mxu0 %v5819
        %v7066 = vpop.f32.mrb[0].mxu0
        %v7067 = vadd.f32 %v6906, %v7066
        %v7068 = vpop.f32.mrb[0].mxu0
        %v7069 = vpop.f32.mrb[0].mxu0
        %v7070 = vadd.f32 %v6909, %v7069
        %v7071 = vpop.f32.mrb[0].mxu0
        %7072 = vmatprep.mubr.bf16.mxu0 %v6076
        %7073 = vmatmul.mubr.bf16.gmra.mrb[0].mxu0 %v5820
        %v7074 = vpop.f32.mrb[0].mxu0
        %v7075 = vadd.f32 %v6914, %v7074
        %v7076 = vpop.f32.mrb[0].mxu0
        %v7077 = vpop.f32.mrb[0].mxu0
        %v7078 = vadd.f32 %v6917, %v7077
        %v7079 = vpop.f32.mrb[0].mxu0
        %7080 = vmatprep.mubr.bf16.mxu0 %v6077
        %7081 = vmatmul.mubr.bf16.gmra.mrb[0].mxu0 %v5821
        %v7082 = vpop.f32.mrb[0].mxu0
        %v7083 = vadd.f32 %v6922, %v7082
        %v7084 = vpop.f32.mrb[0].mxu0
        %v7085 = vpop.f32.mrb[0].mxu0
        %v7086 = vadd.f32 %v6925, %v7085
        %v7087 = vpop.f32.mrb[0].mxu0
        %7088 = vmatprep.mubr.bf16.mxu0 %v6078
        %7089 = vmatmul.mubr.bf16.gmra.mrb[0].mxu0 %v5822
        %v7090 = vpop.f32.mrb[0].mxu0
        %v7091 = vadd.f32 %v6930, %v7090
        %v7092 = vpop.f32.mrb[0].mxu0
        %v7093 = vpop.f32.mrb[0].mxu0
        %v7094 = vadd.f32 %v6933, %v7093
        %v7095 = vpop.f32.mrb[0].mxu0
        %7096 = vmatprep.mubr.bf16.mxu0 %v6079
        %7097 = vmatmul.mubr.bf16.gmra.mrb[0].mxu0 %v5823
        %v7098 = vpop.f32.mrb[0].mxu0
        %v7099 = vadd.f32 %v6938, %v7098
        %v7100 = vpop.f32.mrb[0].mxu0
        %v7101 = vpop.f32.mrb[0].mxu0
        %v7102 = vadd.f32 %v6941, %v7101
        %v7103 = vpop.f32.mrb[0].mxu0
        %7104 = vmatprep.mubr.bf16.mxu0 %v6080
        %7105 = vmatmul.mubr.bf16.gmra.mrb[0].mxu0 %v5824
        %v7106 = vpop.f32.mrb[0].mxu0
        %v7107 = vadd.f32 %v6946, %v7106
        %v7108 = vpop.f32.mrb[0].mxu0
        %v7109 = vpop.f32.mrb[0].mxu0
        %v7110 = vadd.f32 %v6949, %v7109
        %v7111 = vpop.f32.mrb[0].mxu0
        %7112 = vmatprep.mubr.bf16.mxu0 %v6081
        %7113 = vmatmul.mubr.bf16.gmra.mrb[0].mxu0 %v5825
        %v7114 = vpop.f32.mrb[0].mxu0
        %v7115 = vadd.f32 %v6954, %v7114
        %v7116 = vpop.f32.mrb[0].mxu0
        %v7117 = vpop.f32.mrb[0].mxu0
        %v7118 = vadd.f32 %v6957, %v7117
        %v7119 = vpop.f32.mrb[0].mxu0
        %7120 = vmatprep.mubr.bf16.mxu0 %v6082
        %7121 = vmatmul.mubr.bf16.gmra.mrb[0].mxu0 %v5826
        %v7122 = vpop.f32.mrb[0].mxu0
        %v7123 = vadd.f32 %v6962, %v7122
        %v7124 = vpop.f32.mrb[0].mxu0
        %v7125 = vpop.f32.mrb[0].mxu0
        %v7126 = vadd.f32 %v6965, %v7125
        %v7127 = vpop.f32.mrb[0].mxu0
        %7128 = vmatprep.mubr.bf16.mxu0 %v6083
        %7129 = vmatmul.mubr.bf16.gmra.mrb[0].mxu0 %v5827
        %v7130 = vpop.f32.mrb[0].mxu0
        %v7131 = vadd.f32 %v6970, %v7130
        %v7132 = vpop.f32.mrb[0].mxu0
        %v7133 = vpop.f32.mrb[0].mxu0
        %v7134 = vadd.f32 %v6973, %v7133
        %v7135 = vpop.f32.mrb[0].mxu0
        %7136 = vmatprep.mubr.bf16.mxu0 %v6084
        %7137 = vmatmul.mubr.bf16.gmra.mrb[0].mxu0 %v5828
        %v7138 = vpop.f32.mrb[0].mxu0
        %v7139 = vadd.f32 %v6978, %v7138
        %v7140 = vpop.f32.mrb[0].mxu0
        %v7141 = vpop.f32.mrb[0].mxu0
        %v7142 = vadd.f32 %v6981, %v7141
        %v7143 = vpop.f32.mrb[0].mxu0
        %7144 = vdwg.mxu0
        %7145 = vmatprep.subr.bf16.mxu0 0
        %7146 = vmatpush1.bf16.msra.mxu0 %v6566
        %7147 = vmatprep.subr.bf16.mxu0 0
        %7148 = vmatpush1.bf16.msra.mxu0 %v6567
        %7149 = vmatprep.subr.bf16.mxu0 0
        %7150 = vmatpush1.bf16.msra.mxu0 %v6568
        %7151 = vmatprep.subr.bf16.mxu0 0
        %7152 = vmatpush1.bf16.msra.mxu0 %v6569
        %7153 = vmatprep.subr.bf16.mxu0 0
        %7154 = vmatpush1.bf16.msra.mxu0 %v6570
        %7155 = vmatprep.subr.bf16.mxu0 0
        %7156 = vmatpush1.bf16.msra.mxu0 %v6571
        %7157 = vmatprep.subr.bf16.mxu0 0
        %7158 = vmatpush1.bf16.msra.mxu0 %v6572
        %7159 = vmatprep.subr.bf16.mxu0 0
        %7160 = vmatpush1.bf16.msra.mxu0 %v6573
        %7161 = vmatprep.subr.bf16.mxu0 0
        %7162 = vmatpush1.bf16.msra.mxu0 %v6574
        %7163 = vmatprep.subr.bf16.mxu0 0
        %7164 = vmatpush1.bf16.msra.mxu0 %v6575
        %7165 = vmatprep.subr.bf16.mxu0 0
        %7166 = vmatpush1.bf16.msra.mxu0 %v6576
        %7167 = vmatprep.subr.bf16.mxu0 0
        %7168 = vmatpush1.bf16.msra.mxu0 %v6577
        %7169 = vmatprep.subr.bf16.mxu0 0
        %7170 = vmatpush1.bf16.msra.mxu0 %v6578
        %7171 = vmatprep.subr.bf16.mxu0 0
        %7172 = vmatpush1.bf16.msra.mxu0 %v6579
        %7173 = vmatprep.subr.bf16.mxu0 0
        %7174 = vmatpush1.bf16.msra.mxu0 %v6580
        %7175 = vmatprep.subr.bf16.mxu0 0
        %7176 = vmatpush1.bf16.msra.mxu0 %v6581
        %7177 = vmatprep.mubr.bf16.mxu0 %v5814
        %7178 = vmatmul.mubr.bf16.gmra.mrb[0].mxu0 %v6054
        %v7179 = vpop.f32.mrb[0].mxu0
        %v7180 = vadd.f32 %v7019, %v7179
        %v7181 = vpop.f32.mrb[0].mxu0
        %v7182 = vpop.f32.mrb[0].mxu0
        %v7183 = vadd.f32 %v7022, %v7182
        %v7184 = vpop.f32.mrb[0].mxu0
        %7185 = vmatprep.mubr.bf16.mxu0 %v5815
        %7186 = vmatmul.mubr.bf16.gmra.mrb[0].mxu0 %v6055
        %v7187 = vpop.f32.mrb[0].mxu0
        %v7188 = vadd.f32 %v7027, %v7187
        %v7189 = vpop.f32.mrb[0].mxu0
        %v7190 = vpop.f32.mrb[0].mxu0
        %v7191 = vadd.f32 %v7030, %v7190
        %v7192 = vpop.f32.mrb[0].mxu0
        %7193 = vmatprep.mubr.bf16.mxu0 %v5816
        %7194 = vmatmul.mubr.bf16.gmra.mrb[0].mxu0 %v6056
        %v7195 = vpop.f32.mrb[0].mxu0
        %v7196 = vadd.f32 %v7035, %v7195
        %v7197 = vpop.f32.mrb[0].mxu0
        %v7198 = vpop.f32.mrb[0].mxu0
        %v7199 = vadd.f32 %v7038, %v7198
        %v7200 = vpop.f32.mrb[0].mxu0
        %7201 = vmatprep.mubr.bf16.mxu0 %v5817
        %7202 = vmatmul.mubr.bf16.gmra.mrb[0].mxu0 %v6057
        %v7203 = vpop.f32.mrb[0].mxu0
        %v7204 = vadd.f32 %v7043, %v7203
        %v7205 = vpop.f32.mrb[0].mxu0
        %v7206 = vpop.f32.mrb[0].mxu0
        %v7207 = vadd.f32 %v7046, %v7206
        %v7208 = vpop.f32.mrb[0].mxu0
        %7209 = vmatprep.mubr.bf16.mxu0 %v5818
        %7210 = vmatmul.mubr.bf16.gmra.mrb[0].mxu0 %v6058
        %v7211 = vpop.f32.mrb[0].mxu0
        %v7212 = vadd.f32 %v7051, %v7211
        %v7213 = vpop.f32.mrb[0].mxu0
        %v7214 = vpop.f32.mrb[0].mxu0
        %v7215 = vadd.f32 %v7054, %v7214
        %v7216 = vpop.f32.mrb[0].mxu0
        %7217 = vmatprep.mubr.bf16.mxu0 %v5819
        %7218 = vmatmul.mubr.bf16.gmra.mrb[0].mxu0 %v6059
        %v7219 = vpop.f32.mrb[0].mxu0
        %v7220 = vadd.f32 %v7059, %v7219
        %v7221 = vpop.f32.mrb[0].mxu0
        %v7222 = vpop.f32.mrb[0].mxu0
        %v7223 = vadd.f32 %v7062, %v7222
        %v7224 = vpop.f32.mrb[0].mxu0
        %7225 = vmatprep.mubr.bf16.mxu0 %v5820
        %7226 = vmatmul.mubr.bf16.gmra.mrb[0].mxu0 %v6060
        %v7227 = vpop.f32.mrb[0].mxu0
        %v7228 = vadd.f32 %v7067, %v7227
        %v7229 = vpop.f32.mrb[0].mxu0
        %v7230 = vpop.f32.mrb[0].mxu0
        %v7231 = vadd.f32 %v7070, %v7230
        %v7232 = vpop.f32.mrb[0].mxu0
        %7233 = vmatprep.mubr.bf16.mxu0 %v5821
        %7234 = vmatmul.mubr.bf16.gmra.mrb[0].mxu0 %v6061
        %v7235 = vpop.f32.mrb[0].mxu0
        %v7236 = vadd.f32 %v7075, %v7235
        %v7237 = vpop.f32.mrb[0].mxu0
        %v7238 = vpop.f32.mrb[0].mxu0
        %v7239 = vadd.f32 %v7078, %v7238
        %v7240 = vpop.f32.mrb[0].mxu0
        %7241 = vmatprep.mubr.bf16.mxu0 %v5822
        %7242 = vmatmul.mubr.bf16.gmra.mrb[0].mxu0 %v6062
        %v7243 = vpop.f32.mrb[0].mxu0
        %v7244 = vadd.f32 %v7083, %v7243
        %v7245 = vpop.f32.mrb[0].mxu0
        %v7246 = vpop.f32.mrb[0].mxu0
        %v7247 = vadd.f32 %v7086, %v7246
        %v7248 = vpop.f32.mrb[0].mxu0
        %7249 = vmatprep.mubr.bf16.mxu0 %v5823
        %7250 = vmatmul.mubr.bf16.gmra.mrb[0].mxu0 %v6063
        %v7251 = vpop.f32.mrb[0].mxu0
        %v7252 = vadd.f32 %v7091, %v7251
        %v7253 = vpop.f32.mrb[0].mxu0
        %v7254 = vpop.f32.mrb[0].mxu0
        %v7255 = vadd.f32 %v7094, %v7254
        %v7256 = vpop.f32.mrb[0].mxu0
        %7257 = vmatprep.mubr.bf16.mxu0 %v5824
        %7258 = vmatmul.mubr.bf16.gmra.mrb[0].mxu0 %v6064
        %v7259 = vpop.f32.mrb[0].mxu0
        %v7260 = vadd.f32 %v7099, %v7259
        %v7261 = vpop.f32.mrb[0].mxu0
        %v7262 = vpop.f32.mrb[0].mxu0
        %v7263 = vadd.f32 %v7102, %v7262
        %v7264 = vpop.f32.mrb[0].mxu0
        %7265 = vmatprep.mubr.bf16.mxu0 %v5825
        %7266 = vmatmul.mubr.bf16.gmra.mrb[0].mxu0 %v6065
        %v7267 = vpop.f32.mrb[0].mxu0
        %v7268 = vadd.f32 %v7107, %v7267
        %v7269 = vpop.f32.mrb[0].mxu0
        %v7270 = vpop.f32.mrb[0].mxu0
        %v7271 = vadd.f32 %v7110, %v7270
        %v7272 = vpop.f32.mrb[0].mxu0
        %7273 = vmatprep.mubr.bf16.mxu0 %v5826
        %7274 = vmatmul.mubr.bf16.gmra.mrb[0].mxu0 %v6066
        %v7275 = vpop.f32.mrb[0].mxu0
        %v7276 = vadd.f32 %v7115, %v7275
        %v7277 = vpop.f32.mrb[0].mxu0
        %v7278 = vpop.f32.mrb[0].mxu0
        %v7279 = vadd.f32 %v7118, %v7278
        %v7280 = vpop.f32.mrb[0].mxu0
        %7281 = vmatprep.mubr.bf16.mxu0 %v5827
        %7282 = vmatmul.mubr.bf16.gmra.mrb[0].mxu0 %v6067
        %v7283 = vpop.f32.mrb[0].mxu0
        %v7284 = vadd.f32 %v7123, %v7283
        %v7285 = vpop.f32.mrb[0].mxu0
        %v7286 = vpop.f32.mrb[0].mxu0
        %v7287 = vadd.f32 %v7126, %v7286
        %v7288 = vpop.f32.mrb[0].mxu0
        %7289 = vmatprep.mubr.bf16.mxu0 %v5828
        %7290 = vmatmul.mubr.bf16.gmra.mrb[0].mxu0 %v6068
        %v7291 = vpop.f32.mrb[0].mxu0
        %v7292 = vadd.f32 %v7131, %v7291
        %v7293 = vpop.f32.mrb[0].mxu0
        %v7294 = vpop.f32.mrb[0].mxu0
        %v7295 = vadd.f32 %v7134, %v7294
        %v7296 = vpop.f32.mrb[0].mxu0
        %7297 = vmatprep.mubr.bf16.mxu0 0
        %7298 = vmatmul.mubr.bf16.gmra.mrb[0].mxu0 0
        %v7299 = vpop.f32.mrb[0].mxu0
        %v7300 = vadd.f32 %v7139, %v7299
        %v7301 = vpop.f32.mrb[0].mxu0
        %v7302 = vpop.f32.mrb[0].mxu0
        %v7303 = vadd.f32 %v7142, %v7302
        %v7304 = vpop.f32.mrb[0].mxu0
        %7305 = vdwg.mxu0
        %7306 = vmatprep.subr.bf16.mxu0 0
        %7307 = vmatpush1.bf16.msra.mxu0 %v6582
        %7308 = vmatprep.subr.bf16.mxu0 0
        %7309 = vmatpush1.bf16.msra.mxu0 %v6583
        %7310 = vmatprep.subr.bf16.mxu0 0
        %7311 = vmatpush1.bf16.msra.mxu0 %v6584
        %7312 = vmatprep.subr.bf16.mxu0 0
        %7313 = vmatpush1.bf16.msra.mxu0 %v6585
        %7314 = vmatprep.subr.bf16.mxu0 0
        %7315 = vmatpush1.bf16.msra.mxu0 %v6586
        %7316 = vmatprep.subr.bf16.mxu0 0
        %7317 = vmatpush1.bf16.msra.mxu0 %v6587
        %7318 = vmatprep.subr.bf16.mxu0 0
        %7319 = vmatpush1.bf16.msra.mxu0 %v6588
        %7320 = vmatprep.subr.bf16.mxu0 0
        %7321 = vmatpush1.bf16.msra.mxu0 %v6589
        %7322 = vmatprep.subr.bf16.mxu0 0
        %7323 = vmatpush1.bf16.msra.mxu0 0
        %7324 = vmatprep.subr.bf16.mxu0 0
        %7325 = vmatpush1.bf16.msra.mxu0 0
        %7326 = vmatprep.subr.bf16.mxu0 0
        %7327 = vmatpush1.bf16.msra.mxu0 0
        %7328 = vmatprep.subr.bf16.mxu0 0
        %7329 = vmatpush1.bf16.msra.mxu0 0
        %7330 = vmatprep.subr.bf16.mxu0 0
        %7331 = vmatpush1.bf16.msra.mxu0 0
        %7332 = vmatprep.subr.bf16.mxu0 0
        %7333 = vmatpush1.bf16.msra.mxu0 0
        %7334 = vmatprep.subr.bf16.mxu0 0
        %7335 = vmatpush1.bf16.msra.mxu0 0
        %7336 = vmatprep.subr.bf16.mxu0 0
        %7337 = vmatpush1.bf16.msra.mxu0 0
        %7338 = vmatprep.mubr.bf16.mxu0 0
        %7339 = vmatmul.mubr.bf16.gmra.mrb[0].mxu0 %v6070
        %v7340 = vpop.f32.mrb[0].mxu0
        %v7341 = vadd.f32 %v7180, %v7340
        %v7342 = vpop.f32.mrb[0].mxu0
        %v7343 = vpop.f32.mrb[0].mxu0
        %v7344 = vadd.f32 %v7183, %v7343
        %v7345 = vpop.f32.mrb[0].mxu0
        %7346 = vmatprep.mubr.bf16.mxu0 0
        %7347 = vmatmul.mubr.bf16.gmra.mrb[0].mxu0 %v6071
        %v7348 = vpop.f32.mrb[0].mxu0
        %v7349 = vadd.f32 %v7188, %v7348
        %v7350 = vpop.f32.mrb[0].mxu0
        %v7351 = vpop.f32.mrb[0].mxu0
        %v7352 = vadd.f32 %v7191, %v7351
        %v7353 = vpop.f32.mrb[0].mxu0
        %7354 = vmatprep.mubr.bf16.mxu0 0
        %7355 = vmatmul.mubr.bf16.gmra.mrb[0].mxu0 %v6072
        %v7356 = vpop.f32.mrb[0].mxu0
        %v7357 = vadd.f32 %v7196, %v7356
        %v7358 = vpop.f32.mrb[0].mxu0
        %v7359 = vpop.f32.mrb[0].mxu0
        %v7360 = vadd.f32 %v7199, %v7359
        %v7361 = vpop.f32.mrb[0].mxu0
        %7362 = vmatprep.mubr.bf16.mxu0 0
        %7363 = vmatmul.mubr.bf16.gmra.mrb[0].mxu0 %v6073
        %v7364 = vpop.f32.mrb[0].mxu0
        %v7365 = vadd.f32 %v7204, %v7364
        %v7366 = vpop.f32.mrb[0].mxu0
        %v7367 = vpop.f32.mrb[0].mxu0
        %v7368 = vadd.f32 %v7207, %v7367
        %v7369 = vpop.f32.mrb[0].mxu0
        %7370 = vmatprep.mubr.bf16.mxu0 0
        %7371 = vmatmul.mubr.bf16.gmra.mrb[0].mxu0 %v6074
        %v7372 = vpop.f32.mrb[0].mxu0
        %v7373 = vadd.f32 %v7212, %v7372
        %v7374 = vpop.f32.mrb[0].mxu0
        %v7375 = vpop.f32.mrb[0].mxu0
        %v7376 = vadd.f32 %v7215, %v7375
        %v7377 = vpop.f32.mrb[0].mxu0
        %7378 = vmatprep.mubr.bf16.mxu0 0
        %7379 = vmatmul.mubr.bf16.gmra.mrb[0].mxu0 %v6075
        %v7380 = vpop.f32.mrb[0].mxu0
        %v7381 = vadd.f32 %v7220, %v7380
        %v7382 = vpop.f32.mrb[0].mxu0
        %v7383 = vpop.f32.mrb[0].mxu0
        %v7384 = vadd.f32 %v7223, %v7383
        %v7385 = vpop.f32.mrb[0].mxu0
        %7386 = vmatprep.mubr.bf16.mxu0 0
        %7387 = vmatmul.mubr.bf16.gmra.mrb[0].mxu0 %v6076
        %v7388 = vpop.f32.mrb[0].mxu0
        %v7389 = vadd.f32 %v7228, %v7388
        %v7390 = vpop.f32.mrb[0].mxu0
        %v7391 = vpop.f32.mrb[0].mxu0
        %v7392 = vadd.f32 %v7231, %v7391
        %v7393 = vpop.f32.mrb[0].mxu0
        %7394 = vmatprep.mubr.bf16.mxu0 0
        %7395 = vmatmul.mubr.bf16.gmra.mrb[0].mxu0 %v6077
        %v7396 = vpop.f32.mrb[0].mxu0
        %v7397 = vadd.f32 %v7236, %v7396
        %v7398 = vpop.f32.mrb[0].mxu0
        %v7399 = vpop.f32.mrb[0].mxu0
        %v7400 = vadd.f32 %v7239, %v7399
        %v7401 = vpop.f32.mrb[0].mxu0
        %7402 = vmatprep.mubr.bf16.mxu0 0
        %7403 = vmatmul.mubr.bf16.gmra.mrb[0].mxu0 %v6078
        %v7404 = vpop.f32.mrb[0].mxu0
        %v7405 = vadd.f32 %v7244, %v7404
        %v7406 = vpop.f32.mrb[0].mxu0
        %v7407 = vpop.f32.mrb[0].mxu0
        %v7408 = vadd.f32 %v7247, %v7407
        %v7409 = vpop.f32.mrb[0].mxu0
        %7410 = vmatprep.mubr.bf16.mxu0 0
        %7411 = vmatmul.mubr.bf16.gmra.mrb[0].mxu0 %v6079
        %v7412 = vpop.f32.mrb[0].mxu0
        %v7413 = vadd.f32 %v7252, %v7412
        %v7414 = vpop.f32.mrb[0].mxu0
        %v7415 = vpop.f32.mrb[0].mxu0
        %v7416 = vadd.f32 %v7255, %v7415
        %v7417 = vpop.f32.mrb[0].mxu0
        %7418 = vmatprep.mubr.bf16.mxu0 0
        %7419 = vmatmul.mubr.bf16.gmra.mrb[0].mxu0 %v6080
        %v7420 = vpop.f32.mrb[0].mxu0
        %v7421 = vadd.f32 %v7260, %v7420
        %v7422 = vpop.f32.mrb[0].mxu0
        %v7423 = vpop.f32.mrb[0].mxu0
        %v7424 = vadd.f32 %v7263, %v7423
        %v7425 = vpop.f32.mrb[0].mxu0
        %7426 = vmatprep.mubr.bf16.mxu0 0
        %7427 = vmatmul.mubr.bf16.gmra.mrb[0].mxu0 %v6081
        %v7428 = vpop.f32.mrb[0].mxu0
        %v7429 = vadd.f32 %v7268, %v7428
        %v7430 = vpop.f32.mrb[0].mxu0
        %v7431 = vpop.f32.mrb[0].mxu0
        %v7432 = vadd.f32 %v7271, %v7431
        %v7433 = vpop.f32.mrb[0].mxu0
        %7434 = vmatprep.mubr.bf16.mxu0 0
        %7435 = vmatmul.mubr.bf16.gmra.mrb[0].mxu0 %v6082
        %v7436 = vpop.f32.mrb[0].mxu0
        %v7437 = vadd.f32 %v7276, %v7436
        %v7438 = vpop.f32.mrb[0].mxu0
        %v7439 = vpop.f32.mrb[0].mxu0
        %v7440 = vadd.f32 %v7279, %v7439
        %v7441 = vpop.f32.mrb[0].mxu0
        %7442 = vmatprep.mubr.bf16.mxu0 0
        %7443 = vmatmul.mubr.bf16.gmra.mrb[0].mxu0 %v6083
        %v7444 = vpop.f32.mrb[0].mxu0
        %v7445 = vadd.f32 %v7284, %v7444
        %v7446 = vpop.f32.mrb[0].mxu0
        %v7447 = vpop.f32.mrb[0].mxu0
        %v7448 = vadd.f32 %v7287, %v7447
        %v7449 = vpop.f32.mrb[0].mxu0
        %7450 = vmatprep.mubr.bf16.mxu0 0
        %7451 = vmatmul.mubr.bf16.gmra.mrb[0].mxu0 %v6084
        %v7452 = vpop.f32.mrb[0].mxu0
        %v7453 = vadd.f32 %v7292, %v7452
        %v7454 = vpop.f32.mrb[0].mxu0
        %v7455 = vpop.f32.mrb[0].mxu0
        %v7456 = vadd.f32 %v7295, %v7455
        %v7457 = vpop.f32.mrb[0].mxu0
        %7458 = vmatprep.mubr.bf16.mxu0 0
        %7459 = vmatmul.mubr.bf16.gmra.mrb[0].mxu0 0
        %v7460 = vpop.f32.mrb[0].mxu0
        %v7461 = vadd.f32 %v7300, %v7460
        %v7462 = vpop.f32.mrb[0].mxu0
        %v7463 = vpop.f32.mrb[0].mxu0
        %v7464 = vadd.f32 %v7303, %v7463
        %v7465 = vpop.f32.mrb[0].mxu0
        %7466 = vdwg.mxu0
        %s7467 = scalar_lea.vmem [#allocation6], 3
        %v7468 = vld [vmem:[%s7467] sm:$0x1]
        %v7470 = vlaneseq
        %v7471 = vshrl.u32 %v7470, 7
        %v7472 = vsub.s32 0, %v7471
        %v7473 = vrot.slane %v7468, %v7472
        %v7475 = vmul.f32 %v7341, %v7473
        %v7476 = vmul.f32 %v7344, %v7473
        %v7477 = vmul.f32 %v7349, %v7473
        %v7478 = vmul.f32 %v7352, %v7473
        %v7479 = vmul.f32 %v7357, %v7473
        %v7480 = vmul.f32 %v7360, %v7473
        %v7481 = vmul.f32 %v7365, %v7473
        %v7482 = vmul.f32 %v7368, %v7473
        %v7483 = vmul.f32 %v7373, %v7473
        %v7484 = vmul.f32 %v7376, %v7473
        %v7485 = vmul.f32 %v7381, %v7473
        %v7486 = vmul.f32 %v7384, %v7473
        %v7487 = vmul.f32 %v7389, %v7473
        %v7488 = vmul.f32 %v7392, %v7473
        %v7489 = vmul.f32 %v7397, %v7473
        %v7490 = vmul.f32 %v7400, %v7473
        %v7491 = vmul.f32 %v7405, %v7473
        %v7492 = vmul.f32 %v7408, %v7473
        %v7493 = vmul.f32 %v7413, %v7473
        %v7494 = vmul.f32 %v7416, %v7473
        %v7495 = vmul.f32 %v7421, %v7473
        %v7496 = vmul.f32 %v7424, %v7473
        %v7497 = vmul.f32 %v7429, %v7473
        %v7498 = vmul.f32 %v7432, %v7473
        %v7499 = vmul.f32 %v7437, %v7473
        %v7500 = vmul.f32 %v7440, %v7473
        %v7501 = vmul.f32 %v7445, %v7473
        %v7502 = vmul.f32 %v7448, %v7473
        %v7503 = vmul.f32 %v7453, %v7473
        %v7504 = vmul.f32 %v7456, %v7473
        %v7505 = vmul.f32 %v7461, %v7473
        %v7506 = vmul.f32 %v7464, %v7473
        %s7507 = scalar_lea.vmem [#allocation8], 3
        %v7508 = vld [vmem:[%s7507] sm:$0x1]
        %v7510 = vlaneseq
        %v7511 = vshrl.u32 %v7510, 7
        %v7512 = vsub.s32 0, %v7511
        %v7513 = vrot.slane %v7508, %v7512
        %v7515 = vadd.f32 %v7475, %v7513
        %v7516 = vadd.f32 %v7476, %v7513
        %v7517 = vadd.f32 %v7477, %v7513
        %v7518 = vadd.f32 %v7478, %v7513
        %v7519 = vadd.f32 %v7479, %v7513
        %v7520 = vadd.f32 %v7480, %v7513
        %v7521 = vadd.f32 %v7481, %v7513
        %v7522 = vadd.f32 %v7482, %v7513
        %v7523 = vadd.f32 %v7483, %v7513
        %v7524 = vadd.f32 %v7484, %v7513
        %v7525 = vadd.f32 %v7485, %v7513
        %v7526 = vadd.f32 %v7486, %v7513
        %v7527 = vadd.f32 %v7487, %v7513
        %v7528 = vadd.f32 %v7488, %v7513
        %v7529 = vadd.f32 %v7489, %v7513
        %v7530 = vadd.f32 %v7490, %v7513
        %v7531 = vadd.f32 %v7491, %v7513
        %v7532 = vadd.f32 %v7492, %v7513
        %v7533 = vadd.f32 %v7493, %v7513
        %v7534 = vadd.f32 %v7494, %v7513
        %v7535 = vadd.f32 %v7495, %v7513
        %v7536 = vadd.f32 %v7496, %v7513
        %v7537 = vadd.f32 %v7497, %v7513
        %v7538 = vadd.f32 %v7498, %v7513
        %v7539 = vadd.f32 %v7499, %v7513
        %v7540 = vadd.f32 %v7500, %v7513
        %v7541 = vadd.f32 %v7501, %v7513
        %v7542 = vadd.f32 %v7502, %v7513
        %v7543 = vadd.f32 %v7503, %v7513
        %v7544 = vadd.f32 %v7504, %v7513
        %v7545 = vadd.f32 %v7505, %v7513
        %v7546 = vadd.f32 %v7506, %v7513
        %v7547 = vmax.f32 %v7515, 0.0
        %v7548 = vmax.f32 %v7516, 0.0
        %v7549 = vmax.f32 %v7517, 0.0
        %v7550 = vmax.f32 %v7518, 0.0
        %v7551 = vmax.f32 %v7519, 0.0
        %v7552 = vmax.f32 %v7520, 0.0
        %v7553 = vmax.f32 %v7521, 0.0
        %v7554 = vmax.f32 %v7522, 0.0
        %v7555 = vmax.f32 %v7523, 0.0
        %v7556 = vmax.f32 %v7524, 0.0
        %v7557 = vmax.f32 %v7525, 0.0
        %v7558 = vmax.f32 %v7526, 0.0
        %v7559 = vmax.f32 %v7527, 0.0
        %v7560 = vmax.f32 %v7528, 0.0
        %v7561 = vmax.f32 %v7529, 0.0
        %v7562 = vmax.f32 %v7530, 0.0
        %v7563 = vmax.f32 %v7531, 0.0
        %v7564 = vmax.f32 %v7532, 0.0
        %v7565 = vmax.f32 %v7533, 0.0
        %v7566 = vmax.f32 %v7534, 0.0
        %v7567 = vmax.f32 %v7535, 0.0
        %v7568 = vmax.f32 %v7536, 0.0
        %v7569 = vmax.f32 %v7537, 0.0
        %v7570 = vmax.f32 %v7538, 0.0
        %v7571 = vmax.f32 %v7539, 0.0
        %v7572 = vmax.f32 %v7540, 0.0
        %v7573 = vmax.f32 %v7541, 0.0
        %v7574 = vmax.f32 %v7542, 0.0
        %v7575 = vmax.f32 %v7543, 0.0
        %v7576 = vmax.f32 %v7544, 0.0
        %v7577 = vmax.f32 %v7545, 0.0
        %v7578 = vmax.f32 %v7546, 0.0
        %v7579 = vpack.c.bf16 %v7548, %v7547
        %v7580 = vpack.c.bf16 %v7550, %v7549
        %v7581 = vpack.c.bf16 %v7552, %v7551
        %v7582 = vpack.c.bf16 %v7554, %v7553
        %v7583 = vpack.c.bf16 %v7556, %v7555
        %v7584 = vpack.c.bf16 %v7558, %v7557
        %v7585 = vpack.c.bf16 %v7560, %v7559
        %v7586 = vpack.c.bf16 %v7562, %v7561
        %v7587 = vpack.c.bf16 %v7564, %v7563
        %v7588 = vpack.c.bf16 %v7566, %v7565
        %v7589 = vpack.c.bf16 %v7568, %v7567
        %v7590 = vpack.c.bf16 %v7570, %v7569
        %v7591 = vpack.c.bf16 %v7572, %v7571
        %v7592 = vpack.c.bf16 %v7574, %v7573
        %v7593 = vpack.c.bf16 %v7576, %v7575
        %v7594 = vpack.c.bf16 %v7578, %v7577
        %v7595 = vunpack.c.l.bf16 %v7579
        %v7596 = vunpack.c.h.bf16 %v7579
        %v7597 = vunpack.c.l.bf16 %v7580
        %v7598 = vunpack.c.h.bf16 %v7580
        %v7599 = vunpack.c.l.bf16 %v7581
        %v7600 = vunpack.c.h.bf16 %v7581
        %v7601 = vunpack.c.l.bf16 %v7582
        %v7602 = vunpack.c.h.bf16 %v7582
        %v7603 = vunpack.c.l.bf16 %v7583
        %v7604 = vunpack.c.h.bf16 %v7583
        %v7605 = vunpack.c.l.bf16 %v7584
        %v7606 = vunpack.c.h.bf16 %v7584
        %v7607 = vunpack.c.l.bf16 %v7585
        %v7608 = vunpack.c.h.bf16 %v7585
        %v7609 = vunpack.c.l.bf16 %v7586
        %v7610 = vunpack.c.h.bf16 %v7586
        %v7611 = vunpack.c.l.bf16 %v7587
        %v7612 = vunpack.c.h.bf16 %v7587
        %v7613 = vunpack.c.l.bf16 %v7588
        %v7614 = vunpack.c.h.bf16 %v7588
        %v7615 = vunpack.c.l.bf16 %v7589
        %v7616 = vunpack.c.h.bf16 %v7589
        %v7617 = vunpack.c.l.bf16 %v7590
        %v7618 = vunpack.c.h.bf16 %v7590
        %v7619 = vunpack.c.l.bf16 %v7591
        %v7620 = vunpack.c.h.bf16 %v7591
        %v7621 = vunpack.c.l.bf16 %v7592
        %v7622 = vunpack.c.h.bf16 %v7592
        %v7623 = vunpack.c.l.bf16 %v7593
        %v7624 = vunpack.c.h.bf16 %v7593
        %v7625 = vunpack.c.l.bf16 %v7594
        %v7626 = vunpack.c.h.bf16 %v7594
        %v7627 = vrot.slane %v7595, 7
        %v7628 = vrot.slane %v7596, 7
        %v7629 = vrot.slane %v7597, 7
        %v7630 = vrot.slane %v7598, 7
        %v7631 = vrot.slane %v7599, 7
        %v7632 = vrot.slane %v7600, 7
        %v7633 = vrot.slane %v7601, 7
        %v7634 = vrot.slane %v7602, 7
        %v7635 = vrot.slane %v7603, 7
        %v7636 = vrot.slane %v7604, 7
        %v7637 = vrot.slane %v7605, 7
        %v7638 = vrot.slane %v7606, 7
        %v7639 = vrot.slane %v7607, 7
        %v7640 = vrot.slane %v7608, 7
        %v7641 = vrot.slane %v7609, 7
        %v7642 = vrot.slane %v7610, 7
        %v7643 = vrot.slane %v7611, 7
        %v7644 = vrot.slane %v7612, 7
        %v7645 = vrot.slane %v7613, 7
        %v7646 = vrot.slane %v7614, 7
        %v7647 = vrot.slane %v7615, 7
        %v7648 = vrot.slane %v7616, 7
        %v7649 = vrot.slane %v7617, 7
        %v7650 = vrot.slane %v7618, 7
        %v7651 = vrot.slane %v7619, 7
        %v7652 = vrot.slane %v7620, 7
        %v7653 = vrot.slane %v7621, 7
        %v7654 = vrot.slane %v7622, 7
        %v7655 = vrot.slane %v7623, 7
        %v7656 = vrot.slane %v7624, 7
        %v7657 = vrot.slane %v7625, 7
        %v7658 = vrot.slane %v7626, 7
        %v7659 = vsel %vm466, %v7657, %v7658
        %v7660 = vsel %vm466, %v7656, %v7657
        %v7661 = vsel %vm466, %v7655, %v7656
        %v7662 = vsel %vm466, %v7654, %v7655
        %v7663 = vsel %vm466, %v7653, %v7654
        %v7664 = vsel %vm466, %v7652, %v7653
        %v7665 = vsel %vm466, %v7651, %v7652
        %v7666 = vsel %vm466, %v7650, %v7651
        %v7667 = vsel %vm466, %v7649, %v7650
        %v7668 = vsel %vm466, %v7648, %v7649
        %v7669 = vsel %vm466, %v7647, %v7648
        %v7670 = vsel %vm466, %v7646, %v7647
        %v7671 = vsel %vm466, %v7645, %v7646
        %v7672 = vsel %vm466, %v7644, %v7645
        %v7673 = vsel %vm466, %v7643, %v7644
        %v7674 = vsel %vm466, %v7642, %v7643
        %v7675 = vsel %vm466, %v7641, %v7642
        %v7676 = vsel %vm466, %v7640, %v7641
        %v7677 = vsel %vm466, %v7639, %v7640
        %v7678 = vsel %vm466, %v7638, %v7639
        %v7679 = vsel %vm466, %v7637, %v7638
        %v7680 = vsel %vm466, %v7636, %v7637
        %v7681 = vsel %vm466, %v7635, %v7636
        %v7682 = vsel %vm466, %v7634, %v7635
        %v7683 = vsel %vm466, %v7633, %v7634
        %v7684 = vsel %vm466, %v7632, %v7633
        %v7685 = vsel %vm466, %v7631, %v7632
        %v7686 = vsel %vm466, %v7630, %v7631
        %v7687 = vsel %vm466, %v7629, %v7630
        %v7688 = vsel %vm466, %v7628, %v7629
        %v7689 = vsel %vm466, %v7627, %v7628
        %v7690 = vsel %vm466, %v7658, %v7627
        %v7691 = vsel %vm432, %v7690, 0.0
        %v7692 = vsel %vm433, %v7689, 0.0
        %v7693 = vsel %vm432, %v7688, 0.0
        %v7694 = vsel %vm433, %v7687, 0.0
        %v7695 = vsel %vm432, %v7686, 0.0
        %v7696 = vsel %vm433, %v7685, 0.0
        %v7697 = vsel %vm432, %v7684, 0.0
        %v7698 = vsel %vm433, %v7683, 0.0
        %v7699 = vsel %vm432, %v7682, 0.0
        %v7700 = vsel %vm433, %v7681, 0.0
        %v7701 = vsel %vm432, %v7680, 0.0
        %v7702 = vsel %vm433, %v7679, 0.0
        %v7703 = vsel %vm432, %v7678, 0.0
        %v7704 = vsel %vm433, %v7677, 0.0
        %v7705 = vsel %vm432, %v7676, 0.0
        %v7706 = vsel %vm433, %v7675, 0.0
        %v7707 = vsel %vm432, %v7674, 0.0
        %v7708 = vsel %vm433, %v7673, 0.0
        %v7709 = vsel %vm432, %v7672, 0.0
        %v7710 = vsel %vm433, %v7671, 0.0
        %v7711 = vsel %vm432, %v7670, 0.0
        %v7712 = vsel %vm433, %v7669, 0.0
        %v7713 = vsel %vm432, %v7668, 0.0
        %v7714 = vsel %vm433, %v7667, 0.0
        %v7715 = vsel %vm432, %v7666, 0.0
        %v7716 = vsel %vm433, %v7665, 0.0
        %v7717 = vsel %vm432, %v7664, 0.0
        %v7718 = vsel %vm433, %v7663, 0.0
        %v7719 = vsel %vm432, %v7662, 0.0
        %v7720 = vsel %vm433, %v7661, 0.0
        %v7721 = vsel %vm432, %v7660, 0.0
        %v7722 = vsel %vm433, %v7659, 0.0
        %v7723 = vrot.slane %v7595, 1
        %v7724 = vrot.slane %v7596, 1
        %v7725 = vrot.slane %v7597, 1
        %v7726 = vrot.slane %v7598, 1
        %v7727 = vrot.slane %v7599, 1
        %v7728 = vrot.slane %v7600, 1
        %v7729 = vrot.slane %v7601, 1
        %v7730 = vrot.slane %v7602, 1
        %v7731 = vrot.slane %v7603, 1
        %v7732 = vrot.slane %v7604, 1
        %v7733 = vrot.slane %v7605, 1
        %v7734 = vrot.slane %v7606, 1
        %v7735 = vrot.slane %v7607, 1
        %v7736 = vrot.slane %v7608, 1
        %v7737 = vrot.slane %v7609, 1
        %v7738 = vrot.slane %v7610, 1
        %v7739 = vrot.slane %v7611, 1
        %v7740 = vrot.slane %v7612, 1
        %v7741 = vrot.slane %v7613, 1
        %v7742 = vrot.slane %v7614, 1
        %v7743 = vrot.slane %v7615, 1
        %v7744 = vrot.slane %v7616, 1
        %v7745 = vrot.slane %v7617, 1
        %v7746 = vrot.slane %v7618, 1
        %v7747 = vrot.slane %v7619, 1
        %v7748 = vrot.slane %v7620, 1
        %v7749 = vrot.slane %v7621, 1
        %v7750 = vrot.slane %v7622, 1
        %v7751 = vrot.slane %v7623, 1
        %v7752 = vrot.slane %v7624, 1
        %v7753 = vrot.slane %v7625, 1
        %v7754 = vrot.slane %v7626, 1
        %v7755 = vsel %vm565, %v7753, %v7754
        %v7756 = vsel %vm565, %v7752, %v7753
        %v7757 = vsel %vm565, %v7751, %v7752
        %v7758 = vsel %vm565, %v7750, %v7751
        %v7759 = vsel %vm565, %v7749, %v7750
        %v7760 = vsel %vm565, %v7748, %v7749
        %v7761 = vsel %vm565, %v7747, %v7748
        %v7762 = vsel %vm565, %v7746, %v7747
        %v7763 = vsel %vm565, %v7745, %v7746
        %v7764 = vsel %vm565, %v7744, %v7745
        %v7765 = vsel %vm565, %v7743, %v7744
        %v7766 = vsel %vm565, %v7742, %v7743
        %v7767 = vsel %vm565, %v7741, %v7742
        %v7768 = vsel %vm565, %v7740, %v7741
        %v7769 = vsel %vm565, %v7739, %v7740
        %v7770 = vsel %vm565, %v7738, %v7739
        %v7771 = vsel %vm565, %v7737, %v7738
        %v7772 = vsel %vm565, %v7736, %v7737
        %v7773 = vsel %vm565, %v7735, %v7736
        %v7774 = vsel %vm565, %v7734, %v7735
        %v7775 = vsel %vm565, %v7733, %v7734
        %v7776 = vsel %vm565, %v7732, %v7733
        %v7777 = vsel %vm565, %v7731, %v7732
        %v7778 = vsel %vm565, %v7730, %v7731
        %v7779 = vsel %vm565, %v7729, %v7730
        %v7780 = vsel %vm565, %v7728, %v7729
        %v7781 = vsel %vm565, %v7727, %v7728
        %v7782 = vsel %vm565, %v7726, %v7727
        %v7783 = vsel %vm565, %v7725, %v7726
        %v7784 = vsel %vm565, %v7724, %v7725
        %v7785 = vsel %vm565, %v7723, %v7724
        %v7786 = vsel %vm565, %v7754, %v7723
        %v7787 = vsel %vm531, %v7785, 0.0
        %v7788 = vsel %vm532, %v7784, 0.0
        %v7789 = vsel %vm531, %v7783, 0.0
        %v7790 = vsel %vm532, %v7782, 0.0
        %v7791 = vsel %vm531, %v7781, 0.0
        %v7792 = vsel %vm532, %v7780, 0.0
        %v7793 = vsel %vm531, %v7779, 0.0
        %v7794 = vsel %vm532, %v7778, 0.0
        %v7795 = vsel %vm531, %v7777, 0.0
        %v7796 = vsel %vm532, %v7776, 0.0
        %v7797 = vsel %vm531, %v7775, 0.0
        %v7798 = vsel %vm532, %v7774, 0.0
        %v7799 = vsel %vm531, %v7773, 0.0
        %v7800 = vsel %vm532, %v7772, 0.0
        %v7801 = vsel %vm531, %v7771, 0.0
        %v7802 = vsel %vm532, %v7770, 0.0
        %v7803 = vsel %vm531, %v7769, 0.0
        %v7804 = vsel %vm532, %v7768, 0.0
        %v7805 = vsel %vm531, %v7767, 0.0
        %v7806 = vsel %vm532, %v7766, 0.0
        %v7807 = vsel %vm531, %v7765, 0.0
        %v7808 = vsel %vm532, %v7764, 0.0
        %v7809 = vsel %vm531, %v7763, 0.0
        %v7810 = vsel %vm532, %v7762, 0.0
        %v7811 = vsel %vm531, %v7761, 0.0
        %v7812 = vsel %vm532, %v7760, 0.0
        %v7813 = vsel %vm531, %v7759, 0.0
        %v7814 = vsel %vm532, %v7758, 0.0
        %v7815 = vsel %vm531, %v7757, 0.0
        %v7816 = vsel %vm532, %v7756, 0.0
        %v7817 = vsel %vm531, %v7755, 0.0
        %v7818 = vsel %vm532, %v7786, 0.0
        %v7819 = vpack.c.bf16 %v7692, %v7691
        %v7820 = vpack.c.bf16 %v7694, %v7693
        %v7821 = vpack.c.bf16 %v7696, %v7695
        %v7822 = vpack.c.bf16 %v7698, %v7697
        %v7823 = vpack.c.bf16 %v7700, %v7699
        %v7824 = vpack.c.bf16 %v7702, %v7701
        %v7825 = vpack.c.bf16 %v7704, %v7703
        %v7826 = vpack.c.bf16 %v7706, %v7705
        %v7827 = vpack.c.bf16 %v7708, %v7707
        %v7828 = vpack.c.bf16 %v7710, %v7709
        %v7829 = vpack.c.bf16 %v7712, %v7711
        %v7830 = vpack.c.bf16 %v7714, %v7713
        %v7831 = vpack.c.bf16 %v7716, %v7715
        %v7832 = vpack.c.bf16 %v7718, %v7717
        %v7833 = vpack.c.bf16 %v7720, %v7719
        %v7834 = vpack.c.bf16 %v7722, %v7721
        %v7835 = vpack.c.bf16 %v7788, %v7787
        %v7836 = vpack.c.bf16 %v7790, %v7789
        %v7837 = vpack.c.bf16 %v7792, %v7791
        %v7838 = vpack.c.bf16 %v7794, %v7793
        %v7839 = vpack.c.bf16 %v7796, %v7795
        %v7840 = vpack.c.bf16 %v7798, %v7797
        %v7841 = vpack.c.bf16 %v7800, %v7799
        %v7842 = vpack.c.bf16 %v7802, %v7801
        %v7843 = vpack.c.bf16 %v7804, %v7803
        %v7844 = vpack.c.bf16 %v7806, %v7805
        %v7845 = vpack.c.bf16 %v7808, %v7807
        %v7846 = vpack.c.bf16 %v7810, %v7809
        %v7847 = vpack.c.bf16 %v7812, %v7811
        %v7848 = vpack.c.bf16 %v7814, %v7813
        %v7849 = vpack.c.bf16 %v7816, %v7815
        %v7850 = vpack.c.bf16 %v7818, %v7817
        %s7851 = scalar_lea.vmem [#allocation4], 2304
        %v7852 = vld [vmem:[%s7851] sm:$0xf]
        %v7853 = vld [vmem:[%s7851 + $0x4] sm:$0xf]
        %v7854 = vld [vmem:[%s7851 + $0x8] sm:$0xf]
        %v7855 = vld [vmem:[%s7851 + $0xc] sm:$0xf]
        %v7856 = vld [vmem:[%s7851 + $0x10] sm:$0xf]
        %v7857 = vld [vmem:[%s7851 + $0x14] sm:$0xf]
        %v7858 = vld [vmem:[%s7851 + $0x18] sm:$0xf]
        %v7859 = vld [vmem:[%s7851 + $0x1c] sm:$0xf]
        %v7860 = vld [vmem:[%s7851 + $0x20] sm:$0xf]
        %v7861 = vld [vmem:[%s7851 + $0x24] sm:$0xf]
        %v7862 = vld [vmem:[%s7851 + $0x28] sm:$0xf]
        %v7863 = vld [vmem:[%s7851 + $0x2c] sm:$0xf]
        %v7864 = vld [vmem:[%s7851 + $0x30] sm:$0xf]
        %v7865 = vld [vmem:[%s7851 + $0x34] sm:$0xf]
        %v7866 = vld [vmem:[%s7851 + $0x38] sm:$0xf]
        %v7867 = vld [vmem:[%s7851 + $0x3c] sm:$0xf]
        %v7868 = vld [vmem:[%s7851 + $0x40] sm:$0xf]
        %v7869 = vld [vmem:[%s7851 + $0x44] sm:$0xf]
        %v7870 = vld [vmem:[%s7851 + $0x48] sm:$0xf]
        %v7871 = vld [vmem:[%s7851 + $0x4c] sm:$0xf]
        %v7872 = vld [vmem:[%s7851 + $0x50] sm:$0xf]
        %v7873 = vld [vmem:[%s7851 + $0x54] sm:$0xf]
        %v7874 = vld [vmem:[%s7851 + $0x58] sm:$0xf]
        %v7875 = vld [vmem:[%s7851 + $0x5c] sm:$0xf]
        %v7876 = vld [vmem:[%s7851 + $0x60] sm:$0xf]
        %v7877 = vld [vmem:[%s7851 + $0x64] sm:$0xf]
        %v7878 = vld [vmem:[%s7851 + $0x68] sm:$0xf]
        %v7879 = vld [vmem:[%s7851 + $0x6c] sm:$0xf]
        %v7880 = vld [vmem:[%s7851 + $0x70] sm:$0xf]
        %v7881 = vld [vmem:[%s7851 + $0x74] sm:$0xf]
        %v7882 = vld [vmem:[%s7851 + $0x78] sm:$0xf]
        %v7883 = vld [vmem:[%s7851 + $0x7c] sm:$0xf]
        %v7884 = vld [vmem:[%s7851 + $0x80] sm:$0xf]
        %v7885 = vld [vmem:[%s7851 + $0x84] sm:$0xf]
        %v7886 = vld [vmem:[%s7851 + $0x88] sm:$0xf]
        %v7887 = vld [vmem:[%s7851 + $0x8c] sm:$0xf]
        %v7888 = vld [vmem:[%s7851 + $0x90] sm:$0xf]
        %v7889 = vld [vmem:[%s7851 + $0x94] sm:$0xf]
        %v7890 = vld [vmem:[%s7851 + $0x98] sm:$0xf]
        %v7891 = vld [vmem:[%s7851 + $0x9c] sm:$0xf]
        %v7892 = vld [vmem:[%s7851 + $0xa0] sm:$0xf]
        %v7893 = vld [vmem:[%s7851 + $0xa4] sm:$0xf]
        %v7894 = vld [vmem:[%s7851 + $0xa8] sm:$0xf]
        %v7895 = vld [vmem:[%s7851 + $0xac] sm:$0xf]
        %v7896 = vld [vmem:[%s7851 + $0xb0] sm:$0xf]
        %v7897 = vld [vmem:[%s7851 + $0xb4] sm:$0xf]
        %v7898 = vld [vmem:[%s7851 + $0xb8] sm:$0xf]
        %v7899 = vld [vmem:[%s7851 + $0xbc] sm:$0xf]
        %v7900 = vld [vmem:[%s7851 + $0xc0] sm:$0xf]
        %v7901 = vld [vmem:[%s7851 + $0xc4] sm:$0xf]
        %v7902 = vld [vmem:[%s7851 + $0xc8] sm:$0xf]
        %v7903 = vld [vmem:[%s7851 + $0xcc] sm:$0xf]
        %v7904 = vld [vmem:[%s7851 + $0xd0] sm:$0xf]
        %v7905 = vld [vmem:[%s7851 + $0xd4] sm:$0xf]
        %v7906 = vld [vmem:[%s7851 + $0xd8] sm:$0xf]
        %v7907 = vld [vmem:[%s7851 + $0xdc] sm:$0xf]
        %v7908 = vld [vmem:[%s7851 + $0xe0] sm:$0xf]
        %v7909 = vld [vmem:[%s7851 + $0xe4] sm:$0xf]
        %v7910 = vld [vmem:[%s7851 + $0xe8] sm:$0xf]
        %v7911 = vld [vmem:[%s7851 + $0xec] sm:$0xf]
        %v7912 = vld [vmem:[%s7851 + $0xf0] sm:$0xf]
        %v7913 = vld [vmem:[%s7851 + $0xf4] sm:$0xf]
        %v7914 = vld [vmem:[%s7851 + $0xf8] sm:$0xf]
        %v7915 = vld [vmem:[%s7851 + $0xfc] sm:$0xf]
        %v7916 = vld [vmem:[%s7851 + $0x100] sm:$0xf]
        %v7917 = vld [vmem:[%s7851 + $0x104] sm:$0xf]
        %v7918 = vld [vmem:[%s7851 + $0x108] sm:$0xf]
        %v7919 = vld [vmem:[%s7851 + $0x10c] sm:$0xf]
        %v7920 = vld [vmem:[%s7851 + $0x110] sm:$0xf]
        %v7921 = vld [vmem:[%s7851 + $0x114] sm:$0xf]
        %v7922 = vld [vmem:[%s7851 + $0x118] sm:$0xf]
        %v7923 = vld [vmem:[%s7851 + $0x11c] sm:$0xf]
        %v7924 = vld [vmem:[%s7851 + $0x120] sm:$0xf]
        %v7925 = vld [vmem:[%s7851 + $0x124] sm:$0xf]
        %v7926 = vld [vmem:[%s7851 + $0x128] sm:$0xf]
        %v7927 = vld [vmem:[%s7851 + $0x12c] sm:$0xf]
        %v7928 = vld [vmem:[%s7851 + $0x130] sm:$0xf]
        %v7929 = vld [vmem:[%s7851 + $0x134] sm:$0xf]
        %v7930 = vld [vmem:[%s7851 + $0x138] sm:$0xf]
        %v7931 = vld [vmem:[%s7851 + $0x13c] sm:$0xf]
        %v7932 = vld [vmem:[%s7851 + $0x140] sm:$0xf]
        %v7933 = vld [vmem:[%s7851 + $0x144] sm:$0xf]
        %v7934 = vld [vmem:[%s7851 + $0x148] sm:$0xf]
        %v7935 = vld [vmem:[%s7851 + $0x14c] sm:$0xf]
        %v7936 = vld [vmem:[%s7851 + $0x150] sm:$0xf]
        %v7937 = vld [vmem:[%s7851 + $0x154] sm:$0xf]
        %v7938 = vld [vmem:[%s7851 + $0x158] sm:$0xf]
        %v7939 = vld [vmem:[%s7851 + $0x15c] sm:$0xf]
        %v7940 = vld [vmem:[%s7851 + $0x160] sm:$0xf]
        %v7941 = vld [vmem:[%s7851 + $0x164] sm:$0xf]
        %v7942 = vld [vmem:[%s7851 + $0x168] sm:$0xf]
        %v7943 = vld [vmem:[%s7851 + $0x16c] sm:$0xf]
        %v7944 = vld [vmem:[%s7851 + $0x170] sm:$0xf]
        %v7945 = vld [vmem:[%s7851 + $0x174] sm:$0xf]
        %v7946 = vld [vmem:[%s7851 + $0x178] sm:$0xf]
        %v7947 = vld [vmem:[%s7851 + $0x17c] sm:$0xf]
        %v7948 = vld [vmem:[%s7851 + $0x180] sm:$0xf]
        %v7949 = vld [vmem:[%s7851 + $0x184] sm:$0xf]
        %v7950 = vld [vmem:[%s7851 + $0x188] sm:$0xf]
        %v7951 = vld [vmem:[%s7851 + $0x18c] sm:$0xf]
        %v7952 = vld [vmem:[%s7851 + $0x190] sm:$0xf]
        %v7953 = vld [vmem:[%s7851 + $0x194] sm:$0xf]
        %v7954 = vld [vmem:[%s7851 + $0x198] sm:$0xf]
        %v7955 = vld [vmem:[%s7851 + $0x19c] sm:$0xf]
        %v7956 = vld [vmem:[%s7851 + $0x1a0] sm:$0xf]
        %v7957 = vld [vmem:[%s7851 + $0x1a4] sm:$0xf]
        %v7958 = vld [vmem:[%s7851 + $0x1a8] sm:$0xf]
        %v7959 = vld [vmem:[%s7851 + $0x1ac] sm:$0xf]
        %v7960 = vld [vmem:[%s7851 + $0x1b0] sm:$0xf]
        %v7961 = vld [vmem:[%s7851 + $0x1b4] sm:$0xf]
        %v7962 = vld [vmem:[%s7851 + $0x1b8] sm:$0xf]
        %v7963 = vld [vmem:[%s7851 + $0x1bc] sm:$0xf]
        %v7964 = vld [vmem:[%s7851 + $0x1c0] sm:$0xf]
        %v7965 = vld [vmem:[%s7851 + $0x1c4] sm:$0xf]
        %v7966 = vld [vmem:[%s7851 + $0x1c8] sm:$0xf]
        %v7967 = vld [vmem:[%s7851 + $0x1cc] sm:$0xf]
        %v7968 = vld [vmem:[%s7851 + $0x1d0] sm:$0xf]
        %v7969 = vld [vmem:[%s7851 + $0x1d4] sm:$0xf]
        %v7970 = vld [vmem:[%s7851 + $0x1d8] sm:$0xf]
        %v7971 = vld [vmem:[%s7851 + $0x1dc] sm:$0xf]
        %v7972 = vld [vmem:[%s7851 + $0x1e0] sm:$0xf]
        %v7973 = vld [vmem:[%s7851 + $0x1e4] sm:$0xf]
        %v7974 = vld [vmem:[%s7851 + $0x1e8] sm:$0xf]
        %v7975 = vld [vmem:[%s7851 + $0x1ec] sm:$0xf]
        %v7976 = vld [vmem:[%s7851 + $0x1f0] sm:$0xf]
        %v7977 = vld [vmem:[%s7851 + $0x1f4] sm:$0xf]
        %v7978 = vld [vmem:[%s7851 + $0x1f8] sm:$0xf]
        %v7979 = vld [vmem:[%s7851 + $0x1fc] sm:$0xf]
        %v7980 = vld [vmem:[%s7851 + $0x200] sm:$0xf]
        %v7981 = vld [vmem:[%s7851 + $0x204] sm:$0xf]
        %v7982 = vld [vmem:[%s7851 + $0x208] sm:$0xf]
        %v7983 = vld [vmem:[%s7851 + $0x20c] sm:$0xf]
        %v7984 = vld [vmem:[%s7851 + $0x210] sm:$0xf]
        %v7985 = vld [vmem:[%s7851 + $0x214] sm:$0xf]
        %v7986 = vld [vmem:[%s7851 + $0x218] sm:$0xf]
        %v7987 = vld [vmem:[%s7851 + $0x21c] sm:$0xf]
        %v7988 = vld [vmem:[%s7851 + $0x220] sm:$0xf]
        %v7989 = vld [vmem:[%s7851 + $0x224] sm:$0xf]
        %v7990 = vld [vmem:[%s7851 + $0x228] sm:$0xf]
        %v7991 = vld [vmem:[%s7851 + $0x22c] sm:$0xf]
        %v7992 = vld [vmem:[%s7851 + $0x230] sm:$0xf]
        %v7993 = vld [vmem:[%s7851 + $0x234] sm:$0xf]
        %v7994 = vld [vmem:[%s7851 + $0x238] sm:$0xf]
        %v7995 = vld [vmem:[%s7851 + $0x23c] sm:$0xf]
        %v8140 = vunpack.c.l.b16 %v7852
        %v8141 = vunpack.c.l.b16 %v7853
        %v8142 = vunpack.c.l.b16 %v7854
        %v8143 = vunpack.c.l.b16 %v7855
        %v8144 = vunpack.c.l.b16 %v7856
        %v8145 = vunpack.c.l.b16 %v7857
        %v8146 = vunpack.c.l.b16 %v7858
        %v8147 = vunpack.c.l.b16 %v7859
        %v8148 = vunpack.c.l.b16 %v7860
        %v8149 = vunpack.c.l.b16 %v7861
        %v8150 = vunpack.c.l.b16 %v7862
        %v8151 = vunpack.c.l.b16 %v7863
        %v8152 = vunpack.c.l.b16 %v7864
        %v8153 = vunpack.c.l.b16 %v7865
        %v8154 = vunpack.c.l.b16 %v7866
        %v8155 = vunpack.c.l.b16 %v7867
        %v8156 = vunpack.c.l.b16 %v7868
        %v8157 = vunpack.c.l.b16 %v7869
        %v8158 = vunpack.c.l.b16 %v7870
        %v8159 = vunpack.c.l.b16 %v7871
        %v8160 = vunpack.c.l.b16 %v7872
        %v8161 = vunpack.c.l.b16 %v7873
        %v8162 = vunpack.c.l.b16 %v7874
        %v8163 = vunpack.c.l.b16 %v7875
        %v8164 = vunpack.c.l.b16 %v7876
        %v8165 = vunpack.c.l.b16 %v7877
        %v8166 = vunpack.c.l.b16 %v7878
        %v8167 = vunpack.c.l.b16 %v7879
        %v8168 = vunpack.c.l.b16 %v7880
        %v8169 = vunpack.c.l.b16 %v7881
        %v8170 = vunpack.c.l.b16 %v7882
        %v8171 = vunpack.c.l.b16 %v7883
        %v8172 = vunpack.c.l.b16 %v7884
        %v8173 = vunpack.c.l.b16 %v7885
        %v8174 = vunpack.c.l.b16 %v7886
        %v8175 = vunpack.c.l.b16 %v7887
        %v8176 = vunpack.c.l.b16 %v7888
        %v8177 = vunpack.c.l.b16 %v7889
        %v8178 = vunpack.c.l.b16 %v7890
        %v8179 = vunpack.c.l.b16 %v7891
        %v8180 = vunpack.c.l.b16 %v7892
        %v8181 = vunpack.c.l.b16 %v7893
        %v8182 = vunpack.c.l.b16 %v7894
        %v8183 = vunpack.c.l.b16 %v7895
        %v8184 = vunpack.c.l.b16 %v7896
        %v8185 = vunpack.c.l.b16 %v7897
        %v8186 = vunpack.c.l.b16 %v7898
        %v8187 = vunpack.c.l.b16 %v7899
        %v8188 = vunpack.c.l.b16 %v7900
        %v8189 = vunpack.c.l.b16 %v7901
        %v8190 = vunpack.c.l.b16 %v7902
        %v8191 = vunpack.c.l.b16 %v7903
        %v8192 = vunpack.c.l.b16 %v7904
        %v8193 = vunpack.c.l.b16 %v7905
        %v8194 = vunpack.c.l.b16 %v7906
        %v8195 = vunpack.c.l.b16 %v7907
        %v8196 = vunpack.c.l.b16 %v7908
        %v8197 = vunpack.c.l.b16 %v7909
        %v8198 = vunpack.c.l.b16 %v7910
        %v8199 = vunpack.c.l.b16 %v7911
        %v8200 = vunpack.c.l.b16 %v7912
        %v8201 = vunpack.c.l.b16 %v7913
        %v8202 = vunpack.c.l.b16 %v7914
        %v8203 = vunpack.c.l.b16 %v7915
        %v8204 = vunpack.c.l.b16 %v7916
        %v8205 = vunpack.c.l.b16 %v7917
        %v8206 = vunpack.c.l.b16 %v7918
        %v8207 = vunpack.c.l.b16 %v7919
        %v8208 = vunpack.c.l.b16 %v7920
        %v8209 = vunpack.c.l.b16 %v7921
        %v8210 = vunpack.c.l.b16 %v7922
        %v8211 = vunpack.c.l.b16 %v7923
        %v8212 = vunpack.c.l.b16 %v7924
        %v8213 = vunpack.c.l.b16 %v7925
        %v8214 = vunpack.c.l.b16 %v7926
        %v8215 = vunpack.c.l.b16 %v7927
        %v8216 = vunpack.c.l.b16 %v7928
        %v8217 = vunpack.c.l.b16 %v7929
        %v8218 = vunpack.c.l.b16 %v7930
        %v8219 = vunpack.c.l.b16 %v7931
        %v8220 = vunpack.c.l.b16 %v7932
        %v8221 = vunpack.c.l.b16 %v7933
        %v8222 = vunpack.c.l.b16 %v7934
        %v8223 = vunpack.c.l.b16 %v7935
        %v8224 = vunpack.c.l.b16 %v7936
        %v8225 = vunpack.c.l.b16 %v7937
        %v8226 = vunpack.c.l.b16 %v7938
        %v8227 = vunpack.c.l.b16 %v7939
        %v8228 = vunpack.c.l.b16 %v7940
        %v8229 = vunpack.c.l.b16 %v7941
        %v8230 = vunpack.c.l.b16 %v7942
        %v8231 = vunpack.c.l.b16 %v7943
        %v8232 = vunpack.c.l.b16 %v7944
        %v8233 = vunpack.c.l.b16 %v7945
        %v8234 = vunpack.c.l.b16 %v7946
        %v8235 = vunpack.c.l.b16 %v7947
        %v8236 = vunpack.c.l.b16 %v7948
        %v8237 = vunpack.c.l.b16 %v7949
        %v8238 = vunpack.c.l.b16 %v7950
        %v8239 = vunpack.c.l.b16 %v7951
        %v8240 = vunpack.c.l.b16 %v7952
        %v8241 = vunpack.c.l.b16 %v7953
        %v8242 = vunpack.c.l.b16 %v7954
        %v8243 = vunpack.c.l.b16 %v7955
        %v8244 = vunpack.c.l.b16 %v7956
        %v8245 = vunpack.c.l.b16 %v7957
        %v8246 = vunpack.c.l.b16 %v7958
        %v8247 = vunpack.c.l.b16 %v7959
        %v8248 = vunpack.c.l.b16 %v7960
        %v8249 = vunpack.c.l.b16 %v7961
        %v8250 = vunpack.c.l.b16 %v7962
        %v8251 = vunpack.c.l.b16 %v7963
        %v8252 = vunpack.c.l.b16 %v7964
        %v8253 = vunpack.c.l.b16 %v7965
        %v8254 = vunpack.c.l.b16 %v7966
        %v8255 = vunpack.c.l.b16 %v7967
        %v8256 = vunpack.c.l.b16 %v7968
        %v8257 = vunpack.c.l.b16 %v7969
        %v8258 = vunpack.c.l.b16 %v7970
        %v8259 = vunpack.c.l.b16 %v7971
        %v8260 = vunpack.c.l.b16 %v7972
        %v8261 = vunpack.c.l.b16 %v7973
        %v8262 = vunpack.c.l.b16 %v7974
        %v8263 = vunpack.c.l.b16 %v7975
        %v8264 = vunpack.c.l.b16 %v7976
        %v8265 = vunpack.c.l.b16 %v7977
        %v8266 = vunpack.c.l.b16 %v7978
        %v8267 = vunpack.c.l.b16 %v7979
        %v8268 = vunpack.c.l.b16 %v7980
        %v8269 = vunpack.c.l.b16 %v7981
        %v8270 = vunpack.c.l.b16 %v7982
        %v8271 = vunpack.c.l.b16 %v7983
        %v8272 = vunpack.c.l.b16 %v7984
        %v8273 = vunpack.c.l.b16 %v7985
        %v8274 = vunpack.c.l.b16 %v7986
        %v8275 = vunpack.c.l.b16 %v7987
        %v8276 = vunpack.c.l.b16 %v7988
        %v8277 = vunpack.c.l.b16 %v7989
        %v8278 = vunpack.c.l.b16 %v7990
        %v8279 = vunpack.c.l.b16 %v7991
        %v8280 = vunpack.c.l.b16 %v7992
        %v8281 = vunpack.c.l.b16 %v7993
        %v8282 = vunpack.c.l.b16 %v7994
        %v8283 = vunpack.c.l.b16 %v7995
        %v8284 = vpack.c.b16 %v8141, %v8140
        %v8285 = vpack.c.b16 %v8143, %v8142
        %v8286 = vpack.c.b16 %v8145, %v8144
        %v8287 = vpack.c.b16 %v8147, %v8146
        %v8288 = vpack.c.b16 %v8149, %v8148
        %v8289 = vpack.c.b16 %v8151, %v8150
        %v8290 = vpack.c.b16 %v8153, %v8152
        %v8291 = vpack.c.b16 %v8155, %v8154
        %v8292 = vpack.c.b16 %v8157, %v8156
        %v8293 = vpack.c.b16 %v8159, %v8158
        %v8294 = vpack.c.b16 %v8161, %v8160
        %v8295 = vpack.c.b16 %v8163, %v8162
        %v8296 = vpack.c.b16 %v8165, %v8164
        %v8297 = vpack.c.b16 %v8167, %v8166
        %v8298 = vpack.c.b16 %v8169, %v8168
        %v8299 = vpack.c.b16 %v8171, %v8170
        %v8300 = vpack.c.b16 %v8173, %v8172
        %v8301 = vpack.c.b16 %v8175, %v8174
        %v8302 = vpack.c.b16 %v8177, %v8176
        %v8303 = vpack.c.b16 %v8179, %v8178
        %v8304 = vpack.c.b16 %v8181, %v8180
        %v8305 = vpack.c.b16 %v8183, %v8182
        %v8306 = vpack.c.b16 %v8185, %v8184
        %v8307 = vpack.c.b16 %v8187, %v8186
        %v8308 = vpack.c.b16 %v8189, %v8188
        %v8309 = vpack.c.b16 %v8191, %v8190
        %v8310 = vpack.c.b16 %v8193, %v8192
        %v8311 = vpack.c.b16 %v8195, %v8194
        %v8312 = vpack.c.b16 %v8197, %v8196
        %v8313 = vpack.c.b16 %v8199, %v8198
        %v8314 = vpack.c.b16 %v8201, %v8200
        %v8315 = vpack.c.b16 %v8203, %v8202
        %v8316 = vpack.c.b16 %v8205, %v8204
        %v8317 = vpack.c.b16 %v8207, %v8206
        %v8318 = vpack.c.b16 %v8209, %v8208
        %v8319 = vpack.c.b16 %v8211, %v8210
        %v8320 = vpack.c.b16 %v8213, %v8212
        %v8321 = vpack.c.b16 %v8215, %v8214
        %v8322 = vpack.c.b16 %v8217, %v8216
        %v8323 = vpack.c.b16 %v8219, %v8218
        %v8324 = vpack.c.b16 %v8221, %v8220
        %v8325 = vpack.c.b16 %v8223, %v8222
        %v8326 = vpack.c.b16 %v8225, %v8224
        %v8327 = vpack.c.b16 %v8227, %v8226
        %v8328 = vpack.c.b16 %v8229, %v8228
        %v8329 = vpack.c.b16 %v8231, %v8230
        %v8330 = vpack.c.b16 %v8233, %v8232
        %v8331 = vpack.c.b16 %v8235, %v8234
        %v8332 = vpack.c.b16 %v8237, %v8236
        %v8333 = vpack.c.b16 %v8239, %v8238
        %v8334 = vpack.c.b16 %v8241, %v8240
        %v8335 = vpack.c.b16 %v8243, %v8242
        %v8336 = vpack.c.b16 %v8245, %v8244
        %v8337 = vpack.c.b16 %v8247, %v8246
        %v8338 = vpack.c.b16 %v8249, %v8248
        %v8339 = vpack.c.b16 %v8251, %v8250
        %v8340 = vpack.c.b16 %v8253, %v8252
        %v8341 = vpack.c.b16 %v8255, %v8254
        %v8342 = vpack.c.b16 %v8257, %v8256
        %v8343 = vpack.c.b16 %v8259, %v8258
        %v8344 = vpack.c.b16 %v8261, %v8260
        %v8345 = vpack.c.b16 %v8263, %v8262
        %v8346 = vpack.c.b16 %v8265, %v8264
        %v8347 = vpack.c.b16 %v8267, %v8266
        %v8348 = vpack.c.b16 %v8269, %v8268
        %v8349 = vpack.c.b16 %v8271, %v8270
        %v8350 = vpack.c.b16 %v8273, %v8272
        %v8351 = vpack.c.b16 %v8275, %v8274
        %v8352 = vpack.c.b16 %v8277, %v8276
        %v8353 = vpack.c.b16 %v8279, %v8278
        %v8354 = vpack.c.b16 %v8281, %v8280
        %v8355 = vpack.c.b16 %v8283, %v8282
        %8428 = vmatprep.subr.bf16.mxu0 0
        %8429 = vmatpush1.bf16.msra.mxu0 %v8284
        %8430 = vmatprep.subr.bf16.mxu0 0
        %8431 = vmatpush1.bf16.msra.mxu0 %v8285
        %8432 = vmatprep.subr.bf16.mxu0 0
        %8433 = vmatpush1.bf16.msra.mxu0 %v8286
        %8434 = vmatprep.subr.bf16.mxu0 0
        %8435 = vmatpush1.bf16.msra.mxu0 %v8287
        %8436 = vmatprep.subr.bf16.mxu0 0
        %8437 = vmatpush1.bf16.msra.mxu0 %v8288
        %8438 = vmatprep.subr.bf16.mxu0 0
        %8439 = vmatpush1.bf16.msra.mxu0 %v8289
        %8440 = vmatprep.subr.bf16.mxu0 0
        %8441 = vmatpush1.bf16.msra.mxu0 %v8290
        %8442 = vmatprep.subr.bf16.mxu0 0
        %8443 = vmatpush1.bf16.msra.mxu0 %v8291
        %8444 = vmatprep.subr.bf16.mxu0 0
        %8445 = vmatpush1.bf16.msra.mxu0 %v8292
        %8446 = vmatprep.subr.bf16.mxu0 0
        %8447 = vmatpush1.bf16.msra.mxu0 %v8293
        %8448 = vmatprep.subr.bf16.mxu0 0
        %8449 = vmatpush1.bf16.msra.mxu0 %v8294
        %8450 = vmatprep.subr.bf16.mxu0 0
        %8451 = vmatpush1.bf16.msra.mxu0 %v8295
        %8452 = vmatprep.subr.bf16.mxu0 0
        %8453 = vmatpush1.bf16.msra.mxu0 %v8296
        %8454 = vmatprep.subr.bf16.mxu0 0
        %8455 = vmatpush1.bf16.msra.mxu0 %v8297
        %8456 = vmatprep.subr.bf16.mxu0 0
        %8457 = vmatpush1.bf16.msra.mxu0 %v8298
        %8458 = vmatprep.subr.bf16.mxu0 0
        %8459 = vmatpush1.bf16.msra.mxu0 %v8299
        %8460 = vmatprep.mubr.bf16.mxu0 0
        %8461 = vmatmul.mubr.bf16.gmra.mrb[0].mxu0 0
        %v8462 = vpop.f32.mrb[0].mxu0
        %v8463 = vadd.f32 0.0, %v8462
        %v8464 = vpop.f32.mrb[0].mxu0
        %v8465 = vpop.f32.mrb[0].mxu0
        %v8466 = vadd.f32 0.0, %v8465
        %v8467 = vpop.f32.mrb[0].mxu0
        %8468 = vmatprep.mubr.bf16.mxu0 %v7579
        %8469 = vmatmul.mubr.bf16.gmra.mrb[0].mxu0 %v7819
        %v8470 = vpop.f32.mrb[0].mxu0
        %v8471 = vadd.f32 0.0, %v8470
        %v8472 = vpop.f32.mrb[0].mxu0
        %v8473 = vpop.f32.mrb[0].mxu0
        %v8474 = vadd.f32 0.0, %v8473
        %v8475 = vpop.f32.mrb[0].mxu0
        %8476 = vmatprep.mubr.bf16.mxu0 %v7580
        %8477 = vmatmul.mubr.bf16.gmra.mrb[0].mxu0 %v7820
        %v8478 = vpop.f32.mrb[0].mxu0
        %v8479 = vadd.f32 0.0, %v8478
        %v8480 = vpop.f32.mrb[0].mxu0
        %v8481 = vpop.f32.mrb[0].mxu0
        %v8482 = vadd.f32 0.0, %v8481
        %v8483 = vpop.f32.mrb[0].mxu0
        %8484 = vmatprep.mubr.bf16.mxu0 %v7581
        %8485 = vmatmul.mubr.bf16.gmra.mrb[0].mxu0 %v7821
        %v8486 = vpop.f32.mrb[0].mxu0
        %v8487 = vadd.f32 0.0, %v8486
        %v8488 = vpop.f32.mrb[0].mxu0
        %v8489 = vpop.f32.mrb[0].mxu0
        %v8490 = vadd.f32 0.0, %v8489
        %v8491 = vpop.f32.mrb[0].mxu0
        %8492 = vmatprep.mubr.bf16.mxu0 %v7582
        %8493 = vmatmul.mubr.bf16.gmra.mrb[0].mxu0 %v7822
        %v8494 = vpop.f32.mrb[0].mxu0
        %v8495 = vadd.f32 0.0, %v8494
        %v8496 = vpop.f32.mrb[0].mxu0
        %v8497 = vpop.f32.mrb[0].mxu0
        %v8498 = vadd.f32 0.0, %v8497
        %v8499 = vpop.f32.mrb[0].mxu0
        %8500 = vmatprep.mubr.bf16.mxu0 %v7583
        %8501 = vmatmul.mubr.bf16.gmra.mrb[0].mxu0 %v7823
        %v8502 = vpop.f32.mrb[0].mxu0
        %v8503 = vadd.f32 0.0, %v8502
        %v8504 = vpop.f32.mrb[0].mxu0
        %v8505 = vpop.f32.mrb[0].mxu0
        %v8506 = vadd.f32 0.0, %v8505
        %v8507 = vpop.f32.mrb[0].mxu0
        %8508 = vmatprep.mubr.bf16.mxu0 %v7584
        %8509 = vmatmul.mubr.bf16.gmra.mrb[0].mxu0 %v7824
        %v8510 = vpop.f32.mrb[0].mxu0
        %v8511 = vadd.f32 0.0, %v8510
        %v8512 = vpop.f32.mrb[0].mxu0
        %v8513 = vpop.f32.mrb[0].mxu0
        %v8514 = vadd.f32 0.0, %v8513
        %v8515 = vpop.f32.mrb[0].mxu0
        %8516 = vmatprep.mubr.bf16.mxu0 %v7585
        %8517 = vmatmul.mubr.bf16.gmra.mrb[0].mxu0 %v7825
        %v8518 = vpop.f32.mrb[0].mxu0
        %v8519 = vadd.f32 0.0, %v8518
        %v8520 = vpop.f32.mrb[0].mxu0
        %v8521 = vpop.f32.mrb[0].mxu0
        %v8522 = vadd.f32 0.0, %v8521
        %v8523 = vpop.f32.mrb[0].mxu0
        %8524 = vmatprep.mubr.bf16.mxu0 %v7586
        %8525 = vmatmul.mubr.bf16.gmra.mrb[0].mxu0 %v7826
        %v8526 = vpop.f32.mrb[0].mxu0
        %v8527 = vadd.f32 0.0, %v8526
        %v8528 = vpop.f32.mrb[0].mxu0
        %v8529 = vpop.f32.mrb[0].mxu0
        %v8530 = vadd.f32 0.0, %v8529
        %v8531 = vpop.f32.mrb[0].mxu0
        %8532 = vmatprep.mubr.bf16.mxu0 %v7587
        %8533 = vmatmul.mubr.bf16.gmra.mrb[0].mxu0 %v7827
        %v8534 = vpop.f32.mrb[0].mxu0
        %v8535 = vadd.f32 0.0, %v8534
        %v8536 = vpop.f32.mrb[0].mxu0
        %v8537 = vpop.f32.mrb[0].mxu0
        %v8538 = vadd.f32 0.0, %v8537
        %v8539 = vpop.f32.mrb[0].mxu0
        %8540 = vmatprep.mubr.bf16.mxu0 %v7588
        %8541 = vmatmul.mubr.bf16.gmra.mrb[0].mxu0 %v7828
        %v8542 = vpop.f32.mrb[0].mxu0
        %v8543 = vadd.f32 0.0, %v8542
        %v8544 = vpop.f32.mrb[0].mxu0
        %v8545 = vpop.f32.mrb[0].mxu0
        %v8546 = vadd.f32 0.0, %v8545
        %v8547 = vpop.f32.mrb[0].mxu0
        %8548 = vmatprep.mubr.bf16.mxu0 %v7589
        %8549 = vmatmul.mubr.bf16.gmra.mrb[0].mxu0 %v7829
        %v8550 = vpop.f32.mrb[0].mxu0
        %v8551 = vadd.f32 0.0, %v8550
        %v8552 = vpop.f32.mrb[0].mxu0
        %v8553 = vpop.f32.mrb[0].mxu0
        %v8554 = vadd.f32 0.0, %v8553
        %v8555 = vpop.f32.mrb[0].mxu0
        %8556 = vmatprep.mubr.bf16.mxu0 %v7590
        %8557 = vmatmul.mubr.bf16.gmra.mrb[0].mxu0 %v7830
        %v8558 = vpop.f32.mrb[0].mxu0
        %v8559 = vadd.f32 0.0, %v8558
        %v8560 = vpop.f32.mrb[0].mxu0
        %v8561 = vpop.f32.mrb[0].mxu0
        %v8562 = vadd.f32 0.0, %v8561
        %v8563 = vpop.f32.mrb[0].mxu0
        %8564 = vmatprep.mubr.bf16.mxu0 %v7591
        %8565 = vmatmul.mubr.bf16.gmra.mrb[0].mxu0 %v7831
        %v8566 = vpop.f32.mrb[0].mxu0
        %v8567 = vadd.f32 0.0, %v8566
        %v8568 = vpop.f32.mrb[0].mxu0
        %v8569 = vpop.f32.mrb[0].mxu0
        %v8570 = vadd.f32 0.0, %v8569
        %v8571 = vpop.f32.mrb[0].mxu0
        %8572 = vmatprep.mubr.bf16.mxu0 %v7592
        %8573 = vmatmul.mubr.bf16.gmra.mrb[0].mxu0 %v7832
        %v8574 = vpop.f32.mrb[0].mxu0
        %v8575 = vadd.f32 0.0, %v8574
        %v8576 = vpop.f32.mrb[0].mxu0
        %v8577 = vpop.f32.mrb[0].mxu0
        %v8578 = vadd.f32 0.0, %v8577
        %v8579 = vpop.f32.mrb[0].mxu0
        %8580 = vmatprep.mubr.bf16.mxu0 %v7593
        %8581 = vmatmul.mubr.bf16.gmra.mrb[0].mxu0 %v7833
        %v8582 = vpop.f32.mrb[0].mxu0
        %v8583 = vadd.f32 0.0, %v8582
        %v8584 = vpop.f32.mrb[0].mxu0
        %v8585 = vpop.f32.mrb[0].mxu0
        %v8586 = vadd.f32 0.0, %v8585
        %v8587 = vpop.f32.mrb[0].mxu0
        %8588 = vdwg.mxu0
        %8589 = vmatprep.subr.bf16.mxu0 0
        %8590 = vmatpush1.bf16.msra.mxu0 %v8300
        %8591 = vmatprep.subr.bf16.mxu0 0
        %8592 = vmatpush1.bf16.msra.mxu0 %v8301
        %8593 = vmatprep.subr.bf16.mxu0 0
        %8594 = vmatpush1.bf16.msra.mxu0 %v8302
        %8595 = vmatprep.subr.bf16.mxu0 0
        %8596 = vmatpush1.bf16.msra.mxu0 %v8303
        %8597 = vmatprep.subr.bf16.mxu0 0
        %8598 = vmatpush1.bf16.msra.mxu0 %v8304
        %8599 = vmatprep.subr.bf16.mxu0 0
        %8600 = vmatpush1.bf16.msra.mxu0 %v8305
        %8601 = vmatprep.subr.bf16.mxu0 0
        %8602 = vmatpush1.bf16.msra.mxu0 %v8306
        %8603 = vmatprep.subr.bf16.mxu0 0
        %8604 = vmatpush1.bf16.msra.mxu0 %v8307
        %8605 = vmatprep.subr.bf16.mxu0 0
        %8606 = vmatpush1.bf16.msra.mxu0 %v8308
        %8607 = vmatprep.subr.bf16.mxu0 0
        %8608 = vmatpush1.bf16.msra.mxu0 %v8309
        %8609 = vmatprep.subr.bf16.mxu0 0
        %8610 = vmatpush1.bf16.msra.mxu0 %v8310
        %8611 = vmatprep.subr.bf16.mxu0 0
        %8612 = vmatpush1.bf16.msra.mxu0 %v8311
        %8613 = vmatprep.subr.bf16.mxu0 0
        %8614 = vmatpush1.bf16.msra.mxu0 %v8312
        %8615 = vmatprep.subr.bf16.mxu0 0
        %8616 = vmatpush1.bf16.msra.mxu0 %v8313
        %8617 = vmatprep.subr.bf16.mxu0 0
        %8618 = vmatpush1.bf16.msra.mxu0 %v8314
        %8619 = vmatprep.subr.bf16.mxu0 0
        %8620 = vmatpush1.bf16.msra.mxu0 %v8315
        %8621 = vmatprep.mubr.bf16.mxu0 %v7819
        %8622 = vmatmul.mubr.bf16.gmra.mrb[0].mxu0 0
        %v8623 = vpop.f32.mrb[0].mxu0
        %v8624 = vadd.f32 %v8463, %v8623
        %v8625 = vpop.f32.mrb[0].mxu0
        %v8626 = vpop.f32.mrb[0].mxu0
        %v8627 = vadd.f32 %v8466, %v8626
        %v8628 = vpop.f32.mrb[0].mxu0
        %8629 = vmatprep.mubr.bf16.mxu0 %v7820
        %8630 = vmatmul.mubr.bf16.gmra.mrb[0].mxu0 %v7835
        %v8631 = vpop.f32.mrb[0].mxu0
        %v8632 = vadd.f32 %v8471, %v8631
        %v8633 = vpop.f32.mrb[0].mxu0
        %v8634 = vpop.f32.mrb[0].mxu0
        %v8635 = vadd.f32 %v8474, %v8634
        %v8636 = vpop.f32.mrb[0].mxu0
        %8637 = vmatprep.mubr.bf16.mxu0 %v7821
        %8638 = vmatmul.mubr.bf16.gmra.mrb[0].mxu0 %v7836
        %v8639 = vpop.f32.mrb[0].mxu0
        %v8640 = vadd.f32 %v8479, %v8639
        %v8641 = vpop.f32.mrb[0].mxu0
        %v8642 = vpop.f32.mrb[0].mxu0
        %v8643 = vadd.f32 %v8482, %v8642
        %v8644 = vpop.f32.mrb[0].mxu0
        %8645 = vmatprep.mubr.bf16.mxu0 %v7822
        %8646 = vmatmul.mubr.bf16.gmra.mrb[0].mxu0 %v7837
        %v8647 = vpop.f32.mrb[0].mxu0
        %v8648 = vadd.f32 %v8487, %v8647
        %v8649 = vpop.f32.mrb[0].mxu0
        %v8650 = vpop.f32.mrb[0].mxu0
        %v8651 = vadd.f32 %v8490, %v8650
        %v8652 = vpop.f32.mrb[0].mxu0
        %8653 = vmatprep.mubr.bf16.mxu0 %v7823
        %8654 = vmatmul.mubr.bf16.gmra.mrb[0].mxu0 %v7838
        %v8655 = vpop.f32.mrb[0].mxu0
        %v8656 = vadd.f32 %v8495, %v8655
        %v8657 = vpop.f32.mrb[0].mxu0
        %v8658 = vpop.f32.mrb[0].mxu0
        %v8659 = vadd.f32 %v8498, %v8658
        %v8660 = vpop.f32.mrb[0].mxu0
        %8661 = vmatprep.mubr.bf16.mxu0 %v7824
        %8662 = vmatmul.mubr.bf16.gmra.mrb[0].mxu0 %v7839
        %v8663 = vpop.f32.mrb[0].mxu0
        %v8664 = vadd.f32 %v8503, %v8663
        %v8665 = vpop.f32.mrb[0].mxu0
        %v8666 = vpop.f32.mrb[0].mxu0
        %v8667 = vadd.f32 %v8506, %v8666
        %v8668 = vpop.f32.mrb[0].mxu0
        %8669 = vmatprep.mubr.bf16.mxu0 %v7825
        %8670 = vmatmul.mubr.bf16.gmra.mrb[0].mxu0 %v7840
        %v8671 = vpop.f32.mrb[0].mxu0
        %v8672 = vadd.f32 %v8511, %v8671
        %v8673 = vpop.f32.mrb[0].mxu0
        %v8674 = vpop.f32.mrb[0].mxu0
        %v8675 = vadd.f32 %v8514, %v8674
        %v8676 = vpop.f32.mrb[0].mxu0
        %8677 = vmatprep.mubr.bf16.mxu0 %v7826
        %8678 = vmatmul.mubr.bf16.gmra.mrb[0].mxu0 %v7841
        %v8679 = vpop.f32.mrb[0].mxu0
        %v8680 = vadd.f32 %v8519, %v8679
        %v8681 = vpop.f32.mrb[0].mxu0
        %v8682 = vpop.f32.mrb[0].mxu0
        %v8683 = vadd.f32 %v8522, %v8682
        %v8684 = vpop.f32.mrb[0].mxu0
        %8685 = vmatprep.mubr.bf16.mxu0 %v7827
        %8686 = vmatmul.mubr.bf16.gmra.mrb[0].mxu0 %v7842
        %v8687 = vpop.f32.mrb[0].mxu0
        %v8688 = vadd.f32 %v8527, %v8687
        %v8689 = vpop.f32.mrb[0].mxu0
        %v8690 = vpop.f32.mrb[0].mxu0
        %v8691 = vadd.f32 %v8530, %v8690
        %v8692 = vpop.f32.mrb[0].mxu0
        %8693 = vmatprep.mubr.bf16.mxu0 %v7828
        %8694 = vmatmul.mubr.bf16.gmra.mrb[0].mxu0 %v7843
        %v8695 = vpop.f32.mrb[0].mxu0
        %v8696 = vadd.f32 %v8535, %v8695
        %v8697 = vpop.f32.mrb[0].mxu0
        %v8698 = vpop.f32.mrb[0].mxu0
        %v8699 = vadd.f32 %v8538, %v8698
        %v8700 = vpop.f32.mrb[0].mxu0
        %8701 = vmatprep.mubr.bf16.mxu0 %v7829
        %8702 = vmatmul.mubr.bf16.gmra.mrb[0].mxu0 %v7844
        %v8703 = vpop.f32.mrb[0].mxu0
        %v8704 = vadd.f32 %v8543, %v8703
        %v8705 = vpop.f32.mrb[0].mxu0
        %v8706 = vpop.f32.mrb[0].mxu0
        %v8707 = vadd.f32 %v8546, %v8706
        %v8708 = vpop.f32.mrb[0].mxu0
        %8709 = vmatprep.mubr.bf16.mxu0 %v7830
        %8710 = vmatmul.mubr.bf16.gmra.mrb[0].mxu0 %v7845
        %v8711 = vpop.f32.mrb[0].mxu0
        %v8712 = vadd.f32 %v8551, %v8711
        %v8713 = vpop.f32.mrb[0].mxu0
        %v8714 = vpop.f32.mrb[0].mxu0
        %v8715 = vadd.f32 %v8554, %v8714
        %v8716 = vpop.f32.mrb[0].mxu0
        %8717 = vmatprep.mubr.bf16.mxu0 %v7831
        %8718 = vmatmul.mubr.bf16.gmra.mrb[0].mxu0 %v7846
        %v8719 = vpop.f32.mrb[0].mxu0
        %v8720 = vadd.f32 %v8559, %v8719
        %v8721 = vpop.f32.mrb[0].mxu0
        %v8722 = vpop.f32.mrb[0].mxu0
        %v8723 = vadd.f32 %v8562, %v8722
        %v8724 = vpop.f32.mrb[0].mxu0
        %8725 = vmatprep.mubr.bf16.mxu0 %v7832
        %8726 = vmatmul.mubr.bf16.gmra.mrb[0].mxu0 %v7847
        %v8727 = vpop.f32.mrb[0].mxu0
        %v8728 = vadd.f32 %v8567, %v8727
        %v8729 = vpop.f32.mrb[0].mxu0
        %v8730 = vpop.f32.mrb[0].mxu0
        %v8731 = vadd.f32 %v8570, %v8730
        %v8732 = vpop.f32.mrb[0].mxu0
        %8733 = vmatprep.mubr.bf16.mxu0 %v7833
        %8734 = vmatmul.mubr.bf16.gmra.mrb[0].mxu0 %v7848
        %v8735 = vpop.f32.mrb[0].mxu0
        %v8736 = vadd.f32 %v8575, %v8735
        %v8737 = vpop.f32.mrb[0].mxu0
        %v8738 = vpop.f32.mrb[0].mxu0
        %v8739 = vadd.f32 %v8578, %v8738
        %v8740 = vpop.f32.mrb[0].mxu0
        %8741 = vmatprep.mubr.bf16.mxu0 %v7834
        %8742 = vmatmul.mubr.bf16.gmra.mrb[0].mxu0 %v7849
        %v8743 = vpop.f32.mrb[0].mxu0
        %v8744 = vadd.f32 %v8583, %v8743
        %v8745 = vpop.f32.mrb[0].mxu0
        %v8746 = vpop.f32.mrb[0].mxu0
        %v8747 = vadd.f32 %v8586, %v8746
        %v8748 = vpop.f32.mrb[0].mxu0
        %8749 = vdwg.mxu0
        %8750 = vmatprep.subr.bf16.mxu0 0
        %8751 = vmatpush1.bf16.msra.mxu0 %v8316
        %8752 = vmatprep.subr.bf16.mxu0 0
        %8753 = vmatpush1.bf16.msra.mxu0 %v8317
        %8754 = vmatprep.subr.bf16.mxu0 0
        %8755 = vmatpush1.bf16.msra.mxu0 %v8318
        %8756 = vmatprep.subr.bf16.mxu0 0
        %8757 = vmatpush1.bf16.msra.mxu0 %v8319
        %8758 = vmatprep.subr.bf16.mxu0 0
        %8759 = vmatpush1.bf16.msra.mxu0 %v8320
        %8760 = vmatprep.subr.bf16.mxu0 0
        %8761 = vmatpush1.bf16.msra.mxu0 %v8321
        %8762 = vmatprep.subr.bf16.mxu0 0
        %8763 = vmatpush1.bf16.msra.mxu0 %v8322
        %8764 = vmatprep.subr.bf16.mxu0 0
        %8765 = vmatpush1.bf16.msra.mxu0 %v8323
        %8766 = vmatprep.subr.bf16.mxu0 0
        %8767 = vmatpush1.bf16.msra.mxu0 %v8324
        %8768 = vmatprep.subr.bf16.mxu0 0
        %8769 = vmatpush1.bf16.msra.mxu0 %v8325
        %8770 = vmatprep.subr.bf16.mxu0 0
        %8771 = vmatpush1.bf16.msra.mxu0 %v8326
        %8772 = vmatprep.subr.bf16.mxu0 0
        %8773 = vmatpush1.bf16.msra.mxu0 %v8327
        %8774 = vmatprep.subr.bf16.mxu0 0
        %8775 = vmatpush1.bf16.msra.mxu0 %v8328
        %8776 = vmatprep.subr.bf16.mxu0 0
        %8777 = vmatpush1.bf16.msra.mxu0 %v8329
        %8778 = vmatprep.subr.bf16.mxu0 0
        %8779 = vmatpush1.bf16.msra.mxu0 %v8330
        %8780 = vmatprep.subr.bf16.mxu0 0
        %8781 = vmatpush1.bf16.msra.mxu0 %v8331
        %8782 = vmatprep.mubr.bf16.mxu0 %v7835
        %8783 = vmatmul.mubr.bf16.gmra.mrb[0].mxu0 %v7579
        %v8784 = vpop.f32.mrb[0].mxu0
        %v8785 = vadd.f32 %v8624, %v8784
        %v8786 = vpop.f32.mrb[0].mxu0
        %v8787 = vpop.f32.mrb[0].mxu0
        %v8788 = vadd.f32 %v8627, %v8787
        %v8789 = vpop.f32.mrb[0].mxu0
        %8790 = vmatprep.mubr.bf16.mxu0 %v7836
        %8791 = vmatmul.mubr.bf16.gmra.mrb[0].mxu0 %v7580
        %v8792 = vpop.f32.mrb[0].mxu0
        %v8793 = vadd.f32 %v8632, %v8792
        %v8794 = vpop.f32.mrb[0].mxu0
        %v8795 = vpop.f32.mrb[0].mxu0
        %v8796 = vadd.f32 %v8635, %v8795
        %v8797 = vpop.f32.mrb[0].mxu0
        %8798 = vmatprep.mubr.bf16.mxu0 %v7837
        %8799 = vmatmul.mubr.bf16.gmra.mrb[0].mxu0 %v7581
        %v8800 = vpop.f32.mrb[0].mxu0
        %v8801 = vadd.f32 %v8640, %v8800
        %v8802 = vpop.f32.mrb[0].mxu0
        %v8803 = vpop.f32.mrb[0].mxu0
        %v8804 = vadd.f32 %v8643, %v8803
        %v8805 = vpop.f32.mrb[0].mxu0
        %8806 = vmatprep.mubr.bf16.mxu0 %v7838
        %8807 = vmatmul.mubr.bf16.gmra.mrb[0].mxu0 %v7582
        %v8808 = vpop.f32.mrb[0].mxu0
        %v8809 = vadd.f32 %v8648, %v8808
        %v8810 = vpop.f32.mrb[0].mxu0
        %v8811 = vpop.f32.mrb[0].mxu0
        %v8812 = vadd.f32 %v8651, %v8811
        %v8813 = vpop.f32.mrb[0].mxu0
        %8814 = vmatprep.mubr.bf16.mxu0 %v7839
        %8815 = vmatmul.mubr.bf16.gmra.mrb[0].mxu0 %v7583
        %v8816 = vpop.f32.mrb[0].mxu0
        %v8817 = vadd.f32 %v8656, %v8816
        %v8818 = vpop.f32.mrb[0].mxu0
        %v8819 = vpop.f32.mrb[0].mxu0
        %v8820 = vadd.f32 %v8659, %v8819
        %v8821 = vpop.f32.mrb[0].mxu0
        %8822 = vmatprep.mubr.bf16.mxu0 %v7840
        %8823 = vmatmul.mubr.bf16.gmra.mrb[0].mxu0 %v7584
        %v8824 = vpop.f32.mrb[0].mxu0
        %v8825 = vadd.f32 %v8664, %v8824
        %v8826 = vpop.f32.mrb[0].mxu0
        %v8827 = vpop.f32.mrb[0].mxu0
        %v8828 = vadd.f32 %v8667, %v8827
        %v8829 = vpop.f32.mrb[0].mxu0
        %8830 = vmatprep.mubr.bf16.mxu0 %v7841
        %8831 = vmatmul.mubr.bf16.gmra.mrb[0].mxu0 %v7585
        %v8832 = vpop.f32.mrb[0].mxu0
        %v8833 = vadd.f32 %v8672, %v8832
        %v8834 = vpop.f32.mrb[0].mxu0
        %v8835 = vpop.f32.mrb[0].mxu0
        %v8836 = vadd.f32 %v8675, %v8835
        %v8837 = vpop.f32.mrb[0].mxu0
        %8838 = vmatprep.mubr.bf16.mxu0 %v7842
        %8839 = vmatmul.mubr.bf16.gmra.mrb[0].mxu0 %v7586
        %v8840 = vpop.f32.mrb[0].mxu0
        %v8841 = vadd.f32 %v8680, %v8840
        %v8842 = vpop.f32.mrb[0].mxu0
        %v8843 = vpop.f32.mrb[0].mxu0
        %v8844 = vadd.f32 %v8683, %v8843
        %v8845 = vpop.f32.mrb[0].mxu0
        %8846 = vmatprep.mubr.bf16.mxu0 %v7843
        %8847 = vmatmul.mubr.bf16.gmra.mrb[0].mxu0 %v7587
        %v8848 = vpop.f32.mrb[0].mxu0
        %v8849 = vadd.f32 %v8688, %v8848
        %v8850 = vpop.f32.mrb[0].mxu0
        %v8851 = vpop.f32.mrb[0].mxu0
        %v8852 = vadd.f32 %v8691, %v8851
        %v8853 = vpop.f32.mrb[0].mxu0
        %8854 = vmatprep.mubr.bf16.mxu0 %v7844
        %8855 = vmatmul.mubr.bf16.gmra.mrb[0].mxu0 %v7588
        %v8856 = vpop.f32.mrb[0].mxu0
        %v8857 = vadd.f32 %v8696, %v8856
        %v8858 = vpop.f32.mrb[0].mxu0
        %v8859 = vpop.f32.mrb[0].mxu0
        %v8860 = vadd.f32 %v8699, %v8859
        %v8861 = vpop.f32.mrb[0].mxu0
        %8862 = vmatprep.mubr.bf16.mxu0 %v7845
        %8863 = vmatmul.mubr.bf16.gmra.mrb[0].mxu0 %v7589
        %v8864 = vpop.f32.mrb[0].mxu0
        %v8865 = vadd.f32 %v8704, %v8864
        %v8866 = vpop.f32.mrb[0].mxu0
        %v8867 = vpop.f32.mrb[0].mxu0
        %v8868 = vadd.f32 %v8707, %v8867
        %v8869 = vpop.f32.mrb[0].mxu0
        %8870 = vmatprep.mubr.bf16.mxu0 %v7846
        %8871 = vmatmul.mubr.bf16.gmra.mrb[0].mxu0 %v7590
        %v8872 = vpop.f32.mrb[0].mxu0
        %v8873 = vadd.f32 %v8712, %v8872
        %v8874 = vpop.f32.mrb[0].mxu0
        %v8875 = vpop.f32.mrb[0].mxu0
        %v8876 = vadd.f32 %v8715, %v8875
        %v8877 = vpop.f32.mrb[0].mxu0
        %8878 = vmatprep.mubr.bf16.mxu0 %v7847
        %8879 = vmatmul.mubr.bf16.gmra.mrb[0].mxu0 %v7591
        %v8880 = vpop.f32.mrb[0].mxu0
        %v8881 = vadd.f32 %v8720, %v8880
        %v8882 = vpop.f32.mrb[0].mxu0
        %v8883 = vpop.f32.mrb[0].mxu0
        %v8884 = vadd.f32 %v8723, %v8883
        %v8885 = vpop.f32.mrb[0].mxu0
        %8886 = vmatprep.mubr.bf16.mxu0 %v7848
        %8887 = vmatmul.mubr.bf16.gmra.mrb[0].mxu0 %v7592
        %v8888 = vpop.f32.mrb[0].mxu0
        %v8889 = vadd.f32 %v8728, %v8888
        %v8890 = vpop.f32.mrb[0].mxu0
        %v8891 = vpop.f32.mrb[0].mxu0
        %v8892 = vadd.f32 %v8731, %v8891
        %v8893 = vpop.f32.mrb[0].mxu0
        %8894 = vmatprep.mubr.bf16.mxu0 %v7849
        %8895 = vmatmul.mubr.bf16.gmra.mrb[0].mxu0 %v7593
        %v8896 = vpop.f32.mrb[0].mxu0
        %v8897 = vadd.f32 %v8736, %v8896
        %v8898 = vpop.f32.mrb[0].mxu0
        %v8899 = vpop.f32.mrb[0].mxu0
        %v8900 = vadd.f32 %v8739, %v8899
        %v8901 = vpop.f32.mrb[0].mxu0
        %8902 = vmatprep.mubr.bf16.mxu0 %v7850
        %8903 = vmatmul.mubr.bf16.gmra.mrb[0].mxu0 %v7594
        %v8904 = vpop.f32.mrb[0].mxu0
        %v8905 = vadd.f32 %v8744, %v8904
        %v8906 = vpop.f32.mrb[0].mxu0
        %v8907 = vpop.f32.mrb[0].mxu0
        %v8908 = vadd.f32 %v8747, %v8907
        %v8909 = vpop.f32.mrb[0].mxu0
        %8910 = vdwg.mxu0
        %8911 = vmatprep.subr.bf16.mxu0 0
        %8912 = vmatpush1.bf16.msra.mxu0 %v8332
        %8913 = vmatprep.subr.bf16.mxu0 0
        %8914 = vmatpush1.bf16.msra.mxu0 %v8333
        %8915 = vmatprep.subr.bf16.mxu0 0
        %8916 = vmatpush1.bf16.msra.mxu0 %v8334
        %8917 = vmatprep.subr.bf16.mxu0 0
        %8918 = vmatpush1.bf16.msra.mxu0 %v8335
        %8919 = vmatprep.subr.bf16.mxu0 0
        %8920 = vmatpush1.bf16.msra.mxu0 %v8336
        %8921 = vmatprep.subr.bf16.mxu0 0
        %8922 = vmatpush1.bf16.msra.mxu0 %v8337
        %8923 = vmatprep.subr.bf16.mxu0 0
        %8924 = vmatpush1.bf16.msra.mxu0 %v8338
        %8925 = vmatprep.subr.bf16.mxu0 0
        %8926 = vmatpush1.bf16.msra.mxu0 %v8339
        %8927 = vmatprep.subr.bf16.mxu0 0
        %8928 = vmatpush1.bf16.msra.mxu0 %v8340
        %8929 = vmatprep.subr.bf16.mxu0 0
        %8930 = vmatpush1.bf16.msra.mxu0 %v8341
        %8931 = vmatprep.subr.bf16.mxu0 0
        %8932 = vmatpush1.bf16.msra.mxu0 %v8342
        %8933 = vmatprep.subr.bf16.mxu0 0
        %8934 = vmatpush1.bf16.msra.mxu0 %v8343
        %8935 = vmatprep.subr.bf16.mxu0 0
        %8936 = vmatpush1.bf16.msra.mxu0 %v8344
        %8937 = vmatprep.subr.bf16.mxu0 0
        %8938 = vmatpush1.bf16.msra.mxu0 %v8345
        %8939 = vmatprep.subr.bf16.mxu0 0
        %8940 = vmatpush1.bf16.msra.mxu0 %v8346
        %8941 = vmatprep.subr.bf16.mxu0 0
        %8942 = vmatpush1.bf16.msra.mxu0 %v8347
        %8943 = vmatprep.mubr.bf16.mxu0 %v7580
        %8944 = vmatmul.mubr.bf16.gmra.mrb[0].mxu0 %v7820
        %v8945 = vpop.f32.mrb[0].mxu0
        %v8946 = vadd.f32 %v8785, %v8945
        %v8947 = vpop.f32.mrb[0].mxu0
        %v8948 = vpop.f32.mrb[0].mxu0
        %v8949 = vadd.f32 %v8788, %v8948
        %v8950 = vpop.f32.mrb[0].mxu0
        %8951 = vmatprep.mubr.bf16.mxu0 %v7581
        %8952 = vmatmul.mubr.bf16.gmra.mrb[0].mxu0 %v7821
        %v8953 = vpop.f32.mrb[0].mxu0
        %v8954 = vadd.f32 %v8793, %v8953
        %v8955 = vpop.f32.mrb[0].mxu0
        %v8956 = vpop.f32.mrb[0].mxu0
        %v8957 = vadd.f32 %v8796, %v8956
        %v8958 = vpop.f32.mrb[0].mxu0
        %8959 = vmatprep.mubr.bf16.mxu0 %v7582
        %8960 = vmatmul.mubr.bf16.gmra.mrb[0].mxu0 %v7822
        %v8961 = vpop.f32.mrb[0].mxu0
        %v8962 = vadd.f32 %v8801, %v8961
        %v8963 = vpop.f32.mrb[0].mxu0
        %v8964 = vpop.f32.mrb[0].mxu0
        %v8965 = vadd.f32 %v8804, %v8964
        %v8966 = vpop.f32.mrb[0].mxu0
        %8967 = vmatprep.mubr.bf16.mxu0 %v7583
        %8968 = vmatmul.mubr.bf16.gmra.mrb[0].mxu0 %v7823
        %v8969 = vpop.f32.mrb[0].mxu0
        %v8970 = vadd.f32 %v8809, %v8969
        %v8971 = vpop.f32.mrb[0].mxu0
        %v8972 = vpop.f32.mrb[0].mxu0
        %v8973 = vadd.f32 %v8812, %v8972
        %v8974 = vpop.f32.mrb[0].mxu0
        %8975 = vmatprep.mubr.bf16.mxu0 %v7584
        %8976 = vmatmul.mubr.bf16.gmra.mrb[0].mxu0 %v7824
        %v8977 = vpop.f32.mrb[0].mxu0
        %v8978 = vadd.f32 %v8817, %v8977
        %v8979 = vpop.f32.mrb[0].mxu0
        %v8980 = vpop.f32.mrb[0].mxu0
        %v8981 = vadd.f32 %v8820, %v8980
        %v8982 = vpop.f32.mrb[0].mxu0
        %8983 = vmatprep.mubr.bf16.mxu0 %v7585
        %8984 = vmatmul.mubr.bf16.gmra.mrb[0].mxu0 %v7825
        %v8985 = vpop.f32.mrb[0].mxu0
        %v8986 = vadd.f32 %v8825, %v8985
        %v8987 = vpop.f32.mrb[0].mxu0
        %v8988 = vpop.f32.mrb[0].mxu0
        %v8989 = vadd.f32 %v8828, %v8988
        %v8990 = vpop.f32.mrb[0].mxu0
        %8991 = vmatprep.mubr.bf16.mxu0 %v7586
        %8992 = vmatmul.mubr.bf16.gmra.mrb[0].mxu0 %v7826
        %v8993 = vpop.f32.mrb[0].mxu0
        %v8994 = vadd.f32 %v8833, %v8993
        %v8995 = vpop.f32.mrb[0].mxu0
        %v8996 = vpop.f32.mrb[0].mxu0
        %v8997 = vadd.f32 %v8836, %v8996
        %v8998 = vpop.f32.mrb[0].mxu0
        %8999 = vmatprep.mubr.bf16.mxu0 %v7587
        %9000 = vmatmul.mubr.bf16.gmra.mrb[0].mxu0 %v7827
        %v9001 = vpop.f32.mrb[0].mxu0
        %v9002 = vadd.f32 %v8841, %v9001
        %v9003 = vpop.f32.mrb[0].mxu0
        %v9004 = vpop.f32.mrb[0].mxu0
        %v9005 = vadd.f32 %v8844, %v9004
        %v9006 = vpop.f32.mrb[0].mxu0
        %9007 = vmatprep.mubr.bf16.mxu0 %v7588
        %9008 = vmatmul.mubr.bf16.gmra.mrb[0].mxu0 %v7828
        %v9009 = vpop.f32.mrb[0].mxu0
        %v9010 = vadd.f32 %v8849, %v9009
        %v9011 = vpop.f32.mrb[0].mxu0
        %v9012 = vpop.f32.mrb[0].mxu0
        %v9013 = vadd.f32 %v8852, %v9012
        %v9014 = vpop.f32.mrb[0].mxu0
        %9015 = vmatprep.mubr.bf16.mxu0 %v7589
        %9016 = vmatmul.mubr.bf16.gmra.mrb[0].mxu0 %v7829
        %v9017 = vpop.f32.mrb[0].mxu0
        %v9018 = vadd.f32 %v8857, %v9017
        %v9019 = vpop.f32.mrb[0].mxu0
        %v9020 = vpop.f32.mrb[0].mxu0
        %v9021 = vadd.f32 %v8860, %v9020
        %v9022 = vpop.f32.mrb[0].mxu0
        %9023 = vmatprep.mubr.bf16.mxu0 %v7590
        %9024 = vmatmul.mubr.bf16.gmra.mrb[0].mxu0 %v7830
        %v9025 = vpop.f32.mrb[0].mxu0
        %v9026 = vadd.f32 %v8865, %v9025
        %v9027 = vpop.f32.mrb[0].mxu0
        %v9028 = vpop.f32.mrb[0].mxu0
        %v9029 = vadd.f32 %v8868, %v9028
        %v9030 = vpop.f32.mrb[0].mxu0
        %9031 = vmatprep.mubr.bf16.mxu0 %v7591
        %9032 = vmatmul.mubr.bf16.gmra.mrb[0].mxu0 %v7831
        %v9033 = vpop.f32.mrb[0].mxu0
        %v9034 = vadd.f32 %v8873, %v9033
        %v9035 = vpop.f32.mrb[0].mxu0
        %v9036 = vpop.f32.mrb[0].mxu0
        %v9037 = vadd.f32 %v8876, %v9036
        %v9038 = vpop.f32.mrb[0].mxu0
        %9039 = vmatprep.mubr.bf16.mxu0 %v7592
        %9040 = vmatmul.mubr.bf16.gmra.mrb[0].mxu0 %v7832
        %v9041 = vpop.f32.mrb[0].mxu0
        %v9042 = vadd.f32 %v8881, %v9041
        %v9043 = vpop.f32.mrb[0].mxu0
        %v9044 = vpop.f32.mrb[0].mxu0
        %v9045 = vadd.f32 %v8884, %v9044
        %v9046 = vpop.f32.mrb[0].mxu0
        %9047 = vmatprep.mubr.bf16.mxu0 %v7593
        %9048 = vmatmul.mubr.bf16.gmra.mrb[0].mxu0 %v7833
        %v9049 = vpop.f32.mrb[0].mxu0
        %v9050 = vadd.f32 %v8889, %v9049
        %v9051 = vpop.f32.mrb[0].mxu0
        %v9052 = vpop.f32.mrb[0].mxu0
        %v9053 = vadd.f32 %v8892, %v9052
        %v9054 = vpop.f32.mrb[0].mxu0
        %9055 = vmatprep.mubr.bf16.mxu0 %v7594
        %9056 = vmatmul.mubr.bf16.gmra.mrb[0].mxu0 %v7834
        %v9057 = vpop.f32.mrb[0].mxu0
        %v9058 = vadd.f32 %v8897, %v9057
        %v9059 = vpop.f32.mrb[0].mxu0
        %v9060 = vpop.f32.mrb[0].mxu0
        %v9061 = vadd.f32 %v8900, %v9060
        %v9062 = vpop.f32.mrb[0].mxu0
        %9063 = vmatprep.mubr.bf16.mxu0 0
        %9064 = vmatmul.mubr.bf16.gmra.mrb[0].mxu0 0
        %v9065 = vpop.f32.mrb[0].mxu0
        %v9066 = vadd.f32 %v8905, %v9065
        %v9067 = vpop.f32.mrb[0].mxu0
        %v9068 = vpop.f32.mrb[0].mxu0
        %v9069 = vadd.f32 %v8908, %v9068
        %v9070 = vpop.f32.mrb[0].mxu0
        %9071 = vdwg.mxu0
        %9072 = vmatprep.subr.bf16.mxu0 0
        %9073 = vmatpush1.bf16.msra.mxu0 %v8348
        %9074 = vmatprep.subr.bf16.mxu0 0
        %9075 = vmatpush1.bf16.msra.mxu0 %v8349
        %9076 = vmatprep.subr.bf16.mxu0 0
        %9077 = vmatpush1.bf16.msra.mxu0 %v8350
        %9078 = vmatprep.subr.bf16.mxu0 0
        %9079 = vmatpush1.bf16.msra.mxu0 %v8351
        %9080 = vmatprep.subr.bf16.mxu0 0
        %9081 = vmatpush1.bf16.msra.mxu0 %v8352
        %9082 = vmatprep.subr.bf16.mxu0 0
        %9083 = vmatpush1.bf16.msra.mxu0 %v8353
        %9084 = vmatprep.subr.bf16.mxu0 0
        %9085 = vmatpush1.bf16.msra.mxu0 %v8354
        %9086 = vmatprep.subr.bf16.mxu0 0
        %9087 = vmatpush1.bf16.msra.mxu0 %v8355
        %9088 = vmatprep.subr.bf16.mxu0 0
        %9089 = vmatpush1.bf16.msra.mxu0 0
        %9090 = vmatprep.subr.bf16.mxu0 0
        %9091 = vmatpush1.bf16.msra.mxu0 0
        %9092 = vmatprep.subr.bf16.mxu0 0
        %9093 = vmatpush1.bf16.msra.mxu0 0
        %9094 = vmatprep.subr.bf16.mxu0 0
        %9095 = vmatpush1.bf16.msra.mxu0 0
        %9096 = vmatprep.subr.bf16.mxu0 0
        %9097 = vmatpush1.bf16.msra.mxu0 0
        %9098 = vmatprep.subr.bf16.mxu0 0
        %9099 = vmatpush1.bf16.msra.mxu0 0
        %9100 = vmatprep.subr.bf16.mxu0 0
        %9101 = vmatpush1.bf16.msra.mxu0 0
        %9102 = vmatprep.subr.bf16.mxu0 0
        %9103 = vmatpush1.bf16.msra.mxu0 0
        %9104 = vmatprep.mubr.bf16.mxu0 0
        %9105 = vmatmul.mubr.bf16.gmra.mrb[0].mxu0 %v7836
        %v9106 = vpop.f32.mrb[0].mxu0
        %v9107 = vadd.f32 %v8946, %v9106
        %v9108 = vpop.f32.mrb[0].mxu0
        %v9109 = vpop.f32.mrb[0].mxu0
        %v9110 = vadd.f32 %v8949, %v9109
        %v9111 = vpop.f32.mrb[0].mxu0
        %9112 = vmatprep.mubr.bf16.mxu0 0
        %9113 = vmatmul.mubr.bf16.gmra.mrb[0].mxu0 %v7837
        %v9114 = vpop.f32.mrb[0].mxu0
        %v9115 = vadd.f32 %v8954, %v9114
        %v9116 = vpop.f32.mrb[0].mxu0
        %v9117 = vpop.f32.mrb[0].mxu0
        %v9118 = vadd.f32 %v8957, %v9117
        %v9119 = vpop.f32.mrb[0].mxu0
        %9120 = vmatprep.mubr.bf16.mxu0 0
        %9121 = vmatmul.mubr.bf16.gmra.mrb[0].mxu0 %v7838
        %v9122 = vpop.f32.mrb[0].mxu0
        %v9123 = vadd.f32 %v8962, %v9122
        %v9124 = vpop.f32.mrb[0].mxu0
        %v9125 = vpop.f32.mrb[0].mxu0
        %v9126 = vadd.f32 %v8965, %v9125
        %v9127 = vpop.f32.mrb[0].mxu0
        %9128 = vmatprep.mubr.bf16.mxu0 0
        %9129 = vmatmul.mubr.bf16.gmra.mrb[0].mxu0 %v7839
        %v9130 = vpop.f32.mrb[0].mxu0
        %v9131 = vadd.f32 %v8970, %v9130
        %v9132 = vpop.f32.mrb[0].mxu0
        %v9133 = vpop.f32.mrb[0].mxu0
        %v9134 = vadd.f32 %v8973, %v9133
        %v9135 = vpop.f32.mrb[0].mxu0
        %9136 = vmatprep.mubr.bf16.mxu0 0
        %9137 = vmatmul.mubr.bf16.gmra.mrb[0].mxu0 %v7840
        %v9138 = vpop.f32.mrb[0].mxu0
        %v9139 = vadd.f32 %v8978, %v9138
        %v9140 = vpop.f32.mrb[0].mxu0
        %v9141 = vpop.f32.mrb[0].mxu0
        %v9142 = vadd.f32 %v8981, %v9141
        %v9143 = vpop.f32.mrb[0].mxu0
        %9144 = vmatprep.mubr.bf16.mxu0 0
        %9145 = vmatmul.mubr.bf16.gmra.mrb[0].mxu0 %v7841
        %v9146 = vpop.f32.mrb[0].mxu0
        %v9147 = vadd.f32 %v8986, %v9146
        %v9148 = vpop.f32.mrb[0].mxu0
        %v9149 = vpop.f32.mrb[0].mxu0
        %v9150 = vadd.f32 %v8989, %v9149
        %v9151 = vpop.f32.mrb[0].mxu0
        %9152 = vmatprep.mubr.bf16.mxu0 0
        %9153 = vmatmul.mubr.bf16.gmra.mrb[0].mxu0 %v7842
        %v9154 = vpop.f32.mrb[0].mxu0
        %v9155 = vadd.f32 %v8994, %v9154
        %v9156 = vpop.f32.mrb[0].mxu0
        %v9157 = vpop.f32.mrb[0].mxu0
        %v9158 = vadd.f32 %v8997, %v9157
        %v9159 = vpop.f32.mrb[0].mxu0
        %9160 = vmatprep.mubr.bf16.mxu0 0
        %9161 = vmatmul.mubr.bf16.gmra.mrb[0].mxu0 %v7843
        %v9162 = vpop.f32.mrb[0].mxu0
        %v9163 = vadd.f32 %v9002, %v9162
        %v9164 = vpop.f32.mrb[0].mxu0
        %v9165 = vpop.f32.mrb[0].mxu0
        %v9166 = vadd.f32 %v9005, %v9165
        %v9167 = vpop.f32.mrb[0].mxu0
        %9168 = vmatprep.mubr.bf16.mxu0 0
        %9169 = vmatmul.mubr.bf16.gmra.mrb[0].mxu0 %v7844
        %v9170 = vpop.f32.mrb[0].mxu0
        %v9171 = vadd.f32 %v9010, %v9170
        %v9172 = vpop.f32.mrb[0].mxu0
        %v9173 = vpop.f32.mrb[0].mxu0
        %v9174 = vadd.f32 %v9013, %v9173
        %v9175 = vpop.f32.mrb[0].mxu0
        %9176 = vmatprep.mubr.bf16.mxu0 0
        %9177 = vmatmul.mubr.bf16.gmra.mrb[0].mxu0 %v7845
        %v9178 = vpop.f32.mrb[0].mxu0
        %v9179 = vadd.f32 %v9018, %v9178
        %v9180 = vpop.f32.mrb[0].mxu0
        %v9181 = vpop.f32.mrb[0].mxu0
        %v9182 = vadd.f32 %v9021, %v9181
        %v9183 = vpop.f32.mrb[0].mxu0
        %9184 = vmatprep.mubr.bf16.mxu0 0
        %9185 = vmatmul.mubr.bf16.gmra.mrb[0].mxu0 %v7846
        %v9186 = vpop.f32.mrb[0].mxu0
        %v9187 = vadd.f32 %v9026, %v9186
        %v9188 = vpop.f32.mrb[0].mxu0
        %v9189 = vpop.f32.mrb[0].mxu0
        %v9190 = vadd.f32 %v9029, %v9189
        %v9191 = vpop.f32.mrb[0].mxu0
        %9192 = vmatprep.mubr.bf16.mxu0 0
        %9193 = vmatmul.mubr.bf16.gmra.mrb[0].mxu0 %v7847
        %v9194 = vpop.f32.mrb[0].mxu0
        %v9195 = vadd.f32 %v9034, %v9194
        %v9196 = vpop.f32.mrb[0].mxu0
        %v9197 = vpop.f32.mrb[0].mxu0
        %v9198 = vadd.f32 %v9037, %v9197
        %v9199 = vpop.f32.mrb[0].mxu0
        %9200 = vmatprep.mubr.bf16.mxu0 0
        %9201 = vmatmul.mubr.bf16.gmra.mrb[0].mxu0 %v7848
        %v9202 = vpop.f32.mrb[0].mxu0
        %v9203 = vadd.f32 %v9042, %v9202
        %v9204 = vpop.f32.mrb[0].mxu0
        %v9205 = vpop.f32.mrb[0].mxu0
        %v9206 = vadd.f32 %v9045, %v9205
        %v9207 = vpop.f32.mrb[0].mxu0
        %9208 = vmatprep.mubr.bf16.mxu0 0
        %9209 = vmatmul.mubr.bf16.gmra.mrb[0].mxu0 %v7849
        %v9210 = vpop.f32.mrb[0].mxu0
        %v9211 = vadd.f32 %v9050, %v9210
        %v9212 = vpop.f32.mrb[0].mxu0
        %v9213 = vpop.f32.mrb[0].mxu0
        %v9214 = vadd.f32 %v9053, %v9213
        %v9215 = vpop.f32.mrb[0].mxu0
        %9216 = vmatprep.mubr.bf16.mxu0 0
        %9217 = vmatmul.mubr.bf16.gmra.mrb[0].mxu0 %v7850
        %v9218 = vpop.f32.mrb[0].mxu0
        %v9219 = vadd.f32 %v9058, %v9218
        %v9220 = vpop.f32.mrb[0].mxu0
        %v9221 = vpop.f32.mrb[0].mxu0
        %v9222 = vadd.f32 %v9061, %v9221
        %v9223 = vpop.f32.mrb[0].mxu0
        %9224 = vmatprep.mubr.bf16.mxu0 0
        %9225 = vmatmul.mubr.bf16.gmra.mrb[0].mxu0 0
        %v9226 = vpop.f32.mrb[0].mxu0
        %v9227 = vadd.f32 %v9066, %v9226
        %v9228 = vpop.f32.mrb[0].mxu0
        %v9229 = vpop.f32.mrb[0].mxu0
        %v9230 = vadd.f32 %v9069, %v9229
        %v9231 = vpop.f32.mrb[0].mxu0
        %9232 = vdwg.mxu0
        %s9233 = scalar_lea.vmem [#allocation6], 4
        %v9234 = vld [vmem:[%s9233] sm:$0x1]
        %v9236 = vlaneseq
        %v9237 = vshrl.u32 %v9236, 7
        %v9238 = vsub.s32 0, %v9237
        %v9239 = vrot.slane %v9234, %v9238
        %v9241 = vmul.f32 %v9107, %v9239
        %v9242 = vmul.f32 %v9110, %v9239
        %v9243 = vmul.f32 %v9115, %v9239
        %v9244 = vmul.f32 %v9118, %v9239
        %v9245 = vmul.f32 %v9123, %v9239
        %v9246 = vmul.f32 %v9126, %v9239
        %v9247 = vmul.f32 %v9131, %v9239
        %v9248 = vmul.f32 %v9134, %v9239
        %v9249 = vmul.f32 %v9139, %v9239
        %v9250 = vmul.f32 %v9142, %v9239
        %v9251 = vmul.f32 %v9147, %v9239
        %v9252 = vmul.f32 %v9150, %v9239
        %v9253 = vmul.f32 %v9155, %v9239
        %v9254 = vmul.f32 %v9158, %v9239
        %v9255 = vmul.f32 %v9163, %v9239
        %v9256 = vmul.f32 %v9166, %v9239
        %v9257 = vmul.f32 %v9171, %v9239
        %v9258 = vmul.f32 %v9174, %v9239
        %v9259 = vmul.f32 %v9179, %v9239
        %v9260 = vmul.f32 %v9182, %v9239
        %v9261 = vmul.f32 %v9187, %v9239
        %v9262 = vmul.f32 %v9190, %v9239
        %v9263 = vmul.f32 %v9195, %v9239
        %v9264 = vmul.f32 %v9198, %v9239
        %v9265 = vmul.f32 %v9203, %v9239
        %v9266 = vmul.f32 %v9206, %v9239
        %v9267 = vmul.f32 %v9211, %v9239
        %v9268 = vmul.f32 %v9214, %v9239
        %v9269 = vmul.f32 %v9219, %v9239
        %v9270 = vmul.f32 %v9222, %v9239
        %v9271 = vmul.f32 %v9227, %v9239
        %v9272 = vmul.f32 %v9230, %v9239
        %s9273 = scalar_lea.vmem [#allocation8], 4
        %v9274 = vld [vmem:[%s9273] sm:$0x1]
        %v9276 = vlaneseq
        %v9277 = vshrl.u32 %v9276, 7
        %v9278 = vsub.s32 0, %v9277
        %v9279 = vrot.slane %v9274, %v9278
        %v9281 = vadd.f32 %v9241, %v9279
        %v9282 = vadd.f32 %v9242, %v9279
        %v9283 = vadd.f32 %v9243, %v9279
        %v9284 = vadd.f32 %v9244, %v9279
        %v9285 = vadd.f32 %v9245, %v9279
        %v9286 = vadd.f32 %v9246, %v9279
        %v9287 = vadd.f32 %v9247, %v9279
        %v9288 = vadd.f32 %v9248, %v9279
        %v9289 = vadd.f32 %v9249, %v9279
        %v9290 = vadd.f32 %v9250, %v9279
        %v9291 = vadd.f32 %v9251, %v9279
        %v9292 = vadd.f32 %v9252, %v9279
        %v9293 = vadd.f32 %v9253, %v9279
        %v9294 = vadd.f32 %v9254, %v9279
        %v9295 = vadd.f32 %v9255, %v9279
        %v9296 = vadd.f32 %v9256, %v9279
        %v9297 = vadd.f32 %v9257, %v9279
        %v9298 = vadd.f32 %v9258, %v9279
        %v9299 = vadd.f32 %v9259, %v9279
        %v9300 = vadd.f32 %v9260, %v9279
        %v9301 = vadd.f32 %v9261, %v9279
        %v9302 = vadd.f32 %v9262, %v9279
        %v9303 = vadd.f32 %v9263, %v9279
        %v9304 = vadd.f32 %v9264, %v9279
        %v9305 = vadd.f32 %v9265, %v9279
        %v9306 = vadd.f32 %v9266, %v9279
        %v9307 = vadd.f32 %v9267, %v9279
        %v9308 = vadd.f32 %v9268, %v9279
        %v9309 = vadd.f32 %v9269, %v9279
        %v9310 = vadd.f32 %v9270, %v9279
        %v9311 = vadd.f32 %v9271, %v9279
        %v9312 = vadd.f32 %v9272, %v9279
        %v9313 = vadd.f32 %v9281, %v5829
        %v9314 = vadd.f32 %v9282, %v5830
        %v9315 = vadd.f32 %v9283, %v5831
        %v9316 = vadd.f32 %v9284, %v5832
        %v9317 = vadd.f32 %v9285, %v5833
        %v9318 = vadd.f32 %v9286, %v5834
        %v9319 = vadd.f32 %v9287, %v5835
        %v9320 = vadd.f32 %v9288, %v5836
        %v9321 = vadd.f32 %v9289, %v5837
        %v9322 = vadd.f32 %v9290, %v5838
        %v9323 = vadd.f32 %v9291, %v5839
        %v9324 = vadd.f32 %v9292, %v5840
        %v9325 = vadd.f32 %v9293, %v5841
        %v9326 = vadd.f32 %v9294, %v5842
        %v9327 = vadd.f32 %v9295, %v5843
        %v9328 = vadd.f32 %v9296, %v5844
        %v9329 = vadd.f32 %v9297, %v5845
        %v9330 = vadd.f32 %v9298, %v5846
        %v9331 = vadd.f32 %v9299, %v5847
        %v9332 = vadd.f32 %v9300, %v5848
        %v9333 = vadd.f32 %v9301, %v5849
        %v9334 = vadd.f32 %v9302, %v5850
        %v9335 = vadd.f32 %v9303, %v5851
        %v9336 = vadd.f32 %v9304, %v5852
        %v9337 = vadd.f32 %v9305, %v5853
        %v9338 = vadd.f32 %v9306, %v5854
        %v9339 = vadd.f32 %v9307, %v5855
        %v9340 = vadd.f32 %v9308, %v5856
        %v9341 = vadd.f32 %v9309, %v5857
        %v9342 = vadd.f32 %v9310, %v5858
        %v9343 = vadd.f32 %v9311, %v5859
        %v9344 = vadd.f32 %v9312, %v5860
        %v9345 = vmax.f32 %v9313, 0.0
        %v9346 = vmax.f32 %v9314, 0.0
        %v9347 = vmax.f32 %v9315, 0.0
        %v9348 = vmax.f32 %v9316, 0.0
        %v9349 = vmax.f32 %v9317, 0.0
        %v9350 = vmax.f32 %v9318, 0.0
        %v9351 = vmax.f32 %v9319, 0.0
        %v9352 = vmax.f32 %v9320, 0.0
        %v9353 = vmax.f32 %v9321, 0.0
        %v9354 = vmax.f32 %v9322, 0.0
        %v9355 = vmax.f32 %v9323, 0.0
        %v9356 = vmax.f32 %v9324, 0.0
        %v9357 = vmax.f32 %v9325, 0.0
        %v9358 = vmax.f32 %v9326, 0.0
        %v9359 = vmax.f32 %v9327, 0.0
        %v9360 = vmax.f32 %v9328, 0.0
        %v9361 = vmax.f32 %v9329, 0.0
        %v9362 = vmax.f32 %v9330, 0.0
        %v9363 = vmax.f32 %v9331, 0.0
        %v9364 = vmax.f32 %v9332, 0.0
        %v9365 = vmax.f32 %v9333, 0.0
        %v9366 = vmax.f32 %v9334, 0.0
        %v9367 = vmax.f32 %v9335, 0.0
        %v9368 = vmax.f32 %v9336, 0.0
        %v9369 = vmax.f32 %v9337, 0.0
        %v9370 = vmax.f32 %v9338, 0.0
        %v9371 = vmax.f32 %v9339, 0.0
        %v9372 = vmax.f32 %v9340, 0.0
        %v9373 = vmax.f32 %v9341, 0.0
        %v9374 = vmax.f32 %v9342, 0.0
        %v9375 = vmax.f32 %v9343, 0.0
        %v9376 = vmax.f32 %v9344, 0.0
        %v9377 = vpack.c.bf16 %v9346, %v9345
        %v9378 = vpack.c.bf16 %v9348, %v9347
        %v9379 = vpack.c.bf16 %v9350, %v9349
        %v9380 = vpack.c.bf16 %v9352, %v9351
        %v9381 = vpack.c.bf16 %v9354, %v9353
        %v9382 = vpack.c.bf16 %v9356, %v9355
        %v9383 = vpack.c.bf16 %v9358, %v9357
        %v9384 = vpack.c.bf16 %v9360, %v9359
        %v9385 = vpack.c.bf16 %v9362, %v9361
        %v9386 = vpack.c.bf16 %v9364, %v9363
        %v9387 = vpack.c.bf16 %v9366, %v9365
        %v9388 = vpack.c.bf16 %v9368, %v9367
        %v9389 = vpack.c.bf16 %v9370, %v9369
        %v9390 = vpack.c.bf16 %v9372, %v9371
        %v9391 = vpack.c.bf16 %v9374, %v9373
        %v9392 = vpack.c.bf16 %v9376, %v9375
        %v9393 = vunpack.c.l.bf16 %v9377
        %v9394 = vunpack.c.h.bf16 %v9377
        %v9395 = vunpack.c.l.bf16 %v9378
        %v9396 = vunpack.c.h.bf16 %v9378
        %v9397 = vunpack.c.l.bf16 %v9379
        %v9398 = vunpack.c.h.bf16 %v9379
        %v9399 = vunpack.c.l.bf16 %v9380
        %v9400 = vunpack.c.h.bf16 %v9380
        %v9401 = vunpack.c.l.bf16 %v9381
        %v9402 = vunpack.c.h.bf16 %v9381
        %v9403 = vunpack.c.l.bf16 %v9382
        %v9404 = vunpack.c.h.bf16 %v9382
        %v9405 = vunpack.c.l.bf16 %v9383
        %v9406 = vunpack.c.h.bf16 %v9383
        %v9407 = vunpack.c.l.bf16 %v9384
        %v9408 = vunpack.c.h.bf16 %v9384
        %v9409 = vunpack.c.l.bf16 %v9385
        %v9410 = vunpack.c.h.bf16 %v9385
        %v9411 = vunpack.c.l.bf16 %v9386
        %v9412 = vunpack.c.h.bf16 %v9386
        %v9413 = vunpack.c.l.bf16 %v9387
        %v9414 = vunpack.c.h.bf16 %v9387
        %v9415 = vunpack.c.l.bf16 %v9388
        %v9416 = vunpack.c.h.bf16 %v9388
        %v9417 = vunpack.c.l.bf16 %v9389
        %v9418 = vunpack.c.h.bf16 %v9389
        %v9419 = vunpack.c.l.bf16 %v9390
        %v9420 = vunpack.c.h.bf16 %v9390
        %v9421 = vunpack.c.l.bf16 %v9391
        %v9422 = vunpack.c.h.bf16 %v9391
        %v9423 = vunpack.c.l.bf16 %v9392
        %v9424 = vunpack.c.h.bf16 %v9392
        %v9425 = vadd.f32 %v9393, %v9394
        %v9426 = vadd.f32 %v9425, %v9395
        %v9427 = vadd.f32 %v9426, %v9396
        %v9428 = vadd.f32 %v9427, %v9397
        %v9429 = vadd.f32 %v9428, %v9398
        %v9430 = vadd.f32 %v9429, %v9399
        %v9431 = vadd.f32 %v9430, %v9400
        %v9432 = vadd.f32 %v9431, %v9401
        %v9433 = vadd.f32 %v9432, %v9402
        %v9434 = vadd.f32 %v9433, %v9403
        %v9435 = vadd.f32 %v9434, %v9404
        %v9436 = vadd.f32 %v9435, %v9405
        %v9437 = vadd.f32 %v9436, %v9406
        %v9438 = vadd.f32 %v9437, %v9407
        %v9439 = vadd.f32 %v9438, %v9408
        %v9440 = vadd.f32 %v9439, %v9409
        %v9441 = vadd.f32 %v9440, %v9410
        %v9442 = vadd.f32 %v9441, %v9411
        %v9443 = vadd.f32 %v9442, %v9412
        %v9444 = vadd.f32 %v9443, %v9413
        %v9445 = vadd.f32 %v9444, %v9414
        %v9446 = vadd.f32 %v9445, %v9415
        %v9447 = vadd.f32 %v9446, %v9416
        %v9448 = vadd.f32 %v9447, %v9417
        %v9449 = vadd.f32 %v9448, %v9418
        %v9450 = vadd.f32 %v9449, %v9419
        %v9451 = vadd.f32 %v9450, %v9420
        %v9452 = vadd.f32 %v9451, %v9421
        %v9453 = vadd.f32 %v9452, %v9422
        %v9454 = vadd.f32 %v9453, %v9423
        %v9455 = vadd.f32 %v9454, %v9424
        %v9456 = vrot.slane %v9455, 4
        %v9457 = vadd.f32 %v9455, %v9456
        %v9458 = vrot.slane %v9457, 2
        %v9459 = vadd.f32 %v9457, %v9458
        %v9460 = vrot.slane %v9459, 1
        %v9461 = vadd.f32 %v9459, %v9460
        %v9462 = vmul.f32 %v9461, 0.00390625
        %v9463 = vld [vmem:[#allocation9] sm:$0xff]
        %v9464 = vld [vmem:[#allocation9 + $0x8] sm:$0xff]
        %v9465 = vld [vmem:[#allocation9 + $0x10] sm:$0xff]
        %v9466 = vld [vmem:[#allocation9 + $0x18] sm:$0xff]
        %v9467 = vld [vmem:[#allocation9 + $0x20] sm:$0xff]
        %v9468 = vld [vmem:[#allocation9 + $0x28] sm:$0xff]
        %v9469 = vld [vmem:[#allocation9 + $0x30] sm:$0xff]
        %v9470 = vld [vmem:[#allocation9 + $0x38] sm:$0xff]
        %v9471 = vld [vmem:[#allocation9 + $0x40] sm:$0xff]
        %v9472 = vld [vmem:[#allocation9 + $0x48] sm:$0xff]
        %v9473 = vld [vmem:[#allocation9 + $0x50] sm:$0xff]
        %v9474 = vld [vmem:[#allocation9 + $0x58] sm:$0xff]
        %v9475 = vld [vmem:[#allocation9 + $0x60] sm:$0xff]
        %v9476 = vld [vmem:[#allocation9 + $0x68] sm:$0xff]
        %v9477 = vld [vmem:[#allocation9 + $0x70] sm:$0xff]
        %v9478 = vld [vmem:[#allocation9 + $0x78] sm:$0xff]
        %v9479 = vld [vmem:[#allocation11] sm:$0x1]
        %v9481 = vlaneseq
        %v9482 = vshrl.u32 %v9481, 7
        %v9483 = vsub.s32 0, %v9482
        %v9484 = vrot.slane %v9479, %v9483
        %9486 = vmatprep.subr.mxu0 0.0
        %9487 = vmatpush1.msra.mxu0 %v9463
        %9488 = vmatprep.subr.mxu0 0.0
        %9489 = vmatpush1.msra.mxu0 %v9464
        %9490 = vmatprep.subr.mxu0 0.0
        %9491 = vmatpush1.msra.mxu0 %v9465
        %9492 = vmatprep.subr.mxu0 0.0
        %9493 = vmatpush1.msra.mxu0 %v9466
        %9494 = vmatprep.subr.mxu0 0.0
        %9495 = vmatpush1.msra.mxu0 %v9467
        %9496 = vmatprep.subr.mxu0 0.0
        %9497 = vmatpush1.msra.mxu0 %v9468
        %9498 = vmatprep.subr.mxu0 0.0
        %9499 = vmatpush1.msra.mxu0 %v9469
        %9500 = vmatprep.subr.mxu0 0.0
        %9501 = vmatpush1.msra.mxu0 %v9470
        %9502 = vmatprep.subr.mxu0 0.0
        %9503 = vmatpush1.msra.mxu0 %v9471
        %9504 = vmatprep.subr.mxu0 0.0
        %9505 = vmatpush1.msra.mxu0 %v9472
        %9506 = vmatprep.subr.mxu0 0.0
        %9507 = vmatpush1.msra.mxu0 %v9473
        %9508 = vmatprep.subr.mxu0 0.0
        %9509 = vmatpush1.msra.mxu0 %v9474
        %9510 = vmatprep.subr.mxu0 0.0
        %9511 = vmatpush1.msra.mxu0 %v9475
        %9512 = vmatprep.subr.mxu0 0.0
        %9513 = vmatpush1.msra.mxu0 %v9476
        %9514 = vmatprep.subr.mxu0 0.0
        %9515 = vmatpush1.msra.mxu0 %v9477
        %9516 = vmatprep.subr.mxu0 0.0
        %9517 = vmatpush1.msra.mxu0 %v9478
        %9518 = vmatprep.subr.mxu0 0.0
        %9519 = vmatpush1.msra.mxu0 0.0
        %9520 = vmatprep.subr.mxu0 0.0
        %9521 = vmatpush1.msra.mxu0 0.0
        %9522 = vmatprep.subr.mxu0 0.0
        %9523 = vmatpush1.msra.mxu0 0.0
        %9524 = vmatprep.subr.mxu0 0.0
        %9525 = vmatpush1.msra.mxu0 0.0
        %9526 = vmatprep.subr.mxu0 0.0
        %9527 = vmatpush1.msra.mxu0 0.0
        %9528 = vmatprep.subr.mxu0 0.0
        %9529 = vmatpush1.msra.mxu0 0.0
        %9530 = vmatprep.subr.mxu0 0.0
        %9531 = vmatpush1.msra.mxu0 0.0
        %9532 = vmatprep.subr.mxu0 0.0
        %9533 = vmatpush1.msra.mxu0 0.0
        %9534 = vmatprep.subr.mxu0 0.0
        %9535 = vmatpush1.msra.mxu0 0.0
        %9536 = vmatprep.subr.mxu0 0.0
        %9537 = vmatpush1.msra.mxu0 0.0
        %9538 = vmatprep.subr.mxu0 0.0
        %9539 = vmatpush1.msra.mxu0 0.0
        %9540 = vmatprep.subr.mxu0 0.0
        %9541 = vmatpush1.msra.mxu0 0.0
        %9542 = vmatprep.subr.mxu0 0.0
        %9543 = vmatpush1.msra.mxu0 0.0
        %9544 = vmatprep.subr.mxu0 0.0
        %9545 = vmatpush1.msra.mxu0 0.0
        %9546 = vmatprep.subr.mxu0 0.0
        %9547 = vmatpush1.msra.mxu0 0.0
        %9548 = vmatprep.subr.mxu0 0.0
        %9549 = vmatpush1.msra.mxu0 0.0
        %9550 = vmatprep.mubr.f32.mxu0 0.0
        %9551 = vmatmul.mubr.f32.gmra.mrb[0].mxu0 %v9462
        %v9552 = vpop.f32.mrb[0].mxu0
        %v9553 = vadd.f32 %v9484, %v9552
        %v9554 = vpop.f32.mrb[0].mxu0
        %9555 = vdwg.mxu0
        %9556 = vst [vmem:[%s359] sm:$0xff] %v9553
        %9557 = vmax.xlane.f32.xlu0 %v9553
        %v9558 = vpop.xlane.xlu0 %9557
        %v9559 = vsub.f32 %v9553, %v9558
        %v9560 = vmul.f32 %v9559, 1.442695
        %v9561 = vpow.pop %v9560
        %9562 = vadd.xlane.f32.xlu0 %v9561
        %v9563 = vpop.xlane.xlu0 %9562
        %v9564 = vlog2.pop %v9563
        %v9565 = vmul.f32 %v9564, 0.6931472
        %s9566 = sld [smem:[#allocation3 + %s27]]
        %v9567 = vlaneseq
        %v9568 = vand.u32 %v9567, 127
        %v9569 = vstv %s9566
        %vm9570 = vcmp.eq.s32.totalorder %v9568, %v9569
        %v9571 = vsel %vm9570, %v9559, 0.0
        %9572 = vadd.xlane.f32.xlu0 %v9571
        %v9573 = vpop.xlane.xlu0 %9572
        %v9574 = vsub.f32 %v9565, %v9573
        %9575 = vst [vmem:[%s363] sm:$0xff] %v9574
        %p9576 = scmp.lt.s32.totalorder %s27, 1
        %s9577 = scalar_select %p9576, %s27, 1
        %s9578 = smul.addr %s9577, 8
        %s9579 = scalar_lea.vmem %s7, %s9578
        %p9580 = scmp.lt.s32.totalorder %s27, 1
        %s9581 = scalar_select %p9580, %s27, 1
        %s9582 = smul.addr %s9581, 8
        %s9583 = scalar_lea.vmem %s8, %s9582
        // Predicated region
        $region65: #{model_and_loss_forward.1} parent=43 // pred_check
          %p9584 = pneg %p176
        $region66: #{model_and_loss_forward.1} parent=43 // pred_check_branch
          %9586 = sbr.rel (%p9584) target = $region68
        $region67: #{model_and_loss_forward.1} parent=43 // pred_region
          _
        $region68: #{model_and_loss_forward.1} parent=43 // pred_fallthru
          _
        // Predicated region
        $region69: #{model_and_loss_forward.1} parent=43 // pred_check
          %p9587 = pneg %p202
        $region70: #{model_and_loss_forward.1} parent=43 // pred_check_branch
          %9589 = sbr.rel (%p9587) target = $region72
        $region71: #{model_and_loss_forward.1} parent=43 // pred_region
          _
        $region72: #{model_and_loss_forward.1} parent=43 // pred_fallthru
          _
      $region44: #{model_and_loss_forward.1} parent=5 // pred_fallthru
        _
      %p9590 = scmp.le.s32.totalorder 2, %s22
      // Predicated region
      $region73: #{model_and_loss_forward.1} parent=5 // pred_check
        %p9591 = pneg %p9590
      $region74: #{model_and_loss_forward.1} parent=5 // pred_check_branch
        %9593 = sbr.rel (%p9591) target = $region76
      $region75: #{model_and_loss_forward.1} parent=5 // pred_region
        %s9594 = ssub.s32 %s22, 2
        // Predicated region
        $region77: #{model_and_loss_forward.1} parent=75 // pred_check
          %p9595 = pneg %p182
        $region78: #{model_and_loss_forward.1} parent=75 // pred_check_branch
          %9597 = sbr.rel (%p9595) target = $region80
        $region79: #{model_and_loss_forward.1} parent=75 // pred_region
          %p9598 = scmp.lt.s32.totalorder %s28, 1
          %s9599 = scalar_select %p9598, %s28, 1
          %s9600 = smul.addr %s9599, 8
          %s9601 = scalar_lea.vmem %s7, %s9600
        $region80: #{model_and_loss_forward.1} parent=75 // pred_fallthru
          _
        // Predicated region
        $region81: #{model_and_loss_forward.1} parent=75 // pred_check
          %p9602 = pneg %p208
        $region82: #{model_and_loss_forward.1} parent=75 // pred_check_branch
          %9604 = sbr.rel (%p9602) target = $region84
        $region83: #{model_and_loss_forward.1} parent=75 // pred_region
          %p9605 = scmp.lt.s32.totalorder %s28, 1
          %s9606 = scalar_select %p9605, %s28, 1
          %s9607 = smul.addr %s9606, 8
          %s9608 = scalar_lea.vmem %s8, %s9607
        $region84: #{model_and_loss_forward.1} parent=75 // pred_fallthru
          _
      $region76: #{model_and_loss_forward.1} parent=5 // pred_fallthru
        _
    $region6: #{model_and_loss_forward.1} parent=1 // loop_footer
      %s26 = sadd.s32 1, %s22
    $region7: #{model_and_loss_forward.1} parent=1 // loop_footer_branch
      %21 = sbr.rel target = $region3
    $region8: #{model_and_loss_forward.1} parent=1 // loop_exit
      _
    %9609 = vsyncpa [#allocation5], 1
    %s9610 = scalar_lea.sflag [#allocation5], 1
    %9611 = vsyncpa %s9610, 1
    %9612 = vsyncpa [#allocation7], 1
    %9613 = vsyncpa [#allocation10], 1

</llo_original>
